<compile_context>
chip_gen: v5e
topology: v5e:2x2
jax: 0.10.0
libtpu: 0.0.40
codegen_flags: <defaults>
</compile_context>

<pallas_src>
import jax
import jax.numpy as jnp
from jax import lax
from jax.experimental import pallas as pl
from jax.experimental.pallas import tpu as pltpu

# ---- small-scale config mirroring the PyTorch module structure -------------
N_EMBD = 128          # n_embd
N_HEAD = 4            # n_head
HEAD_SIZE = N_EMBD // N_HEAD
N_LAYER = 2           # n_layer
VOCAB = 512           # vocab_size
BLOCK_SIZE = 16       # block_size (max sequence length)
LN_EPS = 1e-5

MATMUL_DTYPE = jnp.bfloat16   # MXU-native on all TPU generations
NEG_INF = -1e30               # large finite negative; exp() underflows to 0


def _layernorm(x, g, b):
    # One-pass variance: E[x^2] - mu^2 (one fewer cross-lane reduce).
    # NOTE: adequate at 0.02-std init; prefer two-pass for trained checkpoints.
    mu = jnp.mean(x, axis=-1, keepdims=True)
    var = jnp.mean(x * x, axis=-1, keepdims=True) - mu * mu
    return (x - mu) * lax.rsqrt(var + LN_EPS) * g + b


def _mm(a, w):
    # bf16 operands on the MXU, f32 accumulation.
    return jnp.dot(a.astype(MATMUL_DTYPE), w.astype(MATMUL_DTYPE),
                   preferred_element_type=jnp.float32)


# ---------------------------------------------------------------------------
# Fused forward: embedding + all blocks + final LN + lm_head, one tile / step.
# ---------------------------------------------------------------------------
def _make_forward_kernel(seq_len):
    T = seq_len
    C = N_EMBD
    HS = HEAD_SIZE

    def kernel(idx_ref, tok_emb_ref, pos_emb_ref,
               ln1g_ref, ln1b_ref, wqkv_ref, wproj_ref, bproj_ref,
               ln2g_ref, ln2b_ref, w1_ref, b1_ref, w2_ref, b2_ref,
               lnfg_ref, lnfb_ref, wlm_ref, blm_ref,
               logits_ref):
        M = idx_ref.shape[0]               # = batch_tile * T rows
        bt = M // T

        # --- fused embedding gather (exact one-hot @ table) + positional add
        ids = idx_ref[...]                                          # (M, 1) i32
        onehot = (lax.broadcasted_iota(jnp.int32, (M, VOCAB), 1)
                  == ids).astype(jnp.float32)                       # (M, V)
        x = jnp.dot(onehot, tok_emb_ref[...],
                    preferred_element_type=jnp.float32)             # (M, C)
        x = x + jnp.tile(pos_emb_ref[...], (bt, 1))                 # + pos_emb

        # --- block-diagonal(batch) AND causal mask over the (M, M) score tile
        row = lax.broadcasted_iota(jnp.int32, (M, M), 0)
        col = lax.broadcasted_iota(jnp.int32, (M, M), 1)
        if (T & (T - 1)) == 0:            # power-of-two T: shifts, no int div
            sh = T.bit_length() - 1
            same_b = (row >> sh) == (col >> sh)
            causal = (col & (T - 1)) <= (row & (T - 1))
        else:
            same_b = (row // T) == (col // T)
            causal = (col % T) <= (row % T)
        mask = same_b & causal

        # NOTE: matches the reference exactly: scaling uses C = n_embd
        #       (x.shape[-1]), not head_size. Intentional.
        scale = C ** (-0.5)

        for l in range(N_LAYER):           # static unroll; weights in VMEM
            # --- multi-head causal self-attention (pre-LN) ---
            h = _layernorm(x, ln1g_ref[l], ln1b_ref[l])
            qkv = _mm(h, wqkv_ref[l]).astype(MATMUL_DTYPE)   # (M, 3C) bf16

            head_outs = []
            for hh in range(N_HEAD):
                qh = qkv[:, 0 * C + hh * HS: 0 * C + (hh + 1) * HS]
                kh = qkv[:, 1 * C + hh * HS: 1 * C + (hh + 1) * HS]
                vh = qkv[:, 2 * C + hh * HS: 2 * C + (hh + 1) * HS]
                # Lane-dense (M, M) scores: q @ k^T contracting last axes
                # (no transpose materialized). Cross-batch entries masked off.
                wei = lax.dot_general(
                    qh, kh, (((1,), (1,)), ((), ())),
                    preferred_element_type=jnp.float32) * scale
                wei = jnp.where(mask, wei, NEG_INF)
                wei = wei - jnp.max(wei, axis=-1, keepdims=True)
                p = jnp.exp(wei)
                # approx reciprocal on the EUP slot (~1e-2 rel err, inference)
                p = p * pl.reciprocal(jnp.sum(p, axis=-1, keepdims=True),
                                      approx=True)
                ho = jnp.dot(p.astype(MATMUL_DTYPE), vh,
                             preferred_element_type=jnp.float32)    # (M, HS)
                head_outs.append(ho.astype(MATMUL_DTYPE))

            # One concat + one K=128 projection matmul (full systolic depth).
            att_in = jnp.concatenate(head_outs, axis=-1)            # (M, C) bf16
            att = jnp.dot(att_in, wproj_ref[l].astype(MATMUL_DTYPE),
                          preferred_element_type=jnp.float32)
            x = x + att + bproj_ref[l]     # dropout == identity (eval)

            # --- feed-forward (pre-LN) ---
            h2 = _layernorm(x, ln2g_ref[l], ln2b_ref[l])
            f = jnp.maximum(_mm(h2, w1_ref[l]) + b1_ref[l], 0.0)
            x = x + _mm(f, w2_ref[l]) + b2_ref[l]

        # --- final LayerNorm + lm_head (lane-dense (M, V) store, V = 512) ---
        hf = _layernorm(x, lnfg_ref[...], lnfb_ref[...])
        logits_ref[...] = _mm(hf, wlm_ref[...]) + blm_ref[...]

    return kernel


def _const_spec(shape):
    n = len(shape)
    return pl.BlockSpec(shape, lambda b, _n=n: (0,) * _n)


def model_forward(idx_tokens, params, *, batch_tile=None):
    """Equivalent of BigramLanguageModel.forward(idx, targets=None) -> (logits, None)."""
    B, T = idx_tokens.shape
    C, V = N_EMBD, VOCAB

    if batch_tile is None:
        # One grid step by default: v5e/v6e have a single TensorCore, so a
        # multi-step grid is just a serial loop that halves matmul M and adds
        # per-step overhead.  On v7x, pass batch_tile = B // 2 explicitly only
        # when each core still gets >= 256 rows.
        batch_tile = B
    assert B % batch_tile == 0
    tile_rows = batch_tile * T
    grid_steps = B // batch_tile

    idx2d = idx_tokens.reshape(B * T, 1).astype(jnp.int32)
    pos_emb = params["pos_emb"][:T]

    weights = (params["tok_emb"], pos_emb,
               params["ln1_g"], params["ln1_b"], params["w_qkv"],
               params["w_proj"], params["b_proj"],
               params["ln2_g"], params["ln2_b"],
               params["w1"], params["b1"], params["w2"], params["b2"],
               params["lnf_g"], params["lnf_b"], params["w_lm"], params["b_lm"])

    in_specs = [pl.BlockSpec((tile_rows, 1), lambda b: (b, 0))]
    in_specs += [_const_spec(w.shape) for w in weights]

    # Advisory cost estimate for scheduling the single fused custom call.
    tokens = B * T
    flops_layer = tokens * 2 * (C * 3 * C + C * C + 2 * C * 4 * C) \
        + grid_steps * N_HEAD * 4 * tile_rows * tile_rows * HEAD_SIZE
    flops = N_LAYER * flops_layer + tokens * 2 * C * V + tokens * 2 * V * C
    bytes_accessed = sum(int(w.size) * w.dtype.itemsize for w in weights) \
        + int(idx2d.size) * 4 + tokens * V * 4
    cost = pl.CostEstimate(
        flops=int(flops),
        transcendentals=int(N_LAYER * grid_steps * N_HEAD * tile_rows * tile_rows),
        bytes_accessed=int(bytes_accessed))

    logits2d = pl.pallas_call(
        _make_forward_kernel(T),
        grid=(grid_steps,),
        in_specs=in_specs,
        out_specs=pl.BlockSpec((tile_rows, V), lambda b: (b, 0)),
        out_shape=jax.ShapeDtypeStruct((B * T, V), jnp.float32),
        compiler_params=pltpu.CompilerParams(
            dimension_semantics=("parallel",)),
        cost_estimate=cost,
    )(idx2d, *weights)

    return logits2d.reshape(B, T, V), None   # loss is None when targets is None
    # TODO(synk): cross-entropy loss path (targets != None) and generate()
    #             multinomial sampling are not implemented in-kernel.


# ---------------------------------------------------------------------------
# Pure-JAX reference with the original module's semantics (exact gather,
# same bf16 matmul casts as the kernel for the transformer blocks).
# ---------------------------------------------------------------------------
def ref_forward(idx_tokens, params):
    B, T = idx_tokens.shape
    C = N_EMBD
    x = params["tok_emb"][idx_tokens] + params["pos_emb"][:T][None]
    causal = jnp.tril(jnp.ones((T, T), dtype=bool))
    scale = C ** (-0.5)

    def mm(a, w):
        return jnp.dot(a.astype(MATMUL_DTYPE), w.astype(MATMUL_DTYPE),
                       preferred_element_type=jnp.float32)

    for l in range(N_LAYER):
        h = _layernorm(x, params["ln1_g"][l], params["ln1_b"][l])
        qkv = mm(h.reshape(B * T, C), params["w_qkv"][l]).reshape(B, T, 3 * C)
        q, k, v = qkv[..., :C], qkv[..., C:2 * C], qkv[..., 2 * C:]
        qh = q.reshape(B, T, N_HEAD, HEAD_SIZE).transpose(0, 2, 1, 3)
        kh = k.reshape(B, T, N_HEAD, HEAD_SIZE).transpose(0, 2, 1, 3)
        vh = v.reshape(B, T, N_HEAD, HEAD_SIZE).transpose(0, 2, 1, 3)
        wei = jnp.einsum('bhqd,bhkd->bhqk',
                         qh.astype(MATMUL_DTYPE), kh.astype(MATMUL_DTYPE),
                         preferred_element_type=jnp.float32) * scale
        wei = jnp.where(causal, wei, NEG_INF)
        p = jax.nn.softmax(wei, axis=-1)
        att = jnp.einsum('bhqk,bhkd->bhqd',
                         p.astype(MATMUL_DTYPE), vh.astype(MATMUL_DTYPE),
                         preferred_element_type=jnp.float32)
        att = att.transpose(0, 2, 1, 3).reshape(B, T, C)
        x = x + mm(att.reshape(B * T, C),
                   params["w_proj"][l]).reshape(B, T, C) + params["b_proj"][l]
        h2 = _layernorm(x, params["ln2_g"][l], params["ln2_b"][l])
        f = jnp.maximum(mm(h2.reshape(B * T, C), params["w1"][l])
                        + params["b1"][l], 0.0)
        x = x + mm(f, params["w2"][l]).reshape(B, T, C) + params["b2"][l]

    hf = _layernorm(x, params["lnf_g"], params["lnf_b"])
    return mm(hf.reshape(B * T, C),
              params["w_lm"]).reshape(B, T, VOCAB) + params["b_lm"]


# ---------------------------------------------------------------------------
# Deterministic parameter init (matmul weights bf16, everything else f32)
# ---------------------------------------------------------------------------
def init_params(key):
    def nrm(k, shape, std=0.02, dtype=jnp.float32):
        return (std * jax.random.normal(k, shape)).astype(dtype)

    keys = iter(jax.random.split(key, 4 + 7 * N_LAYER))
    wd = MATMUL_DTYPE
    p = {
        "tok_emb": nrm(next(keys), (VOCAB, N_EMBD)),
        "pos_emb": nrm(next(keys), (BLOCK_SIZE, N_EMBD)),
        "lnf_g": jnp.ones((1, N_EMBD), jnp.float32),
        "lnf_b": jnp.zeros((1, N_EMBD), jnp.float32),
        "w_lm": nrm(next(keys), (N_EMBD, VOCAB), dtype=wd),
        "b_lm": nrm(next(keys), (1, VOCAB)),
    }
    ln1_g, ln1_b, ln2_g, ln2_b = [], [], [], []
    w_qkv, w_proj, b_proj, w1, b1, w2, b2 = [], [], [], [], [], [], []
    for _ in range(N_LAYER):
        ln1_g.append(jnp.ones((1, N_EMBD), jnp.float32))
        ln1_b.append(jnp.zeros((1, N_EMBD), jnp.float32))
        w_qkv.append(nrm(next(keys), (N_EMBD, 3 * N_EMBD), dtype=wd))  # Wq|Wk|Wv
        w_proj.append(nrm(next(keys), (N_EMBD, N_EMBD), dtype=wd))
        b_proj.append(nrm(next(keys), (1, N_EMBD)))
        ln2_g.append(jnp.ones((1, N_EMBD), jnp.float32))
        ln2_b.append(jnp.zeros((1, N_EMBD), jnp.float32))
        w1.append(nrm(next(keys), (N_EMBD, 4 * N_EMBD), dtype=wd))
        b1.append(nrm(next(keys), (1, 4 * N_EMBD)))
        w2.append(nrm(next(keys), (4 * N_EMBD, N_EMBD), dtype=wd))
        b2.append(nrm(next(keys), (1, N_EMBD)))
    p.update(
        ln1_g=jnp.stack(ln1_g), ln1_b=jnp.stack(ln1_b),
        w_qkv=jnp.stack(w_qkv), w_proj=jnp.stack(w_proj),
        b_proj=jnp.stack(b_proj),
        ln2_g=jnp.stack(ln2_g), ln2_b=jnp.stack(ln2_b),
        w1=jnp.stack(w1), b1=jnp.stack(b1),
        w2=jnp.stack(w2), b2=jnp.stack(b2),
    )
    return p


if __name__ == "__main__":
    key = jax.random.PRNGKey(0)
    pkey, ikey = jax.random.split(key)
    params = init_params(pkey)

    B, T = 8, BLOCK_SIZE
    idx = jax.random.randint(ikey, (B, T), 0, VOCAB, dtype=jnp.int32)

    logits, loss = model_forward(idx, params)
    logits = jax.block_until_ready(logits)
    assert logits.shape == (B, T, VOCAB) and loss is None

    ref = jax.block_until_ready(ref_forward(idx, params))
    # bf16 matmul operands + approx softmax reciprocal + one-hot-matmul
    # embedding gather -> compare at 1e-2.
    err = jnp.max(jnp.abs(logits - ref))
    assert jnp.allclose(logits, ref, rtol=1e-2, atol=1e-2), f"max abs err {err}"

    print("KERNEL_OK")
</pallas_src>

<mosaic_0001>
module attributes {stable_mosaic.version = 11 : i64} {
  func.func @kernel(%arg0: i32, %arg1: memref<128x1xi32, #tpu.memory_space<vmem>>, %arg2: memref<512x128xf32, #tpu.memory_space<vmem>>, %arg3: memref<16x128xf32, #tpu.memory_space<vmem>>, %arg4: memref<2x1x128xf32, #tpu.memory_space<vmem>>, %arg5: memref<2x1x128xf32, #tpu.memory_space<vmem>>, %arg6: memref<2x128x384xbf16, #tpu.memory_space<vmem>>, %arg7: memref<2x128x128xbf16, #tpu.memory_space<vmem>>, %arg8: memref<2x1x128xf32, #tpu.memory_space<vmem>>, %arg9: memref<2x1x128xf32, #tpu.memory_space<vmem>>, %arg10: memref<2x1x128xf32, #tpu.memory_space<vmem>>, %arg11: memref<2x128x512xbf16, #tpu.memory_space<vmem>>, %arg12: memref<2x1x512xf32, #tpu.memory_space<vmem>>, %arg13: memref<2x512x128xbf16, #tpu.memory_space<vmem>>, %arg14: memref<2x1x128xf32, #tpu.memory_space<vmem>>, %arg15: memref<1x128xf32, #tpu.memory_space<vmem>>, %arg16: memref<1x128xf32, #tpu.memory_space<vmem>>, %arg17: memref<128x512xbf16, #tpu.memory_space<vmem>>, %arg18: memref<1x512xf32, #tpu.memory_space<vmem>>, %arg19: memref<128x512xf32, #tpu.memory_space<vmem>>) attributes {dimension_semantics = [#tpu.dimension_semantics<parallel>], iteration_bounds = array<i64: 1>, scalar_prefetch = 0 : i64, scratch_operands = 0 : i64, tpu.core_type = #tpu.core_type<tc>, window_params = [{transform_indices = @transform_0, window_bounds = array<i64: 128, 1>}, {pipeline_mode = #tpu.pipeline_mode<synchronous>, transform_indices = @transform_1, window_bounds = array<i64: 512, 128>}, {pipeline_mode = #tpu.pipeline_mode<synchronous>, transform_indices = @transform_2, window_bounds = array<i64: 16, 128>}, {pipeline_mode = #tpu.pipeline_mode<synchronous>, transform_indices = @transform_3, window_bounds = array<i64: 2, 1, 128>}, {pipeline_mode = #tpu.pipeline_mode<synchronous>, transform_indices = @transform_4, window_bounds = array<i64: 2, 1, 128>}, {pipeline_mode = #tpu.pipeline_mode<synchronous>, transform_indices = @transform_5, window_bounds = array<i64: 2, 128, 384>}, {pipeline_mode = #tpu.pipeline_mode<synchronous>, transform_indices = @transform_6, window_bounds = array<i64: 2, 128, 128>}, {pipeline_mode = #tpu.pipeline_mode<synchronous>, transform_indices = @transform_7, window_bounds = array<i64: 2, 1, 128>}, {pipeline_mode = #tpu.pipeline_mode<synchronous>, transform_indices = @transform_8, window_bounds = array<i64: 2, 1, 128>}, {pipeline_mode = #tpu.pipeline_mode<synchronous>, transform_indices = @transform_9, window_bounds = array<i64: 2, 1, 128>}, {pipeline_mode = #tpu.pipeline_mode<synchronous>, transform_indices = @transform_10, window_bounds = array<i64: 2, 128, 512>}, {pipeline_mode = #tpu.pipeline_mode<synchronous>, transform_indices = @transform_11, window_bounds = array<i64: 2, 1, 512>}, {pipeline_mode = #tpu.pipeline_mode<synchronous>, transform_indices = @transform_12, window_bounds = array<i64: 2, 512, 128>}, {pipeline_mode = #tpu.pipeline_mode<synchronous>, transform_indices = @transform_13, window_bounds = array<i64: 2, 1, 128>}, {pipeline_mode = #tpu.pipeline_mode<synchronous>, transform_indices = @transform_14, window_bounds = array<i64: 1, 128>}, {pipeline_mode = #tpu.pipeline_mode<synchronous>, transform_indices = @transform_15, window_bounds = array<i64: 1, 128>}, {pipeline_mode = #tpu.pipeline_mode<synchronous>, transform_indices = @transform_16, window_bounds = array<i64: 128, 512>}, {pipeline_mode = #tpu.pipeline_mode<synchronous>, transform_indices = @transform_17, window_bounds = array<i64: 1, 512>}, {transform_indices = @transform_18, window_bounds = array<i64: 128, 512>}]} {
    %c0 = arith.constant 0 : index
    %c0_0 = arith.constant 0 : index
    %0 = vector.load %arg1[%c0, %c0_0] : memref<128x1xi32, #tpu.memory_space<vmem>>, vector<128x1xi32>
    %1 = tpu.iota {dimensions = array<i32: 1>} : vector<128x512xi32>
    %2 = vector.broadcast %0 : vector<128x1xi32> to vector<128x512xi32>
    %3 = arith.cmpi eq, %1, %2 : vector<128x512xi32>
    %4 = arith.extui %3 : vector<128x512xi1> to vector<128x512xi32>
    %5 = arith.sitofp %4 : vector<128x512xi32> to vector<128x512xf32>
    %c0_1 = arith.constant 0 : index
    %c0_2 = arith.constant 0 : index
    %6 = vector.load %arg2[%c0_1, %c0_2] : memref<512x128xf32, #tpu.memory_space<vmem>>, vector<512x128xf32>
    %cst = arith.constant dense<0.000000e+00> : vector<128x128xf32>
    %7 = tpu.matmul %5, %6, %cst {dimension_numbers = #tpu.dot_dimension_numbers<[1], [0], [0], [1], [0, 0, 1, 1], [], []>} : vector<128x512xf32>, vector<512x128xf32>, vector<128x128xf32> -> vector<128x128xf32>
    %c0_3 = arith.constant 0 : index
    %c0_4 = arith.constant 0 : index
    %8 = vector.load %arg3[%c0_3, %c0_4] : memref<16x128xf32, #tpu.memory_space<vmem>>, vector<16x128xf32>
    %9 = tpu.concatenate %8, %8, %8, %8, %8, %8, %8, %8 in 0 : vector<16x128xf32>, vector<16x128xf32>, vector<16x128xf32>, vector<16x128xf32>, vector<16x128xf32>, vector<16x128xf32>, vector<16x128xf32>, vector<16x128xf32> -> vector<128x128xf32>
    %10 = arith.addf %7, %9 : vector<128x128xf32>
    %11 = tpu.iota {dimensions = array<i32: 0>} : vector<128x128xi32>
    %12 = tpu.iota {dimensions = array<i32: 1>} : vector<128x128xi32>
    %c4_i32 = arith.constant 4 : i32
    %13 = vector.broadcast %c4_i32 : i32 to vector<128x128xi32>
    %14 = arith.shrsi %11, %13 : vector<128x128xi32>
    %c4_i32_5 = arith.constant 4 : i32
    %15 = vector.broadcast %c4_i32_5 : i32 to vector<128x128xi32>
    %16 = arith.shrsi %12, %15 : vector<128x128xi32>
    %17 = arith.cmpi eq, %14, %16 : vector<128x128xi32>
    %c15_i32 = arith.constant 15 : i32
    %18 = vector.broadcast %c15_i32 : i32 to vector<128x128xi32>
    %19 = arith.andi %12, %18 : vector<128x128xi32>
    %c15_i32_6 = arith.constant 15 : i32
    %20 = vector.broadcast %c15_i32_6 : i32 to vector<128x128xi32>
    %21 = arith.andi %11, %20 : vector<128x128xi32>
    %22 = arith.cmpi sle, %19, %21 : vector<128x128xi32>
    %23 = arith.andi %17, %22 : vector<128x128xi1>
    %c0_7 = arith.constant 0 : index
    %c0_8 = arith.constant 0 : index
    %c0_9 = arith.constant 0 : index
    %24 = vector.load %arg4[%c0_7, %c0_8, %c0_9] : memref<2x1x128xf32, #tpu.memory_space<vmem>>, vector<1x1x128xf32>
    %25 = vector.shape_cast %24 : vector<1x1x128xf32> to vector<1x128xf32>
    %c0_10 = arith.constant 0 : index
    %c0_11 = arith.constant 0 : index
    %c0_12 = arith.constant 0 : index
    %26 = vector.load %arg5[%c0_10, %c0_11, %c0_12] : memref<2x1x128xf32, #tpu.memory_space<vmem>>, vector<1x1x128xf32>
    %27 = vector.shape_cast %26 : vector<1x1x128xf32> to vector<1x128xf32>
    %cst_13 = arith.constant dense<0.000000e+00> : vector<128xf32>
    %28 = vector.multi_reduction <add>, %10, %cst_13 [1] : vector<128x128xf32> to vector<128xf32>
    %29 = vector.shape_cast %28 : vector<128xf32> to vector<128x1xf32>
    %cst_14 = arith.constant 1.280000e+02 : f32
    %30 = vector.broadcast %cst_14 : f32 to vector<128x1xf32>
    %31 = arith.divf %29, %30 : vector<128x1xf32>
    %32 = arith.mulf %10, %10 : vector<128x128xf32>
    %cst_15 = arith.constant dense<0.000000e+00> : vector<128xf32>
    %33 = vector.multi_reduction <add>, %32, %cst_15 [1] : vector<128x128xf32> to vector<128xf32>
    %34 = vector.shape_cast %33 : vector<128xf32> to vector<128x1xf32>
    %cst_16 = arith.constant 1.280000e+02 : f32
    %35 = vector.broadcast %cst_16 : f32 to vector<128x1xf32>
    %36 = arith.divf %34, %35 : vector<128x1xf32>
    %37 = arith.mulf %31, %31 : vector<128x1xf32>
    %38 = arith.subf %36, %37 : vector<128x1xf32>
    %39 = vector.broadcast %31 : vector<128x1xf32> to vector<128x128xf32>
    %40 = arith.subf %10, %39 : vector<128x128xf32>
    %cst_17 = arith.constant 9.99999974E-6 : f32
    %41 = vector.broadcast %cst_17 : f32 to vector<128x1xf32>
    %42 = arith.addf %38, %41 : vector<128x1xf32>
    %43 = math.rsqrt %42 : vector<128x1xf32>
    %44 = vector.broadcast %43 : vector<128x1xf32> to vector<128x128xf32>
    %45 = arith.mulf %40, %44 : vector<128x128xf32>
    %46 = vector.broadcast %25 : vector<1x128xf32> to vector<128x128xf32>
    %47 = arith.mulf %45, %46 : vector<128x128xf32>
    %48 = vector.broadcast %27 : vector<1x128xf32> to vector<128x128xf32>
    %49 = arith.addf %47, %48 : vector<128x128xf32>
    %c0_18 = arith.constant 0 : index
    %c0_19 = arith.constant 0 : index
    %c0_20 = arith.constant 0 : index
    %50 = vector.load %arg6[%c0_18, %c0_19, %c0_20] : memref<2x128x384xbf16, #tpu.memory_space<vmem>>, vector<1x128x384xbf16>
    %51 = vector.shape_cast %50 : vector<1x128x384xbf16> to vector<128x384xbf16>
    %52 = arith.truncf %49 : vector<128x128xf32> to vector<128x128xbf16>
    %cst_21 = arith.constant dense<0.000000e+00> : vector<128x384xf32>
    %53 = tpu.matmul %52, %51, %cst_21 {dimension_numbers = #tpu.dot_dimension_numbers<[1], [0], [0], [1], [0, 0, 1, 1], [], []>} : vector<128x128xbf16>, vector<128x384xbf16>, vector<128x384xf32> -> vector<128x384xf32>
    %54 = arith.truncf %53 : vector<128x384xf32> to vector<128x384xbf16>
    %55 = vector.extract_strided_slice %54 {offsets = [0, 0], sizes = [128, 32], strides = [1, 1]} : vector<128x384xbf16> to vector<128x32xbf16>
    %56 = vector.extract_strided_slice %54 {offsets = [0, 128], sizes = [128, 32], strides = [1, 1]} : vector<128x384xbf16> to vector<128x32xbf16>
    %57 = vector.extract_strided_slice %54 {offsets = [0, 256], sizes = [128, 32], strides = [1, 1]} : vector<128x384xbf16> to vector<128x32xbf16>
    %cst_22 = arith.constant dense<0.000000e+00> : vector<128x128xf32>
    %58 = tpu.matmul %55, %56, %cst_22 {dimension_numbers = #tpu.dot_dimension_numbers<[1], [1], [0], [0], [0, 0, 1, 0], [], []>} : vector<128x32xbf16>, vector<128x32xbf16>, vector<128x128xf32> -> vector<128x128xf32>
    %cst_23 = arith.constant 0.0883883461 : f32
    %59 = vector.broadcast %cst_23 : f32 to vector<128x128xf32>
    %60 = arith.mulf %58, %59 : vector<128x128xf32>
    %cst_24 = arith.constant -1.000000e+30 : f32
    %61 = vector.broadcast %cst_24 : f32 to vector<128x128xf32>
    %62 = arith.select %23, %60, %61 : vector<128x128xi1>, vector<128x128xf32>
    %cst_25 = arith.constant dense<0xFF800000> : vector<128xf32>
    %63 = vector.multi_reduction <maximumf>, %62, %cst_25 [1] : vector<128x128xf32> to vector<128xf32>
    %64 = vector.shape_cast %63 : vector<128xf32> to vector<128x1xf32>
    %65 = vector.broadcast %64 : vector<128x1xf32> to vector<128x128xf32>
    %66 = arith.subf %62, %65 : vector<128x128xf32>
    %67 = math.exp %66 : vector<128x128xf32>
    %cst_26 = arith.constant dense<0.000000e+00> : vector<128xf32>
    %68 = vector.multi_reduction <add>, %67, %cst_26 [1] : vector<128x128xf32> to vector<128xf32>
    %69 = vector.shape_cast %68 : vector<128xf32> to vector<128x1xf32>
    %70 = tpu.reciprocal %69 {approx = true} : vector<128x1xf32> -> vector<128x1xf32>
    %71 = vector.broadcast %70 : vector<128x1xf32> to vector<128x128xf32>
    %72 = arith.mulf %67, %71 : vector<128x128xf32>
    %73 = arith.truncf %72 : vector<128x128xf32> to vector<128x128xbf16>
    %cst_27 = arith.constant dense<0.000000e+00> : vector<128x32xf32>
    %74 = tpu.matmul %73, %57, %cst_27 {dimension_numbers = #tpu.dot_dimension_numbers<[1], [0], [0], [1], [0, 0, 1, 1], [], []>} : vector<128x128xbf16>, vector<128x32xbf16>, vector<128x32xf32> -> vector<128x32xf32>
    %75 = arith.truncf %74 : vector<128x32xf32> to vector<128x32xbf16>
    %76 = vector.extract_strided_slice %54 {offsets = [0, 32], sizes = [128, 32], strides = [1, 1]} : vector<128x384xbf16> to vector<128x32xbf16>
    %77 = vector.extract_strided_slice %54 {offsets = [0, 160], sizes = [128, 32], strides = [1, 1]} : vector<128x384xbf16> to vector<128x32xbf16>
    %78 = vector.extract_strided_slice %54 {offsets = [0, 288], sizes = [128, 32], strides = [1, 1]} : vector<128x384xbf16> to vector<128x32xbf16>
    %cst_28 = arith.constant dense<0.000000e+00> : vector<128x128xf32>
    %79 = tpu.matmul %76, %77, %cst_28 {dimension_numbers = #tpu.dot_dimension_numbers<[1], [1], [0], [0], [0, 0, 1, 0], [], []>} : vector<128x32xbf16>, vector<128x32xbf16>, vector<128x128xf32> -> vector<128x128xf32>
    %cst_29 = arith.constant 0.0883883461 : f32
    %80 = vector.broadcast %cst_29 : f32 to vector<128x128xf32>
    %81 = arith.mulf %79, %80 : vector<128x128xf32>
    %cst_30 = arith.constant -1.000000e+30 : f32
    %82 = vector.broadcast %cst_30 : f32 to vector<128x128xf32>
    %83 = arith.select %23, %81, %82 : vector<128x128xi1>, vector<128x128xf32>
    %cst_31 = arith.constant dense<0xFF800000> : vector<128xf32>
    %84 = vector.multi_reduction <maximumf>, %83, %cst_31 [1] : vector<128x128xf32> to vector<128xf32>
    %85 = vector.shape_cast %84 : vector<128xf32> to vector<128x1xf32>
    %86 = vector.broadcast %85 : vector<128x1xf32> to vector<128x128xf32>
    %87 = arith.subf %83, %86 : vector<128x128xf32>
    %88 = math.exp %87 : vector<128x128xf32>
    %cst_32 = arith.constant dense<0.000000e+00> : vector<128xf32>
    %89 = vector.multi_reduction <add>, %88, %cst_32 [1] : vector<128x128xf32> to vector<128xf32>
    %90 = vector.shape_cast %89 : vector<128xf32> to vector<128x1xf32>
    %91 = tpu.reciprocal %90 {approx = true} : vector<128x1xf32> -> vector<128x1xf32>
    %92 = vector.broadcast %91 : vector<128x1xf32> to vector<128x128xf32>
    %93 = arith.mulf %88, %92 : vector<128x128xf32>
    %94 = arith.truncf %93 : vector<128x128xf32> to vector<128x128xbf16>
    %cst_33 = arith.constant dense<0.000000e+00> : vector<128x32xf32>
    %95 = tpu.matmul %94, %78, %cst_33 {dimension_numbers = #tpu.dot_dimension_numbers<[1], [0], [0], [1], [0, 0, 1, 1], [], []>} : vector<128x128xbf16>, vector<128x32xbf16>, vector<128x32xf32> -> vector<128x32xf32>
    %96 = arith.truncf %95 : vector<128x32xf32> to vector<128x32xbf16>
    %97 = vector.extract_strided_slice %54 {offsets = [0, 64], sizes = [128, 32], strides = [1, 1]} : vector<128x384xbf16> to vector<128x32xbf16>
    %98 = vector.extract_strided_slice %54 {offsets = [0, 192], sizes = [128, 32], strides = [1, 1]} : vector<128x384xbf16> to vector<128x32xbf16>
    %99 = vector.extract_strided_slice %54 {offsets = [0, 320], sizes = [128, 32], strides = [1, 1]} : vector<128x384xbf16> to vector<128x32xbf16>
    %cst_34 = arith.constant dense<0.000000e+00> : vector<128x128xf32>
    %100 = tpu.matmul %97, %98, %cst_34 {dimension_numbers = #tpu.dot_dimension_numbers<[1], [1], [0], [0], [0, 0, 1, 0], [], []>} : vector<128x32xbf16>, vector<128x32xbf16>, vector<128x128xf32> -> vector<128x128xf32>
    %cst_35 = arith.constant 0.0883883461 : f32
    %101 = vector.broadcast %cst_35 : f32 to vector<128x128xf32>
    %102 = arith.mulf %100, %101 : vector<128x128xf32>
    %cst_36 = arith.constant -1.000000e+30 : f32
    %103 = vector.broadcast %cst_36 : f32 to vector<128x128xf32>
    %104 = arith.select %23, %102, %103 : vector<128x128xi1>, vector<128x128xf32>
    %cst_37 = arith.constant dense<0xFF800000> : vector<128xf32>
    %105 = vector.multi_reduction <maximumf>, %104, %cst_37 [1] : vector<128x128xf32> to vector<128xf32>
    %106 = vector.shape_cast %105 : vector<128xf32> to vector<128x1xf32>
    %107 = vector.broadcast %106 : vector<128x1xf32> to vector<128x128xf32>
    %108 = arith.subf %104, %107 : vector<128x128xf32>
    %109 = math.exp %108 : vector<128x128xf32>
    %cst_38 = arith.constant dense<0.000000e+00> : vector<128xf32>
    %110 = vector.multi_reduction <add>, %109, %cst_38 [1] : vector<128x128xf32> to vector<128xf32>
    %111 = vector.shape_cast %110 : vector<128xf32> to vector<128x1xf32>
    %112 = tpu.reciprocal %111 {approx = true} : vector<128x1xf32> -> vector<128x1xf32>
    %113 = vector.broadcast %112 : vector<128x1xf32> to vector<128x128xf32>
    %114 = arith.mulf %109, %113 : vector<128x128xf32>
    %115 = arith.truncf %114 : vector<128x128xf32> to vector<128x128xbf16>
    %cst_39 = arith.constant dense<0.000000e+00> : vector<128x32xf32>
    %116 = tpu.matmul %115, %99, %cst_39 {dimension_numbers = #tpu.dot_dimension_numbers<[1], [0], [0], [1], [0, 0, 1, 1], [], []>} : vector<128x128xbf16>, vector<128x32xbf16>, vector<128x32xf32> -> vector<128x32xf32>
    %117 = arith.truncf %116 : vector<128x32xf32> to vector<128x32xbf16>
    %118 = vector.extract_strided_slice %54 {offsets = [0, 96], sizes = [128, 32], strides = [1, 1]} : vector<128x384xbf16> to vector<128x32xbf16>
    %119 = vector.extract_strided_slice %54 {offsets = [0, 224], sizes = [128, 32], strides = [1, 1]} : vector<128x384xbf16> to vector<128x32xbf16>
    %120 = vector.extract_strided_slice %54 {offsets = [0, 352], sizes = [128, 32], strides = [1, 1]} : vector<128x384xbf16> to vector<128x32xbf16>
    %cst_40 = arith.constant dense<0.000000e+00> : vector<128x128xf32>
    %121 = tpu.matmul %118, %119, %cst_40 {dimension_numbers = #tpu.dot_dimension_numbers<[1], [1], [0], [0], [0, 0, 1, 0], [], []>} : vector<128x32xbf16>, vector<128x32xbf16>, vector<128x128xf32> -> vector<128x128xf32>
    %cst_41 = arith.constant 0.0883883461 : f32
    %122 = vector.broadcast %cst_41 : f32 to vector<128x128xf32>
    %123 = arith.mulf %121, %122 : vector<128x128xf32>
    %cst_42 = arith.constant -1.000000e+30 : f32
    %124 = vector.broadcast %cst_42 : f32 to vector<128x128xf32>
    %125 = arith.select %23, %123, %124 : vector<128x128xi1>, vector<128x128xf32>
    %cst_43 = arith.constant dense<0xFF800000> : vector<128xf32>
    %126 = vector.multi_reduction <maximumf>, %125, %cst_43 [1] : vector<128x128xf32> to vector<128xf32>
    %127 = vector.shape_cast %126 : vector<128xf32> to vector<128x1xf32>
    %128 = vector.broadcast %127 : vector<128x1xf32> to vector<128x128xf32>
    %129 = arith.subf %125, %128 : vector<128x128xf32>
    %130 = math.exp %129 : vector<128x128xf32>
    %cst_44 = arith.constant dense<0.000000e+00> : vector<128xf32>
    %131 = vector.multi_reduction <add>, %130, %cst_44 [1] : vector<128x128xf32> to vector<128xf32>
    %132 = vector.shape_cast %131 : vector<128xf32> to vector<128x1xf32>
    %133 = tpu.reciprocal %132 {approx = true} : vector<128x1xf32> -> vector<128x1xf32>
    %134 = vector.broadcast %133 : vector<128x1xf32> to vector<128x128xf32>
    %135 = arith.mulf %130, %134 : vector<128x128xf32>
    %136 = arith.truncf %135 : vector<128x128xf32> to vector<128x128xbf16>
    %cst_45 = arith.constant dense<0.000000e+00> : vector<128x32xf32>
    %137 = tpu.matmul %136, %120, %cst_45 {dimension_numbers = #tpu.dot_dimension_numbers<[1], [0], [0], [1], [0, 0, 1, 1], [], []>} : vector<128x128xbf16>, vector<128x32xbf16>, vector<128x32xf32> -> vector<128x32xf32>
    %138 = arith.truncf %137 : vector<128x32xf32> to vector<128x32xbf16>
    %139 = tpu.concatenate %75, %96, %117, %138 in 1 : vector<128x32xbf16>, vector<128x32xbf16>, vector<128x32xbf16>, vector<128x32xbf16> -> vector<128x128xbf16>
    %c0_46 = arith.constant 0 : index
    %c0_47 = arith.constant 0 : index
    %c0_48 = arith.constant 0 : index
    %140 = vector.load %arg7[%c0_46, %c0_47, %c0_48] : memref<2x128x128xbf16, #tpu.memory_space<vmem>>, vector<1x128x128xbf16>
    %141 = vector.shape_cast %140 : vector<1x128x128xbf16> to vector<128x128xbf16>
    %cst_49 = arith.constant dense<0.000000e+00> : vector<128x128xf32>
    %142 = tpu.matmul %139, %141, %cst_49 {dimension_numbers = #tpu.dot_dimension_numbers<[1], [0], [0], [1], [0, 0, 1, 1], [], []>} : vector<128x128xbf16>, vector<128x128xbf16>, vector<128x128xf32> -> vector<128x128xf32>
    %143 = arith.addf %10, %142 : vector<128x128xf32>
    %c0_50 = arith.constant 0 : index
    %c0_51 = arith.constant 0 : index
    %c0_52 = arith.constant 0 : index
    %144 = vector.load %arg8[%c0_50, %c0_51, %c0_52] : memref<2x1x128xf32, #tpu.memory_space<vmem>>, vector<1x1x128xf32>
    %145 = vector.shape_cast %144 : vector<1x1x128xf32> to vector<1x128xf32>
    %146 = vector.broadcast %145 : vector<1x128xf32> to vector<128x128xf32>
    %147 = arith.addf %143, %146 : vector<128x128xf32>
    %c0_53 = arith.constant 0 : index
    %c0_54 = arith.constant 0 : index
    %c0_55 = arith.constant 0 : index
    %148 = vector.load %arg9[%c0_53, %c0_54, %c0_55] : memref<2x1x128xf32, #tpu.memory_space<vmem>>, vector<1x1x128xf32>
    %149 = vector.shape_cast %148 : vector<1x1x128xf32> to vector<1x128xf32>
    %c0_56 = arith.constant 0 : index
    %c0_57 = arith.constant 0 : index
    %c0_58 = arith.constant 0 : index
    %150 = vector.load %arg10[%c0_56, %c0_57, %c0_58] : memref<2x1x128xf32, #tpu.memory_space<vmem>>, vector<1x1x128xf32>
    %151 = vector.shape_cast %150 : vector<1x1x128xf32> to vector<1x128xf32>
    %cst_59 = arith.constant dense<0.000000e+00> : vector<128xf32>
    %152 = vector.multi_reduction <add>, %147, %cst_59 [1] : vector<128x128xf32> to vector<128xf32>
    %153 = vector.shape_cast %152 : vector<128xf32> to vector<128x1xf32>
    %cst_60 = arith.constant 1.280000e+02 : f32
    %154 = vector.broadcast %cst_60 : f32 to vector<128x1xf32>
    %155 = arith.divf %153, %154 : vector<128x1xf32>
    %156 = arith.mulf %147, %147 : vector<128x128xf32>
    %cst_61 = arith.constant dense<0.000000e+00> : vector<128xf32>
    %157 = vector.multi_reduction <add>, %156, %cst_61 [1] : vector<128x128xf32> to vector<128xf32>
    %158 = vector.shape_cast %157 : vector<128xf32> to vector<128x1xf32>
    %cst_62 = arith.constant 1.280000e+02 : f32
    %159 = vector.broadcast %cst_62 : f32 to vector<128x1xf32>
    %160 = arith.divf %158, %159 : vector<128x1xf32>
    %161 = arith.mulf %155, %155 : vector<128x1xf32>
    %162 = arith.subf %160, %161 : vector<128x1xf32>
    %163 = vector.broadcast %155 : vector<128x1xf32> to vector<128x128xf32>
    %164 = arith.subf %147, %163 : vector<128x128xf32>
    %cst_63 = arith.constant 9.99999974E-6 : f32
    %165 = vector.broadcast %cst_63 : f32 to vector<128x1xf32>
    %166 = arith.addf %162, %165 : vector<128x1xf32>
    %167 = math.rsqrt %166 : vector<128x1xf32>
    %168 = vector.broadcast %167 : vector<128x1xf32> to vector<128x128xf32>
    %169 = arith.mulf %164, %168 : vector<128x128xf32>
    %170 = vector.broadcast %149 : vector<1x128xf32> to vector<128x128xf32>
    %171 = arith.mulf %169, %170 : vector<128x128xf32>
    %172 = vector.broadcast %151 : vector<1x128xf32> to vector<128x128xf32>
    %173 = arith.addf %171, %172 : vector<128x128xf32>
    %c0_64 = arith.constant 0 : index
    %c0_65 = arith.constant 0 : index
    %c0_66 = arith.constant 0 : index
    %174 = vector.load %arg11[%c0_64, %c0_65, %c0_66] : memref<2x128x512xbf16, #tpu.memory_space<vmem>>, vector<1x128x512xbf16>
    %175 = vector.shape_cast %174 : vector<1x128x512xbf16> to vector<128x512xbf16>
    %176 = arith.truncf %173 : vector<128x128xf32> to vector<128x128xbf16>
    %cst_67 = arith.constant dense<0.000000e+00> : vector<128x512xf32>
    %177 = tpu.matmul %176, %175, %cst_67 {dimension_numbers = #tpu.dot_dimension_numbers<[1], [0], [0], [1], [0, 0, 1, 1], [], []>} : vector<128x128xbf16>, vector<128x512xbf16>, vector<128x512xf32> -> vector<128x512xf32>
    %c0_68 = arith.constant 0 : index
    %c0_69 = arith.constant 0 : index
    %c0_70 = arith.constant 0 : index
    %178 = vector.load %arg12[%c0_68, %c0_69, %c0_70] : memref<2x1x512xf32, #tpu.memory_space<vmem>>, vector<1x1x512xf32>
    %179 = vector.shape_cast %178 : vector<1x1x512xf32> to vector<1x512xf32>
    %180 = vector.broadcast %179 : vector<1x512xf32> to vector<128x512xf32>
    %181 = arith.addf %177, %180 : vector<128x512xf32>
    %cst_71 = arith.constant 0.000000e+00 : f32
    %182 = vector.broadcast %cst_71 : f32 to vector<128x512xf32>
    %183 = arith.maximumf %181, %182 : vector<128x512xf32>
    %c0_72 = arith.constant 0 : index
    %c0_73 = arith.constant 0 : index
    %c0_74 = arith.constant 0 : index
    %184 = vector.load %arg13[%c0_72, %c0_73, %c0_74] : memref<2x512x128xbf16, #tpu.memory_space<vmem>>, vector<1x512x128xbf16>
    %185 = vector.shape_cast %184 : vector<1x512x128xbf16> to vector<512x128xbf16>
    %186 = arith.truncf %183 : vector<128x512xf32> to vector<128x512xbf16>
    %cst_75 = arith.constant dense<0.000000e+00> : vector<128x128xf32>
    %187 = tpu.matmul %186, %185, %cst_75 {dimension_numbers = #tpu.dot_dimension_numbers<[1], [0], [0], [1], [0, 0, 1, 1], [], []>} : vector<128x512xbf16>, vector<512x128xbf16>, vector<128x128xf32> -> vector<128x128xf32>
    %188 = arith.addf %147, %187 : vector<128x128xf32>
    %c0_76 = arith.constant 0 : index
    %c0_77 = arith.constant 0 : index
    %c0_78 = arith.constant 0 : index
    %189 = vector.load %arg14[%c0_76, %c0_77, %c0_78] : memref<2x1x128xf32, #tpu.memory_space<vmem>>, vector<1x1x128xf32>
    %190 = vector.shape_cast %189 : vector<1x1x128xf32> to vector<1x128xf32>
    %191 = vector.broadcast %190 : vector<1x128xf32> to vector<128x128xf32>
    %192 = arith.addf %188, %191 : vector<128x128xf32>
    %c1 = arith.constant 1 : index
    %c0_79 = arith.constant 0 : index
    %c0_80 = arith.constant 0 : index
    %193 = vector.load %arg4[%c1, %c0_79, %c0_80] : memref<2x1x128xf32, #tpu.memory_space<vmem>>, vector<1x1x128xf32>
    %194 = vector.shape_cast %193 : vector<1x1x128xf32> to vector<1x128xf32>
    %c1_81 = arith.constant 1 : index
    %c0_82 = arith.constant 0 : index
    %c0_83 = arith.constant 0 : index
    %195 = vector.load %arg5[%c1_81, %c0_82, %c0_83] : memref<2x1x128xf32, #tpu.memory_space<vmem>>, vector<1x1x128xf32>
    %196 = vector.shape_cast %195 : vector<1x1x128xf32> to vector<1x128xf32>
    %cst_84 = arith.constant dense<0.000000e+00> : vector<128xf32>
    %197 = vector.multi_reduction <add>, %192, %cst_84 [1] : vector<128x128xf32> to vector<128xf32>
    %198 = vector.shape_cast %197 : vector<128xf32> to vector<128x1xf32>
    %cst_85 = arith.constant 1.280000e+02 : f32
    %199 = vector.broadcast %cst_85 : f32 to vector<128x1xf32>
    %200 = arith.divf %198, %199 : vector<128x1xf32>
    %201 = arith.mulf %192, %192 : vector<128x128xf32>
    %cst_86 = arith.constant dense<0.000000e+00> : vector<128xf32>
    %202 = vector.multi_reduction <add>, %201, %cst_86 [1] : vector<128x128xf32> to vector<128xf32>
    %203 = vector.shape_cast %202 : vector<128xf32> to vector<128x1xf32>
    %cst_87 = arith.constant 1.280000e+02 : f32
    %204 = vector.broadcast %cst_87 : f32 to vector<128x1xf32>
    %205 = arith.divf %203, %204 : vector<128x1xf32>
    %206 = arith.mulf %200, %200 : vector<128x1xf32>
    %207 = arith.subf %205, %206 : vector<128x1xf32>
    %208 = vector.broadcast %200 : vector<128x1xf32> to vector<128x128xf32>
    %209 = arith.subf %192, %208 : vector<128x128xf32>
    %cst_88 = arith.constant 9.99999974E-6 : f32
    %210 = vector.broadcast %cst_88 : f32 to vector<128x1xf32>
    %211 = arith.addf %207, %210 : vector<128x1xf32>
    %212 = math.rsqrt %211 : vector<128x1xf32>
    %213 = vector.broadcast %212 : vector<128x1xf32> to vector<128x128xf32>
    %214 = arith.mulf %209, %213 : vector<128x128xf32>
    %215 = vector.broadcast %194 : vector<1x128xf32> to vector<128x128xf32>
    %216 = arith.mulf %214, %215 : vector<128x128xf32>
    %217 = vector.broadcast %196 : vector<1x128xf32> to vector<128x128xf32>
    %218 = arith.addf %216, %217 : vector<128x128xf32>
    %c1_89 = arith.constant 1 : index
    %c0_90 = arith.constant 0 : index
    %c0_91 = arith.constant 0 : index
    %219 = vector.load %arg6[%c1_89, %c0_90, %c0_91] : memref<2x128x384xbf16, #tpu.memory_space<vmem>>, vector<1x128x384xbf16>
    %220 = vector.shape_cast %219 : vector<1x128x384xbf16> to vector<128x384xbf16>
    %221 = arith.truncf %218 : vector<128x128xf32> to vector<128x128xbf16>
    %cst_92 = arith.constant dense<0.000000e+00> : vector<128x384xf32>
    %222 = tpu.matmul %221, %220, %cst_92 {dimension_numbers = #tpu.dot_dimension_numbers<[1], [0], [0], [1], [0, 0, 1, 1], [], []>} : vector<128x128xbf16>, vector<128x384xbf16>, vector<128x384xf32> -> vector<128x384xf32>
    %223 = arith.truncf %222 : vector<128x384xf32> to vector<128x384xbf16>
    %224 = vector.extract_strided_slice %223 {offsets = [0, 0], sizes = [128, 32], strides = [1, 1]} : vector<128x384xbf16> to vector<128x32xbf16>
    %225 = vector.extract_strided_slice %223 {offsets = [0, 128], sizes = [128, 32], strides = [1, 1]} : vector<128x384xbf16> to vector<128x32xbf16>
    %226 = vector.extract_strided_slice %223 {offsets = [0, 256], sizes = [128, 32], strides = [1, 1]} : vector<128x384xbf16> to vector<128x32xbf16>
    %cst_93 = arith.constant dense<0.000000e+00> : vector<128x128xf32>
    %227 = tpu.matmul %224, %225, %cst_93 {dimension_numbers = #tpu.dot_dimension_numbers<[1], [1], [0], [0], [0, 0, 1, 0], [], []>} : vector<128x32xbf16>, vector<128x32xbf16>, vector<128x128xf32> -> vector<128x128xf32>
    %cst_94 = arith.constant 0.0883883461 : f32
    %228 = vector.broadcast %cst_94 : f32 to vector<128x128xf32>
    %229 = arith.mulf %227, %228 : vector<128x128xf32>
    %cst_95 = arith.constant -1.000000e+30 : f32
    %230 = vector.broadcast %cst_95 : f32 to vector<128x128xf32>
    %231 = arith.select %23, %229, %230 : vector<128x128xi1>, vector<128x128xf32>
    %cst_96 = arith.constant dense<0xFF800000> : vector<128xf32>
    %232 = vector.multi_reduction <maximumf>, %231, %cst_96 [1] : vector<128x128xf32> to vector<128xf32>
    %233 = vector.shape_cast %232 : vector<128xf32> to vector<128x1xf32>
    %234 = vector.broadcast %233 : vector<128x1xf32> to vector<128x128xf32>
    %235 = arith.subf %231, %234 : vector<128x128xf32>
    %236 = math.exp %235 : vector<128x128xf32>
    %cst_97 = arith.constant dense<0.000000e+00> : vector<128xf32>
    %237 = vector.multi_reduction <add>, %236, %cst_97 [1] : vector<128x128xf32> to vector<128xf32>
    %238 = vector.shape_cast %237 : vector<128xf32> to vector<128x1xf32>
    %239 = tpu.reciprocal %238 {approx = true} : vector<128x1xf32> -> vector<128x1xf32>
    %240 = vector.broadcast %239 : vector<128x1xf32> to vector<128x128xf32>
    %241 = arith.mulf %236, %240 : vector<128x128xf32>
    %242 = arith.truncf %241 : vector<128x128xf32> to vector<128x128xbf16>
    %cst_98 = arith.constant dense<0.000000e+00> : vector<128x32xf32>
    %243 = tpu.matmul %242, %226, %cst_98 {dimension_numbers = #tpu.dot_dimension_numbers<[1], [0], [0], [1], [0, 0, 1, 1], [], []>} : vector<128x128xbf16>, vector<128x32xbf16>, vector<128x32xf32> -> vector<128x32xf32>
    %244 = arith.truncf %243 : vector<128x32xf32> to vector<128x32xbf16>
    %245 = vector.extract_strided_slice %223 {offsets = [0, 32], sizes = [128, 32], strides = [1, 1]} : vector<128x384xbf16> to vector<128x32xbf16>
    %246 = vector.extract_strided_slice %223 {offsets = [0, 160], sizes = [128, 32], strides = [1, 1]} : vector<128x384xbf16> to vector<128x32xbf16>
    %247 = vector.extract_strided_slice %223 {offsets = [0, 288], sizes = [128, 32], strides = [1, 1]} : vector<128x384xbf16> to vector<128x32xbf16>
    %cst_99 = arith.constant dense<0.000000e+00> : vector<128x128xf32>
    %248 = tpu.matmul %245, %246, %cst_99 {dimension_numbers = #tpu.dot_dimension_numbers<[1], [1], [0], [0], [0, 0, 1, 0], [], []>} : vector<128x32xbf16>, vector<128x32xbf16>, vector<128x128xf32> -> vector<128x128xf32>
    %cst_100 = arith.constant 0.0883883461 : f32
    %249 = vector.broadcast %cst_100 : f32 to vector<128x128xf32>
    %250 = arith.mulf %248, %249 : vector<128x128xf32>
    %cst_101 = arith.constant -1.000000e+30 : f32
    %251 = vector.broadcast %cst_101 : f32 to vector<128x128xf32>
    %252 = arith.select %23, %250, %251 : vector<128x128xi1>, vector<128x128xf32>
    %cst_102 = arith.constant dense<0xFF800000> : vector<128xf32>
    %253 = vector.multi_reduction <maximumf>, %252, %cst_102 [1] : vector<128x128xf32> to vector<128xf32>
    %254 = vector.shape_cast %253 : vector<128xf32> to vector<128x1xf32>
    %255 = vector.broadcast %254 : vector<128x1xf32> to vector<128x128xf32>
    %256 = arith.subf %252, %255 : vector<128x128xf32>
    %257 = math.exp %256 : vector<128x128xf32>
    %cst_103 = arith.constant dense<0.000000e+00> : vector<128xf32>
    %258 = vector.multi_reduction <add>, %257, %cst_103 [1] : vector<128x128xf32> to vector<128xf32>
    %259 = vector.shape_cast %258 : vector<128xf32> to vector<128x1xf32>
    %260 = tpu.reciprocal %259 {approx = true} : vector<128x1xf32> -> vector<128x1xf32>
    %261 = vector.broadcast %260 : vector<128x1xf32> to vector<128x128xf32>
    %262 = arith.mulf %257, %261 : vector<128x128xf32>
    %263 = arith.truncf %262 : vector<128x128xf32> to vector<128x128xbf16>
    %cst_104 = arith.constant dense<0.000000e+00> : vector<128x32xf32>
    %264 = tpu.matmul %263, %247, %cst_104 {dimension_numbers = #tpu.dot_dimension_numbers<[1], [0], [0], [1], [0, 0, 1, 1], [], []>} : vector<128x128xbf16>, vector<128x32xbf16>, vector<128x32xf32> -> vector<128x32xf32>
    %265 = arith.truncf %264 : vector<128x32xf32> to vector<128x32xbf16>
    %266 = vector.extract_strided_slice %223 {offsets = [0, 64], sizes = [128, 32], strides = [1, 1]} : vector<128x384xbf16> to vector<128x32xbf16>
    %267 = vector.extract_strided_slice %223 {offsets = [0, 192], sizes = [128, 32], strides = [1, 1]} : vector<128x384xbf16> to vector<128x32xbf16>
    %268 = vector.extract_strided_slice %223 {offsets = [0, 320], sizes = [128, 32], strides = [1, 1]} : vector<128x384xbf16> to vector<128x32xbf16>
    %cst_105 = arith.constant dense<0.000000e+00> : vector<128x128xf32>
    %269 = tpu.matmul %266, %267, %cst_105 {dimension_numbers = #tpu.dot_dimension_numbers<[1], [1], [0], [0], [0, 0, 1, 0], [], []>} : vector<128x32xbf16>, vector<128x32xbf16>, vector<128x128xf32> -> vector<128x128xf32>
    %cst_106 = arith.constant 0.0883883461 : f32
    %270 = vector.broadcast %cst_106 : f32 to vector<128x128xf32>
    %271 = arith.mulf %269, %270 : vector<128x128xf32>
    %cst_107 = arith.constant -1.000000e+30 : f32
    %272 = vector.broadcast %cst_107 : f32 to vector<128x128xf32>
    %273 = arith.select %23, %271, %272 : vector<128x128xi1>, vector<128x128xf32>
    %cst_108 = arith.constant dense<0xFF800000> : vector<128xf32>
    %274 = vector.multi_reduction <maximumf>, %273, %cst_108 [1] : vector<128x128xf32> to vector<128xf32>
    %275 = vector.shape_cast %274 : vector<128xf32> to vector<128x1xf32>
    %276 = vector.broadcast %275 : vector<128x1xf32> to vector<128x128xf32>
    %277 = arith.subf %273, %276 : vector<128x128xf32>
    %278 = math.exp %277 : vector<128x128xf32>
    %cst_109 = arith.constant dense<0.000000e+00> : vector<128xf32>
    %279 = vector.multi_reduction <add>, %278, %cst_109 [1] : vector<128x128xf32> to vector<128xf32>
    %280 = vector.shape_cast %279 : vector<128xf32> to vector<128x1xf32>
    %281 = tpu.reciprocal %280 {approx = true} : vector<128x1xf32> -> vector<128x1xf32>
    %282 = vector.broadcast %281 : vector<128x1xf32> to vector<128x128xf32>
    %283 = arith.mulf %278, %282 : vector<128x128xf32>
    %284 = arith.truncf %283 : vector<128x128xf32> to vector<128x128xbf16>
    %cst_110 = arith.constant dense<0.000000e+00> : vector<128x32xf32>
    %285 = tpu.matmul %284, %268, %cst_110 {dimension_numbers = #tpu.dot_dimension_numbers<[1], [0], [0], [1], [0, 0, 1, 1], [], []>} : vector<128x128xbf16>, vector<128x32xbf16>, vector<128x32xf32> -> vector<128x32xf32>
    %286 = arith.truncf %285 : vector<128x32xf32> to vector<128x32xbf16>
    %287 = vector.extract_strided_slice %223 {offsets = [0, 96], sizes = [128, 32], strides = [1, 1]} : vector<128x384xbf16> to vector<128x32xbf16>
    %288 = vector.extract_strided_slice %223 {offsets = [0, 224], sizes = [128, 32], strides = [1, 1]} : vector<128x384xbf16> to vector<128x32xbf16>
    %289 = vector.extract_strided_slice %223 {offsets = [0, 352], sizes = [128, 32], strides = [1, 1]} : vector<128x384xbf16> to vector<128x32xbf16>
    %cst_111 = arith.constant dense<0.000000e+00> : vector<128x128xf32>
    %290 = tpu.matmul %287, %288, %cst_111 {dimension_numbers = #tpu.dot_dimension_numbers<[1], [1], [0], [0], [0, 0, 1, 0], [], []>} : vector<128x32xbf16>, vector<128x32xbf16>, vector<128x128xf32> -> vector<128x128xf32>
    %cst_112 = arith.constant 0.0883883461 : f32
    %291 = vector.broadcast %cst_112 : f32 to vector<128x128xf32>
    %292 = arith.mulf %290, %291 : vector<128x128xf32>
    %cst_113 = arith.constant -1.000000e+30 : f32
    %293 = vector.broadcast %cst_113 : f32 to vector<128x128xf32>
    %294 = arith.select %23, %292, %293 : vector<128x128xi1>, vector<128x128xf32>
    %cst_114 = arith.constant dense<0xFF800000> : vector<128xf32>
    %295 = vector.multi_reduction <maximumf>, %294, %cst_114 [1] : vector<128x128xf32> to vector<128xf32>
    %296 = vector.shape_cast %295 : vector<128xf32> to vector<128x1xf32>
    %297 = vector.broadcast %296 : vector<128x1xf32> to vector<128x128xf32>
    %298 = arith.subf %294, %297 : vector<128x128xf32>
    %299 = math.exp %298 : vector<128x128xf32>
    %cst_115 = arith.constant dense<0.000000e+00> : vector<128xf32>
    %300 = vector.multi_reduction <add>, %299, %cst_115 [1] : vector<128x128xf32> to vector<128xf32>
    %301 = vector.shape_cast %300 : vector<128xf32> to vector<128x1xf32>
    %302 = tpu.reciprocal %301 {approx = true} : vector<128x1xf32> -> vector<128x1xf32>
    %303 = vector.broadcast %302 : vector<128x1xf32> to vector<128x128xf32>
    %304 = arith.mulf %299, %303 : vector<128x128xf32>
    %305 = arith.truncf %304 : vector<128x128xf32> to vector<128x128xbf16>
    %cst_116 = arith.constant dense<0.000000e+00> : vector<128x32xf32>
    %306 = tpu.matmul %305, %289, %cst_116 {dimension_numbers = #tpu.dot_dimension_numbers<[1], [0], [0], [1], [0, 0, 1, 1], [], []>} : vector<128x128xbf16>, vector<128x32xbf16>, vector<128x32xf32> -> vector<128x32xf32>
    %307 = arith.truncf %306 : vector<128x32xf32> to vector<128x32xbf16>
    %308 = tpu.concatenate %244, %265, %286, %307 in 1 : vector<128x32xbf16>, vector<128x32xbf16>, vector<128x32xbf16>, vector<128x32xbf16> -> vector<128x128xbf16>
    %c1_117 = arith.constant 1 : index
    %c0_118 = arith.constant 0 : index
    %c0_119 = arith.constant 0 : index
    %309 = vector.load %arg7[%c1_117, %c0_118, %c0_119] : memref<2x128x128xbf16, #tpu.memory_space<vmem>>, vector<1x128x128xbf16>
    %310 = vector.shape_cast %309 : vector<1x128x128xbf16> to vector<128x128xbf16>
    %cst_120 = arith.constant dense<0.000000e+00> : vector<128x128xf32>
    %311 = tpu.matmul %308, %310, %cst_120 {dimension_numbers = #tpu.dot_dimension_numbers<[1], [0], [0], [1], [0, 0, 1, 1], [], []>} : vector<128x128xbf16>, vector<128x128xbf16>, vector<128x128xf32> -> vector<128x128xf32>
    %312 = arith.addf %192, %311 : vector<128x128xf32>
    %c1_121 = arith.constant 1 : index
    %c0_122 = arith.constant 0 : index
    %c0_123 = arith.constant 0 : index
    %313 = vector.load %arg8[%c1_121, %c0_122, %c0_123] : memref<2x1x128xf32, #tpu.memory_space<vmem>>, vector<1x1x128xf32>
    %314 = vector.shape_cast %313 : vector<1x1x128xf32> to vector<1x128xf32>
    %315 = vector.broadcast %314 : vector<1x128xf32> to vector<128x128xf32>
    %316 = arith.addf %312, %315 : vector<128x128xf32>
    %c1_124 = arith.constant 1 : index
    %c0_125 = arith.constant 0 : index
    %c0_126 = arith.constant 0 : index
    %317 = vector.load %arg9[%c1_124, %c0_125, %c0_126] : memref<2x1x128xf32, #tpu.memory_space<vmem>>, vector<1x1x128xf32>
    %318 = vector.shape_cast %317 : vector<1x1x128xf32> to vector<1x128xf32>
    %c1_127 = arith.constant 1 : index
    %c0_128 = arith.constant 0 : index
    %c0_129 = arith.constant 0 : index
    %319 = vector.load %arg10[%c1_127, %c0_128, %c0_129] : memref<2x1x128xf32, #tpu.memory_space<vmem>>, vector<1x1x128xf32>
    %320 = vector.shape_cast %319 : vector<1x1x128xf32> to vector<1x128xf32>
    %cst_130 = arith.constant dense<0.000000e+00> : vector<128xf32>
    %321 = vector.multi_reduction <add>, %316, %cst_130 [1] : vector<128x128xf32> to vector<128xf32>
    %322 = vector.shape_cast %321 : vector<128xf32> to vector<128x1xf32>
    %cst_131 = arith.constant 1.280000e+02 : f32
    %323 = vector.broadcast %cst_131 : f32 to vector<128x1xf32>
    %324 = arith.divf %322, %323 : vector<128x1xf32>
    %325 = arith.mulf %316, %316 : vector<128x128xf32>
    %cst_132 = arith.constant dense<0.000000e+00> : vector<128xf32>
    %326 = vector.multi_reduction <add>, %325, %cst_132 [1] : vector<128x128xf32> to vector<128xf32>
    %327 = vector.shape_cast %326 : vector<128xf32> to vector<128x1xf32>
    %cst_133 = arith.constant 1.280000e+02 : f32
    %328 = vector.broadcast %cst_133 : f32 to vector<128x1xf32>
    %329 = arith.divf %327, %328 : vector<128x1xf32>
    %330 = arith.mulf %324, %324 : vector<128x1xf32>
    %331 = arith.subf %329, %330 : vector<128x1xf32>
    %332 = vector.broadcast %324 : vector<128x1xf32> to vector<128x128xf32>
    %333 = arith.subf %316, %332 : vector<128x128xf32>
    %cst_134 = arith.constant 9.99999974E-6 : f32
    %334 = vector.broadcast %cst_134 : f32 to vector<128x1xf32>
    %335 = arith.addf %331, %334 : vector<128x1xf32>
    %336 = math.rsqrt %335 : vector<128x1xf32>
    %337 = vector.broadcast %336 : vector<128x1xf32> to vector<128x128xf32>
    %338 = arith.mulf %333, %337 : vector<128x128xf32>
    %339 = vector.broadcast %318 : vector<1x128xf32> to vector<128x128xf32>
    %340 = arith.mulf %338, %339 : vector<128x128xf32>
    %341 = vector.broadcast %320 : vector<1x128xf32> to vector<128x128xf32>
    %342 = arith.addf %340, %341 : vector<128x128xf32>
    %c1_135 = arith.constant 1 : index
    %c0_136 = arith.constant 0 : index
    %c0_137 = arith.constant 0 : index
    %343 = vector.load %arg11[%c1_135, %c0_136, %c0_137] : memref<2x128x512xbf16, #tpu.memory_space<vmem>>, vector<1x128x512xbf16>
    %344 = vector.shape_cast %343 : vector<1x128x512xbf16> to vector<128x512xbf16>
    %345 = arith.truncf %342 : vector<128x128xf32> to vector<128x128xbf16>
    %cst_138 = arith.constant dense<0.000000e+00> : vector<128x512xf32>
    %346 = tpu.matmul %345, %344, %cst_138 {dimension_numbers = #tpu.dot_dimension_numbers<[1], [0], [0], [1], [0, 0, 1, 1], [], []>} : vector<128x128xbf16>, vector<128x512xbf16>, vector<128x512xf32> -> vector<128x512xf32>
    %c1_139 = arith.constant 1 : index
    %c0_140 = arith.constant 0 : index
    %c0_141 = arith.constant 0 : index
    %347 = vector.load %arg12[%c1_139, %c0_140, %c0_141] : memref<2x1x512xf32, #tpu.memory_space<vmem>>, vector<1x1x512xf32>
    %348 = vector.shape_cast %347 : vector<1x1x512xf32> to vector<1x512xf32>
    %349 = vector.broadcast %348 : vector<1x512xf32> to vector<128x512xf32>
    %350 = arith.addf %346, %349 : vector<128x512xf32>
    %cst_142 = arith.constant 0.000000e+00 : f32
    %351 = vector.broadcast %cst_142 : f32 to vector<128x512xf32>
    %352 = arith.maximumf %350, %351 : vector<128x512xf32>
    %c1_143 = arith.constant 1 : index
    %c0_144 = arith.constant 0 : index
    %c0_145 = arith.constant 0 : index
    %353 = vector.load %arg13[%c1_143, %c0_144, %c0_145] : memref<2x512x128xbf16, #tpu.memory_space<vmem>>, vector<1x512x128xbf16>
    %354 = vector.shape_cast %353 : vector<1x512x128xbf16> to vector<512x128xbf16>
    %355 = arith.truncf %352 : vector<128x512xf32> to vector<128x512xbf16>
    %cst_146 = arith.constant dense<0.000000e+00> : vector<128x128xf32>
    %356 = tpu.matmul %355, %354, %cst_146 {dimension_numbers = #tpu.dot_dimension_numbers<[1], [0], [0], [1], [0, 0, 1, 1], [], []>} : vector<128x512xbf16>, vector<512x128xbf16>, vector<128x128xf32> -> vector<128x128xf32>
    %357 = arith.addf %316, %356 : vector<128x128xf32>
    %c1_147 = arith.constant 1 : index
    %c0_148 = arith.constant 0 : index
    %c0_149 = arith.constant 0 : index
    %358 = vector.load %arg14[%c1_147, %c0_148, %c0_149] : memref<2x1x128xf32, #tpu.memory_space<vmem>>, vector<1x1x128xf32>
    %359 = vector.shape_cast %358 : vector<1x1x128xf32> to vector<1x128xf32>
    %360 = vector.broadcast %359 : vector<1x128xf32> to vector<128x128xf32>
    %361 = arith.addf %357, %360 : vector<128x128xf32>
    %c0_150 = arith.constant 0 : index
    %c0_151 = arith.constant 0 : index
    %362 = vector.load %arg15[%c0_150, %c0_151] : memref<1x128xf32, #tpu.memory_space<vmem>>, vector<1x128xf32>
    %c0_152 = arith.constant 0 : index
    %c0_153 = arith.constant 0 : index
    %363 = vector.load %arg16[%c0_152, %c0_153] : memref<1x128xf32, #tpu.memory_space<vmem>>, vector<1x128xf32>
    %cst_154 = arith.constant dense<0.000000e+00> : vector<128xf32>
    %364 = vector.multi_reduction <add>, %361, %cst_154 [1] : vector<128x128xf32> to vector<128xf32>
    %365 = vector.shape_cast %364 : vector<128xf32> to vector<128x1xf32>
    %cst_155 = arith.constant 1.280000e+02 : f32
    %366 = vector.broadcast %cst_155 : f32 to vector<128x1xf32>
    %367 = arith.divf %365, %366 : vector<128x1xf32>
    %368 = arith.mulf %361, %361 : vector<128x128xf32>
    %cst_156 = arith.constant dense<0.000000e+00> : vector<128xf32>
    %369 = vector.multi_reduction <add>, %368, %cst_156 [1] : vector<128x128xf32> to vector<128xf32>
    %370 = vector.shape_cast %369 : vector<128xf32> to vector<128x1xf32>
    %cst_157 = arith.constant 1.280000e+02 : f32
    %371 = vector.broadcast %cst_157 : f32 to vector<128x1xf32>
    %372 = arith.divf %370, %371 : vector<128x1xf32>
    %373 = arith.mulf %367, %367 : vector<128x1xf32>
    %374 = arith.subf %372, %373 : vector<128x1xf32>
    %375 = vector.broadcast %367 : vector<128x1xf32> to vector<128x128xf32>
    %376 = arith.subf %361, %375 : vector<128x128xf32>
    %cst_158 = arith.constant 9.99999974E-6 : f32
    %377 = vector.broadcast %cst_158 : f32 to vector<128x1xf32>
    %378 = arith.addf %374, %377 : vector<128x1xf32>
    %379 = math.rsqrt %378 : vector<128x1xf32>
    %380 = vector.broadcast %379 : vector<128x1xf32> to vector<128x128xf32>
    %381 = arith.mulf %376, %380 : vector<128x128xf32>
    %382 = vector.broadcast %362 : vector<1x128xf32> to vector<128x128xf32>
    %383 = arith.mulf %381, %382 : vector<128x128xf32>
    %384 = vector.broadcast %363 : vector<1x128xf32> to vector<128x128xf32>
    %385 = arith.addf %383, %384 : vector<128x128xf32>
    %c0_159 = arith.constant 0 : index
    %c0_160 = arith.constant 0 : index
    %386 = vector.load %arg17[%c0_159, %c0_160] : memref<128x512xbf16, #tpu.memory_space<vmem>>, vector<128x512xbf16>
    %387 = arith.truncf %385 : vector<128x128xf32> to vector<128x128xbf16>
    %cst_161 = arith.constant dense<0.000000e+00> : vector<128x512xf32>
    %388 = tpu.matmul %387, %386, %cst_161 {dimension_numbers = #tpu.dot_dimension_numbers<[1], [0], [0], [1], [0, 0, 1, 1], [], []>} : vector<128x128xbf16>, vector<128x512xbf16>, vector<128x512xf32> -> vector<128x512xf32>
    %c0_162 = arith.constant 0 : index
    %c0_163 = arith.constant 0 : index
    %389 = vector.load %arg18[%c0_162, %c0_163] : memref<1x512xf32, #tpu.memory_space<vmem>>, vector<1x512xf32>
    %390 = vector.broadcast %389 : vector<1x512xf32> to vector<128x512xf32>
    %391 = arith.addf %388, %390 : vector<128x512xf32>
    %c0_164 = arith.constant 0 : index
    %c0_165 = arith.constant 0 : index
    %392 = vector.load %arg19[%c0_164, %c0_165] : memref<128x512xf32, #tpu.memory_space<vmem>>, vector<128x512xf32>
    tpu.vector_store %arg19[%c0_164, %c0_165], %391 {strides = array<i32>} : memref<128x512xf32, #tpu.memory_space<vmem>>, vector<128x512xf32>,
    return
  }
  func.func @transform_0(%arg0: i32) -> (i32, i32) {
    %c0_i32 = arith.constant 0 : i32
    %c0_i32_0 = arith.constant 0 : i32
    return %arg0, %c0_i32 : i32, i32
  }
  func.func @transform_1(%arg0: i32) -> (i32, i32) {
    %c0_i32 = arith.constant 0 : i32
    %c0_i32_0 = arith.constant 0 : i32
    %c0_i32_1 = arith.constant 0 : i32
    return %c0_i32, %c0_i32_0 : i32, i32
  }
  func.func @transform_2(%arg0: i32) -> (i32, i32) {
    %c0_i32 = arith.constant 0 : i32
    %c0_i32_0 = arith.constant 0 : i32
    %c0_i32_1 = arith.constant 0 : i32
    return %c0_i32, %c0_i32_0 : i32, i32
  }
  func.func @transform_3(%arg0: i32) -> (i32, i32, i32) {
    %c0_i32 = arith.constant 0 : i32
    %c0_i32_0 = arith.constant 0 : i32
    %c0_i32_1 = arith.constant 0 : i32
    %c0_i32_2 = arith.constant 0 : i32
    return %c0_i32, %c0_i32_0, %c0_i32_1 : i32, i32, i32
  }
  func.func @transform_4(%arg0: i32) -> (i32, i32, i32) {
    %c0_i32 = arith.constant 0 : i32
    %c0_i32_0 = arith.constant 0 : i32
    %c0_i32_1 = arith.constant 0 : i32
    %c0_i32_2 = arith.constant 0 : i32
    return %c0_i32, %c0_i32_0, %c0_i32_1 : i32, i32, i32
  }
  func.func @transform_5(%arg0: i32) -> (i32, i32, i32) {
    %c0_i32 = arith.constant 0 : i32
    %c0_i32_0 = arith.constant 0 : i32
    %c0_i32_1 = arith.constant 0 : i32
    %c0_i32_2 = arith.constant 0 : i32
    return %c0_i32, %c0_i32_0, %c0_i32_1 : i32, i32, i32
  }
  func.func @transform_6(%arg0: i32) -> (i32, i32, i32) {
    %c0_i32 = arith.constant 0 : i32
    %c0_i32_0 = arith.constant 0 : i32
    %c0_i32_1 = arith.constant 0 : i32
    %c0_i32_2 = arith.constant 0 : i32
    return %c0_i32, %c0_i32_0, %c0_i32_1 : i32, i32, i32
  }
  func.func @transform_7(%arg0: i32) -> (i32, i32, i32) {
    %c0_i32 = arith.constant 0 : i32
    %c0_i32_0 = arith.constant 0 : i32
    %c0_i32_1 = arith.constant 0 : i32
    %c0_i32_2 = arith.constant 0 : i32
    return %c0_i32, %c0_i32_0, %c0_i32_1 : i32, i32, i32
  }
  func.func @transform_8(%arg0: i32) -> (i32, i32, i32) {
    %c0_i32 = arith.constant 0 : i32
    %c0_i32_0 = arith.constant 0 : i32
    %c0_i32_1 = arith.constant 0 : i32
    %c0_i32_2 = arith.constant 0 : i32
    return %c0_i32, %c0_i32_0, %c0_i32_1 : i32, i32, i32
  }
  func.func @transform_9(%arg0: i32) -> (i32, i32, i32) {
    %c0_i32 = arith.constant 0 : i32
    %c0_i32_0 = arith.constant 0 : i32
    %c0_i32_1 = arith.constant 0 : i32
    %c0_i32_2 = arith.constant 0 : i32
    return %c0_i32, %c0_i32_0, %c0_i32_1 : i32, i32, i32
  }
  func.func @transform_10(%arg0: i32) -> (i32, i32, i32) {
    %c0_i32 = arith.constant 0 : i32
    %c0_i32_0 = arith.constant 0 : i32
    %c0_i32_1 = arith.constant 0 : i32
    %c0_i32_2 = arith.constant 0 : i32
    return %c0_i32, %c0_i32_0, %c0_i32_1 : i32, i32, i32
  }
  func.func @transform_11(%arg0: i32) -> (i32, i32, i32) {
    %c0_i32 = arith.constant 0 : i32
    %c0_i32_0 = arith.constant 0 : i32
    %c0_i32_1 = arith.constant 0 : i32
    %c0_i32_2 = arith.constant 0 : i32
    return %c0_i32, %c0_i32_0, %c0_i32_1 : i32, i32, i32
  }
  func.func @transform_12(%arg0: i32) -> (i32, i32, i32) {
    %c0_i32 = arith.constant 0 : i32
    %c0_i32_0 = arith.constant 0 : i32
    %c0_i32_1 = arith.constant 0 : i32
    %c0_i32_2 = arith.constant 0 : i32
    return %c0_i32, %c0_i32_0, %c0_i32_1 : i32, i32, i32
  }
  func.func @transform_13(%arg0: i32) -> (i32, i32, i32) {
    %c0_i32 = arith.constant 0 : i32
    %c0_i32_0 = arith.constant 0 : i32
    %c0_i32_1 = arith.constant 0 : i32
    %c0_i32_2 = arith.constant 0 : i32
    return %c0_i32, %c0_i32_0, %c0_i32_1 : i32, i32, i32
  }
  func.func @transform_14(%arg0: i32) -> (i32, i32) {
    %c0_i32 = arith.constant 0 : i32
    %c0_i32_0 = arith.constant 0 : i32
    %c0_i32_1 = arith.constant 0 : i32
    return %c0_i32, %c0_i32_0 : i32, i32
  }
  func.func @transform_15(%arg0: i32) -> (i32, i32) {
    %c0_i32 = arith.constant 0 : i32
    %c0_i32_0 = arith.constant 0 : i32
    %c0_i32_1 = arith.constant 0 : i32
    return %c0_i32, %c0_i32_0 : i32, i32
  }
  func.func @transform_16(%arg0: i32) -> (i32, i32) {
    %c0_i32 = arith.constant 0 : i32
    %c0_i32_0 = arith.constant 0 : i32
    %c0_i32_1 = arith.constant 0 : i32
    return %c0_i32, %c0_i32_0 : i32, i32
  }
  func.func @transform_17(%arg0: i32) -> (i32, i32) {
    %c0_i32 = arith.constant 0 : i32
    %c0_i32_0 = arith.constant 0 : i32
    %c0_i32_1 = arith.constant 0 : i32
    return %c0_i32, %c0_i32_0 : i32, i32
  }
  func.func @transform_18(%arg0: i32) -> (i32, i32) {
    %c0_i32 = arith.constant 0 : i32
    %c0_i32_0 = arith.constant 0 : i32
    return %arg0, %c0_i32 : i32, i32
  }
}

</mosaic_0001>

<llo_original>
// kernel: tpu_custom_call.1
$region0: #{tpu_custom_call.1}
  #allocation0 [shape = 'u32[]', space=smem, size = 0x4, offset = 0x4, fixed_abs, tag = 'smem constant byte address 0x4 - core index']
  #allocation1 [shape = 'u32[72,128]{1,0:T(1,128)}', space=vmem, size = 0x9000, scoped, tag = 'internal scratch']
  %s0 = inlined_call_operand.vmem [shape: s32[128,1], index: 0, kind: input, shape index: {}]
  %s1 = inlined_call_operand.hbm [shape: f32[512,128], index: 1, kind: input, shape index: {}]
  %s2 = inlined_call_operand.hbm [shape: f32[16,128], index: 2, kind: input, shape index: {}]
  %s3 = inlined_call_operand.hbm [shape: f32[2,1,128], index: 3, kind: input, shape index: {}]
  %s4 = inlined_call_operand.hbm [shape: f32[2,1,128], index: 4, kind: input, shape index: {}]
  %s5 = inlined_call_operand.hbm [shape: bf16[2,128,384], index: 5, kind: input, shape index: {}]
  %s6 = inlined_call_operand.vmem [shape: bf16[2,128,128], index: 6, kind: input, shape index: {}]
  %s7 = inlined_call_operand.hbm [shape: f32[2,1,128], index: 7, kind: input, shape index: {}]
  %s8 = inlined_call_operand.hbm [shape: f32[2,1,128], index: 8, kind: input, shape index: {}]
  %s9 = inlined_call_operand.hbm [shape: f32[2,1,128], index: 9, kind: input, shape index: {}]
  %s10 = inlined_call_operand.hbm [shape: bf16[2,128,512], index: 10, kind: input, shape index: {}]
  %s11 = inlined_call_operand.vmem [shape: f32[2,1,512], index: 11, kind: input, shape index: {}]
  %s12 = inlined_call_operand.hbm [shape: bf16[2,512,128], index: 12, kind: input, shape index: {}]
  %s13 = inlined_call_operand.hbm [shape: f32[2,1,128], index: 13, kind: input, shape index: {}]
  %s14 = inlined_call_operand.vmem [shape: f32[1,128], index: 14, kind: input, shape index: {}]
  %s15 = inlined_call_operand.vmem [shape: f32[1,128], index: 15, kind: input, shape index: {}]
  %s16 = inlined_call_operand.hbm [shape: bf16[128,512], index: 16, kind: input, shape index: {}]
  %s17 = inlined_call_operand.vmem [shape: f32[1,512], index: 17, kind: input, shape index: {}]
  %s18 = inlined_call_operand.hbm [shape: f32[128,512], index: 18, kind: output, shape index: {}]
  %s19 = sld [smem:[#allocation0]]
  $region130: #{tpu_custom_call.1} parent=0
    _
  %s21 = ssub.s32 1, %s19
  %s22 = scalar_select 0, %s21, %s19
  $region1: #{tpu_custom_call.1} parent=0
    #allocation2 [shape = 'u8[262144]{0}', space=vmem, size = 0x40000, scoped, tag = 'input window, operand 1, single buffered']
    #allocation3 [shape = 's32[1]{0}', space=sflag, size = 0x4, scoped, tag = 'scoped memory for tpu_custom_call.1']
    #allocation4 [shape = 's32[1]{0}', space=sflag, size = 0x4, scoped, tag = 'scoped memory for tpu_custom_call.1']
    #allocation5 [shape = 'u8[8192]{0}', space=vmem, size = 0x2000, scoped, tag = 'input window, operand 2, single buffered']
    #allocation6 [shape = 's32[1]{0}', space=sflag, size = 0x4, scoped, tag = 'scoped memory for tpu_custom_call.1']
    #allocation7 [shape = 'u8[1024]{0}', space=vmem, size = 0x400, scoped, tag = 'input window, operand 3, single buffered']
    #allocation8 [shape = 'u8[1024]{0}', space=vmem, size = 0x400, scoped, tag = 'input window, operand 4, single buffered']
    #allocation9 [shape = 's32[1]{0}', space=sflag, size = 0x4, scoped, tag = 'scoped memory for tpu_custom_call.1']
    #allocation10 [shape = 'u8[196608]{0}', space=vmem, size = 0x30000, scoped, tag = 'input window, operand 5, single buffered']
    #allocation11 [shape = 'u8[1024]{0}', space=vmem, size = 0x400, scoped, tag = 'input window, operand 7, single buffered']
    #allocation12 [shape = 's32[1]{0}', space=sflag, size = 0x4, scoped, tag = 'scoped memory for tpu_custom_call.1']
    #allocation13 [shape = 'u8[1024]{0}', space=vmem, size = 0x400, scoped, tag = 'input window, operand 8, single buffered']
    #allocation14 [shape = 'u8[1024]{0}', space=vmem, size = 0x400, scoped, tag = 'input window, operand 9, single buffered']
    #allocation15 [shape = 's32[1]{0}', space=sflag, size = 0x4, scoped, tag = 'scoped memory for tpu_custom_call.1']
    #allocation16 [shape = 'u8[262144]{0}', space=vmem, size = 0x40000, scoped, tag = 'input window, operand 10, single buffered']
    #allocation17 [shape = 'u8[262144]{0}', space=vmem, size = 0x40000, scoped, tag = 'input window, operand 12, single buffered']
    #allocation18 [shape = 's32[1]{0}', space=sflag, size = 0x4, scoped, tag = 'scoped memory for tpu_custom_call.1']
    #allocation19 [shape = 'u8[1024]{0}', space=vmem, size = 0x400, scoped, tag = 'input window, operand 13, single buffered']
    #allocation20 [shape = 'u8[131072]{0}', space=vmem, size = 0x20000, scoped, tag = 'input window, operand 16, single buffered']
    #allocation21 [shape = 's32[1]{0}', space=sflag, size = 0x4, scoped, tag = 'scoped memory for tpu_custom_call.1']
    #allocation22 [shape = 'u8[262144]{0}', space=vmem, size = 0x40000, scoped, tag = 'output window, operand 0, single buffered']
    %23 = vsyncpa [#allocation3], 0
    %24 = vsyncpa [#allocation6], 0
    %25 = vsyncpa [#allocation9], 0
    %26 = vsyncpa [#allocation12], 0
    %27 = vsyncpa [#allocation15], 0
    %28 = vsyncpa [#allocation18], 0
    %29 = vsyncpa [#allocation21], 0
    %30 = vsyncpa [#allocation4], 0
    // Predicated region
    $region2: #{tpu_custom_call.1} parent=1 // pred_check
      _
    $region3: #{tpu_custom_call.1} parent=1 // pred_check_branch
      %32 = sbr.rel (0) target = $region5
    $region4: #{tpu_custom_call.1} parent=1 // pred_region
      _
    $region5: #{tpu_custom_call.1} parent=1 // pred_fallthru
      _
    // Predicated region
    $region6: #{tpu_custom_call.1} parent=1 // pred_check
      _
    $region7: #{tpu_custom_call.1} parent=1 // pred_check_branch
      %34 = sbr.rel (0) target = $region9
    $region8: #{tpu_custom_call.1} parent=1 // pred_region
      %36 = vsyncadd [#allocation3], 0
      %s37 = sshll.u32 %s1, 4
      %s38 = int_to_ptr.hbm [resolvable:$true] %s37
      %s39 = sshll.u32 [#allocation2], 4
      %s40 = int_to_ptr.vmem [resolvable:$true] %s39
      %45 = dma.hbm_to_vmem [thread:$0]  %s38, 8192, %s40, [#allocation3], 128, 128, 8
    $region9: #{tpu_custom_call.1} parent=1 // pred_fallthru
      _
    // Predicated region
    $region10: #{tpu_custom_call.1} parent=1 // pred_check
      _
    $region11: #{tpu_custom_call.1} parent=1 // pred_check_branch
      %47 = sbr.rel (0) target = $region13
    $region12: #{tpu_custom_call.1} parent=1 // pred_region
      %49 = vsyncadd [#allocation6], 0
      %s50 = sshll.u32 %s2, 4
      %s51 = int_to_ptr.hbm [resolvable:$true] %s50
      %s52 = sshll.u32 [#allocation5], 4
      %s53 = int_to_ptr.vmem [resolvable:$true] %s52
      %58 = dma.hbm_to_vmem [thread:$0]  %s51, 256, %s53, [#allocation6], 128, 128, 8
    $region13: #{tpu_custom_call.1} parent=1 // pred_fallthru
      _
    // Predicated region
    $region14: #{tpu_custom_call.1} parent=1 // pred_check
      _
    $region15: #{tpu_custom_call.1} parent=1 // pred_check_branch
      %60 = sbr.rel (0) target = $region17
    $region16: #{tpu_custom_call.1} parent=1 // pred_region
      %62 = vsyncadd [#allocation6], 0
      %s63 = sshll.u32 %s3, 4
      %s64 = int_to_ptr.hbm [resolvable:$true] %s63
      %s65 = sshll.u32 [#allocation7], 4
      %s66 = int_to_ptr.vmem [resolvable:$true] %s65
      %71 = dma.hbm_to_vmem [thread:$0]  %s64, 32, %s66, [#allocation6], 16, 16, 1
    $region17: #{tpu_custom_call.1} parent=1 // pred_fallthru
      _
    // Predicated region
    $region18: #{tpu_custom_call.1} parent=1 // pred_check
      _
    $region19: #{tpu_custom_call.1} parent=1 // pred_check_branch
      %73 = sbr.rel (0) target = $region21
    $region20: #{tpu_custom_call.1} parent=1 // pred_region
      %75 = vsyncadd [#allocation9], 0
      %s76 = sshll.u32 %s4, 4
      %s77 = int_to_ptr.hbm [resolvable:$true] %s76
      %s78 = sshll.u32 [#allocation8], 4
      %s79 = int_to_ptr.vmem [resolvable:$true] %s78
      %84 = dma.hbm_to_vmem [thread:$0]  %s77, 32, %s79, [#allocation9], 16, 16, 1
    $region21: #{tpu_custom_call.1} parent=1 // pred_fallthru
      _
    // Predicated region
    $region22: #{tpu_custom_call.1} parent=1 // pred_check
      _
    $region23: #{tpu_custom_call.1} parent=1 // pred_check_branch
      %86 = sbr.rel (0) target = $region25
    $region24: #{tpu_custom_call.1} parent=1 // pred_region
      %88 = vsyncadd [#allocation9], 0
      %s89 = sshll.u32 %s5, 4
      %s90 = int_to_ptr.hbm [resolvable:$true] %s89
      %s91 = sshll.u32 [#allocation10], 4
      %s92 = int_to_ptr.vmem [resolvable:$true] %s91
      %97 = dma.hbm_to_vmem [thread:$0]  %s90, 6144, %s92, [#allocation9], 192, 192, 12
    $region25: #{tpu_custom_call.1} parent=1 // pred_fallthru
      _
    // Predicated region
    $region26: #{tpu_custom_call.1} parent=1 // pred_check
      _
    $region27: #{tpu_custom_call.1} parent=1 // pred_check_branch
      %99 = sbr.rel (0) target = $region29
    $region28: #{tpu_custom_call.1} parent=1 // pred_region
      _
    $region29: #{tpu_custom_call.1} parent=1 // pred_fallthru
      _
    // Predicated region
    $region30: #{tpu_custom_call.1} parent=1 // pred_check
      _
    $region31: #{tpu_custom_call.1} parent=1 // pred_check_branch
      %101 = sbr.rel (0) target = $region33
    $region32: #{tpu_custom_call.1} parent=1 // pred_region
      %103 = vsyncadd [#allocation12], 0
      %s104 = sshll.u32 %s7, 4
      %s105 = int_to_ptr.hbm [resolvable:$true] %s104
      %s106 = sshll.u32 [#allocation11], 4
      %s107 = int_to_ptr.vmem [resolvable:$true] %s106
      %112 = dma.hbm_to_vmem [thread:$0]  %s105, 32, %s107, [#allocation12], 16, 16, 1
    $region33: #{tpu_custom_call.1} parent=1 // pred_fallthru
      _
    // Predicated region
    $region34: #{tpu_custom_call.1} parent=1 // pred_check
      _
    $region35: #{tpu_custom_call.1} parent=1 // pred_check_branch
      %114 = sbr.rel (0) target = $region37
    $region36: #{tpu_custom_call.1} parent=1 // pred_region
      %116 = vsyncadd [#allocation12], 0
      %s117 = sshll.u32 %s8, 4
      %s118 = int_to_ptr.hbm [resolvable:$true] %s117
      %s119 = sshll.u32 [#allocation13], 4
      %s120 = int_to_ptr.vmem [resolvable:$true] %s119
      %125 = dma.hbm_to_vmem [thread:$0]  %s118, 32, %s120, [#allocation12], 16, 16, 1
    $region37: #{tpu_custom_call.1} parent=1 // pred_fallthru
      _
    // Predicated region
    $region38: #{tpu_custom_call.1} parent=1 // pred_check
      _
    $region39: #{tpu_custom_call.1} parent=1 // pred_check_branch
      %127 = sbr.rel (0) target = $region41
    $region40: #{tpu_custom_call.1} parent=1 // pred_region
      %129 = vsyncadd [#allocation15], 0
      %s130 = sshll.u32 %s9, 4
      %s131 = int_to_ptr.hbm [resolvable:$true] %s130
      %s132 = sshll.u32 [#allocation14], 4
      %s133 = int_to_ptr.vmem [resolvable:$true] %s132
      %138 = dma.hbm_to_vmem [thread:$0]  %s131, 32, %s133, [#allocation15], 16, 16, 1
    $region41: #{tpu_custom_call.1} parent=1 // pred_fallthru
      _
    // Predicated region
    $region42: #{tpu_custom_call.1} parent=1 // pred_check
      _
    $region43: #{tpu_custom_call.1} parent=1 // pred_check_branch
      %140 = sbr.rel (0) target = $region45
    $region44: #{tpu_custom_call.1} parent=1 // pred_region
      %142 = vsyncadd [#allocation15], 0
      %s143 = sshll.u32 %s10, 4
      %s144 = int_to_ptr.hbm [resolvable:$true] %s143
      %s145 = sshll.u32 [#allocation16], 4
      %s146 = int_to_ptr.vmem [resolvable:$true] %s145
      %151 = dma.hbm_to_vmem [thread:$0]  %s144, 8192, %s146, [#allocation15], 256, 256, 16
    $region45: #{tpu_custom_call.1} parent=1 // pred_fallthru
      _
    // Predicated region
    $region46: #{tpu_custom_call.1} parent=1 // pred_check
      _
    $region47: #{tpu_custom_call.1} parent=1 // pred_check_branch
      %153 = sbr.rel (0) target = $region49
    $region48: #{tpu_custom_call.1} parent=1 // pred_region
      _
    $region49: #{tpu_custom_call.1} parent=1 // pred_fallthru
      _
    // Predicated region
    $region50: #{tpu_custom_call.1} parent=1 // pred_check
      _
    $region51: #{tpu_custom_call.1} parent=1 // pred_check_branch
      %155 = sbr.rel (0) target = $region53
    $region52: #{tpu_custom_call.1} parent=1 // pred_region
      %157 = vsyncadd [#allocation18], 0
      %s158 = sshll.u32 %s12, 4
      %s159 = int_to_ptr.hbm [resolvable:$true] %s158
      %s160 = sshll.u32 [#allocation17], 4
      %s161 = int_to_ptr.vmem [resolvable:$true] %s160
      %166 = dma.hbm_to_vmem [thread:$0]  %s159, 8192, %s161, [#allocation18], 64, 64, 4
    $region53: #{tpu_custom_call.1} parent=1 // pred_fallthru
      _
    // Predicated region
    $region54: #{tpu_custom_call.1} parent=1 // pred_check
      _
    $region55: #{tpu_custom_call.1} parent=1 // pred_check_branch
      %168 = sbr.rel (0) target = $region57
    $region56: #{tpu_custom_call.1} parent=1 // pred_region
      %170 = vsyncadd [#allocation18], 0
      %s171 = sshll.u32 %s13, 4
      %s172 = int_to_ptr.hbm [resolvable:$true] %s171
      %s173 = sshll.u32 [#allocation19], 4
      %s174 = int_to_ptr.vmem [resolvable:$true] %s173
      %179 = dma.hbm_to_vmem [thread:$0]  %s172, 32, %s174, [#allocation18], 16, 16, 1
    $region57: #{tpu_custom_call.1} parent=1 // pred_fallthru
      _
    // Predicated region
    $region58: #{tpu_custom_call.1} parent=1 // pred_check
      _
    $region59: #{tpu_custom_call.1} parent=1 // pred_check_branch
      %181 = sbr.rel (0) target = $region61
    $region60: #{tpu_custom_call.1} parent=1 // pred_region
      _
    $region61: #{tpu_custom_call.1} parent=1 // pred_fallthru
      _
    // Predicated region
    $region62: #{tpu_custom_call.1} parent=1 // pred_check
      _
    $region63: #{tpu_custom_call.1} parent=1 // pred_check_branch
      %183 = sbr.rel (0) target = $region65
    $region64: #{tpu_custom_call.1} parent=1 // pred_region
      _
    $region65: #{tpu_custom_call.1} parent=1 // pred_fallthru
      _
    // Predicated region
    $region66: #{tpu_custom_call.1} parent=1 // pred_check
      _
    $region67: #{tpu_custom_call.1} parent=1 // pred_check_branch
      %185 = sbr.rel (0) target = $region69
    $region68: #{tpu_custom_call.1} parent=1 // pred_region
      %187 = vsyncadd [#allocation21], 0
      %s188 = sshll.u32 %s16, 4
      %s189 = int_to_ptr.hbm [resolvable:$true] %s188
      %s190 = sshll.u32 [#allocation20], 4
      %s191 = int_to_ptr.vmem [resolvable:$true] %s190
      %196 = dma.hbm_to_vmem [thread:$0]  %s189, 4096, %s191, [#allocation21], 256, 256, 16
    $region69: #{tpu_custom_call.1} parent=1 // pred_fallthru
      _
    // Predicated region
    $region70: #{tpu_custom_call.1} parent=1 // pred_check
      _
    $region71: #{tpu_custom_call.1} parent=1 // pred_check_branch
      %198 = sbr.rel (0) target = $region73
    $region72: #{tpu_custom_call.1} parent=1 // pred_region
      _
    $region73: #{tpu_custom_call.1} parent=1 // pred_fallthru
      _
    // Predicated region
    $region74: #{tpu_custom_call.1} parent=1 // pred_check
      _
    $region75: #{tpu_custom_call.1} parent=1 // pred_check_branch
      %200 = sbr.rel (0) target = $region77
    $region76: #{tpu_custom_call.1} parent=1 // pred_region
      %202 = dma.done [#allocation3], 8192
    $region77: #{tpu_custom_call.1} parent=1 // pred_fallthru
      _
    // Predicated region
    $region78: #{tpu_custom_call.1} parent=1 // pred_check
      _
    $region79: #{tpu_custom_call.1} parent=1 // pred_check_branch
      %204 = sbr.rel (0) target = $region81
    $region80: #{tpu_custom_call.1} parent=1 // pred_region
      %206 = dma.done [#allocation6], 256
    $region81: #{tpu_custom_call.1} parent=1 // pred_fallthru
      _
    // Predicated region
    $region82: #{tpu_custom_call.1} parent=1 // pred_check
      _
    $region83: #{tpu_custom_call.1} parent=1 // pred_check_branch
      %208 = sbr.rel (0) target = $region85
    $region84: #{tpu_custom_call.1} parent=1 // pred_region
      %210 = dma.done [#allocation6], 32
    $region85: #{tpu_custom_call.1} parent=1 // pred_fallthru
      _
    // Predicated region
    $region86: #{tpu_custom_call.1} parent=1 // pred_check
      _
    $region87: #{tpu_custom_call.1} parent=1 // pred_check_branch
      %212 = sbr.rel (0) target = $region89
    $region88: #{tpu_custom_call.1} parent=1 // pred_region
      %214 = dma.done [#allocation9], 32
    $region89: #{tpu_custom_call.1} parent=1 // pred_fallthru
      _
    // Predicated region
    $region90: #{tpu_custom_call.1} parent=1 // pred_check
      _
    $region91: #{tpu_custom_call.1} parent=1 // pred_check_branch
      %216 = sbr.rel (0) target = $region93
    $region92: #{tpu_custom_call.1} parent=1 // pred_region
      %218 = dma.done [#allocation9], 6144
    $region93: #{tpu_custom_call.1} parent=1 // pred_fallthru
      _
    // Predicated region
    $region94: #{tpu_custom_call.1} parent=1 // pred_check
      _
    $region95: #{tpu_custom_call.1} parent=1 // pred_check_branch
      %220 = sbr.rel (0) target = $region97
    $region96: #{tpu_custom_call.1} parent=1 // pred_region
      %222 = dma.done [#allocation12], 32
    $region97: #{tpu_custom_call.1} parent=1 // pred_fallthru
      _
    // Predicated region
    $region98: #{tpu_custom_call.1} parent=1 // pred_check
      _
    $region99: #{tpu_custom_call.1} parent=1 // pred_check_branch
      %224 = sbr.rel (0) target = $region101
    $region100: #{tpu_custom_call.1} parent=1 // pred_region
      %226 = dma.done [#allocation12], 32
    $region101: #{tpu_custom_call.1} parent=1 // pred_fallthru
      _
    // Predicated region
    $region102: #{tpu_custom_call.1} parent=1 // pred_check
      _
    $region103: #{tpu_custom_call.1} parent=1 // pred_check_branch
      %228 = sbr.rel (0) target = $region105
    $region104: #{tpu_custom_call.1} parent=1 // pred_region
      %230 = dma.done [#allocation15], 32
    $region105: #{tpu_custom_call.1} parent=1 // pred_fallthru
      _
    // Predicated region
    $region106: #{tpu_custom_call.1} parent=1 // pred_check
      _
    $region107: #{tpu_custom_call.1} parent=1 // pred_check_branch
      %232 = sbr.rel (0) target = $region109
    $region108: #{tpu_custom_call.1} parent=1 // pred_region
      %234 = dma.done [#allocation15], 8192
    $region109: #{tpu_custom_call.1} parent=1 // pred_fallthru
      _
    // Predicated region
    $region110: #{tpu_custom_call.1} parent=1 // pred_check
      _
    $region111: #{tpu_custom_call.1} parent=1 // pred_check_branch
      %236 = sbr.rel (0) target = $region113
    $region112: #{tpu_custom_call.1} parent=1 // pred_region
      %238 = dma.done [#allocation18], 8192
    $region113: #{tpu_custom_call.1} parent=1 // pred_fallthru
      _
    // Predicated region
    $region114: #{tpu_custom_call.1} parent=1 // pred_check
      _
    $region115: #{tpu_custom_call.1} parent=1 // pred_check_branch
      %240 = sbr.rel (0) target = $region117
    $region116: #{tpu_custom_call.1} parent=1 // pred_region
      %242 = dma.done [#allocation18], 32
    $region117: #{tpu_custom_call.1} parent=1 // pred_fallthru
      _
    // Predicated region
    $region118: #{tpu_custom_call.1} parent=1 // pred_check
      _
    $region119: #{tpu_custom_call.1} parent=1 // pred_check_branch
      %244 = sbr.rel (0) target = $region121
    $region120: #{tpu_custom_call.1} parent=1 // pred_region
      %246 = dma.done [#allocation21], 4096
    $region121: #{tpu_custom_call.1} parent=1 // pred_fallthru
      _
    %v247 = vld [vmem:[%s0] sm:$0xff]
    %v248 = vld [vmem:[%s0 + $0x8] sm:$0xff]
    %v249 = vld [vmem:[%s0 + $0x10] sm:$0xff]
    %v250 = vld [vmem:[%s0 + $0x18] sm:$0xff]
    %v251 = vld [vmem:[%s0 + $0x20] sm:$0xff]
    %v252 = vld [vmem:[%s0 + $0x28] sm:$0xff]
    %v253 = vld [vmem:[%s0 + $0x30] sm:$0xff]
    %v254 = vld [vmem:[%s0 + $0x38] sm:$0xff]
    %v255 = vld [vmem:[%s0 + $0x40] sm:$0xff]
    %v256 = vld [vmem:[%s0 + $0x48] sm:$0xff]
    %v257 = vld [vmem:[%s0 + $0x50] sm:$0xff]
    %v258 = vld [vmem:[%s0 + $0x58] sm:$0xff]
    %v259 = vld [vmem:[%s0 + $0x60] sm:$0xff]
    %v260 = vld [vmem:[%s0 + $0x68] sm:$0xff]
    %v261 = vld [vmem:[%s0 + $0x70] sm:$0xff]
    %v262 = vld [vmem:[%s0 + $0x78] sm:$0xff]
    %v263 = vlaneseq
    %v264 = vand.u32 %v263, 127
    %v265 = vadd.s32 %v264, 128
    %v266 = vadd.s32 %v264, 256
    %v267 = vadd.s32 %v264, 384
    %268 = vset.pattern.permute.xlu0 0
    %269 = vperm.xlu0 %268, %v247
    %v270 = vpop.permute.xlu0 %269
    %271 = vset.pattern.permute.xlu0 0
    %272 = vperm.xlu0 %271, %v248
    %v273 = vpop.permute.xlu0 %272
    %274 = vset.pattern.permute.xlu0 0
    %275 = vperm.xlu0 %274, %v249
    %v276 = vpop.permute.xlu0 %275
    %277 = vset.pattern.permute.xlu0 0
    %278 = vperm.xlu0 %277, %v250
    %v279 = vpop.permute.xlu0 %278
    %280 = vset.pattern.permute.xlu0 0
    %281 = vperm.xlu0 %280, %v251
    %v282 = vpop.permute.xlu0 %281
    %283 = vset.pattern.permute.xlu0 0
    %284 = vperm.xlu0 %283, %v252
    %v285 = vpop.permute.xlu0 %284
    %286 = vset.pattern.permute.xlu0 0
    %287 = vperm.xlu0 %286, %v253
    %v288 = vpop.permute.xlu0 %287
    %289 = vset.pattern.permute.xlu0 0
    %290 = vperm.xlu0 %289, %v254
    %v291 = vpop.permute.xlu0 %290
    %292 = vset.pattern.permute.xlu0 0
    %293 = vperm.xlu0 %292, %v255
    %v294 = vpop.permute.xlu0 %293
    %295 = vset.pattern.permute.xlu0 0
    %296 = vperm.xlu0 %295, %v256
    %v297 = vpop.permute.xlu0 %296
    %298 = vset.pattern.permute.xlu0 0
    %299 = vperm.xlu0 %298, %v257
    %v300 = vpop.permute.xlu0 %299
    %301 = vset.pattern.permute.xlu0 0
    %302 = vperm.xlu0 %301, %v258
    %v303 = vpop.permute.xlu0 %302
    %304 = vset.pattern.permute.xlu0 0
    %305 = vperm.xlu0 %304, %v259
    %v306 = vpop.permute.xlu0 %305
    %307 = vset.pattern.permute.xlu0 0
    %308 = vperm.xlu0 %307, %v260
    %v309 = vpop.permute.xlu0 %308
    %310 = vset.pattern.permute.xlu0 0
    %311 = vperm.xlu0 %310, %v261
    %v312 = vpop.permute.xlu0 %311
    %313 = vset.pattern.permute.xlu0 0
    %314 = vperm.xlu0 %313, %v262
    %v315 = vpop.permute.xlu0 %314
    %vm316 = vcmp.eq.s32.totalorder %v264, %v270
    %vm317 = vcmp.eq.s32.totalorder %v265, %v270
    %vm318 = vcmp.eq.s32.totalorder %v266, %v270
    %vm319 = vcmp.eq.s32.totalorder %v267, %v270
    %vm320 = vcmp.eq.s32.totalorder %v264, %v273
    %vm321 = vcmp.eq.s32.totalorder %v265, %v273
    %vm322 = vcmp.eq.s32.totalorder %v266, %v273
    %vm323 = vcmp.eq.s32.totalorder %v267, %v273
    %vm324 = vcmp.eq.s32.totalorder %v264, %v276
    %vm325 = vcmp.eq.s32.totalorder %v265, %v276
    %vm326 = vcmp.eq.s32.totalorder %v266, %v276
    %vm327 = vcmp.eq.s32.totalorder %v267, %v276
    %vm328 = vcmp.eq.s32.totalorder %v264, %v279
    %vm329 = vcmp.eq.s32.totalorder %v265, %v279
    %vm330 = vcmp.eq.s32.totalorder %v266, %v279
    %vm331 = vcmp.eq.s32.totalorder %v267, %v279
    %vm332 = vcmp.eq.s32.totalorder %v264, %v282
    %vm333 = vcmp.eq.s32.totalorder %v265, %v282
    %vm334 = vcmp.eq.s32.totalorder %v266, %v282
    %vm335 = vcmp.eq.s32.totalorder %v267, %v282
    %vm336 = vcmp.eq.s32.totalorder %v264, %v285
    %vm337 = vcmp.eq.s32.totalorder %v265, %v285
    %vm338 = vcmp.eq.s32.totalorder %v266, %v285
    %vm339 = vcmp.eq.s32.totalorder %v267, %v285
    %vm340 = vcmp.eq.s32.totalorder %v264, %v288
    %vm341 = vcmp.eq.s32.totalorder %v265, %v288
    %vm342 = vcmp.eq.s32.totalorder %v266, %v288
    %vm343 = vcmp.eq.s32.totalorder %v267, %v288
    %vm344 = vcmp.eq.s32.totalorder %v264, %v291
    %vm345 = vcmp.eq.s32.totalorder %v265, %v291
    %vm346 = vcmp.eq.s32.totalorder %v266, %v291
    %vm347 = vcmp.eq.s32.totalorder %v267, %v291
    %vm348 = vcmp.eq.s32.totalorder %v264, %v294
    %vm349 = vcmp.eq.s32.totalorder %v265, %v294
    %vm350 = vcmp.eq.s32.totalorder %v266, %v294
    %vm351 = vcmp.eq.s32.totalorder %v267, %v294
    %vm352 = vcmp.eq.s32.totalorder %v264, %v297
    %vm353 = vcmp.eq.s32.totalorder %v265, %v297
    %vm354 = vcmp.eq.s32.totalorder %v266, %v297
    %vm355 = vcmp.eq.s32.totalorder %v267, %v297
    %vm356 = vcmp.eq.s32.totalorder %v264, %v300
    %vm357 = vcmp.eq.s32.totalorder %v265, %v300
    %vm358 = vcmp.eq.s32.totalorder %v266, %v300
    %vm359 = vcmp.eq.s32.totalorder %v267, %v300
    %vm360 = vcmp.eq.s32.totalorder %v264, %v303
    %vm361 = vcmp.eq.s32.totalorder %v265, %v303
    %vm362 = vcmp.eq.s32.totalorder %v266, %v303
    %vm363 = vcmp.eq.s32.totalorder %v267, %v303
    %vm364 = vcmp.eq.s32.totalorder %v264, %v306
    %vm365 = vcmp.eq.s32.totalorder %v265, %v306
    %vm366 = vcmp.eq.s32.totalorder %v266, %v306
    %vm367 = vcmp.eq.s32.totalorder %v267, %v306
    %vm368 = vcmp.eq.s32.totalorder %v264, %v309
    %vm369 = vcmp.eq.s32.totalorder %v265, %v309
    %vm370 = vcmp.eq.s32.totalorder %v266, %v309
    %vm371 = vcmp.eq.s32.totalorder %v267, %v309
    %vm372 = vcmp.eq.s32.totalorder %v264, %v312
    %vm373 = vcmp.eq.s32.totalorder %v265, %v312
    %vm374 = vcmp.eq.s32.totalorder %v266, %v312
    %vm375 = vcmp.eq.s32.totalorder %v267, %v312
    %vm376 = vcmp.eq.s32.totalorder %v264, %v315
    %vm377 = vcmp.eq.s32.totalorder %v265, %v315
    %vm378 = vcmp.eq.s32.totalorder %v266, %v315
    %vm379 = vcmp.eq.s32.totalorder %v267, %v315
    %v380 = vsel %vm316, 1, 0
    %v381 = vsel %vm317, 1, 0
    %v382 = vsel %vm318, 1, 0
    %v383 = vsel %vm319, 1, 0
    %v384 = vsel %vm320, 1, 0
    %v385 = vsel %vm321, 1, 0
    %v386 = vsel %vm322, 1, 0
    %v387 = vsel %vm323, 1, 0
    %v388 = vsel %vm324, 1, 0
    %v389 = vsel %vm325, 1, 0
    %v390 = vsel %vm326, 1, 0
    %v391 = vsel %vm327, 1, 0
    %v392 = vsel %vm328, 1, 0
    %v393 = vsel %vm329, 1, 0
    %v394 = vsel %vm330, 1, 0
    %v395 = vsel %vm331, 1, 0
    %v396 = vsel %vm332, 1, 0
    %v397 = vsel %vm333, 1, 0
    %v398 = vsel %vm334, 1, 0
    %v399 = vsel %vm335, 1, 0
    %v400 = vsel %vm336, 1, 0
    %v401 = vsel %vm337, 1, 0
    %v402 = vsel %vm338, 1, 0
    %v403 = vsel %vm339, 1, 0
    %v404 = vsel %vm340, 1, 0
    %v405 = vsel %vm341, 1, 0
    %v406 = vsel %vm342, 1, 0
    %v407 = vsel %vm343, 1, 0
    %v408 = vsel %vm344, 1, 0
    %v409 = vsel %vm345, 1, 0
    %v410 = vsel %vm346, 1, 0
    %v411 = vsel %vm347, 1, 0
    %v412 = vsel %vm348, 1, 0
    %v413 = vsel %vm349, 1, 0
    %v414 = vsel %vm350, 1, 0
    %v415 = vsel %vm351, 1, 0
    %v416 = vsel %vm352, 1, 0
    %v417 = vsel %vm353, 1, 0
    %v418 = vsel %vm354, 1, 0
    %v419 = vsel %vm355, 1, 0
    %v420 = vsel %vm356, 1, 0
    %v421 = vsel %vm357, 1, 0
    %v422 = vsel %vm358, 1, 0
    %v423 = vsel %vm359, 1, 0
    %v424 = vsel %vm360, 1, 0
    %v425 = vsel %vm361, 1, 0
    %v426 = vsel %vm362, 1, 0
    %v427 = vsel %vm363, 1, 0
    %v428 = vsel %vm364, 1, 0
    %v429 = vsel %vm365, 1, 0
    %v430 = vsel %vm366, 1, 0
    %v431 = vsel %vm367, 1, 0
    %v432 = vsel %vm368, 1, 0
    %v433 = vsel %vm369, 1, 0
    %v434 = vsel %vm370, 1, 0
    %v435 = vsel %vm371, 1, 0
    %v436 = vsel %vm372, 1, 0
    %v437 = vsel %vm373, 1, 0
    %v438 = vsel %vm374, 1, 0
    %v439 = vsel %vm375, 1, 0
    %v440 = vsel %vm376, 1, 0
    %v441 = vsel %vm377, 1, 0
    %v442 = vsel %vm378, 1, 0
    %v443 = vsel %vm379, 1, 0
    %v444 = vcvt.s32.f32 %v380
    %v445 = vcvt.s32.f32 %v381
    %v446 = vcvt.s32.f32 %v382
    %v447 = vcvt.s32.f32 %v383
    %v448 = vcvt.s32.f32 %v384
    %v449 = vcvt.s32.f32 %v385
    %v450 = vcvt.s32.f32 %v386
    %v451 = vcvt.s32.f32 %v387
    %v452 = vcvt.s32.f32 %v388
    %v453 = vcvt.s32.f32 %v389
    %v454 = vcvt.s32.f32 %v390
    %v455 = vcvt.s32.f32 %v391
    %v456 = vcvt.s32.f32 %v392
    %v457 = vcvt.s32.f32 %v393
    %v458 = vcvt.s32.f32 %v394
    %v459 = vcvt.s32.f32 %v395
    %v460 = vcvt.s32.f32 %v396
    %v461 = vcvt.s32.f32 %v397
    %v462 = vcvt.s32.f32 %v398
    %v463 = vcvt.s32.f32 %v399
    %v464 = vcvt.s32.f32 %v400
    %v465 = vcvt.s32.f32 %v401
    %v466 = vcvt.s32.f32 %v402
    %v467 = vcvt.s32.f32 %v403
    %v468 = vcvt.s32.f32 %v404
    %v469 = vcvt.s32.f32 %v405
    %v470 = vcvt.s32.f32 %v406
    %v471 = vcvt.s32.f32 %v407
    %v472 = vcvt.s32.f32 %v408
    %v473 = vcvt.s32.f32 %v409
    %v474 = vcvt.s32.f32 %v410
    %v475 = vcvt.s32.f32 %v411
    %v476 = vcvt.s32.f32 %v412
    %v477 = vcvt.s32.f32 %v413
    %v478 = vcvt.s32.f32 %v414
    %v479 = vcvt.s32.f32 %v415
    %v480 = vcvt.s32.f32 %v416
    %v481 = vcvt.s32.f32 %v417
    %v482 = vcvt.s32.f32 %v418
    %v483 = vcvt.s32.f32 %v419
    %v484 = vcvt.s32.f32 %v420
    %v485 = vcvt.s32.f32 %v421
    %v486 = vcvt.s32.f32 %v422
    %v487 = vcvt.s32.f32 %v423
    %v488 = vcvt.s32.f32 %v424
    %v489 = vcvt.s32.f32 %v425
    %v490 = vcvt.s32.f32 %v426
    %v491 = vcvt.s32.f32 %v427
    %v492 = vcvt.s32.f32 %v428
    %v493 = vcvt.s32.f32 %v429
    %v494 = vcvt.s32.f32 %v430
    %v495 = vcvt.s32.f32 %v431
    %v496 = vcvt.s32.f32 %v432
    %v497 = vcvt.s32.f32 %v433
    %v498 = vcvt.s32.f32 %v434
    %v499 = vcvt.s32.f32 %v435
    %v500 = vcvt.s32.f32 %v436
    %v501 = vcvt.s32.f32 %v437
    %v502 = vcvt.s32.f32 %v438
    %v503 = vcvt.s32.f32 %v439
    %v504 = vcvt.s32.f32 %v440
    %v505 = vcvt.s32.f32 %v441
    %v506 = vcvt.s32.f32 %v442
    %v507 = vcvt.s32.f32 %v443
    %v508 = vld [vmem:[#allocation2] sm:$0xff]
    %v509 = vld [vmem:[#allocation2 + $0x8] sm:$0xff]
    %v510 = vld [vmem:[#allocation2 + $0x10] sm:$0xff]
    %v511 = vld [vmem:[#allocation2 + $0x18] sm:$0xff]
    %v512 = vld [vmem:[#allocation2 + $0x20] sm:$0xff]
    %v513 = vld [vmem:[#allocation2 + $0x28] sm:$0xff]
    %v514 = vld [vmem:[#allocation2 + $0x30] sm:$0xff]
    %v515 = vld [vmem:[#allocation2 + $0x38] sm:$0xff]
    %v516 = vld [vmem:[#allocation2 + $0x40] sm:$0xff]
    %v517 = vld [vmem:[#allocation2 + $0x48] sm:$0xff]
    %v518 = vld [vmem:[#allocation2 + $0x50] sm:$0xff]
    %v519 = vld [vmem:[#allocation2 + $0x58] sm:$0xff]
    %v520 = vld [vmem:[#allocation2 + $0x60] sm:$0xff]
    %v521 = vld [vmem:[#allocation2 + $0x68] sm:$0xff]
    %v522 = vld [vmem:[#allocation2 + $0x70] sm:$0xff]
    %v523 = vld [vmem:[#allocation2 + $0x78] sm:$0xff]
    %v524 = vld [vmem:[#allocation2 + $0x80] sm:$0xff]
    %v525 = vld [vmem:[#allocation2 + $0x88] sm:$0xff]
    %v526 = vld [vmem:[#allocation2 + $0x90] sm:$0xff]
    %v527 = vld [vmem:[#allocation2 + $0x98] sm:$0xff]
    %v528 = vld [vmem:[#allocation2 + $0xa0] sm:$0xff]
    %v529 = vld [vmem:[#allocation2 + $0xa8] sm:$0xff]
    %v530 = vld [vmem:[#allocation2 + $0xb0] sm:$0xff]
    %v531 = vld [vmem:[#allocation2 + $0xb8] sm:$0xff]
    %v532 = vld [vmem:[#allocation2 + $0xc0] sm:$0xff]
    %v533 = vld [vmem:[#allocation2 + $0xc8] sm:$0xff]
    %v534 = vld [vmem:[#allocation2 + $0xd0] sm:$0xff]
    %v535 = vld [vmem:[#allocation2 + $0xd8] sm:$0xff]
    %v536 = vld [vmem:[#allocation2 + $0xe0] sm:$0xff]
    %v537 = vld [vmem:[#allocation2 + $0xe8] sm:$0xff]
    %v538 = vld [vmem:[#allocation2 + $0xf0] sm:$0xff]
    %v539 = vld [vmem:[#allocation2 + $0xf8] sm:$0xff]
    %v540 = vld [vmem:[#allocation2 + $0x100] sm:$0xff]
    %v541 = vld [vmem:[#allocation2 + $0x108] sm:$0xff]
    %v542 = vld [vmem:[#allocation2 + $0x110] sm:$0xff]
    %v543 = vld [vmem:[#allocation2 + $0x118] sm:$0xff]
    %v544 = vld [vmem:[#allocation2 + $0x120] sm:$0xff]
    %v545 = vld [vmem:[#allocation2 + $0x128] sm:$0xff]
    %v546 = vld [vmem:[#allocation2 + $0x130] sm:$0xff]
    %v547 = vld [vmem:[#allocation2 + $0x138] sm:$0xff]
    %v548 = vld [vmem:[#allocation2 + $0x140] sm:$0xff]
    %v549 = vld [vmem:[#allocation2 + $0x148] sm:$0xff]
    %v550 = vld [vmem:[#allocation2 + $0x150] sm:$0xff]
    %v551 = vld [vmem:[#allocation2 + $0x158] sm:$0xff]
    %v552 = vld [vmem:[#allocation2 + $0x160] sm:$0xff]
    %v553 = vld [vmem:[#allocation2 + $0x168] sm:$0xff]
    %v554 = vld [vmem:[#allocation2 + $0x170] sm:$0xff]
    %v555 = vld [vmem:[#allocation2 + $0x178] sm:$0xff]
    %v556 = vld [vmem:[#allocation2 + $0x180] sm:$0xff]
    %v557 = vld [vmem:[#allocation2 + $0x188] sm:$0xff]
    %v558 = vld [vmem:[#allocation2 + $0x190] sm:$0xff]
    %v559 = vld [vmem:[#allocation2 + $0x198] sm:$0xff]
    %v560 = vld [vmem:[#allocation2 + $0x1a0] sm:$0xff]
    %v561 = vld [vmem:[#allocation2 + $0x1a8] sm:$0xff]
    %v562 = vld [vmem:[#allocation2 + $0x1b0] sm:$0xff]
    %v563 = vld [vmem:[#allocation2 + $0x1b8] sm:$0xff]
    %v564 = vld [vmem:[#allocation2 + $0x1c0] sm:$0xff]
    %v565 = vld [vmem:[#allocation2 + $0x1c8] sm:$0xff]
    %v566 = vld [vmem:[#allocation2 + $0x1d0] sm:$0xff]
    %v567 = vld [vmem:[#allocation2 + $0x1d8] sm:$0xff]
    %v568 = vld [vmem:[#allocation2 + $0x1e0] sm:$0xff]
    %v569 = vld [vmem:[#allocation2 + $0x1e8] sm:$0xff]
    %v570 = vld [vmem:[#allocation2 + $0x1f0] sm:$0xff]
    %v571 = vld [vmem:[#allocation2 + $0x1f8] sm:$0xff]
    %v572 = vld [vmem:[#allocation5] sm:$0xff]
    %v573 = vld [vmem:[#allocation5 + $0x8] sm:$0xff]
    %574 = vmatpush.msra.mxu0 %v523
    %575 = vmatpush.msra.mxu0 %v522
    %576 = vmatpush.msra.mxu0 %v521
    %577 = vmatpush.msra.mxu0 %v520
    %578 = vmatpush.msra.mxu0 %v519
    %579 = vmatpush.msra.mxu0 %v518
    %580 = vmatpush.msra.mxu0 %v517
    %581 = vmatpush.msra.mxu0 %v516
    %582 = vmatpush.msra.mxu0 %v515
    %583 = vmatpush.msra.mxu0 %v514
    %584 = vmatpush.msra.mxu0 %v513
    %585 = vmatpush.msra.mxu0 %v512
    %586 = vmatpush.msra.mxu0 %v511
    %587 = vmatpush.msra.mxu0 %v510
    %588 = vmatpush.msra.mxu0 %v509
    %589 = vmatpush.msra.mxu0 %v508
    %590 = vmatmul.f32.gmra.mxu0 %v444
    %v591 = vpop.f32.mrf.mxu0
    %v592 = vadd.f32 %v572, %v591
    %593 = vmatmul.f32.gmra.mxu0 %v448
    %v594 = vpop.f32.mrf.mxu0
    %v595 = vadd.f32 %v573, %v594
    %596 = vmatmul.f32.gmra.mxu0 %v452
    %v597 = vpop.f32.mrf.mxu0
    %v598 = vadd.f32 %v572, %v597
    %599 = vmatmul.f32.gmra.mxu0 %v456
    %v600 = vpop.f32.mrf.mxu0
    %v601 = vadd.f32 %v573, %v600
    %602 = vmatmul.f32.gmra.mxu0 %v460
    %v603 = vpop.f32.mrf.mxu0
    %v604 = vadd.f32 %v572, %v603
    %605 = vmatmul.f32.gmra.mxu0 %v464
    %v606 = vpop.f32.mrf.mxu0
    %v607 = vadd.f32 %v573, %v606
    %608 = vmatmul.f32.gmra.mxu0 %v468
    %v609 = vpop.f32.mrf.mxu0
    %v610 = vadd.f32 %v572, %v609
    %611 = vmatmul.f32.gmra.mxu0 %v472
    %v612 = vpop.f32.mrf.mxu0
    %v613 = vadd.f32 %v573, %v612
    %614 = vmatmul.f32.gmra.mxu0 %v476
    %v615 = vpop.f32.mrf.mxu0
    %v616 = vadd.f32 %v572, %v615
    %617 = vmatmul.f32.gmra.mxu0 %v480
    %v618 = vpop.f32.mrf.mxu0
    %v619 = vadd.f32 %v573, %v618
    %620 = vmatmul.f32.gmra.mxu0 %v484
    %v621 = vpop.f32.mrf.mxu0
    %v622 = vadd.f32 %v572, %v621
    %623 = vmatmul.f32.gmra.mxu0 %v488
    %v624 = vpop.f32.mrf.mxu0
    %v625 = vadd.f32 %v573, %v624
    %626 = vmatmul.f32.gmra.mxu0 %v492
    %v627 = vpop.f32.mrf.mxu0
    %v628 = vadd.f32 %v572, %v627
    %629 = vmatmul.f32.gmra.mxu0 %v496
    %v630 = vpop.f32.mrf.mxu0
    %v631 = vadd.f32 %v573, %v630
    %632 = vmatmul.f32.gmra.mxu0 %v500
    %v633 = vpop.f32.mrf.mxu0
    %v634 = vadd.f32 %v572, %v633
    %635 = vmatmul.f32.gmra.mxu0 %v504
    %v636 = vpop.f32.mrf.mxu0
    %v637 = vadd.f32 %v573, %v636
    %638 = vdwg.mxu0
    %639 = vmatpush.msra.mxu0 %v539
    %640 = vmatpush.msra.mxu0 %v538
    %641 = vmatpush.msra.mxu0 %v537
    %642 = vmatpush.msra.mxu0 %v536
    %643 = vmatpush.msra.mxu0 %v535
    %644 = vmatpush.msra.mxu0 %v534
    %645 = vmatpush.msra.mxu0 %v533
    %646 = vmatpush.msra.mxu0 %v532
    %647 = vmatpush.msra.mxu0 %v531
    %648 = vmatpush.msra.mxu0 %v530
    %649 = vmatpush.msra.mxu0 %v529
    %650 = vmatpush.msra.mxu0 %v528
    %651 = vmatpush.msra.mxu0 %v527
    %652 = vmatpush.msra.mxu0 %v526
    %653 = vmatpush.msra.mxu0 %v525
    %654 = vmatpush.msra.mxu0 %v524
    %655 = vmatmul.f32.gmra.mxu0 %v445
    %v656 = vpop.f32.mrf.mxu0
    %v657 = vadd.f32 %v592, %v656
    %658 = vmatmul.f32.gmra.mxu0 %v449
    %v659 = vpop.f32.mrf.mxu0
    %v660 = vadd.f32 %v595, %v659
    %661 = vmatmul.f32.gmra.mxu0 %v453
    %v662 = vpop.f32.mrf.mxu0
    %v663 = vadd.f32 %v598, %v662
    %664 = vmatmul.f32.gmra.mxu0 %v457
    %v665 = vpop.f32.mrf.mxu0
    %v666 = vadd.f32 %v601, %v665
    %667 = vmatmul.f32.gmra.mxu0 %v461
    %v668 = vpop.f32.mrf.mxu0
    %v669 = vadd.f32 %v604, %v668
    %670 = vmatmul.f32.gmra.mxu0 %v465
    %v671 = vpop.f32.mrf.mxu0
    %v672 = vadd.f32 %v607, %v671
    %673 = vmatmul.f32.gmra.mxu0 %v469
    %v674 = vpop.f32.mrf.mxu0
    %v675 = vadd.f32 %v610, %v674
    %676 = vmatmul.f32.gmra.mxu0 %v473
    %v677 = vpop.f32.mrf.mxu0
    %v678 = vadd.f32 %v613, %v677
    %679 = vmatmul.f32.gmra.mxu0 %v477
    %v680 = vpop.f32.mrf.mxu0
    %v681 = vadd.f32 %v616, %v680
    %682 = vmatmul.f32.gmra.mxu0 %v481
    %v683 = vpop.f32.mrf.mxu0
    %v684 = vadd.f32 %v619, %v683
    %685 = vmatmul.f32.gmra.mxu0 %v485
    %v686 = vpop.f32.mrf.mxu0
    %v687 = vadd.f32 %v622, %v686
    %688 = vmatmul.f32.gmra.mxu0 %v489
    %v689 = vpop.f32.mrf.mxu0
    %v690 = vadd.f32 %v625, %v689
    %691 = vmatmul.f32.gmra.mxu0 %v493
    %v692 = vpop.f32.mrf.mxu0
    %v693 = vadd.f32 %v628, %v692
    %694 = vmatmul.f32.gmra.mxu0 %v497
    %v695 = vpop.f32.mrf.mxu0
    %v696 = vadd.f32 %v631, %v695
    %697 = vmatmul.f32.gmra.mxu0 %v501
    %v698 = vpop.f32.mrf.mxu0
    %v699 = vadd.f32 %v634, %v698
    %700 = vmatmul.f32.gmra.mxu0 %v505
    %v701 = vpop.f32.mrf.mxu0
    %v702 = vadd.f32 %v637, %v701
    %703 = vdwg.mxu0
    %704 = vmatpush.msra.mxu0 %v555
    %705 = vmatpush.msra.mxu0 %v554
    %706 = vmatpush.msra.mxu0 %v553
    %707 = vmatpush.msra.mxu0 %v552
    %708 = vmatpush.msra.mxu0 %v551
    %709 = vmatpush.msra.mxu0 %v550
    %710 = vmatpush.msra.mxu0 %v549
    %711 = vmatpush.msra.mxu0 %v548
    %712 = vmatpush.msra.mxu0 %v547
    %713 = vmatpush.msra.mxu0 %v546
    %714 = vmatpush.msra.mxu0 %v545
    %715 = vmatpush.msra.mxu0 %v544
    %716 = vmatpush.msra.mxu0 %v543
    %717 = vmatpush.msra.mxu0 %v542
    %718 = vmatpush.msra.mxu0 %v541
    %719 = vmatpush.msra.mxu0 %v540
    %720 = vmatmul.f32.gmra.mxu0 %v446
    %v721 = vpop.f32.mrf.mxu0
    %v722 = vadd.f32 %v657, %v721
    %723 = vmatmul.f32.gmra.mxu0 %v450
    %v724 = vpop.f32.mrf.mxu0
    %v725 = vadd.f32 %v660, %v724
    %726 = vmatmul.f32.gmra.mxu0 %v454
    %v727 = vpop.f32.mrf.mxu0
    %v728 = vadd.f32 %v663, %v727
    %729 = vmatmul.f32.gmra.mxu0 %v458
    %v730 = vpop.f32.mrf.mxu0
    %v731 = vadd.f32 %v666, %v730
    %732 = vmatmul.f32.gmra.mxu0 %v462
    %v733 = vpop.f32.mrf.mxu0
    %v734 = vadd.f32 %v669, %v733
    %735 = vmatmul.f32.gmra.mxu0 %v466
    %v736 = vpop.f32.mrf.mxu0
    %v737 = vadd.f32 %v672, %v736
    %738 = vmatmul.f32.gmra.mxu0 %v470
    %v739 = vpop.f32.mrf.mxu0
    %v740 = vadd.f32 %v675, %v739
    %741 = vmatmul.f32.gmra.mxu0 %v474
    %v742 = vpop.f32.mrf.mxu0
    %v743 = vadd.f32 %v678, %v742
    %744 = vmatmul.f32.gmra.mxu0 %v478
    %v745 = vpop.f32.mrf.mxu0
    %v746 = vadd.f32 %v681, %v745
    %747 = vmatmul.f32.gmra.mxu0 %v482
    %v748 = vpop.f32.mrf.mxu0
    %v749 = vadd.f32 %v684, %v748
    %750 = vmatmul.f32.gmra.mxu0 %v486
    %v751 = vpop.f32.mrf.mxu0
    %v752 = vadd.f32 %v687, %v751
    %753 = vmatmul.f32.gmra.mxu0 %v490
    %v754 = vpop.f32.mrf.mxu0
    %v755 = vadd.f32 %v690, %v754
    %756 = vmatmul.f32.gmra.mxu0 %v494
    %v757 = vpop.f32.mrf.mxu0
    %v758 = vadd.f32 %v693, %v757
    %759 = vmatmul.f32.gmra.mxu0 %v498
    %v760 = vpop.f32.mrf.mxu0
    %v761 = vadd.f32 %v696, %v760
    %762 = vmatmul.f32.gmra.mxu0 %v502
    %v763 = vpop.f32.mrf.mxu0
    %v764 = vadd.f32 %v699, %v763
    %765 = vmatmul.f32.gmra.mxu0 %v506
    %v766 = vpop.f32.mrf.mxu0
    %v767 = vadd.f32 %v702, %v766
    %768 = vdwg.mxu0
    %769 = vmatpush.msra.mxu0 %v571
    %770 = vmatpush.msra.mxu0 %v570
    %771 = vmatpush.msra.mxu0 %v569
    %772 = vmatpush.msra.mxu0 %v568
    %773 = vmatpush.msra.mxu0 %v567
    %774 = vmatpush.msra.mxu0 %v566
    %775 = vmatpush.msra.mxu0 %v565
    %776 = vmatpush.msra.mxu0 %v564
    %777 = vmatpush.msra.mxu0 %v563
    %778 = vmatpush.msra.mxu0 %v562
    %779 = vmatpush.msra.mxu0 %v561
    %780 = vmatpush.msra.mxu0 %v560
    %781 = vmatpush.msra.mxu0 %v559
    %782 = vmatpush.msra.mxu0 %v558
    %783 = vmatpush.msra.mxu0 %v557
    %784 = vmatpush.msra.mxu0 %v556
    %785 = vmatmul.f32.gmra.mxu0 %v447
    %v786 = vpop.f32.mrf.mxu0
    %v787 = vadd.f32 %v722, %v786
    %788 = vmatmul.f32.gmra.mxu0 %v451
    %v789 = vpop.f32.mrf.mxu0
    %v790 = vadd.f32 %v725, %v789
    %791 = vmatmul.f32.gmra.mxu0 %v455
    %v792 = vpop.f32.mrf.mxu0
    %v793 = vadd.f32 %v728, %v792
    %794 = vmatmul.f32.gmra.mxu0 %v459
    %v795 = vpop.f32.mrf.mxu0
    %v796 = vadd.f32 %v731, %v795
    %797 = vmatmul.f32.gmra.mxu0 %v463
    %v798 = vpop.f32.mrf.mxu0
    %v799 = vadd.f32 %v734, %v798
    %800 = vmatmul.f32.gmra.mxu0 %v467
    %v801 = vpop.f32.mrf.mxu0
    %v802 = vadd.f32 %v737, %v801
    %803 = vmatmul.f32.gmra.mxu0 %v471
    %v804 = vpop.f32.mrf.mxu0
    %v805 = vadd.f32 %v740, %v804
    %806 = vmatmul.f32.gmra.mxu0 %v475
    %v807 = vpop.f32.mrf.mxu0
    %v808 = vadd.f32 %v743, %v807
    %809 = vmatmul.f32.gmra.mxu0 %v479
    %v810 = vpop.f32.mrf.mxu0
    %v811 = vadd.f32 %v746, %v810
    %812 = vmatmul.f32.gmra.mxu0 %v483
    %v813 = vpop.f32.mrf.mxu0
    %v814 = vadd.f32 %v749, %v813
    %815 = vmatmul.f32.gmra.mxu0 %v487
    %v816 = vpop.f32.mrf.mxu0
    %v817 = vadd.f32 %v752, %v816
    %818 = vmatmul.f32.gmra.mxu0 %v491
    %v819 = vpop.f32.mrf.mxu0
    %v820 = vadd.f32 %v755, %v819
    %821 = vmatmul.f32.gmra.mxu0 %v495
    %v822 = vpop.f32.mrf.mxu0
    %v823 = vadd.f32 %v758, %v822
    %824 = vmatmul.f32.gmra.mxu0 %v499
    %v825 = vpop.f32.mrf.mxu0
    %v826 = vadd.f32 %v761, %v825
    %827 = vmatmul.f32.gmra.mxu0 %v503
    %v828 = vpop.f32.mrf.mxu0
    %v829 = vadd.f32 %v764, %v828
    %830 = vmatmul.f32.gmra.mxu0 %v507
    %v831 = vpop.f32.mrf.mxu0
    %v832 = vadd.f32 %v767, %v831
    %833 = vdwg.mxu0
    %v834 = vlaneseq
    %v835 = vshrl.u32 %v834, 7
    %v836 = vadd.s32 %v835, 8
    %v837 = vadd.s32 %v835, 16
    %v838 = vadd.s32 %v835, 24
    %v839 = vadd.s32 %v835, 32
    %v840 = vadd.s32 %v835, 40
    %v841 = vadd.s32 %v835, 48
    %v842 = vadd.s32 %v835, 56
    %v843 = vadd.s32 %v835, 64
    %v844 = vadd.s32 %v835, 72
    %v845 = vadd.s32 %v835, 80
    %v846 = vadd.s32 %v835, 88
    %v847 = vadd.s32 %v835, 96
    %v848 = vadd.s32 %v835, 104
    %v849 = vadd.s32 %v835, 112
    %v850 = vadd.s32 %v835, 120
    %v851 = vshra.s32 %v835, 4
    %v852 = vshra.s32 %v836, 4
    %v853 = vshra.s32 %v837, 4
    %v854 = vshra.s32 %v838, 4
    %v855 = vshra.s32 %v839, 4
    %v856 = vshra.s32 %v840, 4
    %v857 = vshra.s32 %v841, 4
    %v858 = vshra.s32 %v842, 4
    %v859 = vshra.s32 %v843, 4
    %v860 = vshra.s32 %v844, 4
    %v861 = vshra.s32 %v845, 4
    %v862 = vshra.s32 %v846, 4
    %v863 = vshra.s32 %v847, 4
    %v864 = vshra.s32 %v848, 4
    %v865 = vshra.s32 %v849, 4
    %v866 = vshra.s32 %v850, 4
    %v867 = vshra.s32 %v264, 4
    %vm868 = vcmp.eq.s32.totalorder %v851, %v867
    %vm869 = vcmp.eq.s32.totalorder %v852, %v867
    %vm870 = vcmp.eq.s32.totalorder %v853, %v867
    %vm871 = vcmp.eq.s32.totalorder %v854, %v867
    %vm872 = vcmp.eq.s32.totalorder %v855, %v867
    %vm873 = vcmp.eq.s32.totalorder %v856, %v867
    %vm874 = vcmp.eq.s32.totalorder %v857, %v867
    %vm875 = vcmp.eq.s32.totalorder %v858, %v867
    %vm876 = vcmp.eq.s32.totalorder %v859, %v867
    %vm877 = vcmp.eq.s32.totalorder %v860, %v867
    %vm878 = vcmp.eq.s32.totalorder %v861, %v867
    %vm879 = vcmp.eq.s32.totalorder %v862, %v867
    %vm880 = vcmp.eq.s32.totalorder %v863, %v867
    %vm881 = vcmp.eq.s32.totalorder %v864, %v867
    %vm882 = vcmp.eq.s32.totalorder %v865, %v867
    %vm883 = vcmp.eq.s32.totalorder %v866, %v867
    %v884 = vand.u32 %v264, 15
    %v885 = vand.u32 %v835, 15
    %v886 = vand.u32 %v836, 15
    %v887 = vand.u32 %v837, 15
    %v888 = vand.u32 %v838, 15
    %v889 = vand.u32 %v839, 15
    %v890 = vand.u32 %v840, 15
    %v891 = vand.u32 %v841, 15
    %v892 = vand.u32 %v842, 15
    %v893 = vand.u32 %v843, 15
    %v894 = vand.u32 %v844, 15
    %v895 = vand.u32 %v845, 15
    %v896 = vand.u32 %v846, 15
    %v897 = vand.u32 %v847, 15
    %v898 = vand.u32 %v848, 15
    %v899 = vand.u32 %v849, 15
    %v900 = vand.u32 %v850, 15
    %vm901 = vcmp.le.s32.totalorder %v884, %v885
    %vm902 = vcmp.le.s32.totalorder %v884, %v886
    %vm903 = vcmp.le.s32.totalorder %v884, %v887
    %vm904 = vcmp.le.s32.totalorder %v884, %v888
    %vm905 = vcmp.le.s32.totalorder %v884, %v889
    %vm906 = vcmp.le.s32.totalorder %v884, %v890
    %vm907 = vcmp.le.s32.totalorder %v884, %v891
    %vm908 = vcmp.le.s32.totalorder %v884, %v892
    %vm909 = vcmp.le.s32.totalorder %v884, %v893
    %vm910 = vcmp.le.s32.totalorder %v884, %v894
    %vm911 = vcmp.le.s32.totalorder %v884, %v895
    %vm912 = vcmp.le.s32.totalorder %v884, %v896
    %vm913 = vcmp.le.s32.totalorder %v884, %v897
    %vm914 = vcmp.le.s32.totalorder %v884, %v898
    %vm915 = vcmp.le.s32.totalorder %v884, %v899
    %vm916 = vcmp.le.s32.totalorder %v884, %v900
    %vm917 = vmand %vm868, %vm901
    %vm918 = vmand %vm869, %vm902
    %vm919 = vmand %vm870, %vm903
    %vm920 = vmand %vm871, %vm904
    %vm921 = vmand %vm872, %vm905
    %vm922 = vmand %vm873, %vm906
    %vm923 = vmand %vm874, %vm907
    %vm924 = vmand %vm875, %vm908
    %vm925 = vmand %vm876, %vm909
    %vm926 = vmand %vm877, %vm910
    %vm927 = vmand %vm878, %vm911
    %vm928 = vmand %vm879, %vm912
    %vm929 = vmand %vm880, %vm913
    %vm930 = vmand %vm881, %vm914
    %vm931 = vmand %vm882, %vm915
    %vm932 = vmand %vm883, %vm916
    %v933 = vld [vmem:[#allocation7] sm:$0x1]
    %v934 = vld [vmem:[#allocation8] sm:$0x1]
    %935 = vadd.xlane.f32.xlu0 %v787
    %v936 = vpop.xlane.xlu0 %935
    %937 = vadd.xlane.f32.xlu0 %v790
    %v938 = vpop.xlane.xlu0 %937
    %939 = vadd.xlane.f32.xlu0 %v793
    %v940 = vpop.xlane.xlu0 %939
    %941 = vadd.xlane.f32.xlu0 %v796
    %v942 = vpop.xlane.xlu0 %941
    %943 = vadd.xlane.f32.xlu0 %v799
    %v944 = vpop.xlane.xlu0 %943
    %945 = vadd.xlane.f32.xlu0 %v802
    %v946 = vpop.xlane.xlu0 %945
    %947 = vadd.xlane.f32.xlu0 %v805
    %v948 = vpop.xlane.xlu0 %947
    %949 = vadd.xlane.f32.xlu0 %v808
    %v950 = vpop.xlane.xlu0 %949
    %951 = vadd.xlane.f32.xlu0 %v811
    %v952 = vpop.xlane.xlu0 %951
    %953 = vadd.xlane.f32.xlu0 %v814
    %v954 = vpop.xlane.xlu0 %953
    %955 = vadd.xlane.f32.xlu0 %v817
    %v956 = vpop.xlane.xlu0 %955
    %957 = vadd.xlane.f32.xlu0 %v820
    %v958 = vpop.xlane.xlu0 %957
    %959 = vadd.xlane.f32.xlu0 %v823
    %v960 = vpop.xlane.xlu0 %959
    %961 = vadd.xlane.f32.xlu0 %v826
    %v962 = vpop.xlane.xlu0 %961
    %963 = vadd.xlane.f32.xlu0 %v829
    %v964 = vpop.xlane.xlu0 %963
    %965 = vadd.xlane.f32.xlu0 %v832
    %v966 = vpop.xlane.xlu0 %965
    %v967 = vrcp.pop 128.0
    %v968 = vmul.f32 128.0, %v967
    %v969 = vsub.f32 1.0, %v968
    %v970 = vmul.f32 %v967, %v969
    %v971 = vadd.f32 %v967, %v970
    %vm972 = vweird.f32 %v967
    %v973 = vsel %vm972, %v967, %v971
    %v974 = vmul.f32 %v936, %v973
    %v975 = vmul.f32 %v938, %v973
    %v976 = vmul.f32 %v940, %v973
    %v977 = vmul.f32 %v942, %v973
    %v978 = vmul.f32 %v944, %v973
    %v979 = vmul.f32 %v946, %v973
    %v980 = vmul.f32 %v948, %v973
    %v981 = vmul.f32 %v950, %v973
    %v982 = vmul.f32 %v952, %v973
    %v983 = vmul.f32 %v954, %v973
    %v984 = vmul.f32 %v956, %v973
    %v985 = vmul.f32 %v958, %v973
    %v986 = vmul.f32 %v960, %v973
    %v987 = vmul.f32 %v962, %v973
    %v988 = vmul.f32 %v964, %v973
    %v989 = vmul.f32 %v966, %v973
    %v990 = vmul.f32 %v787, %v787
    %v991 = vmul.f32 %v790, %v790
    %v992 = vmul.f32 %v793, %v793
    %v993 = vmul.f32 %v796, %v796
    %v994 = vmul.f32 %v799, %v799
    %v995 = vmul.f32 %v802, %v802
    %v996 = vmul.f32 %v805, %v805
    %v997 = vmul.f32 %v808, %v808
    %v998 = vmul.f32 %v811, %v811
    %v999 = vmul.f32 %v814, %v814
    %v1000 = vmul.f32 %v817, %v817
    %v1001 = vmul.f32 %v820, %v820
    %v1002 = vmul.f32 %v823, %v823
    %v1003 = vmul.f32 %v826, %v826
    %v1004 = vmul.f32 %v829, %v829
    %v1005 = vmul.f32 %v832, %v832
    %1006 = vadd.xlane.f32.xlu0 %v990
    %v1007 = vpop.xlane.xlu0 %1006
    %1008 = vadd.xlane.f32.xlu0 %v991
    %v1009 = vpop.xlane.xlu0 %1008
    %1010 = vadd.xlane.f32.xlu0 %v992
    %v1011 = vpop.xlane.xlu0 %1010
    %1012 = vadd.xlane.f32.xlu0 %v993
    %v1013 = vpop.xlane.xlu0 %1012
    %1014 = vadd.xlane.f32.xlu0 %v994
    %v1015 = vpop.xlane.xlu0 %1014
    %1016 = vadd.xlane.f32.xlu0 %v995
    %v1017 = vpop.xlane.xlu0 %1016
    %1018 = vadd.xlane.f32.xlu0 %v996
    %v1019 = vpop.xlane.xlu0 %1018
    %1020 = vadd.xlane.f32.xlu0 %v997
    %v1021 = vpop.xlane.xlu0 %1020
    %1022 = vadd.xlane.f32.xlu0 %v998
    %v1023 = vpop.xlane.xlu0 %1022
    %1024 = vadd.xlane.f32.xlu0 %v999
    %v1025 = vpop.xlane.xlu0 %1024
    %1026 = vadd.xlane.f32.xlu0 %v1000
    %v1027 = vpop.xlane.xlu0 %1026
    %1028 = vadd.xlane.f32.xlu0 %v1001
    %v1029 = vpop.xlane.xlu0 %1028
    %1030 = vadd.xlane.f32.xlu0 %v1002
    %v1031 = vpop.xlane.xlu0 %1030
    %1032 = vadd.xlane.f32.xlu0 %v1003
    %v1033 = vpop.xlane.xlu0 %1032
    %1034 = vadd.xlane.f32.xlu0 %v1004
    %v1035 = vpop.xlane.xlu0 %1034
    %1036 = vadd.xlane.f32.xlu0 %v1005
    %v1037 = vpop.xlane.xlu0 %1036
    %v1038 = vmul.f32 %v1007, %v973
    %v1039 = vmul.f32 %v1009, %v973
    %v1040 = vmul.f32 %v1011, %v973
    %v1041 = vmul.f32 %v1013, %v973
    %v1042 = vmul.f32 %v1015, %v973
    %v1043 = vmul.f32 %v1017, %v973
    %v1044 = vmul.f32 %v1019, %v973
    %v1045 = vmul.f32 %v1021, %v973
    %v1046 = vmul.f32 %v1023, %v973
    %v1047 = vmul.f32 %v1025, %v973
    %v1048 = vmul.f32 %v1027, %v973
    %v1049 = vmul.f32 %v1029, %v973
    %v1050 = vmul.f32 %v1031, %v973
    %v1051 = vmul.f32 %v1033, %v973
    %v1052 = vmul.f32 %v1035, %v973
    %v1053 = vmul.f32 %v1037, %v973
    %v1054 = vmul.f32 %v974, %v974
    %v1055 = vmul.f32 %v975, %v975
    %v1056 = vmul.f32 %v976, %v976
    %v1057 = vmul.f32 %v977, %v977
    %v1058 = vmul.f32 %v978, %v978
    %v1059 = vmul.f32 %v979, %v979
    %v1060 = vmul.f32 %v980, %v980
    %v1061 = vmul.f32 %v981, %v981
    %v1062 = vmul.f32 %v982, %v982
    %v1063 = vmul.f32 %v983, %v983
    %v1064 = vmul.f32 %v984, %v984
    %v1065 = vmul.f32 %v985, %v985
    %v1066 = vmul.f32 %v986, %v986
    %v1067 = vmul.f32 %v987, %v987
    %v1068 = vmul.f32 %v988, %v988
    %v1069 = vmul.f32 %v989, %v989
    %v1070 = vsub.f32 %v1038, %v1054
    %v1071 = vsub.f32 %v1039, %v1055
    %v1072 = vsub.f32 %v1040, %v1056
    %v1073 = vsub.f32 %v1041, %v1057
    %v1074 = vsub.f32 %v1042, %v1058
    %v1075 = vsub.f32 %v1043, %v1059
    %v1076 = vsub.f32 %v1044, %v1060
    %v1077 = vsub.f32 %v1045, %v1061
    %v1078 = vsub.f32 %v1046, %v1062
    %v1079 = vsub.f32 %v1047, %v1063
    %v1080 = vsub.f32 %v1048, %v1064
    %v1081 = vsub.f32 %v1049, %v1065
    %v1082 = vsub.f32 %v1050, %v1066
    %v1083 = vsub.f32 %v1051, %v1067
    %v1084 = vsub.f32 %v1052, %v1068
    %v1085 = vsub.f32 %v1053, %v1069
    %v1086 = vsub.f32 %v787, %v974
    %v1087 = vsub.f32 %v790, %v975
    %v1088 = vsub.f32 %v793, %v976
    %v1089 = vsub.f32 %v796, %v977
    %v1090 = vsub.f32 %v799, %v978
    %v1091 = vsub.f32 %v802, %v979
    %v1092 = vsub.f32 %v805, %v980
    %v1093 = vsub.f32 %v808, %v981
    %v1094 = vsub.f32 %v811, %v982
    %v1095 = vsub.f32 %v814, %v983
    %v1096 = vsub.f32 %v817, %v984
    %v1097 = vsub.f32 %v820, %v985
    %v1098 = vsub.f32 %v823, %v986
    %v1099 = vsub.f32 %v826, %v987
    %v1100 = vsub.f32 %v829, %v988
    %v1101 = vsub.f32 %v832, %v989
    %v1102 = vadd.f32 %v1070, 1e-05
    %v1103 = vadd.f32 %v1071, 1e-05
    %v1104 = vadd.f32 %v1072, 1e-05
    %v1105 = vadd.f32 %v1073, 1e-05
    %v1106 = vadd.f32 %v1074, 1e-05
    %v1107 = vadd.f32 %v1075, 1e-05
    %v1108 = vadd.f32 %v1076, 1e-05
    %v1109 = vadd.f32 %v1077, 1e-05
    %v1110 = vadd.f32 %v1078, 1e-05
    %v1111 = vadd.f32 %v1079, 1e-05
    %v1112 = vadd.f32 %v1080, 1e-05
    %v1113 = vadd.f32 %v1081, 1e-05
    %v1114 = vadd.f32 %v1082, 1e-05
    %v1115 = vadd.f32 %v1083, 1e-05
    %v1116 = vadd.f32 %v1084, 1e-05
    %v1117 = vadd.f32 %v1085, 1e-05
    %v1118 = vrsqrt.pop %v1102
    %v1119 = vmul.f32 %v1118, %v1102
    %v1120 = vmul.f32 %v1119, %v1118
    %v1121 = vmul.f32 0.5, %v1120
    %v1122 = vsub.f32 1.5, %v1121
    %v1123 = vmul.f32 %v1118, %v1122
    %vm1124 = vweird.f32 %v1102
    %vm1125 = vweird.f32 %v1118
    %vm1126 = vmor %vm1124, %vm1125
    %v1127 = vsel %vm1126, %v1118, %v1123
    %v1128 = vrsqrt.pop %v1103
    %v1129 = vmul.f32 %v1128, %v1103
    %v1130 = vmul.f32 %v1129, %v1128
    %v1131 = vmul.f32 0.5, %v1130
    %v1132 = vsub.f32 1.5, %v1131
    %v1133 = vmul.f32 %v1128, %v1132
    %vm1134 = vweird.f32 %v1103
    %vm1135 = vweird.f32 %v1128
    %vm1136 = vmor %vm1134, %vm1135
    %v1137 = vsel %vm1136, %v1128, %v1133
    %v1138 = vrsqrt.pop %v1104
    %v1139 = vmul.f32 %v1138, %v1104
    %v1140 = vmul.f32 %v1139, %v1138
    %v1141 = vmul.f32 0.5, %v1140
    %v1142 = vsub.f32 1.5, %v1141
    %v1143 = vmul.f32 %v1138, %v1142
    %vm1144 = vweird.f32 %v1104
    %vm1145 = vweird.f32 %v1138
    %vm1146 = vmor %vm1144, %vm1145
    %v1147 = vsel %vm1146, %v1138, %v1143
    %v1148 = vrsqrt.pop %v1105
    %v1149 = vmul.f32 %v1148, %v1105
    %v1150 = vmul.f32 %v1149, %v1148
    %v1151 = vmul.f32 0.5, %v1150
    %v1152 = vsub.f32 1.5, %v1151
    %v1153 = vmul.f32 %v1148, %v1152
    %vm1154 = vweird.f32 %v1105
    %vm1155 = vweird.f32 %v1148
    %vm1156 = vmor %vm1154, %vm1155
    %v1157 = vsel %vm1156, %v1148, %v1153
    %v1158 = vrsqrt.pop %v1106
    %v1159 = vmul.f32 %v1158, %v1106
    %v1160 = vmul.f32 %v1159, %v1158
    %v1161 = vmul.f32 0.5, %v1160
    %v1162 = vsub.f32 1.5, %v1161
    %v1163 = vmul.f32 %v1158, %v1162
    %vm1164 = vweird.f32 %v1106
    %vm1165 = vweird.f32 %v1158
    %vm1166 = vmor %vm1164, %vm1165
    %v1167 = vsel %vm1166, %v1158, %v1163
    %v1168 = vrsqrt.pop %v1107
    %v1169 = vmul.f32 %v1168, %v1107
    %v1170 = vmul.f32 %v1169, %v1168
    %v1171 = vmul.f32 0.5, %v1170
    %v1172 = vsub.f32 1.5, %v1171
    %v1173 = vmul.f32 %v1168, %v1172
    %vm1174 = vweird.f32 %v1107
    %vm1175 = vweird.f32 %v1168
    %vm1176 = vmor %vm1174, %vm1175
    %v1177 = vsel %vm1176, %v1168, %v1173
    %v1178 = vrsqrt.pop %v1108
    %v1179 = vmul.f32 %v1178, %v1108
    %v1180 = vmul.f32 %v1179, %v1178
    %v1181 = vmul.f32 0.5, %v1180
    %v1182 = vsub.f32 1.5, %v1181
    %v1183 = vmul.f32 %v1178, %v1182
    %vm1184 = vweird.f32 %v1108
    %vm1185 = vweird.f32 %v1178
    %vm1186 = vmor %vm1184, %vm1185
    %v1187 = vsel %vm1186, %v1178, %v1183
    %v1188 = vrsqrt.pop %v1109
    %v1189 = vmul.f32 %v1188, %v1109
    %v1190 = vmul.f32 %v1189, %v1188
    %v1191 = vmul.f32 0.5, %v1190
    %v1192 = vsub.f32 1.5, %v1191
    %v1193 = vmul.f32 %v1188, %v1192
    %vm1194 = vweird.f32 %v1109
    %vm1195 = vweird.f32 %v1188
    %vm1196 = vmor %vm1194, %vm1195
    %v1197 = vsel %vm1196, %v1188, %v1193
    %v1198 = vrsqrt.pop %v1110
    %v1199 = vmul.f32 %v1198, %v1110
    %v1200 = vmul.f32 %v1199, %v1198
    %v1201 = vmul.f32 0.5, %v1200
    %v1202 = vsub.f32 1.5, %v1201
    %v1203 = vmul.f32 %v1198, %v1202
    %vm1204 = vweird.f32 %v1110
    %vm1205 = vweird.f32 %v1198
    %vm1206 = vmor %vm1204, %vm1205
    %v1207 = vsel %vm1206, %v1198, %v1203
    %v1208 = vrsqrt.pop %v1111
    %v1209 = vmul.f32 %v1208, %v1111
    %v1210 = vmul.f32 %v1209, %v1208
    %v1211 = vmul.f32 0.5, %v1210
    %v1212 = vsub.f32 1.5, %v1211
    %v1213 = vmul.f32 %v1208, %v1212
    %vm1214 = vweird.f32 %v1111
    %vm1215 = vweird.f32 %v1208
    %vm1216 = vmor %vm1214, %vm1215
    %v1217 = vsel %vm1216, %v1208, %v1213
    %v1218 = vrsqrt.pop %v1112
    %v1219 = vmul.f32 %v1218, %v1112
    %v1220 = vmul.f32 %v1219, %v1218
    %v1221 = vmul.f32 0.5, %v1220
    %v1222 = vsub.f32 1.5, %v1221
    %v1223 = vmul.f32 %v1218, %v1222
    %vm1224 = vweird.f32 %v1112
    %vm1225 = vweird.f32 %v1218
    %vm1226 = vmor %vm1224, %vm1225
    %v1227 = vsel %vm1226, %v1218, %v1223
    %v1228 = vrsqrt.pop %v1113
    %v1229 = vmul.f32 %v1228, %v1113
    %v1230 = vmul.f32 %v1229, %v1228
    %v1231 = vmul.f32 0.5, %v1230
    %v1232 = vsub.f32 1.5, %v1231
    %v1233 = vmul.f32 %v1228, %v1232
    %vm1234 = vweird.f32 %v1113
    %vm1235 = vweird.f32 %v1228
    %vm1236 = vmor %vm1234, %vm1235
    %v1237 = vsel %vm1236, %v1228, %v1233
    %v1238 = vrsqrt.pop %v1114
    %v1239 = vmul.f32 %v1238, %v1114
    %v1240 = vmul.f32 %v1239, %v1238
    %v1241 = vmul.f32 0.5, %v1240
    %v1242 = vsub.f32 1.5, %v1241
    %v1243 = vmul.f32 %v1238, %v1242
    %vm1244 = vweird.f32 %v1114
    %vm1245 = vweird.f32 %v1238
    %vm1246 = vmor %vm1244, %vm1245
    %v1247 = vsel %vm1246, %v1238, %v1243
    %v1248 = vrsqrt.pop %v1115
    %v1249 = vmul.f32 %v1248, %v1115
    %v1250 = vmul.f32 %v1249, %v1248
    %v1251 = vmul.f32 0.5, %v1250
    %v1252 = vsub.f32 1.5, %v1251
    %v1253 = vmul.f32 %v1248, %v1252
    %vm1254 = vweird.f32 %v1115
    %vm1255 = vweird.f32 %v1248
    %vm1256 = vmor %vm1254, %vm1255
    %v1257 = vsel %vm1256, %v1248, %v1253
    %v1258 = vrsqrt.pop %v1116
    %v1259 = vmul.f32 %v1258, %v1116
    %v1260 = vmul.f32 %v1259, %v1258
    %v1261 = vmul.f32 0.5, %v1260
    %v1262 = vsub.f32 1.5, %v1261
    %v1263 = vmul.f32 %v1258, %v1262
    %vm1264 = vweird.f32 %v1116
    %vm1265 = vweird.f32 %v1258
    %vm1266 = vmor %vm1264, %vm1265
    %v1267 = vsel %vm1266, %v1258, %v1263
    %v1268 = vrsqrt.pop %v1117
    %v1269 = vmul.f32 %v1268, %v1117
    %v1270 = vmul.f32 %v1269, %v1268
    %v1271 = vmul.f32 0.5, %v1270
    %v1272 = vsub.f32 1.5, %v1271
    %v1273 = vmul.f32 %v1268, %v1272
    %vm1274 = vweird.f32 %v1117
    %vm1275 = vweird.f32 %v1268
    %vm1276 = vmor %vm1274, %vm1275
    %v1277 = vsel %vm1276, %v1268, %v1273
    %v1278 = vmul.f32 %v1086, %v1127
    %v1279 = vmul.f32 %v1087, %v1137
    %v1280 = vmul.f32 %v1088, %v1147
    %v1281 = vmul.f32 %v1089, %v1157
    %v1282 = vmul.f32 %v1090, %v1167
    %v1283 = vmul.f32 %v1091, %v1177
    %v1284 = vmul.f32 %v1092, %v1187
    %v1285 = vmul.f32 %v1093, %v1197
    %v1286 = vmul.f32 %v1094, %v1207
    %v1287 = vmul.f32 %v1095, %v1217
    %v1288 = vmul.f32 %v1096, %v1227
    %v1289 = vmul.f32 %v1097, %v1237
    %v1290 = vmul.f32 %v1098, %v1247
    %v1291 = vmul.f32 %v1099, %v1257
    %v1292 = vmul.f32 %v1100, %v1267
    %v1293 = vmul.f32 %v1101, %v1277
    %v1295 = vperm.slane %v933, 0
    %v1297 = vmul.f32 %v1278, %v1295
    %v1298 = vmul.f32 %v1279, %v1295
    %v1299 = vmul.f32 %v1280, %v1295
    %v1300 = vmul.f32 %v1281, %v1295
    %v1301 = vmul.f32 %v1282, %v1295
    %v1302 = vmul.f32 %v1283, %v1295
    %v1303 = vmul.f32 %v1284, %v1295
    %v1304 = vmul.f32 %v1285, %v1295
    %v1305 = vmul.f32 %v1286, %v1295
    %v1306 = vmul.f32 %v1287, %v1295
    %v1307 = vmul.f32 %v1288, %v1295
    %v1308 = vmul.f32 %v1289, %v1295
    %v1309 = vmul.f32 %v1290, %v1295
    %v1310 = vmul.f32 %v1291, %v1295
    %v1311 = vmul.f32 %v1292, %v1295
    %v1312 = vmul.f32 %v1293, %v1295
    %v1314 = vperm.slane %v934, 0
    %v1316 = vadd.f32 %v1297, %v1314
    %v1317 = vadd.f32 %v1298, %v1314
    %v1318 = vadd.f32 %v1299, %v1314
    %v1319 = vadd.f32 %v1300, %v1314
    %v1320 = vadd.f32 %v1301, %v1314
    %v1321 = vadd.f32 %v1302, %v1314
    %v1322 = vadd.f32 %v1303, %v1314
    %v1323 = vadd.f32 %v1304, %v1314
    %v1324 = vadd.f32 %v1305, %v1314
    %v1325 = vadd.f32 %v1306, %v1314
    %v1326 = vadd.f32 %v1307, %v1314
    %v1327 = vadd.f32 %v1308, %v1314
    %v1328 = vadd.f32 %v1309, %v1314
    %v1329 = vadd.f32 %v1310, %v1314
    %v1330 = vadd.f32 %v1311, %v1314
    %v1331 = vadd.f32 %v1312, %v1314
    %v1332 = vld [vmem:[#allocation10] sm:$0xff]
    %v1333 = vld [vmem:[#allocation10 + $0x8] sm:$0xf]
    %v1334 = vld [vmem:[#allocation10 + $0xc] sm:$0xff]
    %v1335 = vld [vmem:[#allocation10 + $0x14] sm:$0xf]
    %v1336 = vld [vmem:[#allocation10 + $0x18] sm:$0xff]
    %v1337 = vld [vmem:[#allocation10 + $0x20] sm:$0xf]
    %v1338 = vld [vmem:[#allocation10 + $0x24] sm:$0xff]
    %v1339 = vld [vmem:[#allocation10 + $0x2c] sm:$0xf]
    %v1340 = vld [vmem:[#allocation10 + $0x30] sm:$0xff]
    %v1341 = vld [vmem:[#allocation10 + $0x38] sm:$0xf]
    %v1342 = vld [vmem:[#allocation10 + $0x3c] sm:$0xff]
    %v1343 = vld [vmem:[#allocation10 + $0x44] sm:$0xf]
    %v1344 = vld [vmem:[#allocation10 + $0x48] sm:$0xff]
    %v1345 = vld [vmem:[#allocation10 + $0x50] sm:$0xf]
    %v1346 = vld [vmem:[#allocation10 + $0x54] sm:$0xff]
    %v1347 = vld [vmem:[#allocation10 + $0x5c] sm:$0xf]
    %v1348 = vld [vmem:[#allocation10 + $0x60] sm:$0xff]
    %v1349 = vld [vmem:[#allocation10 + $0x68] sm:$0xf]
    %v1350 = vld [vmem:[#allocation10 + $0x6c] sm:$0xff]
    %v1351 = vld [vmem:[#allocation10 + $0x74] sm:$0xf]
    %v1352 = vld [vmem:[#allocation10 + $0x78] sm:$0xff]
    %v1353 = vld [vmem:[#allocation10 + $0x80] sm:$0xf]
    %v1354 = vld [vmem:[#allocation10 + $0x84] sm:$0xff]
    %v1355 = vld [vmem:[#allocation10 + $0x8c] sm:$0xf]
    %v1356 = vld [vmem:[#allocation10 + $0x90] sm:$0xff]
    %v1357 = vld [vmem:[#allocation10 + $0x98] sm:$0xf]
    %v1358 = vld [vmem:[#allocation10 + $0x9c] sm:$0xff]
    %v1359 = vld [vmem:[#allocation10 + $0xa4] sm:$0xf]
    %v1360 = vld [vmem:[#allocation10 + $0xa8] sm:$0xff]
    %v1361 = vld [vmem:[#allocation10 + $0xb0] sm:$0xf]
    %v1362 = vld [vmem:[#allocation10 + $0xb4] sm:$0xff]
    %v1363 = vld [vmem:[#allocation10 + $0xbc] sm:$0xf]
    %v1364 = vpack.c.bf16 %v1317, %v1316
    %v1365 = vpack.c.bf16 %v1319, %v1318
    %v1366 = vpack.c.bf16 %v1321, %v1320
    %v1367 = vpack.c.bf16 %v1323, %v1322
    %v1368 = vpack.c.bf16 %v1325, %v1324
    %v1369 = vpack.c.bf16 %v1327, %v1326
    %v1370 = vpack.c.bf16 %v1329, %v1328
    %v1371 = vpack.c.bf16 %v1331, %v1330
    %v1404 = vunpack.c.l.b16 %v1332
    %v1405 = vunpack.c.h.b16 %v1332
    %v1406 = vunpack.c.l.b16 %v1333
    %v1407 = vunpack.c.l.b16 %v1334
    %v1408 = vunpack.c.h.b16 %v1334
    %v1409 = vunpack.c.l.b16 %v1335
    %v1410 = vunpack.c.l.b16 %v1336
    %v1411 = vunpack.c.h.b16 %v1336
    %v1412 = vunpack.c.l.b16 %v1337
    %v1413 = vunpack.c.l.b16 %v1338
    %v1414 = vunpack.c.h.b16 %v1338
    %v1415 = vunpack.c.l.b16 %v1339
    %v1416 = vunpack.c.l.b16 %v1340
    %v1417 = vunpack.c.h.b16 %v1340
    %v1418 = vunpack.c.l.b16 %v1341
    %v1419 = vunpack.c.l.b16 %v1342
    %v1420 = vunpack.c.h.b16 %v1342
    %v1421 = vunpack.c.l.b16 %v1343
    %v1422 = vunpack.c.l.b16 %v1344
    %v1423 = vunpack.c.h.b16 %v1344
    %v1424 = vunpack.c.l.b16 %v1345
    %v1425 = vunpack.c.l.b16 %v1346
    %v1426 = vunpack.c.h.b16 %v1346
    %v1427 = vunpack.c.l.b16 %v1347
    %v1428 = vunpack.c.l.b16 %v1348
    %v1429 = vunpack.c.h.b16 %v1348
    %v1430 = vunpack.c.l.b16 %v1349
    %v1431 = vunpack.c.l.b16 %v1350
    %v1432 = vunpack.c.h.b16 %v1350
    %v1433 = vunpack.c.l.b16 %v1351
    %v1434 = vunpack.c.l.b16 %v1352
    %v1435 = vunpack.c.h.b16 %v1352
    %v1436 = vunpack.c.l.b16 %v1353
    %v1437 = vunpack.c.l.b16 %v1354
    %v1438 = vunpack.c.h.b16 %v1354
    %v1439 = vunpack.c.l.b16 %v1355
    %v1440 = vunpack.c.l.b16 %v1356
    %v1441 = vunpack.c.h.b16 %v1356
    %v1442 = vunpack.c.l.b16 %v1357
    %v1443 = vunpack.c.l.b16 %v1358
    %v1444 = vunpack.c.h.b16 %v1358
    %v1445 = vunpack.c.l.b16 %v1359
    %v1446 = vunpack.c.l.b16 %v1360
    %v1447 = vunpack.c.h.b16 %v1360
    %v1448 = vunpack.c.l.b16 %v1361
    %v1449 = vunpack.c.l.b16 %v1362
    %v1450 = vunpack.c.h.b16 %v1362
    %v1451 = vunpack.c.l.b16 %v1363
    %v1452 = vpack.c.b16 %v1407, %v1404
    %v1453 = vpack.c.b16 %v1408, %v1405
    %v1454 = vpack.c.b16 %v1409, %v1406
    %v1455 = vpack.c.b16 %v1413, %v1410
    %v1456 = vpack.c.b16 %v1414, %v1411
    %v1457 = vpack.c.b16 %v1415, %v1412
    %v1458 = vpack.c.b16 %v1419, %v1416
    %v1459 = vpack.c.b16 %v1420, %v1417
    %v1460 = vpack.c.b16 %v1421, %v1418
    %v1461 = vpack.c.b16 %v1425, %v1422
    %v1462 = vpack.c.b16 %v1426, %v1423
    %v1463 = vpack.c.b16 %v1427, %v1424
    %v1464 = vpack.c.b16 %v1431, %v1428
    %v1465 = vpack.c.b16 %v1432, %v1429
    %v1466 = vpack.c.b16 %v1433, %v1430
    %v1467 = vpack.c.b16 %v1437, %v1434
    %v1468 = vpack.c.b16 %v1438, %v1435
    %v1469 = vpack.c.b16 %v1439, %v1436
    %v1470 = vpack.c.b16 %v1443, %v1440
    %v1471 = vpack.c.b16 %v1444, %v1441
    %v1472 = vpack.c.b16 %v1445, %v1442
    %v1473 = vpack.c.b16 %v1449, %v1446
    %v1474 = vpack.c.b16 %v1450, %v1447
    %v1475 = vpack.c.b16 %v1451, %v1448
    %1500 = vmatpush.bf16.msra.mxu0 %v1473
    %1501 = vmatpush.bf16.msra.mxu0 %v1470
    %1502 = vmatpush.bf16.msra.mxu0 %v1467
    %1503 = vmatpush.bf16.msra.mxu0 %v1464
    %1504 = vmatpush.bf16.msra.mxu0 %v1461
    %1505 = vmatpush.bf16.msra.mxu0 %v1458
    %1506 = vmatpush.bf16.msra.mxu0 %v1455
    %1507 = vmatpush.bf16.msra.mxu0 %v1452
    %1508 = vmatmul.bf16.gmra.mxu0 %v1364
    %v1509 = vpop.f32.mrf.mxu0
    %v1510 = vadd.f32 0.0, %v1509
    %v1511 = vpop.f32.mrf.mxu0
    %v1512 = vadd.f32 0.0, %v1511
    %1513 = vmatmul.bf16.gmra.mxu0 %v1365
    %v1514 = vpop.f32.mrf.mxu0
    %v1515 = vadd.f32 0.0, %v1514
    %v1516 = vpop.f32.mrf.mxu0
    %v1517 = vadd.f32 0.0, %v1516
    %1518 = vmatmul.bf16.gmra.mxu0 %v1366
    %v1519 = vpop.f32.mrf.mxu0
    %v1520 = vadd.f32 0.0, %v1519
    %v1521 = vpop.f32.mrf.mxu0
    %v1522 = vadd.f32 0.0, %v1521
    %1523 = vmatmul.bf16.gmra.mxu0 %v1367
    %v1524 = vpop.f32.mrf.mxu0
    %v1525 = vadd.f32 0.0, %v1524
    %v1526 = vpop.f32.mrf.mxu0
    %v1527 = vadd.f32 0.0, %v1526
    %1528 = vmatmul.bf16.gmra.mxu0 %v1368
    %v1529 = vpop.f32.mrf.mxu0
    %v1530 = vadd.f32 0.0, %v1529
    %v1531 = vpop.f32.mrf.mxu0
    %v1532 = vadd.f32 0.0, %v1531
    %1533 = vmatmul.bf16.gmra.mxu0 %v1369
    %v1534 = vpop.f32.mrf.mxu0
    %v1535 = vadd.f32 0.0, %v1534
    %v1536 = vpop.f32.mrf.mxu0
    %v1537 = vadd.f32 0.0, %v1536
    %1538 = vmatmul.bf16.gmra.mxu0 %v1370
    %v1539 = vpop.f32.mrf.mxu0
    %v1540 = vadd.f32 0.0, %v1539
    %v1541 = vpop.f32.mrf.mxu0
    %v1542 = vadd.f32 0.0, %v1541
    %1543 = vmatmul.bf16.gmra.mxu0 %v1371
    %v1544 = vpop.f32.mrf.mxu0
    %v1545 = vadd.f32 0.0, %v1544
    %v1546 = vpop.f32.mrf.mxu0
    %v1547 = vadd.f32 0.0, %v1546
    %1548 = vdwg.mxu0
    %1549 = vmatpush.bf16.msra.mxu0 %v1474
    %1550 = vmatpush.bf16.msra.mxu0 %v1471
    %1551 = vmatpush.bf16.msra.mxu0 %v1468
    %1552 = vmatpush.bf16.msra.mxu0 %v1465
    %1553 = vmatpush.bf16.msra.mxu0 %v1462
    %1554 = vmatpush.bf16.msra.mxu0 %v1459
    %1555 = vmatpush.bf16.msra.mxu0 %v1456
    %1556 = vmatpush.bf16.msra.mxu0 %v1453
    %1557 = vmatmul.bf16.gmra.mxu0 %v1364
    %v1558 = vpop.f32.mrf.mxu0
    %v1559 = vadd.f32 0.0, %v1558
    %v1560 = vpop.f32.mrf.mxu0
    %v1561 = vadd.f32 0.0, %v1560
    %1562 = vmatmul.bf16.gmra.mxu0 %v1365
    %v1563 = vpop.f32.mrf.mxu0
    %v1564 = vadd.f32 0.0, %v1563
    %v1565 = vpop.f32.mrf.mxu0
    %v1566 = vadd.f32 0.0, %v1565
    %1567 = vmatmul.bf16.gmra.mxu0 %v1366
    %v1568 = vpop.f32.mrf.mxu0
    %v1569 = vadd.f32 0.0, %v1568
    %v1570 = vpop.f32.mrf.mxu0
    %v1571 = vadd.f32 0.0, %v1570
    %1572 = vmatmul.bf16.gmra.mxu0 %v1367
    %v1573 = vpop.f32.mrf.mxu0
    %v1574 = vadd.f32 0.0, %v1573
    %v1575 = vpop.f32.mrf.mxu0
    %v1576 = vadd.f32 0.0, %v1575
    %1577 = vmatmul.bf16.gmra.mxu0 %v1368
    %v1578 = vpop.f32.mrf.mxu0
    %v1579 = vadd.f32 0.0, %v1578
    %v1580 = vpop.f32.mrf.mxu0
    %v1581 = vadd.f32 0.0, %v1580
    %1582 = vmatmul.bf16.gmra.mxu0 %v1369
    %v1583 = vpop.f32.mrf.mxu0
    %v1584 = vadd.f32 0.0, %v1583
    %v1585 = vpop.f32.mrf.mxu0
    %v1586 = vadd.f32 0.0, %v1585
    %1587 = vmatmul.bf16.gmra.mxu0 %v1370
    %v1588 = vpop.f32.mrf.mxu0
    %v1589 = vadd.f32 0.0, %v1588
    %v1590 = vpop.f32.mrf.mxu0
    %v1591 = vadd.f32 0.0, %v1590
    %1592 = vmatmul.bf16.gmra.mxu0 %v1371
    %v1593 = vpop.f32.mrf.mxu0
    %v1594 = vadd.f32 0.0, %v1593
    %v1595 = vpop.f32.mrf.mxu0
    %v1596 = vadd.f32 0.0, %v1595
    %1597 = vdwg.mxu0
    %1598 = vmatpush.bf16.msra.mxu0 %v1475
    %1599 = vmatpush.bf16.msra.mxu0 %v1472
    %1600 = vmatpush.bf16.msra.mxu0 %v1469
    %1601 = vmatpush.bf16.msra.mxu0 %v1466
    %1602 = vmatpush.bf16.msra.mxu0 %v1463
    %1603 = vmatpush.bf16.msra.mxu0 %v1460
    %1604 = vmatpush.bf16.msra.mxu0 %v1457
    %1605 = vmatpush.bf16.msra.mxu0 %v1454
    %1606 = vmatmul.bf16.gmra.mxu0 %v1364
    %v1607 = vpop.f32.mrf.mxu0
    %v1608 = vadd.f32 0.0, %v1607
    %v1609 = vpop.f32.mrf.mxu0
    %v1610 = vadd.f32 0.0, %v1609
    %1611 = vmatmul.bf16.gmra.mxu0 %v1365
    %v1612 = vpop.f32.mrf.mxu0
    %v1613 = vadd.f32 0.0, %v1612
    %v1614 = vpop.f32.mrf.mxu0
    %v1615 = vadd.f32 0.0, %v1614
    %1616 = vmatmul.bf16.gmra.mxu0 %v1366
    %v1617 = vpop.f32.mrf.mxu0
    %v1618 = vadd.f32 0.0, %v1617
    %v1619 = vpop.f32.mrf.mxu0
    %v1620 = vadd.f32 0.0, %v1619
    %1621 = vmatmul.bf16.gmra.mxu0 %v1367
    %v1622 = vpop.f32.mrf.mxu0
    %v1623 = vadd.f32 0.0, %v1622
    %v1624 = vpop.f32.mrf.mxu0
    %v1625 = vadd.f32 0.0, %v1624
    %1626 = vmatmul.bf16.gmra.mxu0 %v1368
    %v1627 = vpop.f32.mrf.mxu0
    %v1628 = vadd.f32 0.0, %v1627
    %v1629 = vpop.f32.mrf.mxu0
    %v1630 = vadd.f32 0.0, %v1629
    %1631 = vmatmul.bf16.gmra.mxu0 %v1369
    %v1632 = vpop.f32.mrf.mxu0
    %v1633 = vadd.f32 0.0, %v1632
    %v1634 = vpop.f32.mrf.mxu0
    %v1635 = vadd.f32 0.0, %v1634
    %1636 = vmatmul.bf16.gmra.mxu0 %v1370
    %v1637 = vpop.f32.mrf.mxu0
    %v1638 = vadd.f32 0.0, %v1637
    %v1639 = vpop.f32.mrf.mxu0
    %v1640 = vadd.f32 0.0, %v1639
    %1641 = vmatmul.bf16.gmra.mxu0 %v1371
    %v1642 = vpop.f32.mrf.mxu0
    %v1643 = vadd.f32 0.0, %v1642
    %v1644 = vpop.f32.mrf.mxu0
    %v1645 = vadd.f32 0.0, %v1644
    %1646 = vdwg.mxu0
    %v1647 = vpack.c.bf16 %v1559, %v1510
    %v1648 = vpack.c.bf16 %v1608, %v1608
    %v1649 = vpack.c.bf16 %v1561, %v1512
    %v1650 = vpack.c.bf16 %v1610, %v1610
    %v1651 = vpack.c.bf16 %v1564, %v1515
    %v1652 = vpack.c.bf16 %v1613, %v1613
    %v1653 = vpack.c.bf16 %v1566, %v1517
    %v1654 = vpack.c.bf16 %v1615, %v1615
    %v1655 = vpack.c.bf16 %v1569, %v1520
    %v1656 = vpack.c.bf16 %v1618, %v1618
    %v1657 = vpack.c.bf16 %v1571, %v1522
    %v1658 = vpack.c.bf16 %v1620, %v1620
    %v1659 = vpack.c.bf16 %v1574, %v1525
    %v1660 = vpack.c.bf16 %v1623, %v1623
    %v1661 = vpack.c.bf16 %v1576, %v1527
    %v1662 = vpack.c.bf16 %v1625, %v1625
    %v1663 = vpack.c.bf16 %v1579, %v1530
    %v1664 = vpack.c.bf16 %v1628, %v1628
    %v1665 = vpack.c.bf16 %v1581, %v1532
    %v1666 = vpack.c.bf16 %v1630, %v1630
    %v1667 = vpack.c.bf16 %v1584, %v1535
    %v1668 = vpack.c.bf16 %v1633, %v1633
    %v1669 = vpack.c.bf16 %v1586, %v1537
    %v1670 = vpack.c.bf16 %v1635, %v1635
    %v1671 = vpack.c.bf16 %v1589, %v1540
    %v1672 = vpack.c.bf16 %v1638, %v1638
    %v1673 = vpack.c.bf16 %v1591, %v1542
    %v1674 = vpack.c.bf16 %v1640, %v1640
    %v1675 = vpack.c.bf16 %v1594, %v1545
    %v1676 = vpack.c.bf16 %v1643, %v1643
    %v1677 = vpack.c.bf16 %v1596, %v1547
    %v1678 = vpack.c.bf16 %v1645, %v1645
    %v1695 = vunpack.c.l.b16 %v1647
    %v1696 = vunpack.c.l.b16 %v1649
    %v1697 = vunpack.c.l.b16 %v1651
    %v1698 = vunpack.c.l.b16 %v1653
    %v1699 = vunpack.c.l.b16 %v1655
    %v1700 = vunpack.c.l.b16 %v1657
    %v1701 = vunpack.c.l.b16 %v1659
    %v1702 = vunpack.c.l.b16 %v1661
    %v1703 = vunpack.c.l.b16 %v1663
    %v1704 = vunpack.c.l.b16 %v1665
    %v1705 = vunpack.c.l.b16 %v1667
    %v1706 = vunpack.c.l.b16 %v1669
    %v1707 = vunpack.c.l.b16 %v1671
    %v1708 = vunpack.c.l.b16 %v1673
    %v1709 = vunpack.c.l.b16 %v1675
    %v1710 = vunpack.c.l.b16 %v1677
    %v1711 = vpack.c.b16 %v1696, %v1695
    %v1712 = vpack.c.b16 %v1698, %v1697
    %v1713 = vpack.c.b16 %v1700, %v1699
    %v1714 = vpack.c.b16 %v1702, %v1701
    %v1715 = vpack.c.b16 %v1704, %v1703
    %v1716 = vpack.c.b16 %v1706, %v1705
    %v1717 = vpack.c.b16 %v1708, %v1707
    %v1718 = vpack.c.b16 %v1710, %v1709
    %v1719 = vunpack.c.h.b16 %v1647
    %v1720 = vunpack.c.h.b16 %v1649
    %v1721 = vunpack.c.h.b16 %v1651
    %v1722 = vunpack.c.h.b16 %v1653
    %v1723 = vunpack.c.h.b16 %v1655
    %v1724 = vunpack.c.h.b16 %v1657
    %v1725 = vunpack.c.h.b16 %v1659
    %v1726 = vunpack.c.h.b16 %v1661
    %v1727 = vunpack.c.h.b16 %v1663
    %v1728 = vunpack.c.h.b16 %v1665
    %v1729 = vunpack.c.h.b16 %v1667
    %v1730 = vunpack.c.h.b16 %v1669
    %v1731 = vunpack.c.h.b16 %v1671
    %v1732 = vunpack.c.h.b16 %v1673
    %v1733 = vunpack.c.h.b16 %v1675
    %v1734 = vunpack.c.h.b16 %v1677
    %v1735 = vpack.c.b16 %v1720, %v1719
    %v1736 = vpack.c.b16 %v1722, %v1721
    %v1737 = vpack.c.b16 %v1724, %v1723
    %v1738 = vpack.c.b16 %v1726, %v1725
    %v1739 = vpack.c.b16 %v1728, %v1727
    %v1740 = vpack.c.b16 %v1730, %v1729
    %v1741 = vpack.c.b16 %v1732, %v1731
    %v1742 = vpack.c.b16 %v1734, %v1733
    %vm1743 = vcmask 261120
    %v1745 = vsel %vm1743, %v1711, 0
    %v1748 = vsel %vm1743, %v1712, 0
    %v1751 = vsel %vm1743, %v1713, 0
    %v1754 = vsel %vm1743, %v1714, 0
    %v1757 = vsel %vm1743, %v1715, 0
    %v1760 = vsel %vm1743, %v1716, 0
    %v1763 = vsel %vm1743, %v1717, 0
    %v1766 = vsel %vm1743, %v1718, 0
    %v1769 = vsel %vm1743, %v1735, 0
    %v1772 = vsel %vm1743, %v1736, 0
    %v1775 = vsel %vm1743, %v1737, 0
    %v1778 = vsel %vm1743, %v1738, 0
    %v1781 = vsel %vm1743, %v1739, 0
    %v1784 = vsel %vm1743, %v1740, 0
    %v1787 = vsel %vm1743, %v1741, 0
    %v1790 = vsel %vm1743, %v1742, 0
    %1792 = vmatpush.bf16.xpose.msra.mxu0 %v1790
    %1793 = vmatpush.bf16.xpose.msra.mxu0 %v1787
    %1794 = vmatpush.bf16.xpose.msra.mxu0 %v1784
    %1795 = vmatpush.bf16.xpose.msra.mxu0 %v1781
    %1796 = vmatpush.bf16.xpose.msra.mxu0 %v1778
    %1797 = vmatpush.bf16.xpose.msra.mxu0 %v1775
    %1798 = vmatpush.bf16.xpose.msra.mxu0 %v1772
    %1799 = vmatpush.bf16.xpose.msra.mxu0 %v1769
    %1800 = vmatmul.bf16.gmra.mxu0 %v1745
    %v1801 = vpop.f32.mrf.mxu0
    %v1802 = vadd.f32 0.0, %v1801
    %v1803 = vpop.f32.mrf.mxu0
    %v1804 = vadd.f32 0.0, %v1803
    %1805 = vmatmul.bf16.gmra.mxu0 %v1748
    %v1806 = vpop.f32.mrf.mxu0
    %v1807 = vadd.f32 0.0, %v1806
    %v1808 = vpop.f32.mrf.mxu0
    %v1809 = vadd.f32 0.0, %v1808
    %1810 = vmatmul.bf16.gmra.mxu0 %v1751
    %v1811 = vpop.f32.mrf.mxu0
    %v1812 = vadd.f32 0.0, %v1811
    %v1813 = vpop.f32.mrf.mxu0
    %v1814 = vadd.f32 0.0, %v1813
    %1815 = vmatmul.bf16.gmra.mxu0 %v1754
    %v1816 = vpop.f32.mrf.mxu0
    %v1817 = vadd.f32 0.0, %v1816
    %v1818 = vpop.f32.mrf.mxu0
    %v1819 = vadd.f32 0.0, %v1818
    %1820 = vmatmul.bf16.gmra.mxu0 %v1757
    %v1821 = vpop.f32.mrf.mxu0
    %v1822 = vadd.f32 0.0, %v1821
    %v1823 = vpop.f32.mrf.mxu0
    %v1824 = vadd.f32 0.0, %v1823
    %1825 = vmatmul.bf16.gmra.mxu0 %v1760
    %v1826 = vpop.f32.mrf.mxu0
    %v1827 = vadd.f32 0.0, %v1826
    %v1828 = vpop.f32.mrf.mxu0
    %v1829 = vadd.f32 0.0, %v1828
    %1830 = vmatmul.bf16.gmra.mxu0 %v1763
    %v1831 = vpop.f32.mrf.mxu0
    %v1832 = vadd.f32 0.0, %v1831
    %v1833 = vpop.f32.mrf.mxu0
    %v1834 = vadd.f32 0.0, %v1833
    %1835 = vmatmul.bf16.gmra.mxu0 %v1766
    %v1836 = vpop.f32.mrf.mxu0
    %v1837 = vadd.f32 0.0, %v1836
    %v1838 = vpop.f32.mrf.mxu0
    %v1839 = vadd.f32 0.0, %v1838
    %1840 = vdwg.mxu0
    %v1841 = vmul.f32 %v1802, 0.088388346
    %v1842 = vmul.f32 %v1804, 0.088388346
    %v1843 = vmul.f32 %v1807, 0.088388346
    %v1844 = vmul.f32 %v1809, 0.088388346
    %v1845 = vmul.f32 %v1812, 0.088388346
    %v1846 = vmul.f32 %v1814, 0.088388346
    %v1847 = vmul.f32 %v1817, 0.088388346
    %v1848 = vmul.f32 %v1819, 0.088388346
    %v1849 = vmul.f32 %v1822, 0.088388346
    %v1850 = vmul.f32 %v1824, 0.088388346
    %v1851 = vmul.f32 %v1827, 0.088388346
    %v1852 = vmul.f32 %v1829, 0.088388346
    %v1853 = vmul.f32 %v1832, 0.088388346
    %v1854 = vmul.f32 %v1834, 0.088388346
    %v1855 = vmul.f32 %v1837, 0.088388346
    %v1856 = vmul.f32 %v1839, 0.088388346
    %v1857 = vsel %vm917, %v1841, -1e+30
    %v1858 = vsel %vm918, %v1842, -1e+30
    %v1859 = vsel %vm919, %v1843, -1e+30
    %v1860 = vsel %vm920, %v1844, -1e+30
    %v1861 = vsel %vm921, %v1845, -1e+30
    %v1862 = vsel %vm922, %v1846, -1e+30
    %v1863 = vsel %vm923, %v1847, -1e+30
    %v1864 = vsel %vm924, %v1848, -1e+30
    %v1865 = vsel %vm925, %v1849, -1e+30
    %v1866 = vsel %vm926, %v1850, -1e+30
    %v1867 = vsel %vm927, %v1851, -1e+30
    %v1868 = vsel %vm928, %v1852, -1e+30
    %v1869 = vsel %vm929, %v1853, -1e+30
    %v1870 = vsel %vm930, %v1854, -1e+30
    %v1871 = vsel %vm931, %v1855, -1e+30
    %v1872 = vsel %vm932, %v1856, -1e+30
    %1873 = vmax.xlane.f32.xlu0 %v1857
    %v1874 = vpop.xlane.xlu0 %1873
    %1875 = vmax.xlane.f32.xlu0 %v1858
    %v1876 = vpop.xlane.xlu0 %1875
    %1877 = vmax.xlane.f32.xlu0 %v1859
    %v1878 = vpop.xlane.xlu0 %1877
    %1879 = vmax.xlane.f32.xlu0 %v1860
    %v1880 = vpop.xlane.xlu0 %1879
    %1881 = vmax.xlane.f32.xlu0 %v1861
    %v1882 = vpop.xlane.xlu0 %1881
    %1883 = vmax.xlane.f32.xlu0 %v1862
    %v1884 = vpop.xlane.xlu0 %1883
    %1885 = vmax.xlane.f32.xlu0 %v1863
    %v1886 = vpop.xlane.xlu0 %1885
    %1887 = vmax.xlane.f32.xlu0 %v1864
    %v1888 = vpop.xlane.xlu0 %1887
    %1889 = vmax.xlane.f32.xlu0 %v1865
    %v1890 = vpop.xlane.xlu0 %1889
    %1891 = vmax.xlane.f32.xlu0 %v1866
    %v1892 = vpop.xlane.xlu0 %1891
    %1893 = vmax.xlane.f32.xlu0 %v1867
    %v1894 = vpop.xlane.xlu0 %1893
    %1895 = vmax.xlane.f32.xlu0 %v1868
    %v1896 = vpop.xlane.xlu0 %1895
    %1897 = vmax.xlane.f32.xlu0 %v1869
    %v1898 = vpop.xlane.xlu0 %1897
    %1899 = vmax.xlane.f32.xlu0 %v1870
    %v1900 = vpop.xlane.xlu0 %1899
    %1901 = vmax.xlane.f32.xlu0 %v1871
    %v1902 = vpop.xlane.xlu0 %1901
    %1903 = vmax.xlane.f32.xlu0 %v1872
    %v1904 = vpop.xlane.xlu0 %1903
    %v1905 = vsub.f32 %v1857, %v1874
    %v1906 = vsub.f32 %v1858, %v1876
    %v1907 = vsub.f32 %v1859, %v1878
    %v1908 = vsub.f32 %v1860, %v1880
    %v1909 = vsub.f32 %v1861, %v1882
    %v1910 = vsub.f32 %v1862, %v1884
    %v1911 = vsub.f32 %v1863, %v1886
    %v1912 = vsub.f32 %v1864, %v1888
    %v1913 = vsub.f32 %v1865, %v1890
    %v1914 = vsub.f32 %v1866, %v1892
    %v1915 = vsub.f32 %v1867, %v1894
    %v1916 = vsub.f32 %v1868, %v1896
    %v1917 = vsub.f32 %v1869, %v1898
    %v1918 = vsub.f32 %v1870, %v1900
    %v1919 = vsub.f32 %v1871, %v1902
    %v1920 = vsub.f32 %v1872, %v1904
    %v1921 = vmul.f32 %v1905, 1.442695
    %v1922 = vpow.pop %v1921
    %v1923 = vmul.f32 %v1906, 1.442695
    %v1924 = vpow.pop %v1923
    %v1925 = vmul.f32 %v1907, 1.442695
    %v1926 = vpow.pop %v1925
    %v1927 = vmul.f32 %v1908, 1.442695
    %v1928 = vpow.pop %v1927
    %v1929 = vmul.f32 %v1909, 1.442695
    %v1930 = vpow.pop %v1929
    %v1931 = vmul.f32 %v1910, 1.442695
    %v1932 = vpow.pop %v1931
    %v1933 = vmul.f32 %v1911, 1.442695
    %v1934 = vpow.pop %v1933
    %v1935 = vmul.f32 %v1912, 1.442695
    %v1936 = vpow.pop %v1935
    %v1937 = vmul.f32 %v1913, 1.442695
    %v1938 = vpow.pop %v1937
    %v1939 = vmul.f32 %v1914, 1.442695
    %v1940 = vpow.pop %v1939
    %v1941 = vmul.f32 %v1915, 1.442695
    %v1942 = vpow.pop %v1941
    %v1943 = vmul.f32 %v1916, 1.442695
    %v1944 = vpow.pop %v1943
    %v1945 = vmul.f32 %v1917, 1.442695
    %v1946 = vpow.pop %v1945
    %v1947 = vmul.f32 %v1918, 1.442695
    %v1948 = vpow.pop %v1947
    %v1949 = vmul.f32 %v1919, 1.442695
    %v1950 = vpow.pop %v1949
    %v1951 = vmul.f32 %v1920, 1.442695
    %v1952 = vpow.pop %v1951
    %1953 = vadd.xlane.f32.xlu0 %v1922
    %v1954 = vpop.xlane.xlu0 %1953
    %1955 = vadd.xlane.f32.xlu0 %v1924
    %v1956 = vpop.xlane.xlu0 %1955
    %1957 = vadd.xlane.f32.xlu0 %v1926
    %v1958 = vpop.xlane.xlu0 %1957
    %1959 = vadd.xlane.f32.xlu0 %v1928
    %v1960 = vpop.xlane.xlu0 %1959
    %1961 = vadd.xlane.f32.xlu0 %v1930
    %v1962 = vpop.xlane.xlu0 %1961
    %1963 = vadd.xlane.f32.xlu0 %v1932
    %v1964 = vpop.xlane.xlu0 %1963
    %1965 = vadd.xlane.f32.xlu0 %v1934
    %v1966 = vpop.xlane.xlu0 %1965
    %1967 = vadd.xlane.f32.xlu0 %v1936
    %v1968 = vpop.xlane.xlu0 %1967
    %1969 = vadd.xlane.f32.xlu0 %v1938
    %v1970 = vpop.xlane.xlu0 %1969
    %1971 = vadd.xlane.f32.xlu0 %v1940
    %v1972 = vpop.xlane.xlu0 %1971
    %1973 = vadd.xlane.f32.xlu0 %v1942
    %v1974 = vpop.xlane.xlu0 %1973
    %1975 = vadd.xlane.f32.xlu0 %v1944
    %v1976 = vpop.xlane.xlu0 %1975
    %1977 = vadd.xlane.f32.xlu0 %v1946
    %v1978 = vpop.xlane.xlu0 %1977
    %1979 = vadd.xlane.f32.xlu0 %v1948
    %v1980 = vpop.xlane.xlu0 %1979
    %1981 = vadd.xlane.f32.xlu0 %v1950
    %v1982 = vpop.xlane.xlu0 %1981
    %1983 = vadd.xlane.f32.xlu0 %v1952
    %v1984 = vpop.xlane.xlu0 %1983
    %v1985 = vrcp.pop %v1954
    %v1986 = vrcp.pop %v1956
    %v1987 = vrcp.pop %v1958
    %v1988 = vrcp.pop %v1960
    %v1989 = vrcp.pop %v1962
    %v1990 = vrcp.pop %v1964
    %v1991 = vrcp.pop %v1966
    %v1992 = vrcp.pop %v1968
    %v1993 = vrcp.pop %v1970
    %v1994 = vrcp.pop %v1972
    %v1995 = vrcp.pop %v1974
    %v1996 = vrcp.pop %v1976
    %v1997 = vrcp.pop %v1978
    %v1998 = vrcp.pop %v1980
    %v1999 = vrcp.pop %v1982
    %v2000 = vrcp.pop %v1984
    %v2001 = vmul.f32 %v1922, %v1985
    %v2002 = vmul.f32 %v1924, %v1986
    %v2003 = vmul.f32 %v1926, %v1987
    %v2004 = vmul.f32 %v1928, %v1988
    %v2005 = vmul.f32 %v1930, %v1989
    %v2006 = vmul.f32 %v1932, %v1990
    %v2007 = vmul.f32 %v1934, %v1991
    %v2008 = vmul.f32 %v1936, %v1992
    %v2009 = vmul.f32 %v1938, %v1993
    %v2010 = vmul.f32 %v1940, %v1994
    %v2011 = vmul.f32 %v1942, %v1995
    %v2012 = vmul.f32 %v1944, %v1996
    %v2013 = vmul.f32 %v1946, %v1997
    %v2014 = vmul.f32 %v1948, %v1998
    %v2015 = vmul.f32 %v1950, %v1999
    %v2016 = vmul.f32 %v1952, %v2000
    %v2017 = vpack.c.bf16 %v2002, %v2001
    %v2018 = vpack.c.bf16 %v2004, %v2003
    %v2019 = vpack.c.bf16 %v2006, %v2005
    %v2020 = vpack.c.bf16 %v2008, %v2007
    %v2021 = vpack.c.bf16 %v2010, %v2009
    %v2022 = vpack.c.bf16 %v2012, %v2011
    %v2023 = vpack.c.bf16 %v2014, %v2013
    %v2024 = vpack.c.bf16 %v2016, %v2015
    %v2041 = vunpack.c.l.b16 %v1648
    %v2042 = vunpack.c.l.b16 %v1650
    %v2043 = vunpack.c.l.b16 %v1652
    %v2044 = vunpack.c.l.b16 %v1654
    %v2045 = vunpack.c.l.b16 %v1656
    %v2046 = vunpack.c.l.b16 %v1658
    %v2047 = vunpack.c.l.b16 %v1660
    %v2048 = vunpack.c.l.b16 %v1662
    %v2049 = vunpack.c.l.b16 %v1664
    %v2050 = vunpack.c.l.b16 %v1666
    %v2051 = vunpack.c.l.b16 %v1668
    %v2052 = vunpack.c.l.b16 %v1670
    %v2053 = vunpack.c.l.b16 %v1672
    %v2054 = vunpack.c.l.b16 %v1674
    %v2055 = vunpack.c.l.b16 %v1676
    %v2056 = vunpack.c.l.b16 %v1678
    %v2057 = vpack.c.b16 %v2042, %v2041
    %v2058 = vpack.c.b16 %v2044, %v2043
    %v2059 = vpack.c.b16 %v2046, %v2045
    %v2060 = vpack.c.b16 %v2048, %v2047
    %v2061 = vpack.c.b16 %v2050, %v2049
    %v2062 = vpack.c.b16 %v2052, %v2051
    %v2063 = vpack.c.b16 %v2054, %v2053
    %v2064 = vpack.c.b16 %v2056, %v2055
    %2073 = vmatpush.bf16.msra.mxu0 %v2064
    %2074 = vmatpush.bf16.msra.mxu0 %v2063
    %2075 = vmatpush.bf16.msra.mxu0 %v2062
    %2076 = vmatpush.bf16.msra.mxu0 %v2061
    %2077 = vmatpush.bf16.msra.mxu0 %v2060
    %2078 = vmatpush.bf16.msra.mxu0 %v2059
    %2079 = vmatpush.bf16.msra.mxu0 %v2058
    %2080 = vmatpush.bf16.msra.mxu0 %v2057
    %2081 = vmatmul.bf16.gmra.mxu0 %v2017
    %v2082 = vpop.f32.mrf.mxu0
    %v2083 = vadd.f32 0.0, %v2082
    %v2084 = vpop.f32.mrf.mxu0
    %v2085 = vadd.f32 0.0, %v2084
    %2086 = vmatmul.bf16.gmra.mxu0 %v2018
    %v2087 = vpop.f32.mrf.mxu0
    %v2088 = vadd.f32 0.0, %v2087
    %v2089 = vpop.f32.mrf.mxu0
    %v2090 = vadd.f32 0.0, %v2089
    %2091 = vmatmul.bf16.gmra.mxu0 %v2019
    %v2092 = vpop.f32.mrf.mxu0
    %v2093 = vadd.f32 0.0, %v2092
    %v2094 = vpop.f32.mrf.mxu0
    %v2095 = vadd.f32 0.0, %v2094
    %2096 = vmatmul.bf16.gmra.mxu0 %v2020
    %v2097 = vpop.f32.mrf.mxu0
    %v2098 = vadd.f32 0.0, %v2097
    %v2099 = vpop.f32.mrf.mxu0
    %v2100 = vadd.f32 0.0, %v2099
    %2101 = vmatmul.bf16.gmra.mxu0 %v2021
    %v2102 = vpop.f32.mrf.mxu0
    %v2103 = vadd.f32 0.0, %v2102
    %v2104 = vpop.f32.mrf.mxu0
    %v2105 = vadd.f32 0.0, %v2104
    %2106 = vmatmul.bf16.gmra.mxu0 %v2022
    %v2107 = vpop.f32.mrf.mxu0
    %v2108 = vadd.f32 0.0, %v2107
    %v2109 = vpop.f32.mrf.mxu0
    %v2110 = vadd.f32 0.0, %v2109
    %2111 = vmatmul.bf16.gmra.mxu0 %v2023
    %v2112 = vpop.f32.mrf.mxu0
    %v2113 = vadd.f32 0.0, %v2112
    %v2114 = vpop.f32.mrf.mxu0
    %v2115 = vadd.f32 0.0, %v2114
    %2116 = vmatmul.bf16.gmra.mxu0 %v2024
    %v2117 = vpop.f32.mrf.mxu0
    %v2118 = vadd.f32 0.0, %v2117
    %v2119 = vpop.f32.mrf.mxu0
    %v2120 = vadd.f32 0.0, %v2119
    %2121 = vdwg.mxu0
    %v2122 = vpack.c.bf16 %v2083, %v2083
    %v2123 = vpack.c.bf16 %v2085, %v2085
    %v2124 = vpack.c.bf16 %v2088, %v2088
    %v2125 = vpack.c.bf16 %v2090, %v2090
    %v2126 = vpack.c.bf16 %v2093, %v2093
    %v2127 = vpack.c.bf16 %v2095, %v2095
    %v2128 = vpack.c.bf16 %v2098, %v2098
    %v2129 = vpack.c.bf16 %v2100, %v2100
    %v2130 = vpack.c.bf16 %v2103, %v2103
    %v2131 = vpack.c.bf16 %v2105, %v2105
    %v2132 = vpack.c.bf16 %v2108, %v2108
    %v2133 = vpack.c.bf16 %v2110, %v2110
    %v2134 = vpack.c.bf16 %v2113, %v2113
    %v2135 = vpack.c.bf16 %v2115, %v2115
    %v2136 = vpack.c.bf16 %v2118, %v2118
    %v2137 = vpack.c.bf16 %v2120, %v2120
    %2138 = vrot.lane.b32.xlu0 %v1711, 96
    %v2139 = vpop.permute.xlu0 %2138
    %2140 = vrot.lane.b32.xlu0 %v1712, 96
    %v2141 = vpop.permute.xlu0 %2140
    %2142 = vrot.lane.b32.xlu0 %v1713, 96
    %v2143 = vpop.permute.xlu0 %2142
    %2144 = vrot.lane.b32.xlu0 %v1714, 96
    %v2145 = vpop.permute.xlu0 %2144
    %2146 = vrot.lane.b32.xlu0 %v1715, 96
    %v2147 = vpop.permute.xlu0 %2146
    %2148 = vrot.lane.b32.xlu0 %v1716, 96
    %v2149 = vpop.permute.xlu0 %2148
    %2150 = vrot.lane.b32.xlu0 %v1717, 96
    %v2151 = vpop.permute.xlu0 %2150
    %2152 = vrot.lane.b32.xlu0 %v1718, 96
    %v2153 = vpop.permute.xlu0 %2152
    %2154 = vrot.lane.b32.xlu0 %v1735, 96
    %v2155 = vpop.permute.xlu0 %2154
    %2156 = vrot.lane.b32.xlu0 %v1736, 96
    %v2157 = vpop.permute.xlu0 %2156
    %2158 = vrot.lane.b32.xlu0 %v1737, 96
    %v2159 = vpop.permute.xlu0 %2158
    %2160 = vrot.lane.b32.xlu0 %v1738, 96
    %v2161 = vpop.permute.xlu0 %2160
    %2162 = vrot.lane.b32.xlu0 %v1739, 96
    %v2163 = vpop.permute.xlu0 %2162
    %2164 = vrot.lane.b32.xlu0 %v1740, 96
    %v2165 = vpop.permute.xlu0 %2164
    %2166 = vrot.lane.b32.xlu0 %v1741, 96
    %v2167 = vpop.permute.xlu0 %2166
    %2168 = vrot.lane.b32.xlu0 %v1742, 96
    %v2169 = vpop.permute.xlu0 %2168
    %v2171 = vsel %vm1743, %v2139, 0
    %v2174 = vsel %vm1743, %v2141, 0
    %v2177 = vsel %vm1743, %v2143, 0
    %v2180 = vsel %vm1743, %v2145, 0
    %v2183 = vsel %vm1743, %v2147, 0
    %v2186 = vsel %vm1743, %v2149, 0
    %v2189 = vsel %vm1743, %v2151, 0
    %v2192 = vsel %vm1743, %v2153, 0
    %v2195 = vsel %vm1743, %v2155, 0
    %v2198 = vsel %vm1743, %v2157, 0
    %v2201 = vsel %vm1743, %v2159, 0
    %v2204 = vsel %vm1743, %v2161, 0
    %v2207 = vsel %vm1743, %v2163, 0
    %v2210 = vsel %vm1743, %v2165, 0
    %v2213 = vsel %vm1743, %v2167, 0
    %v2216 = vsel %vm1743, %v2169, 0
    %2218 = vmatpush.bf16.xpose.msra.mxu0 %v2216
    %2219 = vmatpush.bf16.xpose.msra.mxu0 %v2213
    %2220 = vmatpush.bf16.xpose.msra.mxu0 %v2210
    %2221 = vmatpush.bf16.xpose.msra.mxu0 %v2207
    %2222 = vmatpush.bf16.xpose.msra.mxu0 %v2204
    %2223 = vmatpush.bf16.xpose.msra.mxu0 %v2201
    %2224 = vmatpush.bf16.xpose.msra.mxu0 %v2198
    %2225 = vmatpush.bf16.xpose.msra.mxu0 %v2195
    %2226 = vmatmul.bf16.gmra.mxu0 %v2171
    %v2227 = vpop.f32.mrf.mxu0
    %v2228 = vadd.f32 0.0, %v2227
    %v2229 = vpop.f32.mrf.mxu0
    %v2230 = vadd.f32 0.0, %v2229
    %2231 = vmatmul.bf16.gmra.mxu0 %v2174
    %v2232 = vpop.f32.mrf.mxu0
    %v2233 = vadd.f32 0.0, %v2232
    %v2234 = vpop.f32.mrf.mxu0
    %v2235 = vadd.f32 0.0, %v2234
    %2236 = vmatmul.bf16.gmra.mxu0 %v2177
    %v2237 = vpop.f32.mrf.mxu0
    %v2238 = vadd.f32 0.0, %v2237
    %v2239 = vpop.f32.mrf.mxu0
    %v2240 = vadd.f32 0.0, %v2239
    %2241 = vmatmul.bf16.gmra.mxu0 %v2180
    %v2242 = vpop.f32.mrf.mxu0
    %v2243 = vadd.f32 0.0, %v2242
    %v2244 = vpop.f32.mrf.mxu0
    %v2245 = vadd.f32 0.0, %v2244
    %2246 = vmatmul.bf16.gmra.mxu0 %v2183
    %v2247 = vpop.f32.mrf.mxu0
    %v2248 = vadd.f32 0.0, %v2247
    %v2249 = vpop.f32.mrf.mxu0
    %v2250 = vadd.f32 0.0, %v2249
    %2251 = vmatmul.bf16.gmra.mxu0 %v2186
    %v2252 = vpop.f32.mrf.mxu0
    %v2253 = vadd.f32 0.0, %v2252
    %v2254 = vpop.f32.mrf.mxu0
    %v2255 = vadd.f32 0.0, %v2254
    %2256 = vmatmul.bf16.gmra.mxu0 %v2189
    %v2257 = vpop.f32.mrf.mxu0
    %v2258 = vadd.f32 0.0, %v2257
    %v2259 = vpop.f32.mrf.mxu0
    %v2260 = vadd.f32 0.0, %v2259
    %2261 = vmatmul.bf16.gmra.mxu0 %v2192
    %v2262 = vpop.f32.mrf.mxu0
    %v2263 = vadd.f32 0.0, %v2262
    %v2264 = vpop.f32.mrf.mxu0
    %v2265 = vadd.f32 0.0, %v2264
    %2266 = vdwg.mxu0
    %v2267 = vmul.f32 %v2228, 0.088388346
    %v2268 = vmul.f32 %v2230, 0.088388346
    %v2269 = vmul.f32 %v2233, 0.088388346
    %v2270 = vmul.f32 %v2235, 0.088388346
    %v2271 = vmul.f32 %v2238, 0.088388346
    %v2272 = vmul.f32 %v2240, 0.088388346
    %v2273 = vmul.f32 %v2243, 0.088388346
    %v2274 = vmul.f32 %v2245, 0.088388346
    %v2275 = vmul.f32 %v2248, 0.088388346
    %v2276 = vmul.f32 %v2250, 0.088388346
    %v2277 = vmul.f32 %v2253, 0.088388346
    %v2278 = vmul.f32 %v2255, 0.088388346
    %v2279 = vmul.f32 %v2258, 0.088388346
    %v2280 = vmul.f32 %v2260, 0.088388346
    %v2281 = vmul.f32 %v2263, 0.088388346
    %v2282 = vmul.f32 %v2265, 0.088388346
    %v2283 = vsel %vm917, %v2267, -1e+30
    %v2284 = vsel %vm918, %v2268, -1e+30
    %v2285 = vsel %vm919, %v2269, -1e+30
    %v2286 = vsel %vm920, %v2270, -1e+30
    %v2287 = vsel %vm921, %v2271, -1e+30
    %v2288 = vsel %vm922, %v2272, -1e+30
    %v2289 = vsel %vm923, %v2273, -1e+30
    %v2290 = vsel %vm924, %v2274, -1e+30
    %v2291 = vsel %vm925, %v2275, -1e+30
    %v2292 = vsel %vm926, %v2276, -1e+30
    %v2293 = vsel %vm927, %v2277, -1e+30
    %v2294 = vsel %vm928, %v2278, -1e+30
    %v2295 = vsel %vm929, %v2279, -1e+30
    %v2296 = vsel %vm930, %v2280, -1e+30
    %v2297 = vsel %vm931, %v2281, -1e+30
    %v2298 = vsel %vm932, %v2282, -1e+30
    %2299 = vmax.xlane.f32.xlu0 %v2283
    %v2300 = vpop.xlane.xlu0 %2299
    %2301 = vmax.xlane.f32.xlu0 %v2284
    %v2302 = vpop.xlane.xlu0 %2301
    %2303 = vmax.xlane.f32.xlu0 %v2285
    %v2304 = vpop.xlane.xlu0 %2303
    %2305 = vmax.xlane.f32.xlu0 %v2286
    %v2306 = vpop.xlane.xlu0 %2305
    %2307 = vmax.xlane.f32.xlu0 %v2287
    %v2308 = vpop.xlane.xlu0 %2307
    %2309 = vmax.xlane.f32.xlu0 %v2288
    %v2310 = vpop.xlane.xlu0 %2309
    %2311 = vmax.xlane.f32.xlu0 %v2289
    %v2312 = vpop.xlane.xlu0 %2311
    %2313 = vmax.xlane.f32.xlu0 %v2290
    %v2314 = vpop.xlane.xlu0 %2313
    %2315 = vmax.xlane.f32.xlu0 %v2291
    %v2316 = vpop.xlane.xlu0 %2315
    %2317 = vmax.xlane.f32.xlu0 %v2292
    %v2318 = vpop.xlane.xlu0 %2317
    %2319 = vmax.xlane.f32.xlu0 %v2293
    %v2320 = vpop.xlane.xlu0 %2319
    %2321 = vmax.xlane.f32.xlu0 %v2294
    %v2322 = vpop.xlane.xlu0 %2321
    %2323 = vmax.xlane.f32.xlu0 %v2295
    %v2324 = vpop.xlane.xlu0 %2323
    %2325 = vmax.xlane.f32.xlu0 %v2296
    %v2326 = vpop.xlane.xlu0 %2325
    %2327 = vmax.xlane.f32.xlu0 %v2297
    %v2328 = vpop.xlane.xlu0 %2327
    %2329 = vmax.xlane.f32.xlu0 %v2298
    %v2330 = vpop.xlane.xlu0 %2329
    %v2331 = vsub.f32 %v2283, %v2300
    %v2332 = vsub.f32 %v2284, %v2302
    %v2333 = vsub.f32 %v2285, %v2304
    %v2334 = vsub.f32 %v2286, %v2306
    %v2335 = vsub.f32 %v2287, %v2308
    %v2336 = vsub.f32 %v2288, %v2310
    %v2337 = vsub.f32 %v2289, %v2312
    %v2338 = vsub.f32 %v2290, %v2314
    %v2339 = vsub.f32 %v2291, %v2316
    %v2340 = vsub.f32 %v2292, %v2318
    %v2341 = vsub.f32 %v2293, %v2320
    %v2342 = vsub.f32 %v2294, %v2322
    %v2343 = vsub.f32 %v2295, %v2324
    %v2344 = vsub.f32 %v2296, %v2326
    %v2345 = vsub.f32 %v2297, %v2328
    %v2346 = vsub.f32 %v2298, %v2330
    %v2347 = vmul.f32 %v2331, 1.442695
    %v2348 = vpow.pop %v2347
    %v2349 = vmul.f32 %v2332, 1.442695
    %v2350 = vpow.pop %v2349
    %v2351 = vmul.f32 %v2333, 1.442695
    %v2352 = vpow.pop %v2351
    %v2353 = vmul.f32 %v2334, 1.442695
    %v2354 = vpow.pop %v2353
    %v2355 = vmul.f32 %v2335, 1.442695
    %v2356 = vpow.pop %v2355
    %v2357 = vmul.f32 %v2336, 1.442695
    %v2358 = vpow.pop %v2357
    %v2359 = vmul.f32 %v2337, 1.442695
    %v2360 = vpow.pop %v2359
    %v2361 = vmul.f32 %v2338, 1.442695
    %v2362 = vpow.pop %v2361
    %v2363 = vmul.f32 %v2339, 1.442695
    %v2364 = vpow.pop %v2363
    %v2365 = vmul.f32 %v2340, 1.442695
    %v2366 = vpow.pop %v2365
    %v2367 = vmul.f32 %v2341, 1.442695
    %v2368 = vpow.pop %v2367
    %v2369 = vmul.f32 %v2342, 1.442695
    %v2370 = vpow.pop %v2369
    %v2371 = vmul.f32 %v2343, 1.442695
    %v2372 = vpow.pop %v2371
    %v2373 = vmul.f32 %v2344, 1.442695
    %v2374 = vpow.pop %v2373
    %v2375 = vmul.f32 %v2345, 1.442695
    %v2376 = vpow.pop %v2375
    %v2377 = vmul.f32 %v2346, 1.442695
    %v2378 = vpow.pop %v2377
    %2379 = vadd.xlane.f32.xlu0 %v2348
    %v2380 = vpop.xlane.xlu0 %2379
    %2381 = vadd.xlane.f32.xlu0 %v2350
    %v2382 = vpop.xlane.xlu0 %2381
    %2383 = vadd.xlane.f32.xlu0 %v2352
    %v2384 = vpop.xlane.xlu0 %2383
    %2385 = vadd.xlane.f32.xlu0 %v2354
    %v2386 = vpop.xlane.xlu0 %2385
    %2387 = vadd.xlane.f32.xlu0 %v2356
    %v2388 = vpop.xlane.xlu0 %2387
    %2389 = vadd.xlane.f32.xlu0 %v2358
    %v2390 = vpop.xlane.xlu0 %2389
    %2391 = vadd.xlane.f32.xlu0 %v2360
    %v2392 = vpop.xlane.xlu0 %2391
    %2393 = vadd.xlane.f32.xlu0 %v2362
    %v2394 = vpop.xlane.xlu0 %2393
    %2395 = vadd.xlane.f32.xlu0 %v2364
    %v2396 = vpop.xlane.xlu0 %2395
    %2397 = vadd.xlane.f32.xlu0 %v2366
    %v2398 = vpop.xlane.xlu0 %2397
    %2399 = vadd.xlane.f32.xlu0 %v2368
    %v2400 = vpop.xlane.xlu0 %2399
    %2401 = vadd.xlane.f32.xlu0 %v2370
    %v2402 = vpop.xlane.xlu0 %2401
    %2403 = vadd.xlane.f32.xlu0 %v2372
    %v2404 = vpop.xlane.xlu0 %2403
    %2405 = vadd.xlane.f32.xlu0 %v2374
    %v2406 = vpop.xlane.xlu0 %2405
    %2407 = vadd.xlane.f32.xlu0 %v2376
    %v2408 = vpop.xlane.xlu0 %2407
    %2409 = vadd.xlane.f32.xlu0 %v2378
    %v2410 = vpop.xlane.xlu0 %2409
    %v2411 = vrcp.pop %v2380
    %v2412 = vrcp.pop %v2382
    %v2413 = vrcp.pop %v2384
    %v2414 = vrcp.pop %v2386
    %v2415 = vrcp.pop %v2388
    %v2416 = vrcp.pop %v2390
    %v2417 = vrcp.pop %v2392
    %v2418 = vrcp.pop %v2394
    %v2419 = vrcp.pop %v2396
    %v2420 = vrcp.pop %v2398
    %v2421 = vrcp.pop %v2400
    %v2422 = vrcp.pop %v2402
    %v2423 = vrcp.pop %v2404
    %v2424 = vrcp.pop %v2406
    %v2425 = vrcp.pop %v2408
    %v2426 = vrcp.pop %v2410
    %v2427 = vmul.f32 %v2348, %v2411
    %v2428 = vmul.f32 %v2350, %v2412
    %v2429 = vmul.f32 %v2352, %v2413
    %v2430 = vmul.f32 %v2354, %v2414
    %v2431 = vmul.f32 %v2356, %v2415
    %v2432 = vmul.f32 %v2358, %v2416
    %v2433 = vmul.f32 %v2360, %v2417
    %v2434 = vmul.f32 %v2362, %v2418
    %v2435 = vmul.f32 %v2364, %v2419
    %v2436 = vmul.f32 %v2366, %v2420
    %v2437 = vmul.f32 %v2368, %v2421
    %v2438 = vmul.f32 %v2370, %v2422
    %v2439 = vmul.f32 %v2372, %v2423
    %v2440 = vmul.f32 %v2374, %v2424
    %v2441 = vmul.f32 %v2376, %v2425
    %v2442 = vmul.f32 %v2378, %v2426
    %v2443 = vpack.c.bf16 %v2428, %v2427
    %v2444 = vpack.c.bf16 %v2430, %v2429
    %v2445 = vpack.c.bf16 %v2432, %v2431
    %v2446 = vpack.c.bf16 %v2434, %v2433
    %v2447 = vpack.c.bf16 %v2436, %v2435
    %v2448 = vpack.c.bf16 %v2438, %v2437
    %v2449 = vpack.c.bf16 %v2440, %v2439
    %v2450 = vpack.c.bf16 %v2442, %v2441
    %2451 = vrot.lane.b32.xlu0 %v2057, 96
    %v2452 = vpop.permute.xlu0 %2451
    %2453 = vrot.lane.b32.xlu0 %v2058, 96
    %v2454 = vpop.permute.xlu0 %2453
    %2455 = vrot.lane.b32.xlu0 %v2059, 96
    %v2456 = vpop.permute.xlu0 %2455
    %2457 = vrot.lane.b32.xlu0 %v2060, 96
    %v2458 = vpop.permute.xlu0 %2457
    %2459 = vrot.lane.b32.xlu0 %v2061, 96
    %v2460 = vpop.permute.xlu0 %2459
    %2461 = vrot.lane.b32.xlu0 %v2062, 96
    %v2462 = vpop.permute.xlu0 %2461
    %2463 = vrot.lane.b32.xlu0 %v2063, 96
    %v2464 = vpop.permute.xlu0 %2463
    %2465 = vrot.lane.b32.xlu0 %v2064, 96
    %v2466 = vpop.permute.xlu0 %2465
    %2475 = vmatpush.bf16.msra.mxu0 %v2466
    %2476 = vmatpush.bf16.msra.mxu0 %v2464
    %2477 = vmatpush.bf16.msra.mxu0 %v2462
    %2478 = vmatpush.bf16.msra.mxu0 %v2460
    %2479 = vmatpush.bf16.msra.mxu0 %v2458
    %2480 = vmatpush.bf16.msra.mxu0 %v2456
    %2481 = vmatpush.bf16.msra.mxu0 %v2454
    %2482 = vmatpush.bf16.msra.mxu0 %v2452
    %2483 = vmatmul.bf16.gmra.mxu0 %v2443
    %v2484 = vpop.f32.mrf.mxu0
    %v2485 = vadd.f32 0.0, %v2484
    %v2486 = vpop.f32.mrf.mxu0
    %v2487 = vadd.f32 0.0, %v2486
    %2488 = vmatmul.bf16.gmra.mxu0 %v2444
    %v2489 = vpop.f32.mrf.mxu0
    %v2490 = vadd.f32 0.0, %v2489
    %v2491 = vpop.f32.mrf.mxu0
    %v2492 = vadd.f32 0.0, %v2491
    %2493 = vmatmul.bf16.gmra.mxu0 %v2445
    %v2494 = vpop.f32.mrf.mxu0
    %v2495 = vadd.f32 0.0, %v2494
    %v2496 = vpop.f32.mrf.mxu0
    %v2497 = vadd.f32 0.0, %v2496
    %2498 = vmatmul.bf16.gmra.mxu0 %v2446
    %v2499 = vpop.f32.mrf.mxu0
    %v2500 = vadd.f32 0.0, %v2499
    %v2501 = vpop.f32.mrf.mxu0
    %v2502 = vadd.f32 0.0, %v2501
    %2503 = vmatmul.bf16.gmra.mxu0 %v2447
    %v2504 = vpop.f32.mrf.mxu0
    %v2505 = vadd.f32 0.0, %v2504
    %v2506 = vpop.f32.mrf.mxu0
    %v2507 = vadd.f32 0.0, %v2506
    %2508 = vmatmul.bf16.gmra.mxu0 %v2448
    %v2509 = vpop.f32.mrf.mxu0
    %v2510 = vadd.f32 0.0, %v2509
    %v2511 = vpop.f32.mrf.mxu0
    %v2512 = vadd.f32 0.0, %v2511
    %2513 = vmatmul.bf16.gmra.mxu0 %v2449
    %v2514 = vpop.f32.mrf.mxu0
    %v2515 = vadd.f32 0.0, %v2514
    %v2516 = vpop.f32.mrf.mxu0
    %v2517 = vadd.f32 0.0, %v2516
    %2518 = vmatmul.bf16.gmra.mxu0 %v2450
    %v2519 = vpop.f32.mrf.mxu0
    %v2520 = vadd.f32 0.0, %v2519
    %v2521 = vpop.f32.mrf.mxu0
    %v2522 = vadd.f32 0.0, %v2521
    %2523 = vdwg.mxu0
    %v2524 = vpack.c.bf16 %v2485, %v2485
    %v2525 = vpack.c.bf16 %v2487, %v2487
    %v2526 = vpack.c.bf16 %v2490, %v2490
    %v2527 = vpack.c.bf16 %v2492, %v2492
    %v2528 = vpack.c.bf16 %v2495, %v2495
    %v2529 = vpack.c.bf16 %v2497, %v2497
    %v2530 = vpack.c.bf16 %v2500, %v2500
    %v2531 = vpack.c.bf16 %v2502, %v2502
    %v2532 = vpack.c.bf16 %v2505, %v2505
    %v2533 = vpack.c.bf16 %v2507, %v2507
    %v2534 = vpack.c.bf16 %v2510, %v2510
    %v2535 = vpack.c.bf16 %v2512, %v2512
    %v2536 = vpack.c.bf16 %v2515, %v2515
    %v2537 = vpack.c.bf16 %v2517, %v2517
    %v2538 = vpack.c.bf16 %v2520, %v2520
    %v2539 = vpack.c.bf16 %v2522, %v2522
    %2540 = vrot.lane.b32.xlu0 %v1711, 64
    %v2541 = vpop.permute.xlu0 %2540
    %2542 = vrot.lane.b32.xlu0 %v1712, 64
    %v2543 = vpop.permute.xlu0 %2542
    %2544 = vrot.lane.b32.xlu0 %v1713, 64
    %v2545 = vpop.permute.xlu0 %2544
    %2546 = vrot.lane.b32.xlu0 %v1714, 64
    %v2547 = vpop.permute.xlu0 %2546
    %2548 = vrot.lane.b32.xlu0 %v1715, 64
    %v2549 = vpop.permute.xlu0 %2548
    %2550 = vrot.lane.b32.xlu0 %v1716, 64
    %v2551 = vpop.permute.xlu0 %2550
    %2552 = vrot.lane.b32.xlu0 %v1717, 64
    %v2553 = vpop.permute.xlu0 %2552
    %2554 = vrot.lane.b32.xlu0 %v1718, 64
    %v2555 = vpop.permute.xlu0 %2554
    %2556 = vrot.lane.b32.xlu0 %v1735, 64
    %v2557 = vpop.permute.xlu0 %2556
    %2558 = vrot.lane.b32.xlu0 %v1736, 64
    %v2559 = vpop.permute.xlu0 %2558
    %2560 = vrot.lane.b32.xlu0 %v1737, 64
    %v2561 = vpop.permute.xlu0 %2560
    %2562 = vrot.lane.b32.xlu0 %v1738, 64
    %v2563 = vpop.permute.xlu0 %2562
    %2564 = vrot.lane.b32.xlu0 %v1739, 64
    %v2565 = vpop.permute.xlu0 %2564
    %2566 = vrot.lane.b32.xlu0 %v1740, 64
    %v2567 = vpop.permute.xlu0 %2566
    %2568 = vrot.lane.b32.xlu0 %v1741, 64
    %v2569 = vpop.permute.xlu0 %2568
    %2570 = vrot.lane.b32.xlu0 %v1742, 64
    %v2571 = vpop.permute.xlu0 %2570
    %v2573 = vsel %vm1743, %v2541, 0
    %v2576 = vsel %vm1743, %v2543, 0
    %v2579 = vsel %vm1743, %v2545, 0
    %v2582 = vsel %vm1743, %v2547, 0
    %v2585 = vsel %vm1743, %v2549, 0
    %v2588 = vsel %vm1743, %v2551, 0
    %v2591 = vsel %vm1743, %v2553, 0
    %v2594 = vsel %vm1743, %v2555, 0
    %v2597 = vsel %vm1743, %v2557, 0
    %v2600 = vsel %vm1743, %v2559, 0
    %v2603 = vsel %vm1743, %v2561, 0
    %v2606 = vsel %vm1743, %v2563, 0
    %v2609 = vsel %vm1743, %v2565, 0
    %v2612 = vsel %vm1743, %v2567, 0
    %v2615 = vsel %vm1743, %v2569, 0
    %v2618 = vsel %vm1743, %v2571, 0
    %2620 = vmatpush.bf16.xpose.msra.mxu0 %v2618
    %2621 = vmatpush.bf16.xpose.msra.mxu0 %v2615
    %2622 = vmatpush.bf16.xpose.msra.mxu0 %v2612
    %2623 = vmatpush.bf16.xpose.msra.mxu0 %v2609
    %2624 = vmatpush.bf16.xpose.msra.mxu0 %v2606
    %2625 = vmatpush.bf16.xpose.msra.mxu0 %v2603
    %2626 = vmatpush.bf16.xpose.msra.mxu0 %v2600
    %2627 = vmatpush.bf16.xpose.msra.mxu0 %v2597
    %2628 = vmatmul.bf16.gmra.mxu0 %v2573
    %v2629 = vpop.f32.mrf.mxu0
    %v2630 = vadd.f32 0.0, %v2629
    %v2631 = vpop.f32.mrf.mxu0
    %v2632 = vadd.f32 0.0, %v2631
    %2633 = vmatmul.bf16.gmra.mxu0 %v2576
    %v2634 = vpop.f32.mrf.mxu0
    %v2635 = vadd.f32 0.0, %v2634
    %v2636 = vpop.f32.mrf.mxu0
    %v2637 = vadd.f32 0.0, %v2636
    %2638 = vmatmul.bf16.gmra.mxu0 %v2579
    %v2639 = vpop.f32.mrf.mxu0
    %v2640 = vadd.f32 0.0, %v2639
    %v2641 = vpop.f32.mrf.mxu0
    %v2642 = vadd.f32 0.0, %v2641
    %2643 = vmatmul.bf16.gmra.mxu0 %v2582
    %v2644 = vpop.f32.mrf.mxu0
    %v2645 = vadd.f32 0.0, %v2644
    %v2646 = vpop.f32.mrf.mxu0
    %v2647 = vadd.f32 0.0, %v2646
    %2648 = vmatmul.bf16.gmra.mxu0 %v2585
    %v2649 = vpop.f32.mrf.mxu0
    %v2650 = vadd.f32 0.0, %v2649
    %v2651 = vpop.f32.mrf.mxu0
    %v2652 = vadd.f32 0.0, %v2651
    %2653 = vmatmul.bf16.gmra.mxu0 %v2588
    %v2654 = vpop.f32.mrf.mxu0
    %v2655 = vadd.f32 0.0, %v2654
    %v2656 = vpop.f32.mrf.mxu0
    %v2657 = vadd.f32 0.0, %v2656
    %2658 = vmatmul.bf16.gmra.mxu0 %v2591
    %v2659 = vpop.f32.mrf.mxu0
    %v2660 = vadd.f32 0.0, %v2659
    %v2661 = vpop.f32.mrf.mxu0
    %v2662 = vadd.f32 0.0, %v2661
    %2663 = vmatmul.bf16.gmra.mxu0 %v2594
    %v2664 = vpop.f32.mrf.mxu0
    %v2665 = vadd.f32 0.0, %v2664
    %v2666 = vpop.f32.mrf.mxu0
    %v2667 = vadd.f32 0.0, %v2666
    %2668 = vdwg.mxu0
    %v2669 = vmul.f32 %v2630, 0.088388346
    %v2670 = vmul.f32 %v2632, 0.088388346
    %v2671 = vmul.f32 %v2635, 0.088388346
    %v2672 = vmul.f32 %v2637, 0.088388346
    %v2673 = vmul.f32 %v2640, 0.088388346
    %v2674 = vmul.f32 %v2642, 0.088388346
    %v2675 = vmul.f32 %v2645, 0.088388346
    %v2676 = vmul.f32 %v2647, 0.088388346
    %v2677 = vmul.f32 %v2650, 0.088388346
    %v2678 = vmul.f32 %v2652, 0.088388346
    %v2679 = vmul.f32 %v2655, 0.088388346
    %v2680 = vmul.f32 %v2657, 0.088388346
    %v2681 = vmul.f32 %v2660, 0.088388346
    %v2682 = vmul.f32 %v2662, 0.088388346
    %v2683 = vmul.f32 %v2665, 0.088388346
    %v2684 = vmul.f32 %v2667, 0.088388346
    %v2685 = vsel %vm917, %v2669, -1e+30
    %v2686 = vsel %vm918, %v2670, -1e+30
    %v2687 = vsel %vm919, %v2671, -1e+30
    %v2688 = vsel %vm920, %v2672, -1e+30
    %v2689 = vsel %vm921, %v2673, -1e+30
    %v2690 = vsel %vm922, %v2674, -1e+30
    %v2691 = vsel %vm923, %v2675, -1e+30
    %v2692 = vsel %vm924, %v2676, -1e+30
    %v2693 = vsel %vm925, %v2677, -1e+30
    %v2694 = vsel %vm926, %v2678, -1e+30
    %v2695 = vsel %vm927, %v2679, -1e+30
    %v2696 = vsel %vm928, %v2680, -1e+30
    %v2697 = vsel %vm929, %v2681, -1e+30
    %v2698 = vsel %vm930, %v2682, -1e+30
    %v2699 = vsel %vm931, %v2683, -1e+30
    %v2700 = vsel %vm932, %v2684, -1e+30
    %2701 = vmax.xlane.f32.xlu0 %v2685
    %v2702 = vpop.xlane.xlu0 %2701
    %2703 = vmax.xlane.f32.xlu0 %v2686
    %v2704 = vpop.xlane.xlu0 %2703
    %2705 = vmax.xlane.f32.xlu0 %v2687
    %v2706 = vpop.xlane.xlu0 %2705
    %2707 = vmax.xlane.f32.xlu0 %v2688
    %v2708 = vpop.xlane.xlu0 %2707
    %2709 = vmax.xlane.f32.xlu0 %v2689
    %v2710 = vpop.xlane.xlu0 %2709
    %2711 = vmax.xlane.f32.xlu0 %v2690
    %v2712 = vpop.xlane.xlu0 %2711
    %2713 = vmax.xlane.f32.xlu0 %v2691
    %v2714 = vpop.xlane.xlu0 %2713
    %2715 = vmax.xlane.f32.xlu0 %v2692
    %v2716 = vpop.xlane.xlu0 %2715
    %2717 = vmax.xlane.f32.xlu0 %v2693
    %v2718 = vpop.xlane.xlu0 %2717
    %2719 = vmax.xlane.f32.xlu0 %v2694
    %v2720 = vpop.xlane.xlu0 %2719
    %2721 = vmax.xlane.f32.xlu0 %v2695
    %v2722 = vpop.xlane.xlu0 %2721
    %2723 = vmax.xlane.f32.xlu0 %v2696
    %v2724 = vpop.xlane.xlu0 %2723
    %2725 = vmax.xlane.f32.xlu0 %v2697
    %v2726 = vpop.xlane.xlu0 %2725
    %2727 = vmax.xlane.f32.xlu0 %v2698
    %v2728 = vpop.xlane.xlu0 %2727
    %2729 = vmax.xlane.f32.xlu0 %v2699
    %v2730 = vpop.xlane.xlu0 %2729
    %2731 = vmax.xlane.f32.xlu0 %v2700
    %v2732 = vpop.xlane.xlu0 %2731
    %v2733 = vsub.f32 %v2685, %v2702
    %v2734 = vsub.f32 %v2686, %v2704
    %v2735 = vsub.f32 %v2687, %v2706
    %v2736 = vsub.f32 %v2688, %v2708
    %v2737 = vsub.f32 %v2689, %v2710
    %v2738 = vsub.f32 %v2690, %v2712
    %v2739 = vsub.f32 %v2691, %v2714
    %v2740 = vsub.f32 %v2692, %v2716
    %v2741 = vsub.f32 %v2693, %v2718
    %v2742 = vsub.f32 %v2694, %v2720
    %v2743 = vsub.f32 %v2695, %v2722
    %v2744 = vsub.f32 %v2696, %v2724
    %v2745 = vsub.f32 %v2697, %v2726
    %v2746 = vsub.f32 %v2698, %v2728
    %v2747 = vsub.f32 %v2699, %v2730
    %v2748 = vsub.f32 %v2700, %v2732
    %v2749 = vmul.f32 %v2733, 1.442695
    %v2750 = vpow.pop %v2749
    %v2751 = vmul.f32 %v2734, 1.442695
    %v2752 = vpow.pop %v2751
    %v2753 = vmul.f32 %v2735, 1.442695
    %v2754 = vpow.pop %v2753
    %v2755 = vmul.f32 %v2736, 1.442695
    %v2756 = vpow.pop %v2755
    %v2757 = vmul.f32 %v2737, 1.442695
    %v2758 = vpow.pop %v2757
    %v2759 = vmul.f32 %v2738, 1.442695
    %v2760 = vpow.pop %v2759
    %v2761 = vmul.f32 %v2739, 1.442695
    %v2762 = vpow.pop %v2761
    %v2763 = vmul.f32 %v2740, 1.442695
    %v2764 = vpow.pop %v2763
    %v2765 = vmul.f32 %v2741, 1.442695
    %v2766 = vpow.pop %v2765
    %v2767 = vmul.f32 %v2742, 1.442695
    %v2768 = vpow.pop %v2767
    %v2769 = vmul.f32 %v2743, 1.442695
    %v2770 = vpow.pop %v2769
    %v2771 = vmul.f32 %v2744, 1.442695
    %v2772 = vpow.pop %v2771
    %v2773 = vmul.f32 %v2745, 1.442695
    %v2774 = vpow.pop %v2773
    %v2775 = vmul.f32 %v2746, 1.442695
    %v2776 = vpow.pop %v2775
    %v2777 = vmul.f32 %v2747, 1.442695
    %v2778 = vpow.pop %v2777
    %v2779 = vmul.f32 %v2748, 1.442695
    %v2780 = vpow.pop %v2779
    %2781 = vadd.xlane.f32.xlu0 %v2750
    %v2782 = vpop.xlane.xlu0 %2781
    %2783 = vadd.xlane.f32.xlu0 %v2752
    %v2784 = vpop.xlane.xlu0 %2783
    %2785 = vadd.xlane.f32.xlu0 %v2754
    %v2786 = vpop.xlane.xlu0 %2785
    %2787 = vadd.xlane.f32.xlu0 %v2756
    %v2788 = vpop.xlane.xlu0 %2787
    %2789 = vadd.xlane.f32.xlu0 %v2758
    %v2790 = vpop.xlane.xlu0 %2789
    %2791 = vadd.xlane.f32.xlu0 %v2760
    %v2792 = vpop.xlane.xlu0 %2791
    %2793 = vadd.xlane.f32.xlu0 %v2762
    %v2794 = vpop.xlane.xlu0 %2793
    %2795 = vadd.xlane.f32.xlu0 %v2764
    %v2796 = vpop.xlane.xlu0 %2795
    %2797 = vadd.xlane.f32.xlu0 %v2766
    %v2798 = vpop.xlane.xlu0 %2797
    %2799 = vadd.xlane.f32.xlu0 %v2768
    %v2800 = vpop.xlane.xlu0 %2799
    %2801 = vadd.xlane.f32.xlu0 %v2770
    %v2802 = vpop.xlane.xlu0 %2801
    %2803 = vadd.xlane.f32.xlu0 %v2772
    %v2804 = vpop.xlane.xlu0 %2803
    %2805 = vadd.xlane.f32.xlu0 %v2774
    %v2806 = vpop.xlane.xlu0 %2805
    %2807 = vadd.xlane.f32.xlu0 %v2776
    %v2808 = vpop.xlane.xlu0 %2807
    %2809 = vadd.xlane.f32.xlu0 %v2778
    %v2810 = vpop.xlane.xlu0 %2809
    %2811 = vadd.xlane.f32.xlu0 %v2780
    %v2812 = vpop.xlane.xlu0 %2811
    %v2813 = vrcp.pop %v2782
    %v2814 = vrcp.pop %v2784
    %v2815 = vrcp.pop %v2786
    %v2816 = vrcp.pop %v2788
    %v2817 = vrcp.pop %v2790
    %v2818 = vrcp.pop %v2792
    %v2819 = vrcp.pop %v2794
    %v2820 = vrcp.pop %v2796
    %v2821 = vrcp.pop %v2798
    %v2822 = vrcp.pop %v2800
    %v2823 = vrcp.pop %v2802
    %v2824 = vrcp.pop %v2804
    %v2825 = vrcp.pop %v2806
    %v2826 = vrcp.pop %v2808
    %v2827 = vrcp.pop %v2810
    %v2828 = vrcp.pop %v2812
    %v2829 = vmul.f32 %v2750, %v2813
    %v2830 = vmul.f32 %v2752, %v2814
    %v2831 = vmul.f32 %v2754, %v2815
    %v2832 = vmul.f32 %v2756, %v2816
    %v2833 = vmul.f32 %v2758, %v2817
    %v2834 = vmul.f32 %v2760, %v2818
    %v2835 = vmul.f32 %v2762, %v2819
    %v2836 = vmul.f32 %v2764, %v2820
    %v2837 = vmul.f32 %v2766, %v2821
    %v2838 = vmul.f32 %v2768, %v2822
    %v2839 = vmul.f32 %v2770, %v2823
    %v2840 = vmul.f32 %v2772, %v2824
    %v2841 = vmul.f32 %v2774, %v2825
    %v2842 = vmul.f32 %v2776, %v2826
    %v2843 = vmul.f32 %v2778, %v2827
    %v2844 = vmul.f32 %v2780, %v2828
    %v2845 = vpack.c.bf16 %v2830, %v2829
    %v2846 = vpack.c.bf16 %v2832, %v2831
    %v2847 = vpack.c.bf16 %v2834, %v2833
    %v2848 = vpack.c.bf16 %v2836, %v2835
    %v2849 = vpack.c.bf16 %v2838, %v2837
    %v2850 = vpack.c.bf16 %v2840, %v2839
    %v2851 = vpack.c.bf16 %v2842, %v2841
    %v2852 = vpack.c.bf16 %v2844, %v2843
    %2853 = vrot.lane.b32.xlu0 %v2057, 64
    %v2854 = vpop.permute.xlu0 %2853
    %2855 = vrot.lane.b32.xlu0 %v2058, 64
    %v2856 = vpop.permute.xlu0 %2855
    %2857 = vrot.lane.b32.xlu0 %v2059, 64
    %v2858 = vpop.permute.xlu0 %2857
    %2859 = vrot.lane.b32.xlu0 %v2060, 64
    %v2860 = vpop.permute.xlu0 %2859
    %2861 = vrot.lane.b32.xlu0 %v2061, 64
    %v2862 = vpop.permute.xlu0 %2861
    %2863 = vrot.lane.b32.xlu0 %v2062, 64
    %v2864 = vpop.permute.xlu0 %2863
    %2865 = vrot.lane.b32.xlu0 %v2063, 64
    %v2866 = vpop.permute.xlu0 %2865
    %2867 = vrot.lane.b32.xlu0 %v2064, 64
    %v2868 = vpop.permute.xlu0 %2867
    %2877 = vmatpush.bf16.msra.mxu0 %v2868
    %2878 = vmatpush.bf16.msra.mxu0 %v2866
    %2879 = vmatpush.bf16.msra.mxu0 %v2864
    %2880 = vmatpush.bf16.msra.mxu0 %v2862
    %2881 = vmatpush.bf16.msra.mxu0 %v2860
    %2882 = vmatpush.bf16.msra.mxu0 %v2858
    %2883 = vmatpush.bf16.msra.mxu0 %v2856
    %2884 = vmatpush.bf16.msra.mxu0 %v2854
    %2885 = vmatmul.bf16.gmra.mxu0 %v2845
    %v2886 = vpop.f32.mrf.mxu0
    %v2887 = vadd.f32 0.0, %v2886
    %v2888 = vpop.f32.mrf.mxu0
    %v2889 = vadd.f32 0.0, %v2888
    %2890 = vmatmul.bf16.gmra.mxu0 %v2846
    %v2891 = vpop.f32.mrf.mxu0
    %v2892 = vadd.f32 0.0, %v2891
    %v2893 = vpop.f32.mrf.mxu0
    %v2894 = vadd.f32 0.0, %v2893
    %2895 = vmatmul.bf16.gmra.mxu0 %v2847
    %v2896 = vpop.f32.mrf.mxu0
    %v2897 = vadd.f32 0.0, %v2896
    %v2898 = vpop.f32.mrf.mxu0
    %v2899 = vadd.f32 0.0, %v2898
    %2900 = vmatmul.bf16.gmra.mxu0 %v2848
    %v2901 = vpop.f32.mrf.mxu0
    %v2902 = vadd.f32 0.0, %v2901
    %v2903 = vpop.f32.mrf.mxu0
    %v2904 = vadd.f32 0.0, %v2903
    %2905 = vmatmul.bf16.gmra.mxu0 %v2849
    %v2906 = vpop.f32.mrf.mxu0
    %v2907 = vadd.f32 0.0, %v2906
    %v2908 = vpop.f32.mrf.mxu0
    %v2909 = vadd.f32 0.0, %v2908
    %2910 = vmatmul.bf16.gmra.mxu0 %v2850
    %v2911 = vpop.f32.mrf.mxu0
    %v2912 = vadd.f32 0.0, %v2911
    %v2913 = vpop.f32.mrf.mxu0
    %v2914 = vadd.f32 0.0, %v2913
    %2915 = vmatmul.bf16.gmra.mxu0 %v2851
    %v2916 = vpop.f32.mrf.mxu0
    %v2917 = vadd.f32 0.0, %v2916
    %v2918 = vpop.f32.mrf.mxu0
    %v2919 = vadd.f32 0.0, %v2918
    %2920 = vmatmul.bf16.gmra.mxu0 %v2852
    %v2921 = vpop.f32.mrf.mxu0
    %v2922 = vadd.f32 0.0, %v2921
    %v2923 = vpop.f32.mrf.mxu0
    %v2924 = vadd.f32 0.0, %v2923
    %2925 = vdwg.mxu0
    %v2926 = vpack.c.bf16 %v2887, %v2887
    %v2927 = vpack.c.bf16 %v2889, %v2889
    %v2928 = vpack.c.bf16 %v2892, %v2892
    %v2929 = vpack.c.bf16 %v2894, %v2894
    %v2930 = vpack.c.bf16 %v2897, %v2897
    %v2931 = vpack.c.bf16 %v2899, %v2899
    %v2932 = vpack.c.bf16 %v2902, %v2902
    %v2933 = vpack.c.bf16 %v2904, %v2904
    %v2934 = vpack.c.bf16 %v2907, %v2907
    %v2935 = vpack.c.bf16 %v2909, %v2909
    %v2936 = vpack.c.bf16 %v2912, %v2912
    %v2937 = vpack.c.bf16 %v2914, %v2914
    %v2938 = vpack.c.bf16 %v2917, %v2917
    %v2939 = vpack.c.bf16 %v2919, %v2919
    %v2940 = vpack.c.bf16 %v2922, %v2922
    %v2941 = vpack.c.bf16 %v2924, %v2924
    %2942 = vrot.lane.b32.xlu0 %v1711, 32
    %v2943 = vpop.permute.xlu0 %2942
    %2944 = vrot.lane.b32.xlu0 %v1712, 32
    %v2945 = vpop.permute.xlu0 %2944
    %2946 = vrot.lane.b32.xlu0 %v1713, 32
    %v2947 = vpop.permute.xlu0 %2946
    %2948 = vrot.lane.b32.xlu0 %v1714, 32
    %v2949 = vpop.permute.xlu0 %2948
    %2950 = vrot.lane.b32.xlu0 %v1715, 32
    %v2951 = vpop.permute.xlu0 %2950
    %2952 = vrot.lane.b32.xlu0 %v1716, 32
    %v2953 = vpop.permute.xlu0 %2952
    %2954 = vrot.lane.b32.xlu0 %v1717, 32
    %v2955 = vpop.permute.xlu0 %2954
    %2956 = vrot.lane.b32.xlu0 %v1718, 32
    %v2957 = vpop.permute.xlu0 %2956
    %2958 = vrot.lane.b32.xlu0 %v1735, 32
    %v2959 = vpop.permute.xlu0 %2958
    %2960 = vrot.lane.b32.xlu0 %v1736, 32
    %v2961 = vpop.permute.xlu0 %2960
    %2962 = vrot.lane.b32.xlu0 %v1737, 32
    %v2963 = vpop.permute.xlu0 %2962
    %2964 = vrot.lane.b32.xlu0 %v1738, 32
    %v2965 = vpop.permute.xlu0 %2964
    %2966 = vrot.lane.b32.xlu0 %v1739, 32
    %v2967 = vpop.permute.xlu0 %2966
    %2968 = vrot.lane.b32.xlu0 %v1740, 32
    %v2969 = vpop.permute.xlu0 %2968
    %2970 = vrot.lane.b32.xlu0 %v1741, 32
    %v2971 = vpop.permute.xlu0 %2970
    %2972 = vrot.lane.b32.xlu0 %v1742, 32
    %v2973 = vpop.permute.xlu0 %2972
    %v2975 = vsel %vm1743, %v2943, 0
    %v2978 = vsel %vm1743, %v2945, 0
    %v2981 = vsel %vm1743, %v2947, 0
    %v2984 = vsel %vm1743, %v2949, 0
    %v2987 = vsel %vm1743, %v2951, 0
    %v2990 = vsel %vm1743, %v2953, 0
    %v2993 = vsel %vm1743, %v2955, 0
    %v2996 = vsel %vm1743, %v2957, 0
    %v2999 = vsel %vm1743, %v2959, 0
    %v3002 = vsel %vm1743, %v2961, 0
    %v3005 = vsel %vm1743, %v2963, 0
    %v3008 = vsel %vm1743, %v2965, 0
    %v3011 = vsel %vm1743, %v2967, 0
    %v3014 = vsel %vm1743, %v2969, 0
    %v3017 = vsel %vm1743, %v2971, 0
    %v3020 = vsel %vm1743, %v2973, 0
    %3022 = vmatpush.bf16.xpose.msra.mxu0 %v3020
    %3023 = vmatpush.bf16.xpose.msra.mxu0 %v3017
    %3024 = vmatpush.bf16.xpose.msra.mxu0 %v3014
    %3025 = vmatpush.bf16.xpose.msra.mxu0 %v3011
    %3026 = vmatpush.bf16.xpose.msra.mxu0 %v3008
    %3027 = vmatpush.bf16.xpose.msra.mxu0 %v3005
    %3028 = vmatpush.bf16.xpose.msra.mxu0 %v3002
    %3029 = vmatpush.bf16.xpose.msra.mxu0 %v2999
    %3030 = vmatmul.bf16.gmra.mxu0 %v2975
    %v3031 = vpop.f32.mrf.mxu0
    %v3032 = vadd.f32 0.0, %v3031
    %v3033 = vpop.f32.mrf.mxu0
    %v3034 = vadd.f32 0.0, %v3033
    %3035 = vmatmul.bf16.gmra.mxu0 %v2978
    %v3036 = vpop.f32.mrf.mxu0
    %v3037 = vadd.f32 0.0, %v3036
    %v3038 = vpop.f32.mrf.mxu0
    %v3039 = vadd.f32 0.0, %v3038
    %3040 = vmatmul.bf16.gmra.mxu0 %v2981
    %v3041 = vpop.f32.mrf.mxu0
    %v3042 = vadd.f32 0.0, %v3041
    %v3043 = vpop.f32.mrf.mxu0
    %v3044 = vadd.f32 0.0, %v3043
    %3045 = vmatmul.bf16.gmra.mxu0 %v2984
    %v3046 = vpop.f32.mrf.mxu0
    %v3047 = vadd.f32 0.0, %v3046
    %v3048 = vpop.f32.mrf.mxu0
    %v3049 = vadd.f32 0.0, %v3048
    %3050 = vmatmul.bf16.gmra.mxu0 %v2987
    %v3051 = vpop.f32.mrf.mxu0
    %v3052 = vadd.f32 0.0, %v3051
    %v3053 = vpop.f32.mrf.mxu0
    %v3054 = vadd.f32 0.0, %v3053
    %3055 = vmatmul.bf16.gmra.mxu0 %v2990
    %v3056 = vpop.f32.mrf.mxu0
    %v3057 = vadd.f32 0.0, %v3056
    %v3058 = vpop.f32.mrf.mxu0
    %v3059 = vadd.f32 0.0, %v3058
    %3060 = vmatmul.bf16.gmra.mxu0 %v2993
    %v3061 = vpop.f32.mrf.mxu0
    %v3062 = vadd.f32 0.0, %v3061
    %v3063 = vpop.f32.mrf.mxu0
    %v3064 = vadd.f32 0.0, %v3063
    %3065 = vmatmul.bf16.gmra.mxu0 %v2996
    %v3066 = vpop.f32.mrf.mxu0
    %v3067 = vadd.f32 0.0, %v3066
    %v3068 = vpop.f32.mrf.mxu0
    %v3069 = vadd.f32 0.0, %v3068
    %3070 = vdwg.mxu0
    %v3071 = vmul.f32 %v3032, 0.088388346
    %v3072 = vmul.f32 %v3034, 0.088388346
    %v3073 = vmul.f32 %v3037, 0.088388346
    %v3074 = vmul.f32 %v3039, 0.088388346
    %v3075 = vmul.f32 %v3042, 0.088388346
    %v3076 = vmul.f32 %v3044, 0.088388346
    %v3077 = vmul.f32 %v3047, 0.088388346
    %v3078 = vmul.f32 %v3049, 0.088388346
    %v3079 = vmul.f32 %v3052, 0.088388346
    %v3080 = vmul.f32 %v3054, 0.088388346
    %v3081 = vmul.f32 %v3057, 0.088388346
    %v3082 = vmul.f32 %v3059, 0.088388346
    %v3083 = vmul.f32 %v3062, 0.088388346
    %v3084 = vmul.f32 %v3064, 0.088388346
    %v3085 = vmul.f32 %v3067, 0.088388346
    %v3086 = vmul.f32 %v3069, 0.088388346
    %v3087 = vsel %vm917, %v3071, -1e+30
    %v3088 = vsel %vm918, %v3072, -1e+30
    %v3089 = vsel %vm919, %v3073, -1e+30
    %v3090 = vsel %vm920, %v3074, -1e+30
    %v3091 = vsel %vm921, %v3075, -1e+30
    %v3092 = vsel %vm922, %v3076, -1e+30
    %v3093 = vsel %vm923, %v3077, -1e+30
    %v3094 = vsel %vm924, %v3078, -1e+30
    %v3095 = vsel %vm925, %v3079, -1e+30
    %v3096 = vsel %vm926, %v3080, -1e+30
    %v3097 = vsel %vm927, %v3081, -1e+30
    %v3098 = vsel %vm928, %v3082, -1e+30
    %v3099 = vsel %vm929, %v3083, -1e+30
    %v3100 = vsel %vm930, %v3084, -1e+30
    %v3101 = vsel %vm931, %v3085, -1e+30
    %v3102 = vsel %vm932, %v3086, -1e+30
    %3103 = vmax.xlane.f32.xlu0 %v3087
    %v3104 = vpop.xlane.xlu0 %3103
    %3105 = vmax.xlane.f32.xlu0 %v3088
    %v3106 = vpop.xlane.xlu0 %3105
    %3107 = vmax.xlane.f32.xlu0 %v3089
    %v3108 = vpop.xlane.xlu0 %3107
    %3109 = vmax.xlane.f32.xlu0 %v3090
    %v3110 = vpop.xlane.xlu0 %3109
    %3111 = vmax.xlane.f32.xlu0 %v3091
    %v3112 = vpop.xlane.xlu0 %3111
    %3113 = vmax.xlane.f32.xlu0 %v3092
    %v3114 = vpop.xlane.xlu0 %3113
    %3115 = vmax.xlane.f32.xlu0 %v3093
    %v3116 = vpop.xlane.xlu0 %3115
    %3117 = vmax.xlane.f32.xlu0 %v3094
    %v3118 = vpop.xlane.xlu0 %3117
    %3119 = vmax.xlane.f32.xlu0 %v3095
    %v3120 = vpop.xlane.xlu0 %3119
    %3121 = vmax.xlane.f32.xlu0 %v3096
    %v3122 = vpop.xlane.xlu0 %3121
    %3123 = vmax.xlane.f32.xlu0 %v3097
    %v3124 = vpop.xlane.xlu0 %3123
    %3125 = vmax.xlane.f32.xlu0 %v3098
    %v3126 = vpop.xlane.xlu0 %3125
    %3127 = vmax.xlane.f32.xlu0 %v3099
    %v3128 = vpop.xlane.xlu0 %3127
    %3129 = vmax.xlane.f32.xlu0 %v3100
    %v3130 = vpop.xlane.xlu0 %3129
    %3131 = vmax.xlane.f32.xlu0 %v3101
    %v3132 = vpop.xlane.xlu0 %3131
    %3133 = vmax.xlane.f32.xlu0 %v3102
    %v3134 = vpop.xlane.xlu0 %3133
    %v3135 = vsub.f32 %v3087, %v3104
    %v3136 = vsub.f32 %v3088, %v3106
    %v3137 = vsub.f32 %v3089, %v3108
    %v3138 = vsub.f32 %v3090, %v3110
    %v3139 = vsub.f32 %v3091, %v3112
    %v3140 = vsub.f32 %v3092, %v3114
    %v3141 = vsub.f32 %v3093, %v3116
    %v3142 = vsub.f32 %v3094, %v3118
    %v3143 = vsub.f32 %v3095, %v3120
    %v3144 = vsub.f32 %v3096, %v3122
    %v3145 = vsub.f32 %v3097, %v3124
    %v3146 = vsub.f32 %v3098, %v3126
    %v3147 = vsub.f32 %v3099, %v3128
    %v3148 = vsub.f32 %v3100, %v3130
    %v3149 = vsub.f32 %v3101, %v3132
    %v3150 = vsub.f32 %v3102, %v3134
    %v3151 = vmul.f32 %v3135, 1.442695
    %v3152 = vpow.pop %v3151
    %v3153 = vmul.f32 %v3136, 1.442695
    %v3154 = vpow.pop %v3153
    %v3155 = vmul.f32 %v3137, 1.442695
    %v3156 = vpow.pop %v3155
    %v3157 = vmul.f32 %v3138, 1.442695
    %v3158 = vpow.pop %v3157
    %v3159 = vmul.f32 %v3139, 1.442695
    %v3160 = vpow.pop %v3159
    %v3161 = vmul.f32 %v3140, 1.442695
    %v3162 = vpow.pop %v3161
    %v3163 = vmul.f32 %v3141, 1.442695
    %v3164 = vpow.pop %v3163
    %v3165 = vmul.f32 %v3142, 1.442695
    %v3166 = vpow.pop %v3165
    %v3167 = vmul.f32 %v3143, 1.442695
    %v3168 = vpow.pop %v3167
    %v3169 = vmul.f32 %v3144, 1.442695
    %v3170 = vpow.pop %v3169
    %v3171 = vmul.f32 %v3145, 1.442695
    %v3172 = vpow.pop %v3171
    %v3173 = vmul.f32 %v3146, 1.442695
    %v3174 = vpow.pop %v3173
    %v3175 = vmul.f32 %v3147, 1.442695
    %v3176 = vpow.pop %v3175
    %v3177 = vmul.f32 %v3148, 1.442695
    %v3178 = vpow.pop %v3177
    %v3179 = vmul.f32 %v3149, 1.442695
    %v3180 = vpow.pop %v3179
    %v3181 = vmul.f32 %v3150, 1.442695
    %v3182 = vpow.pop %v3181
    %3183 = vadd.xlane.f32.xlu0 %v3152
    %v3184 = vpop.xlane.xlu0 %3183
    %3185 = vadd.xlane.f32.xlu0 %v3154
    %v3186 = vpop.xlane.xlu0 %3185
    %3187 = vadd.xlane.f32.xlu0 %v3156
    %v3188 = vpop.xlane.xlu0 %3187
    %3189 = vadd.xlane.f32.xlu0 %v3158
    %v3190 = vpop.xlane.xlu0 %3189
    %3191 = vadd.xlane.f32.xlu0 %v3160
    %v3192 = vpop.xlane.xlu0 %3191
    %3193 = vadd.xlane.f32.xlu0 %v3162
    %v3194 = vpop.xlane.xlu0 %3193
    %3195 = vadd.xlane.f32.xlu0 %v3164
    %v3196 = vpop.xlane.xlu0 %3195
    %3197 = vadd.xlane.f32.xlu0 %v3166
    %v3198 = vpop.xlane.xlu0 %3197
    %3199 = vadd.xlane.f32.xlu0 %v3168
    %v3200 = vpop.xlane.xlu0 %3199
    %3201 = vadd.xlane.f32.xlu0 %v3170
    %v3202 = vpop.xlane.xlu0 %3201
    %3203 = vadd.xlane.f32.xlu0 %v3172
    %v3204 = vpop.xlane.xlu0 %3203
    %3205 = vadd.xlane.f32.xlu0 %v3174
    %v3206 = vpop.xlane.xlu0 %3205
    %3207 = vadd.xlane.f32.xlu0 %v3176
    %v3208 = vpop.xlane.xlu0 %3207
    %3209 = vadd.xlane.f32.xlu0 %v3178
    %v3210 = vpop.xlane.xlu0 %3209
    %3211 = vadd.xlane.f32.xlu0 %v3180
    %v3212 = vpop.xlane.xlu0 %3211
    %3213 = vadd.xlane.f32.xlu0 %v3182
    %v3214 = vpop.xlane.xlu0 %3213
    %v3215 = vrcp.pop %v3184
    %v3216 = vrcp.pop %v3186
    %v3217 = vrcp.pop %v3188
    %v3218 = vrcp.pop %v3190
    %v3219 = vrcp.pop %v3192
    %v3220 = vrcp.pop %v3194
    %v3221 = vrcp.pop %v3196
    %v3222 = vrcp.pop %v3198
    %v3223 = vrcp.pop %v3200
    %v3224 = vrcp.pop %v3202
    %v3225 = vrcp.pop %v3204
    %v3226 = vrcp.pop %v3206
    %v3227 = vrcp.pop %v3208
    %v3228 = vrcp.pop %v3210
    %v3229 = vrcp.pop %v3212
    %v3230 = vrcp.pop %v3214
    %v3231 = vmul.f32 %v3152, %v3215
    %v3232 = vmul.f32 %v3154, %v3216
    %v3233 = vmul.f32 %v3156, %v3217
    %v3234 = vmul.f32 %v3158, %v3218
    %v3235 = vmul.f32 %v3160, %v3219
    %v3236 = vmul.f32 %v3162, %v3220
    %v3237 = vmul.f32 %v3164, %v3221
    %v3238 = vmul.f32 %v3166, %v3222
    %v3239 = vmul.f32 %v3168, %v3223
    %v3240 = vmul.f32 %v3170, %v3224
    %v3241 = vmul.f32 %v3172, %v3225
    %v3242 = vmul.f32 %v3174, %v3226
    %v3243 = vmul.f32 %v3176, %v3227
    %v3244 = vmul.f32 %v3178, %v3228
    %v3245 = vmul.f32 %v3180, %v3229
    %v3246 = vmul.f32 %v3182, %v3230
    %v3247 = vpack.c.bf16 %v3232, %v3231
    %v3248 = vpack.c.bf16 %v3234, %v3233
    %v3249 = vpack.c.bf16 %v3236, %v3235
    %v3250 = vpack.c.bf16 %v3238, %v3237
    %v3251 = vpack.c.bf16 %v3240, %v3239
    %v3252 = vpack.c.bf16 %v3242, %v3241
    %v3253 = vpack.c.bf16 %v3244, %v3243
    %v3254 = vpack.c.bf16 %v3246, %v3245
    %3255 = vrot.lane.b32.xlu0 %v2057, 32
    %v3256 = vpop.permute.xlu0 %3255
    %3257 = vrot.lane.b32.xlu0 %v2058, 32
    %v3258 = vpop.permute.xlu0 %3257
    %3259 = vrot.lane.b32.xlu0 %v2059, 32
    %v3260 = vpop.permute.xlu0 %3259
    %3261 = vrot.lane.b32.xlu0 %v2060, 32
    %v3262 = vpop.permute.xlu0 %3261
    %3263 = vrot.lane.b32.xlu0 %v2061, 32
    %v3264 = vpop.permute.xlu0 %3263
    %3265 = vrot.lane.b32.xlu0 %v2062, 32
    %v3266 = vpop.permute.xlu0 %3265
    %3267 = vrot.lane.b32.xlu0 %v2063, 32
    %v3268 = vpop.permute.xlu0 %3267
    %3269 = vrot.lane.b32.xlu0 %v2064, 32
    %v3270 = vpop.permute.xlu0 %3269
    %3279 = vmatpush.bf16.msra.mxu0 %v3270
    %3280 = vmatpush.bf16.msra.mxu0 %v3268
    %3281 = vmatpush.bf16.msra.mxu0 %v3266
    %3282 = vmatpush.bf16.msra.mxu0 %v3264
    %3283 = vmatpush.bf16.msra.mxu0 %v3262
    %3284 = vmatpush.bf16.msra.mxu0 %v3260
    %3285 = vmatpush.bf16.msra.mxu0 %v3258
    %3286 = vmatpush.bf16.msra.mxu0 %v3256
    %3287 = vmatmul.bf16.gmra.mxu0 %v3247
    %v3288 = vpop.f32.mrf.mxu0
    %v3289 = vadd.f32 0.0, %v3288
    %v3290 = vpop.f32.mrf.mxu0
    %v3291 = vadd.f32 0.0, %v3290
    %3292 = vmatmul.bf16.gmra.mxu0 %v3248
    %v3293 = vpop.f32.mrf.mxu0
    %v3294 = vadd.f32 0.0, %v3293
    %v3295 = vpop.f32.mrf.mxu0
    %v3296 = vadd.f32 0.0, %v3295
    %3297 = vmatmul.bf16.gmra.mxu0 %v3249
    %v3298 = vpop.f32.mrf.mxu0
    %v3299 = vadd.f32 0.0, %v3298
    %v3300 = vpop.f32.mrf.mxu0
    %v3301 = vadd.f32 0.0, %v3300
    %3302 = vmatmul.bf16.gmra.mxu0 %v3250
    %v3303 = vpop.f32.mrf.mxu0
    %v3304 = vadd.f32 0.0, %v3303
    %v3305 = vpop.f32.mrf.mxu0
    %v3306 = vadd.f32 0.0, %v3305
    %3307 = vmatmul.bf16.gmra.mxu0 %v3251
    %v3308 = vpop.f32.mrf.mxu0
    %v3309 = vadd.f32 0.0, %v3308
    %v3310 = vpop.f32.mrf.mxu0
    %v3311 = vadd.f32 0.0, %v3310
    %3312 = vmatmul.bf16.gmra.mxu0 %v3252
    %v3313 = vpop.f32.mrf.mxu0
    %v3314 = vadd.f32 0.0, %v3313
    %v3315 = vpop.f32.mrf.mxu0
    %v3316 = vadd.f32 0.0, %v3315
    %3317 = vmatmul.bf16.gmra.mxu0 %v3253
    %v3318 = vpop.f32.mrf.mxu0
    %v3319 = vadd.f32 0.0, %v3318
    %v3320 = vpop.f32.mrf.mxu0
    %v3321 = vadd.f32 0.0, %v3320
    %3322 = vmatmul.bf16.gmra.mxu0 %v3254
    %v3323 = vpop.f32.mrf.mxu0
    %v3324 = vadd.f32 0.0, %v3323
    %v3325 = vpop.f32.mrf.mxu0
    %v3326 = vadd.f32 0.0, %v3325
    %3327 = vdwg.mxu0
    %v3328 = vpack.c.bf16 %v3289, %v3289
    %v3329 = vpack.c.bf16 %v3291, %v3291
    %v3330 = vpack.c.bf16 %v3294, %v3294
    %v3331 = vpack.c.bf16 %v3296, %v3296
    %v3332 = vpack.c.bf16 %v3299, %v3299
    %v3333 = vpack.c.bf16 %v3301, %v3301
    %v3334 = vpack.c.bf16 %v3304, %v3304
    %v3335 = vpack.c.bf16 %v3306, %v3306
    %v3336 = vpack.c.bf16 %v3309, %v3309
    %v3337 = vpack.c.bf16 %v3311, %v3311
    %v3338 = vpack.c.bf16 %v3314, %v3314
    %v3339 = vpack.c.bf16 %v3316, %v3316
    %v3340 = vpack.c.bf16 %v3319, %v3319
    %v3341 = vpack.c.bf16 %v3321, %v3321
    %v3342 = vpack.c.bf16 %v3324, %v3324
    %v3343 = vpack.c.bf16 %v3326, %v3326
    %v3360 = vunpack.c.l.b16 %v2122
    %v3361 = vunpack.c.l.b16 %v2123
    %v3362 = vunpack.c.l.b16 %v2124
    %v3363 = vunpack.c.l.b16 %v2125
    %v3364 = vunpack.c.l.b16 %v2126
    %v3365 = vunpack.c.l.b16 %v2127
    %v3366 = vunpack.c.l.b16 %v2128
    %v3367 = vunpack.c.l.b16 %v2129
    %v3368 = vunpack.c.l.b16 %v2130
    %v3369 = vunpack.c.l.b16 %v2131
    %v3370 = vunpack.c.l.b16 %v2132
    %v3371 = vunpack.c.l.b16 %v2133
    %v3372 = vunpack.c.l.b16 %v2134
    %v3373 = vunpack.c.l.b16 %v2135
    %v3374 = vunpack.c.l.b16 %v2136
    %v3375 = vunpack.c.l.b16 %v2137
    %v3376 = vpack.c.b16 %v3361, %v3360
    %v3377 = vpack.c.b16 %v3363, %v3362
    %v3378 = vpack.c.b16 %v3365, %v3364
    %v3379 = vpack.c.b16 %v3367, %v3366
    %v3380 = vpack.c.b16 %v3369, %v3368
    %v3381 = vpack.c.b16 %v3371, %v3370
    %v3382 = vpack.c.b16 %v3373, %v3372
    %v3383 = vpack.c.b16 %v3375, %v3374
    %v3400 = vunpack.c.l.b16 %v2524
    %v3401 = vunpack.c.l.b16 %v2525
    %v3402 = vunpack.c.l.b16 %v2526
    %v3403 = vunpack.c.l.b16 %v2527
    %v3404 = vunpack.c.l.b16 %v2528
    %v3405 = vunpack.c.l.b16 %v2529
    %v3406 = vunpack.c.l.b16 %v2530
    %v3407 = vunpack.c.l.b16 %v2531
    %v3408 = vunpack.c.l.b16 %v2532
    %v3409 = vunpack.c.l.b16 %v2533
    %v3410 = vunpack.c.l.b16 %v2534
    %v3411 = vunpack.c.l.b16 %v2535
    %v3412 = vunpack.c.l.b16 %v2536
    %v3413 = vunpack.c.l.b16 %v2537
    %v3414 = vunpack.c.l.b16 %v2538
    %v3415 = vunpack.c.l.b16 %v2539
    %v3416 = vpack.c.b16 %v3401, %v3400
    %v3417 = vpack.c.b16 %v3403, %v3402
    %v3418 = vpack.c.b16 %v3405, %v3404
    %v3419 = vpack.c.b16 %v3407, %v3406
    %v3420 = vpack.c.b16 %v3409, %v3408
    %v3421 = vpack.c.b16 %v3411, %v3410
    %v3422 = vpack.c.b16 %v3413, %v3412
    %v3423 = vpack.c.b16 %v3415, %v3414
    %3424 = vrot.lane.b32.xlu0 %v3416, 32
    %v3425 = vpop.permute.xlu0 %3424
    %3426 = vrot.lane.b32.xlu0 %v3417, 32
    %v3427 = vpop.permute.xlu0 %3426
    %3428 = vrot.lane.b32.xlu0 %v3418, 32
    %v3429 = vpop.permute.xlu0 %3428
    %3430 = vrot.lane.b32.xlu0 %v3419, 32
    %v3431 = vpop.permute.xlu0 %3430
    %3432 = vrot.lane.b32.xlu0 %v3420, 32
    %v3433 = vpop.permute.xlu0 %3432
    %3434 = vrot.lane.b32.xlu0 %v3421, 32
    %v3435 = vpop.permute.xlu0 %3434
    %3436 = vrot.lane.b32.xlu0 %v3422, 32
    %v3437 = vpop.permute.xlu0 %3436
    %3438 = vrot.lane.b32.xlu0 %v3423, 32
    %v3439 = vpop.permute.xlu0 %3438
    %v3456 = vunpack.c.l.b16 %v2926
    %v3457 = vunpack.c.l.b16 %v2927
    %v3458 = vunpack.c.l.b16 %v2928
    %v3459 = vunpack.c.l.b16 %v2929
    %v3460 = vunpack.c.l.b16 %v2930
    %v3461 = vunpack.c.l.b16 %v2931
    %v3462 = vunpack.c.l.b16 %v2932
    %v3463 = vunpack.c.l.b16 %v2933
    %v3464 = vunpack.c.l.b16 %v2934
    %v3465 = vunpack.c.l.b16 %v2935
    %v3466 = vunpack.c.l.b16 %v2936
    %v3467 = vunpack.c.l.b16 %v2937
    %v3468 = vunpack.c.l.b16 %v2938
    %v3469 = vunpack.c.l.b16 %v2939
    %v3470 = vunpack.c.l.b16 %v2940
    %v3471 = vunpack.c.l.b16 %v2941
    %v3472 = vpack.c.b16 %v3457, %v3456
    %v3473 = vpack.c.b16 %v3459, %v3458
    %v3474 = vpack.c.b16 %v3461, %v3460
    %v3475 = vpack.c.b16 %v3463, %v3462
    %v3476 = vpack.c.b16 %v3465, %v3464
    %v3477 = vpack.c.b16 %v3467, %v3466
    %v3478 = vpack.c.b16 %v3469, %v3468
    %v3479 = vpack.c.b16 %v3471, %v3470
    %3480 = vrot.lane.b32.xlu0 %v3472, 64
    %v3481 = vpop.permute.xlu0 %3480
    %3482 = vrot.lane.b32.xlu0 %v3473, 64
    %v3483 = vpop.permute.xlu0 %3482
    %3484 = vrot.lane.b32.xlu0 %v3474, 64
    %v3485 = vpop.permute.xlu0 %3484
    %3486 = vrot.lane.b32.xlu0 %v3475, 64
    %v3487 = vpop.permute.xlu0 %3486
    %3488 = vrot.lane.b32.xlu0 %v3476, 64
    %v3489 = vpop.permute.xlu0 %3488
    %3490 = vrot.lane.b32.xlu0 %v3477, 64
    %v3491 = vpop.permute.xlu0 %3490
    %3492 = vrot.lane.b32.xlu0 %v3478, 64
    %v3493 = vpop.permute.xlu0 %3492
    %3494 = vrot.lane.b32.xlu0 %v3479, 64
    %v3495 = vpop.permute.xlu0 %3494
    %v3512 = vunpack.c.l.b16 %v3328
    %v3513 = vunpack.c.l.b16 %v3329
    %v3514 = vunpack.c.l.b16 %v3330
    %v3515 = vunpack.c.l.b16 %v3331
    %v3516 = vunpack.c.l.b16 %v3332
    %v3517 = vunpack.c.l.b16 %v3333
    %v3518 = vunpack.c.l.b16 %v3334
    %v3519 = vunpack.c.l.b16 %v3335
    %v3520 = vunpack.c.l.b16 %v3336
    %v3521 = vunpack.c.l.b16 %v3337
    %v3522 = vunpack.c.l.b16 %v3338
    %v3523 = vunpack.c.l.b16 %v3339
    %v3524 = vunpack.c.l.b16 %v3340
    %v3525 = vunpack.c.l.b16 %v3341
    %v3526 = vunpack.c.l.b16 %v3342
    %v3527 = vunpack.c.l.b16 %v3343
    %v3528 = vpack.c.b16 %v3513, %v3512
    %v3529 = vpack.c.b16 %v3515, %v3514
    %v3530 = vpack.c.b16 %v3517, %v3516
    %v3531 = vpack.c.b16 %v3519, %v3518
    %v3532 = vpack.c.b16 %v3521, %v3520
    %v3533 = vpack.c.b16 %v3523, %v3522
    %v3534 = vpack.c.b16 %v3525, %v3524
    %v3535 = vpack.c.b16 %v3527, %v3526
    %3536 = vrot.lane.b32.xlu0 %v3528, 96
    %v3537 = vpop.permute.xlu0 %3536
    %3538 = vrot.lane.b32.xlu0 %v3529, 96
    %v3539 = vpop.permute.xlu0 %3538
    %3540 = vrot.lane.b32.xlu0 %v3530, 96
    %v3541 = vpop.permute.xlu0 %3540
    %3542 = vrot.lane.b32.xlu0 %v3531, 96
    %v3543 = vpop.permute.xlu0 %3542
    %3544 = vrot.lane.b32.xlu0 %v3532, 96
    %v3545 = vpop.permute.xlu0 %3544
    %3546 = vrot.lane.b32.xlu0 %v3533, 96
    %v3547 = vpop.permute.xlu0 %3546
    %3548 = vrot.lane.b32.xlu0 %v3534, 96
    %v3549 = vpop.permute.xlu0 %3548
    %3550 = vrot.lane.b32.xlu0 %v3535, 96
    %v3551 = vpop.permute.xlu0 %3550
    %v3554 = vsel %vm1743, %v3376, %v3425
    %v3557 = vsel %vm1743, %v3377, %v3427
    %v3560 = vsel %vm1743, %v3378, %v3429
    %v3563 = vsel %vm1743, %v3379, %v3431
    %v3566 = vsel %vm1743, %v3380, %v3433
    %v3569 = vsel %vm1743, %v3381, %v3435
    %v3572 = vsel %vm1743, %v3382, %v3437
    %v3575 = vsel %vm1743, %v3383, %v3439
    %vm3576 = vcmask 523264
    %v3578 = vsel %vm3576, %v3554, %v3481
    %v3580 = vsel %vm3576, %v3557, %v3483
    %v3582 = vsel %vm3576, %v3560, %v3485
    %v3584 = vsel %vm3576, %v3563, %v3487
    %v3586 = vsel %vm3576, %v3566, %v3489
    %v3588 = vsel %vm3576, %v3569, %v3491
    %v3590 = vsel %vm3576, %v3572, %v3493
    %v3592 = vsel %vm3576, %v3575, %v3495
    %vm3593 = vcmask 785408
    %v3595 = vsel %vm3593, %v3578, %v3537
    %v3598 = vsel %vm3593, %v3580, %v3539
    %v3601 = vsel %vm3593, %v3582, %v3541
    %v3604 = vsel %vm3593, %v3584, %v3543
    %v3607 = vsel %vm3593, %v3586, %v3545
    %v3610 = vsel %vm3593, %v3588, %v3547
    %v3613 = vsel %vm3593, %v3590, %v3549
    %v3616 = vsel %vm3593, %v3592, %v3551
    %v3618 = vld [vmem:[%s6] sm:$0xf]
    %v3619 = vld [vmem:[%s6 + $0x4] sm:$0xf]
    %v3620 = vld [vmem:[%s6 + $0x8] sm:$0xf]
    %v3621 = vld [vmem:[%s6 + $0xc] sm:$0xf]
    %v3622 = vld [vmem:[%s6 + $0x10] sm:$0xf]
    %v3623 = vld [vmem:[%s6 + $0x14] sm:$0xf]
    %v3624 = vld [vmem:[%s6 + $0x18] sm:$0xf]
    %v3625 = vld [vmem:[%s6 + $0x1c] sm:$0xf]
    %v3626 = vld [vmem:[%s6 + $0x20] sm:$0xf]
    %v3627 = vld [vmem:[%s6 + $0x24] sm:$0xf]
    %v3628 = vld [vmem:[%s6 + $0x28] sm:$0xf]
    %v3629 = vld [vmem:[%s6 + $0x2c] sm:$0xf]
    %v3630 = vld [vmem:[%s6 + $0x30] sm:$0xf]
    %v3631 = vld [vmem:[%s6 + $0x34] sm:$0xf]
    %v3632 = vld [vmem:[%s6 + $0x38] sm:$0xf]
    %v3633 = vld [vmem:[%s6 + $0x3c] sm:$0xf]
    %v3650 = vunpack.c.l.b16 %v3618
    %v3651 = vunpack.c.l.b16 %v3619
    %v3652 = vunpack.c.l.b16 %v3620
    %v3653 = vunpack.c.l.b16 %v3621
    %v3654 = vunpack.c.l.b16 %v3622
    %v3655 = vunpack.c.l.b16 %v3623
    %v3656 = vunpack.c.l.b16 %v3624
    %v3657 = vunpack.c.l.b16 %v3625
    %v3658 = vunpack.c.l.b16 %v3626
    %v3659 = vunpack.c.l.b16 %v3627
    %v3660 = vunpack.c.l.b16 %v3628
    %v3661 = vunpack.c.l.b16 %v3629
    %v3662 = vunpack.c.l.b16 %v3630
    %v3663 = vunpack.c.l.b16 %v3631
    %v3664 = vunpack.c.l.b16 %v3632
    %v3665 = vunpack.c.l.b16 %v3633
    %v3666 = vpack.c.b16 %v3651, %v3650
    %v3667 = vpack.c.b16 %v3653, %v3652
    %v3668 = vpack.c.b16 %v3655, %v3654
    %v3669 = vpack.c.b16 %v3657, %v3656
    %v3670 = vpack.c.b16 %v3659, %v3658
    %v3671 = vpack.c.b16 %v3661, %v3660
    %v3672 = vpack.c.b16 %v3663, %v3662
    %v3673 = vpack.c.b16 %v3665, %v3664
    %3682 = vmatpush.bf16.msra.mxu0 %v3673
    %3683 = vmatpush.bf16.msra.mxu0 %v3672
    %3684 = vmatpush.bf16.msra.mxu0 %v3671
    %3685 = vmatpush.bf16.msra.mxu0 %v3670
    %3686 = vmatpush.bf16.msra.mxu0 %v3669
    %3687 = vmatpush.bf16.msra.mxu0 %v3668
    %3688 = vmatpush.bf16.msra.mxu0 %v3667
    %3689 = vmatpush.bf16.msra.mxu0 %v3666
    %3690 = vmatmul.bf16.gmra.mxu0 %v3595
    %v3691 = vpop.f32.mrf.mxu0
    %v3692 = vadd.f32 0.0, %v3691
    %v3693 = vpop.f32.mrf.mxu0
    %v3694 = vadd.f32 0.0, %v3693
    %3695 = vmatmul.bf16.gmra.mxu0 %v3598
    %v3696 = vpop.f32.mrf.mxu0
    %v3697 = vadd.f32 0.0, %v3696
    %v3698 = vpop.f32.mrf.mxu0
    %v3699 = vadd.f32 0.0, %v3698
    %3700 = vmatmul.bf16.gmra.mxu0 %v3601
    %v3701 = vpop.f32.mrf.mxu0
    %v3702 = vadd.f32 0.0, %v3701
    %v3703 = vpop.f32.mrf.mxu0
    %v3704 = vadd.f32 0.0, %v3703
    %3705 = vmatmul.bf16.gmra.mxu0 %v3604
    %v3706 = vpop.f32.mrf.mxu0
    %v3707 = vadd.f32 0.0, %v3706
    %v3708 = vpop.f32.mrf.mxu0
    %v3709 = vadd.f32 0.0, %v3708
    %3710 = vmatmul.bf16.gmra.mxu0 %v3607
    %v3711 = vpop.f32.mrf.mxu0
    %v3712 = vadd.f32 0.0, %v3711
    %v3713 = vpop.f32.mrf.mxu0
    %v3714 = vadd.f32 0.0, %v3713
    %3715 = vmatmul.bf16.gmra.mxu0 %v3610
    %v3716 = vpop.f32.mrf.mxu0
    %v3717 = vadd.f32 0.0, %v3716
    %v3718 = vpop.f32.mrf.mxu0
    %v3719 = vadd.f32 0.0, %v3718
    %3720 = vmatmul.bf16.gmra.mxu0 %v3613
    %v3721 = vpop.f32.mrf.mxu0
    %v3722 = vadd.f32 0.0, %v3721
    %v3723 = vpop.f32.mrf.mxu0
    %v3724 = vadd.f32 0.0, %v3723
    %3725 = vmatmul.bf16.gmra.mxu0 %v3616
    %v3726 = vpop.f32.mrf.mxu0
    %v3727 = vadd.f32 0.0, %v3726
    %v3728 = vpop.f32.mrf.mxu0
    %v3729 = vadd.f32 0.0, %v3728
    %3730 = vdwg.mxu0
    %v3731 = vadd.f32 %v787, %v3692
    %v3732 = vadd.f32 %v790, %v3694
    %v3733 = vadd.f32 %v793, %v3697
    %v3734 = vadd.f32 %v796, %v3699
    %v3735 = vadd.f32 %v799, %v3702
    %v3736 = vadd.f32 %v802, %v3704
    %v3737 = vadd.f32 %v805, %v3707
    %v3738 = vadd.f32 %v808, %v3709
    %v3739 = vadd.f32 %v811, %v3712
    %v3740 = vadd.f32 %v814, %v3714
    %v3741 = vadd.f32 %v817, %v3717
    %v3742 = vadd.f32 %v820, %v3719
    %v3743 = vadd.f32 %v823, %v3722
    %v3744 = vadd.f32 %v826, %v3724
    %v3745 = vadd.f32 %v829, %v3727
    %v3746 = vadd.f32 %v832, %v3729
    %v3747 = vld [vmem:[#allocation11] sm:$0x1]
    %v3749 = vperm.slane %v3747, 0
    %v3751 = vadd.f32 %v3731, %v3749
    %v3752 = vadd.f32 %v3732, %v3749
    %v3753 = vadd.f32 %v3733, %v3749
    %v3754 = vadd.f32 %v3734, %v3749
    %v3755 = vadd.f32 %v3735, %v3749
    %v3756 = vadd.f32 %v3736, %v3749
    %v3757 = vadd.f32 %v3737, %v3749
    %v3758 = vadd.f32 %v3738, %v3749
    %v3759 = vadd.f32 %v3739, %v3749
    %v3760 = vadd.f32 %v3740, %v3749
    %v3761 = vadd.f32 %v3741, %v3749
    %v3762 = vadd.f32 %v3742, %v3749
    %v3763 = vadd.f32 %v3743, %v3749
    %v3764 = vadd.f32 %v3744, %v3749
    %v3765 = vadd.f32 %v3745, %v3749
    %v3766 = vadd.f32 %v3746, %v3749
    %v3767 = vld [vmem:[#allocation13] sm:$0x1]
    %v3768 = vld [vmem:[#allocation14] sm:$0x1]
    %3769 = vadd.xlane.f32.xlu0 %v3751
    %v3770 = vpop.xlane.xlu0 %3769
    %3771 = vadd.xlane.f32.xlu0 %v3752
    %v3772 = vpop.xlane.xlu0 %3771
    %3773 = vadd.xlane.f32.xlu0 %v3753
    %v3774 = vpop.xlane.xlu0 %3773
    %3775 = vadd.xlane.f32.xlu0 %v3754
    %v3776 = vpop.xlane.xlu0 %3775
    %3777 = vadd.xlane.f32.xlu0 %v3755
    %v3778 = vpop.xlane.xlu0 %3777
    %3779 = vadd.xlane.f32.xlu0 %v3756
    %v3780 = vpop.xlane.xlu0 %3779
    %3781 = vadd.xlane.f32.xlu0 %v3757
    %v3782 = vpop.xlane.xlu0 %3781
    %3783 = vadd.xlane.f32.xlu0 %v3758
    %v3784 = vpop.xlane.xlu0 %3783
    %3785 = vadd.xlane.f32.xlu0 %v3759
    %v3786 = vpop.xlane.xlu0 %3785
    %3787 = vadd.xlane.f32.xlu0 %v3760
    %v3788 = vpop.xlane.xlu0 %3787
    %3789 = vadd.xlane.f32.xlu0 %v3761
    %v3790 = vpop.xlane.xlu0 %3789
    %3791 = vadd.xlane.f32.xlu0 %v3762
    %v3792 = vpop.xlane.xlu0 %3791
    %3793 = vadd.xlane.f32.xlu0 %v3763
    %v3794 = vpop.xlane.xlu0 %3793
    %3795 = vadd.xlane.f32.xlu0 %v3764
    %v3796 = vpop.xlane.xlu0 %3795
    %3797 = vadd.xlane.f32.xlu0 %v3765
    %v3798 = vpop.xlane.xlu0 %3797
    %3799 = vadd.xlane.f32.xlu0 %v3766
    %v3800 = vpop.xlane.xlu0 %3799
    %v3801 = vmul.f32 %v3770, %v973
    %v3802 = vmul.f32 %v3772, %v973
    %v3803 = vmul.f32 %v3774, %v973
    %v3804 = vmul.f32 %v3776, %v973
    %v3805 = vmul.f32 %v3778, %v973
    %v3806 = vmul.f32 %v3780, %v973
    %v3807 = vmul.f32 %v3782, %v973
    %v3808 = vmul.f32 %v3784, %v973
    %v3809 = vmul.f32 %v3786, %v973
    %v3810 = vmul.f32 %v3788, %v973
    %v3811 = vmul.f32 %v3790, %v973
    %v3812 = vmul.f32 %v3792, %v973
    %v3813 = vmul.f32 %v3794, %v973
    %v3814 = vmul.f32 %v3796, %v973
    %v3815 = vmul.f32 %v3798, %v973
    %v3816 = vmul.f32 %v3800, %v973
    %v3817 = vmul.f32 %v3751, %v3751
    %v3818 = vmul.f32 %v3752, %v3752
    %v3819 = vmul.f32 %v3753, %v3753
    %v3820 = vmul.f32 %v3754, %v3754
    %v3821 = vmul.f32 %v3755, %v3755
    %v3822 = vmul.f32 %v3756, %v3756
    %v3823 = vmul.f32 %v3757, %v3757
    %v3824 = vmul.f32 %v3758, %v3758
    %v3825 = vmul.f32 %v3759, %v3759
    %v3826 = vmul.f32 %v3760, %v3760
    %v3827 = vmul.f32 %v3761, %v3761
    %v3828 = vmul.f32 %v3762, %v3762
    %v3829 = vmul.f32 %v3763, %v3763
    %v3830 = vmul.f32 %v3764, %v3764
    %v3831 = vmul.f32 %v3765, %v3765
    %v3832 = vmul.f32 %v3766, %v3766
    %3833 = vadd.xlane.f32.xlu0 %v3817
    %v3834 = vpop.xlane.xlu0 %3833
    %3835 = vadd.xlane.f32.xlu0 %v3818
    %v3836 = vpop.xlane.xlu0 %3835
    %3837 = vadd.xlane.f32.xlu0 %v3819
    %v3838 = vpop.xlane.xlu0 %3837
    %3839 = vadd.xlane.f32.xlu0 %v3820
    %v3840 = vpop.xlane.xlu0 %3839
    %3841 = vadd.xlane.f32.xlu0 %v3821
    %v3842 = vpop.xlane.xlu0 %3841
    %3843 = vadd.xlane.f32.xlu0 %v3822
    %v3844 = vpop.xlane.xlu0 %3843
    %3845 = vadd.xlane.f32.xlu0 %v3823
    %v3846 = vpop.xlane.xlu0 %3845
    %3847 = vadd.xlane.f32.xlu0 %v3824
    %v3848 = vpop.xlane.xlu0 %3847
    %3849 = vadd.xlane.f32.xlu0 %v3825
    %v3850 = vpop.xlane.xlu0 %3849
    %3851 = vadd.xlane.f32.xlu0 %v3826
    %v3852 = vpop.xlane.xlu0 %3851
    %3853 = vadd.xlane.f32.xlu0 %v3827
    %v3854 = vpop.xlane.xlu0 %3853
    %3855 = vadd.xlane.f32.xlu0 %v3828
    %v3856 = vpop.xlane.xlu0 %3855
    %3857 = vadd.xlane.f32.xlu0 %v3829
    %v3858 = vpop.xlane.xlu0 %3857
    %3859 = vadd.xlane.f32.xlu0 %v3830
    %v3860 = vpop.xlane.xlu0 %3859
    %3861 = vadd.xlane.f32.xlu0 %v3831
    %v3862 = vpop.xlane.xlu0 %3861
    %3863 = vadd.xlane.f32.xlu0 %v3832
    %v3864 = vpop.xlane.xlu0 %3863
    %v3865 = vmul.f32 %v3834, %v973
    %v3866 = vmul.f32 %v3836, %v973
    %v3867 = vmul.f32 %v3838, %v973
    %v3868 = vmul.f32 %v3840, %v973
    %v3869 = vmul.f32 %v3842, %v973
    %v3870 = vmul.f32 %v3844, %v973
    %v3871 = vmul.f32 %v3846, %v973
    %v3872 = vmul.f32 %v3848, %v973
    %v3873 = vmul.f32 %v3850, %v973
    %v3874 = vmul.f32 %v3852, %v973
    %v3875 = vmul.f32 %v3854, %v973
    %v3876 = vmul.f32 %v3856, %v973
    %v3877 = vmul.f32 %v3858, %v973
    %v3878 = vmul.f32 %v3860, %v973
    %v3879 = vmul.f32 %v3862, %v973
    %v3880 = vmul.f32 %v3864, %v973
    %v3881 = vmul.f32 %v3801, %v3801
    %v3882 = vmul.f32 %v3802, %v3802
    %v3883 = vmul.f32 %v3803, %v3803
    %v3884 = vmul.f32 %v3804, %v3804
    %v3885 = vmul.f32 %v3805, %v3805
    %v3886 = vmul.f32 %v3806, %v3806
    %v3887 = vmul.f32 %v3807, %v3807
    %v3888 = vmul.f32 %v3808, %v3808
    %v3889 = vmul.f32 %v3809, %v3809
    %v3890 = vmul.f32 %v3810, %v3810
    %v3891 = vmul.f32 %v3811, %v3811
    %v3892 = vmul.f32 %v3812, %v3812
    %v3893 = vmul.f32 %v3813, %v3813
    %v3894 = vmul.f32 %v3814, %v3814
    %v3895 = vmul.f32 %v3815, %v3815
    %v3896 = vmul.f32 %v3816, %v3816
    %v3897 = vsub.f32 %v3865, %v3881
    %v3898 = vsub.f32 %v3866, %v3882
    %v3899 = vsub.f32 %v3867, %v3883
    %v3900 = vsub.f32 %v3868, %v3884
    %v3901 = vsub.f32 %v3869, %v3885
    %v3902 = vsub.f32 %v3870, %v3886
    %v3903 = vsub.f32 %v3871, %v3887
    %v3904 = vsub.f32 %v3872, %v3888
    %v3905 = vsub.f32 %v3873, %v3889
    %v3906 = vsub.f32 %v3874, %v3890
    %v3907 = vsub.f32 %v3875, %v3891
    %v3908 = vsub.f32 %v3876, %v3892
    %v3909 = vsub.f32 %v3877, %v3893
    %v3910 = vsub.f32 %v3878, %v3894
    %v3911 = vsub.f32 %v3879, %v3895
    %v3912 = vsub.f32 %v3880, %v3896
    %v3913 = vsub.f32 %v3751, %v3801
    %v3914 = vsub.f32 %v3752, %v3802
    %v3915 = vsub.f32 %v3753, %v3803
    %v3916 = vsub.f32 %v3754, %v3804
    %v3917 = vsub.f32 %v3755, %v3805
    %v3918 = vsub.f32 %v3756, %v3806
    %v3919 = vsub.f32 %v3757, %v3807
    %v3920 = vsub.f32 %v3758, %v3808
    %v3921 = vsub.f32 %v3759, %v3809
    %v3922 = vsub.f32 %v3760, %v3810
    %v3923 = vsub.f32 %v3761, %v3811
    %v3924 = vsub.f32 %v3762, %v3812
    %v3925 = vsub.f32 %v3763, %v3813
    %v3926 = vsub.f32 %v3764, %v3814
    %v3927 = vsub.f32 %v3765, %v3815
    %v3928 = vsub.f32 %v3766, %v3816
    %v3929 = vadd.f32 %v3897, 1e-05
    %v3930 = vadd.f32 %v3898, 1e-05
    %v3931 = vadd.f32 %v3899, 1e-05
    %v3932 = vadd.f32 %v3900, 1e-05
    %v3933 = vadd.f32 %v3901, 1e-05
    %v3934 = vadd.f32 %v3902, 1e-05
    %v3935 = vadd.f32 %v3903, 1e-05
    %v3936 = vadd.f32 %v3904, 1e-05
    %v3937 = vadd.f32 %v3905, 1e-05
    %v3938 = vadd.f32 %v3906, 1e-05
    %v3939 = vadd.f32 %v3907, 1e-05
    %v3940 = vadd.f32 %v3908, 1e-05
    %v3941 = vadd.f32 %v3909, 1e-05
    %v3942 = vadd.f32 %v3910, 1e-05
    %v3943 = vadd.f32 %v3911, 1e-05
    %v3944 = vadd.f32 %v3912, 1e-05
    %v3945 = vrsqrt.pop %v3929
    %v3946 = vmul.f32 %v3945, %v3929
    %v3947 = vmul.f32 %v3946, %v3945
    %v3948 = vmul.f32 0.5, %v3947
    %v3949 = vsub.f32 1.5, %v3948
    %v3950 = vmul.f32 %v3945, %v3949
    %vm3951 = vweird.f32 %v3929
    %vm3952 = vweird.f32 %v3945
    %vm3953 = vmor %vm3951, %vm3952
    %v3954 = vsel %vm3953, %v3945, %v3950
    %v3955 = vrsqrt.pop %v3930
    %v3956 = vmul.f32 %v3955, %v3930
    %v3957 = vmul.f32 %v3956, %v3955
    %v3958 = vmul.f32 0.5, %v3957
    %v3959 = vsub.f32 1.5, %v3958
    %v3960 = vmul.f32 %v3955, %v3959
    %vm3961 = vweird.f32 %v3930
    %vm3962 = vweird.f32 %v3955
    %vm3963 = vmor %vm3961, %vm3962
    %v3964 = vsel %vm3963, %v3955, %v3960
    %v3965 = vrsqrt.pop %v3931
    %v3966 = vmul.f32 %v3965, %v3931
    %v3967 = vmul.f32 %v3966, %v3965
    %v3968 = vmul.f32 0.5, %v3967
    %v3969 = vsub.f32 1.5, %v3968
    %v3970 = vmul.f32 %v3965, %v3969
    %vm3971 = vweird.f32 %v3931
    %vm3972 = vweird.f32 %v3965
    %vm3973 = vmor %vm3971, %vm3972
    %v3974 = vsel %vm3973, %v3965, %v3970
    %v3975 = vrsqrt.pop %v3932
    %v3976 = vmul.f32 %v3975, %v3932
    %v3977 = vmul.f32 %v3976, %v3975
    %v3978 = vmul.f32 0.5, %v3977
    %v3979 = vsub.f32 1.5, %v3978
    %v3980 = vmul.f32 %v3975, %v3979
    %vm3981 = vweird.f32 %v3932
    %vm3982 = vweird.f32 %v3975
    %vm3983 = vmor %vm3981, %vm3982
    %v3984 = vsel %vm3983, %v3975, %v3980
    %v3985 = vrsqrt.pop %v3933
    %v3986 = vmul.f32 %v3985, %v3933
    %v3987 = vmul.f32 %v3986, %v3985
    %v3988 = vmul.f32 0.5, %v3987
    %v3989 = vsub.f32 1.5, %v3988
    %v3990 = vmul.f32 %v3985, %v3989
    %vm3991 = vweird.f32 %v3933
    %vm3992 = vweird.f32 %v3985
    %vm3993 = vmor %vm3991, %vm3992
    %v3994 = vsel %vm3993, %v3985, %v3990
    %v3995 = vrsqrt.pop %v3934
    %v3996 = vmul.f32 %v3995, %v3934
    %v3997 = vmul.f32 %v3996, %v3995
    %v3998 = vmul.f32 0.5, %v3997
    %v3999 = vsub.f32 1.5, %v3998
    %v4000 = vmul.f32 %v3995, %v3999
    %vm4001 = vweird.f32 %v3934
    %vm4002 = vweird.f32 %v3995
    %vm4003 = vmor %vm4001, %vm4002
    %v4004 = vsel %vm4003, %v3995, %v4000
    %v4005 = vrsqrt.pop %v3935
    %v4006 = vmul.f32 %v4005, %v3935
    %v4007 = vmul.f32 %v4006, %v4005
    %v4008 = vmul.f32 0.5, %v4007
    %v4009 = vsub.f32 1.5, %v4008
    %v4010 = vmul.f32 %v4005, %v4009
    %vm4011 = vweird.f32 %v3935
    %vm4012 = vweird.f32 %v4005
    %vm4013 = vmor %vm4011, %vm4012
    %v4014 = vsel %vm4013, %v4005, %v4010
    %v4015 = vrsqrt.pop %v3936
    %v4016 = vmul.f32 %v4015, %v3936
    %v4017 = vmul.f32 %v4016, %v4015
    %v4018 = vmul.f32 0.5, %v4017
    %v4019 = vsub.f32 1.5, %v4018
    %v4020 = vmul.f32 %v4015, %v4019
    %vm4021 = vweird.f32 %v3936
    %vm4022 = vweird.f32 %v4015
    %vm4023 = vmor %vm4021, %vm4022
    %v4024 = vsel %vm4023, %v4015, %v4020
    %v4025 = vrsqrt.pop %v3937
    %v4026 = vmul.f32 %v4025, %v3937
    %v4027 = vmul.f32 %v4026, %v4025
    %v4028 = vmul.f32 0.5, %v4027
    %v4029 = vsub.f32 1.5, %v4028
    %v4030 = vmul.f32 %v4025, %v4029
    %vm4031 = vweird.f32 %v3937
    %vm4032 = vweird.f32 %v4025
    %vm4033 = vmor %vm4031, %vm4032
    %v4034 = vsel %vm4033, %v4025, %v4030
    %v4035 = vrsqrt.pop %v3938
    %v4036 = vmul.f32 %v4035, %v3938
    %v4037 = vmul.f32 %v4036, %v4035
    %v4038 = vmul.f32 0.5, %v4037
    %v4039 = vsub.f32 1.5, %v4038
    %v4040 = vmul.f32 %v4035, %v4039
    %vm4041 = vweird.f32 %v3938
    %vm4042 = vweird.f32 %v4035
    %vm4043 = vmor %vm4041, %vm4042
    %v4044 = vsel %vm4043, %v4035, %v4040
    %v4045 = vrsqrt.pop %v3939
    %v4046 = vmul.f32 %v4045, %v3939
    %v4047 = vmul.f32 %v4046, %v4045
    %v4048 = vmul.f32 0.5, %v4047
    %v4049 = vsub.f32 1.5, %v4048
    %v4050 = vmul.f32 %v4045, %v4049
    %vm4051 = vweird.f32 %v3939
    %vm4052 = vweird.f32 %v4045
    %vm4053 = vmor %vm4051, %vm4052
    %v4054 = vsel %vm4053, %v4045, %v4050
    %v4055 = vrsqrt.pop %v3940
    %v4056 = vmul.f32 %v4055, %v3940
    %v4057 = vmul.f32 %v4056, %v4055
    %v4058 = vmul.f32 0.5, %v4057
    %v4059 = vsub.f32 1.5, %v4058
    %v4060 = vmul.f32 %v4055, %v4059
    %vm4061 = vweird.f32 %v3940
    %vm4062 = vweird.f32 %v4055
    %vm4063 = vmor %vm4061, %vm4062
    %v4064 = vsel %vm4063, %v4055, %v4060
    %v4065 = vrsqrt.pop %v3941
    %v4066 = vmul.f32 %v4065, %v3941
    %v4067 = vmul.f32 %v4066, %v4065
    %v4068 = vmul.f32 0.5, %v4067
    %v4069 = vsub.f32 1.5, %v4068
    %v4070 = vmul.f32 %v4065, %v4069
    %vm4071 = vweird.f32 %v3941
    %vm4072 = vweird.f32 %v4065
    %vm4073 = vmor %vm4071, %vm4072
    %v4074 = vsel %vm4073, %v4065, %v4070
    %v4075 = vrsqrt.pop %v3942
    %v4076 = vmul.f32 %v4075, %v3942
    %v4077 = vmul.f32 %v4076, %v4075
    %v4078 = vmul.f32 0.5, %v4077
    %v4079 = vsub.f32 1.5, %v4078
    %v4080 = vmul.f32 %v4075, %v4079
    %vm4081 = vweird.f32 %v3942
    %vm4082 = vweird.f32 %v4075
    %vm4083 = vmor %vm4081, %vm4082
    %v4084 = vsel %vm4083, %v4075, %v4080
    %v4085 = vrsqrt.pop %v3943
    %v4086 = vmul.f32 %v4085, %v3943
    %v4087 = vmul.f32 %v4086, %v4085
    %v4088 = vmul.f32 0.5, %v4087
    %v4089 = vsub.f32 1.5, %v4088
    %v4090 = vmul.f32 %v4085, %v4089
    %vm4091 = vweird.f32 %v3943
    %vm4092 = vweird.f32 %v4085
    %vm4093 = vmor %vm4091, %vm4092
    %v4094 = vsel %vm4093, %v4085, %v4090
    %v4095 = vrsqrt.pop %v3944
    %v4096 = vmul.f32 %v4095, %v3944
    %v4097 = vmul.f32 %v4096, %v4095
    %v4098 = vmul.f32 0.5, %v4097
    %v4099 = vsub.f32 1.5, %v4098
    %v4100 = vmul.f32 %v4095, %v4099
    %vm4101 = vweird.f32 %v3944
    %vm4102 = vweird.f32 %v4095
    %vm4103 = vmor %vm4101, %vm4102
    %v4104 = vsel %vm4103, %v4095, %v4100
    %v4105 = vmul.f32 %v3913, %v3954
    %v4106 = vmul.f32 %v3914, %v3964
    %v4107 = vmul.f32 %v3915, %v3974
    %v4108 = vmul.f32 %v3916, %v3984
    %v4109 = vmul.f32 %v3917, %v3994
    %v4110 = vmul.f32 %v3918, %v4004
    %v4111 = vmul.f32 %v3919, %v4014
    %v4112 = vmul.f32 %v3920, %v4024
    %v4113 = vmul.f32 %v3921, %v4034
    %v4114 = vmul.f32 %v3922, %v4044
    %v4115 = vmul.f32 %v3923, %v4054
    %v4116 = vmul.f32 %v3924, %v4064
    %v4117 = vmul.f32 %v3925, %v4074
    %v4118 = vmul.f32 %v3926, %v4084
    %v4119 = vmul.f32 %v3927, %v4094
    %v4120 = vmul.f32 %v3928, %v4104
    %v4122 = vperm.slane %v3767, 0
    %v4124 = vmul.f32 %v4105, %v4122
    %v4125 = vmul.f32 %v4106, %v4122
    %v4126 = vmul.f32 %v4107, %v4122
    %v4127 = vmul.f32 %v4108, %v4122
    %v4128 = vmul.f32 %v4109, %v4122
    %v4129 = vmul.f32 %v4110, %v4122
    %v4130 = vmul.f32 %v4111, %v4122
    %v4131 = vmul.f32 %v4112, %v4122
    %v4132 = vmul.f32 %v4113, %v4122
    %v4133 = vmul.f32 %v4114, %v4122
    %v4134 = vmul.f32 %v4115, %v4122
    %v4135 = vmul.f32 %v4116, %v4122
    %v4136 = vmul.f32 %v4117, %v4122
    %v4137 = vmul.f32 %v4118, %v4122
    %v4138 = vmul.f32 %v4119, %v4122
    %v4139 = vmul.f32 %v4120, %v4122
    %v4141 = vperm.slane %v3768, 0
    %v4143 = vadd.f32 %v4124, %v4141
    %v4144 = vadd.f32 %v4125, %v4141
    %v4145 = vadd.f32 %v4126, %v4141
    %v4146 = vadd.f32 %v4127, %v4141
    %v4147 = vadd.f32 %v4128, %v4141
    %v4148 = vadd.f32 %v4129, %v4141
    %v4149 = vadd.f32 %v4130, %v4141
    %v4150 = vadd.f32 %v4131, %v4141
    %v4151 = vadd.f32 %v4132, %v4141
    %v4152 = vadd.f32 %v4133, %v4141
    %v4153 = vadd.f32 %v4134, %v4141
    %v4154 = vadd.f32 %v4135, %v4141
    %v4155 = vadd.f32 %v4136, %v4141
    %v4156 = vadd.f32 %v4137, %v4141
    %v4157 = vadd.f32 %v4138, %v4141
    %v4158 = vadd.f32 %v4139, %v4141
    %v4159 = vld [vmem:[#allocation16] sm:$0xff]
    %v4160 = vld [vmem:[#allocation16 + $0x8] sm:$0xff]
    %v4161 = vld [vmem:[#allocation16 + $0x10] sm:$0xff]
    %v4162 = vld [vmem:[#allocation16 + $0x18] sm:$0xff]
    %v4163 = vld [vmem:[#allocation16 + $0x20] sm:$0xff]
    %v4164 = vld [vmem:[#allocation16 + $0x28] sm:$0xff]
    %v4165 = vld [vmem:[#allocation16 + $0x30] sm:$0xff]
    %v4166 = vld [vmem:[#allocation16 + $0x38] sm:$0xff]
    %v4167 = vld [vmem:[#allocation16 + $0x40] sm:$0xff]
    %v4168 = vld [vmem:[#allocation16 + $0x48] sm:$0xff]
    %v4169 = vld [vmem:[#allocation16 + $0x50] sm:$0xff]
    %v4170 = vld [vmem:[#allocation16 + $0x58] sm:$0xff]
    %v4171 = vld [vmem:[#allocation16 + $0x60] sm:$0xff]
    %v4172 = vld [vmem:[#allocation16 + $0x68] sm:$0xff]
    %v4173 = vld [vmem:[#allocation16 + $0x70] sm:$0xff]
    %v4174 = vld [vmem:[#allocation16 + $0x78] sm:$0xff]
    %v4175 = vld [vmem:[#allocation16 + $0x80] sm:$0xff]
    %v4176 = vld [vmem:[#allocation16 + $0x88] sm:$0xff]
    %v4177 = vld [vmem:[#allocation16 + $0x90] sm:$0xff]
    %v4178 = vld [vmem:[#allocation16 + $0x98] sm:$0xff]
    %v4179 = vld [vmem:[#allocation16 + $0xa0] sm:$0xff]
    %v4180 = vld [vmem:[#allocation16 + $0xa8] sm:$0xff]
    %v4181 = vld [vmem:[#allocation16 + $0xb0] sm:$0xff]
    %v4182 = vld [vmem:[#allocation16 + $0xb8] sm:$0xff]
    %v4183 = vld [vmem:[#allocation16 + $0xc0] sm:$0xff]
    %v4184 = vld [vmem:[#allocation16 + $0xc8] sm:$0xff]
    %v4185 = vld [vmem:[#allocation16 + $0xd0] sm:$0xff]
    %v4186 = vld [vmem:[#allocation16 + $0xd8] sm:$0xff]
    %v4187 = vld [vmem:[#allocation16 + $0xe0] sm:$0xff]
    %v4188 = vld [vmem:[#allocation16 + $0xe8] sm:$0xff]
    %v4189 = vld [vmem:[#allocation16 + $0xf0] sm:$0xff]
    %v4190 = vld [vmem:[#allocation16 + $0xf8] sm:$0xff]
    %v4191 = vpack.c.bf16 %v4144, %v4143
    %v4192 = vpack.c.bf16 %v4146, %v4145
    %v4193 = vpack.c.bf16 %v4148, %v4147
    %v4194 = vpack.c.bf16 %v4150, %v4149
    %v4195 = vpack.c.bf16 %v4152, %v4151
    %v4196 = vpack.c.bf16 %v4154, %v4153
    %v4197 = vpack.c.bf16 %v4156, %v4155
    %v4198 = vpack.c.bf16 %v4158, %v4157
    %v4199 = vld [vmem:[%s11] sm:$0xf]
    %v4201 = vperm.slane %v4199, 0
    %v4202 = vperm.slane %v4199, 1
    %v4203 = vperm.slane %v4199, 2
    %v4204 = vperm.slane %v4199, 3
    %v4241 = vunpack.c.l.b16 %v4159
    %v4242 = vunpack.c.h.b16 %v4159
    %v4243 = vunpack.c.l.b16 %v4160
    %v4244 = vunpack.c.h.b16 %v4160
    %v4245 = vunpack.c.l.b16 %v4161
    %v4246 = vunpack.c.h.b16 %v4161
    %v4247 = vunpack.c.l.b16 %v4162
    %v4248 = vunpack.c.h.b16 %v4162
    %v4249 = vunpack.c.l.b16 %v4163
    %v4250 = vunpack.c.h.b16 %v4163
    %v4251 = vunpack.c.l.b16 %v4164
    %v4252 = vunpack.c.h.b16 %v4164
    %v4253 = vunpack.c.l.b16 %v4165
    %v4254 = vunpack.c.h.b16 %v4165
    %v4255 = vunpack.c.l.b16 %v4166
    %v4256 = vunpack.c.h.b16 %v4166
    %v4257 = vunpack.c.l.b16 %v4167
    %v4258 = vunpack.c.h.b16 %v4167
    %v4259 = vunpack.c.l.b16 %v4168
    %v4260 = vunpack.c.h.b16 %v4168
    %v4261 = vunpack.c.l.b16 %v4169
    %v4262 = vunpack.c.h.b16 %v4169
    %v4263 = vunpack.c.l.b16 %v4170
    %v4264 = vunpack.c.h.b16 %v4170
    %v4265 = vunpack.c.l.b16 %v4171
    %v4266 = vunpack.c.h.b16 %v4171
    %v4267 = vunpack.c.l.b16 %v4172
    %v4268 = vunpack.c.h.b16 %v4172
    %v4269 = vunpack.c.l.b16 %v4173
    %v4270 = vunpack.c.h.b16 %v4173
    %v4271 = vunpack.c.l.b16 %v4174
    %v4272 = vunpack.c.h.b16 %v4174
    %v4273 = vunpack.c.l.b16 %v4175
    %v4274 = vunpack.c.h.b16 %v4175
    %v4275 = vunpack.c.l.b16 %v4176
    %v4276 = vunpack.c.h.b16 %v4176
    %v4277 = vunpack.c.l.b16 %v4177
    %v4278 = vunpack.c.h.b16 %v4177
    %v4279 = vunpack.c.l.b16 %v4178
    %v4280 = vunpack.c.h.b16 %v4178
    %v4281 = vunpack.c.l.b16 %v4179
    %v4282 = vunpack.c.h.b16 %v4179
    %v4283 = vunpack.c.l.b16 %v4180
    %v4284 = vunpack.c.h.b16 %v4180
    %v4285 = vunpack.c.l.b16 %v4181
    %v4286 = vunpack.c.h.b16 %v4181
    %v4287 = vunpack.c.l.b16 %v4182
    %v4288 = vunpack.c.h.b16 %v4182
    %v4289 = vunpack.c.l.b16 %v4183
    %v4290 = vunpack.c.h.b16 %v4183
    %v4291 = vunpack.c.l.b16 %v4184
    %v4292 = vunpack.c.h.b16 %v4184
    %v4293 = vunpack.c.l.b16 %v4185
    %v4294 = vunpack.c.h.b16 %v4185
    %v4295 = vunpack.c.l.b16 %v4186
    %v4296 = vunpack.c.h.b16 %v4186
    %v4297 = vunpack.c.l.b16 %v4187
    %v4298 = vunpack.c.h.b16 %v4187
    %v4299 = vunpack.c.l.b16 %v4188
    %v4300 = vunpack.c.h.b16 %v4188
    %v4301 = vunpack.c.l.b16 %v4189
    %v4302 = vunpack.c.h.b16 %v4189
    %v4303 = vunpack.c.l.b16 %v4190
    %v4304 = vunpack.c.h.b16 %v4190
    %v4305 = vpack.c.b16 %v4245, %v4241
    %v4306 = vpack.c.b16 %v4246, %v4242
    %v4307 = vpack.c.b16 %v4247, %v4243
    %v4308 = vpack.c.b16 %v4248, %v4244
    %v4309 = vpack.c.b16 %v4253, %v4249
    %v4310 = vpack.c.b16 %v4254, %v4250
    %v4311 = vpack.c.b16 %v4255, %v4251
    %v4312 = vpack.c.b16 %v4256, %v4252
    %v4313 = vpack.c.b16 %v4261, %v4257
    %v4314 = vpack.c.b16 %v4262, %v4258
    %v4315 = vpack.c.b16 %v4263, %v4259
    %v4316 = vpack.c.b16 %v4264, %v4260
    %v4317 = vpack.c.b16 %v4269, %v4265
    %v4318 = vpack.c.b16 %v4270, %v4266
    %v4319 = vpack.c.b16 %v4271, %v4267
    %v4320 = vpack.c.b16 %v4272, %v4268
    %v4321 = vpack.c.b16 %v4277, %v4273
    %v4322 = vpack.c.b16 %v4278, %v4274
    %v4323 = vpack.c.b16 %v4279, %v4275
    %v4324 = vpack.c.b16 %v4280, %v4276
    %v4325 = vpack.c.b16 %v4285, %v4281
    %v4326 = vpack.c.b16 %v4286, %v4282
    %v4327 = vpack.c.b16 %v4287, %v4283
    %v4328 = vpack.c.b16 %v4288, %v4284
    %v4329 = vpack.c.b16 %v4293, %v4289
    %v4330 = vpack.c.b16 %v4294, %v4290
    %v4331 = vpack.c.b16 %v4295, %v4291
    %v4332 = vpack.c.b16 %v4296, %v4292
    %v4333 = vpack.c.b16 %v4301, %v4297
    %v4334 = vpack.c.b16 %v4302, %v4298
    %v4335 = vpack.c.b16 %v4303, %v4299
    %v4336 = vpack.c.b16 %v4304, %v4300
    %4369 = vmatpush.bf16.msra.mxu0 %v4333
    %4370 = vmatpush.bf16.msra.mxu0 %v4329
    %4371 = vmatpush.bf16.msra.mxu0 %v4325
    %4372 = vmatpush.bf16.msra.mxu0 %v4321
    %4373 = vmatpush.bf16.msra.mxu0 %v4317
    %4374 = vmatpush.bf16.msra.mxu0 %v4313
    %4375 = vmatpush.bf16.msra.mxu0 %v4309
    %4376 = vmatpush.bf16.msra.mxu0 %v4305
    %4377 = vmatmul.bf16.gmra.mxu0 %v4191
    %v4378 = vpop.f32.mrf.mxu0
    %v4379 = vadd.f32 %v4201, %v4378
    %v4380 = vpop.f32.mrf.mxu0
    %v4381 = vadd.f32 %v4201, %v4380
    %4382 = vmatmul.bf16.gmra.mxu0 %v4192
    %v4383 = vpop.f32.mrf.mxu0
    %v4384 = vadd.f32 %v4201, %v4383
    %v4385 = vpop.f32.mrf.mxu0
    %v4386 = vadd.f32 %v4201, %v4385
    %4387 = vmatmul.bf16.gmra.mxu0 %v4193
    %v4388 = vpop.f32.mrf.mxu0
    %v4389 = vadd.f32 %v4201, %v4388
    %v4390 = vpop.f32.mrf.mxu0
    %v4391 = vadd.f32 %v4201, %v4390
    %4392 = vmatmul.bf16.gmra.mxu0 %v4194
    %v4393 = vpop.f32.mrf.mxu0
    %v4394 = vadd.f32 %v4201, %v4393
    %v4395 = vpop.f32.mrf.mxu0
    %v4396 = vadd.f32 %v4201, %v4395
    %4397 = vmatmul.bf16.gmra.mxu0 %v4195
    %v4398 = vpop.f32.mrf.mxu0
    %v4399 = vadd.f32 %v4201, %v4398
    %v4400 = vpop.f32.mrf.mxu0
    %v4401 = vadd.f32 %v4201, %v4400
    %4402 = vmatmul.bf16.gmra.mxu0 %v4196
    %v4403 = vpop.f32.mrf.mxu0
    %v4404 = vadd.f32 %v4201, %v4403
    %v4405 = vpop.f32.mrf.mxu0
    %v4406 = vadd.f32 %v4201, %v4405
    %4407 = vmatmul.bf16.gmra.mxu0 %v4197
    %v4408 = vpop.f32.mrf.mxu0
    %v4409 = vadd.f32 %v4201, %v4408
    %v4410 = vpop.f32.mrf.mxu0
    %v4411 = vadd.f32 %v4201, %v4410
    %4412 = vmatmul.bf16.gmra.mxu0 %v4198
    %v4413 = vpop.f32.mrf.mxu0
    %v4414 = vadd.f32 %v4201, %v4413
    %v4415 = vpop.f32.mrf.mxu0
    %v4416 = vadd.f32 %v4201, %v4415
    %4417 = vdwg.mxu0
    %4418 = vmatpush.bf16.msra.mxu0 %v4334
    %4419 = vmatpush.bf16.msra.mxu0 %v4330
    %4420 = vmatpush.bf16.msra.mxu0 %v4326
    %4421 = vmatpush.bf16.msra.mxu0 %v4322
    %4422 = vmatpush.bf16.msra.mxu0 %v4318
    %4423 = vmatpush.bf16.msra.mxu0 %v4314
    %4424 = vmatpush.bf16.msra.mxu0 %v4310
    %4425 = vmatpush.bf16.msra.mxu0 %v4306
    %4426 = vmatmul.bf16.gmra.mxu0 %v4191
    %v4427 = vpop.f32.mrf.mxu0
    %v4428 = vadd.f32 %v4202, %v4427
    %v4429 = vpop.f32.mrf.mxu0
    %v4430 = vadd.f32 %v4202, %v4429
    %4431 = vmatmul.bf16.gmra.mxu0 %v4192
    %v4432 = vpop.f32.mrf.mxu0
    %v4433 = vadd.f32 %v4202, %v4432
    %v4434 = vpop.f32.mrf.mxu0
    %v4435 = vadd.f32 %v4202, %v4434
    %4436 = vmatmul.bf16.gmra.mxu0 %v4193
    %v4437 = vpop.f32.mrf.mxu0
    %v4438 = vadd.f32 %v4202, %v4437
    %v4439 = vpop.f32.mrf.mxu0
    %v4440 = vadd.f32 %v4202, %v4439
    %4441 = vmatmul.bf16.gmra.mxu0 %v4194
    %v4442 = vpop.f32.mrf.mxu0
    %v4443 = vadd.f32 %v4202, %v4442
    %v4444 = vpop.f32.mrf.mxu0
    %v4445 = vadd.f32 %v4202, %v4444
    %4446 = vmatmul.bf16.gmra.mxu0 %v4195
    %v4447 = vpop.f32.mrf.mxu0
    %v4448 = vadd.f32 %v4202, %v4447
    %v4449 = vpop.f32.mrf.mxu0
    %v4450 = vadd.f32 %v4202, %v4449
    %4451 = vmatmul.bf16.gmra.mxu0 %v4196
    %v4452 = vpop.f32.mrf.mxu0
    %v4453 = vadd.f32 %v4202, %v4452
    %v4454 = vpop.f32.mrf.mxu0
    %v4455 = vadd.f32 %v4202, %v4454
    %4456 = vmatmul.bf16.gmra.mxu0 %v4197
    %v4457 = vpop.f32.mrf.mxu0
    %v4458 = vadd.f32 %v4202, %v4457
    %v4459 = vpop.f32.mrf.mxu0
    %v4460 = vadd.f32 %v4202, %v4459
    %4461 = vmatmul.bf16.gmra.mxu0 %v4198
    %v4462 = vpop.f32.mrf.mxu0
    %v4463 = vadd.f32 %v4202, %v4462
    %v4464 = vpop.f32.mrf.mxu0
    %v4465 = vadd.f32 %v4202, %v4464
    %4466 = vdwg.mxu0
    %4467 = vmatpush.bf16.msra.mxu0 %v4335
    %4468 = vmatpush.bf16.msra.mxu0 %v4331
    %4469 = vmatpush.bf16.msra.mxu0 %v4327
    %4470 = vmatpush.bf16.msra.mxu0 %v4323
    %4471 = vmatpush.bf16.msra.mxu0 %v4319
    %4472 = vmatpush.bf16.msra.mxu0 %v4315
    %4473 = vmatpush.bf16.msra.mxu0 %v4311
    %4474 = vmatpush.bf16.msra.mxu0 %v4307
    %4475 = vmatmul.bf16.gmra.mxu0 %v4191
    %v4476 = vpop.f32.mrf.mxu0
    %v4477 = vadd.f32 %v4203, %v4476
    %v4478 = vpop.f32.mrf.mxu0
    %v4479 = vadd.f32 %v4203, %v4478
    %4480 = vmatmul.bf16.gmra.mxu0 %v4192
    %v4481 = vpop.f32.mrf.mxu0
    %v4482 = vadd.f32 %v4203, %v4481
    %v4483 = vpop.f32.mrf.mxu0
    %v4484 = vadd.f32 %v4203, %v4483
    %4485 = vmatmul.bf16.gmra.mxu0 %v4193
    %v4486 = vpop.f32.mrf.mxu0
    %v4487 = vadd.f32 %v4203, %v4486
    %v4488 = vpop.f32.mrf.mxu0
    %v4489 = vadd.f32 %v4203, %v4488
    %4490 = vmatmul.bf16.gmra.mxu0 %v4194
    %v4491 = vpop.f32.mrf.mxu0
    %v4492 = vadd.f32 %v4203, %v4491
    %v4493 = vpop.f32.mrf.mxu0
    %v4494 = vadd.f32 %v4203, %v4493
    %4495 = vmatmul.bf16.gmra.mxu0 %v4195
    %v4496 = vpop.f32.mrf.mxu0
    %v4497 = vadd.f32 %v4203, %v4496
    %v4498 = vpop.f32.mrf.mxu0
    %v4499 = vadd.f32 %v4203, %v4498
    %4500 = vmatmul.bf16.gmra.mxu0 %v4196
    %v4501 = vpop.f32.mrf.mxu0
    %v4502 = vadd.f32 %v4203, %v4501
    %v4503 = vpop.f32.mrf.mxu0
    %v4504 = vadd.f32 %v4203, %v4503
    %4505 = vmatmul.bf16.gmra.mxu0 %v4197
    %v4506 = vpop.f32.mrf.mxu0
    %v4507 = vadd.f32 %v4203, %v4506
    %v4508 = vpop.f32.mrf.mxu0
    %v4509 = vadd.f32 %v4203, %v4508
    %4510 = vmatmul.bf16.gmra.mxu0 %v4198
    %v4511 = vpop.f32.mrf.mxu0
    %v4512 = vadd.f32 %v4203, %v4511
    %v4513 = vpop.f32.mrf.mxu0
    %v4514 = vadd.f32 %v4203, %v4513
    %4515 = vdwg.mxu0
    %4516 = vmatpush.bf16.msra.mxu0 %v4336
    %4517 = vmatpush.bf16.msra.mxu0 %v4332
    %4518 = vmatpush.bf16.msra.mxu0 %v4328
    %4519 = vmatpush.bf16.msra.mxu0 %v4324
    %4520 = vmatpush.bf16.msra.mxu0 %v4320
    %4521 = vmatpush.bf16.msra.mxu0 %v4316
    %4522 = vmatpush.bf16.msra.mxu0 %v4312
    %4523 = vmatpush.bf16.msra.mxu0 %v4308
    %4524 = vmatmul.bf16.gmra.mxu0 %v4191
    %v4525 = vpop.f32.mrf.mxu0
    %v4526 = vadd.f32 %v4204, %v4525
    %v4527 = vpop.f32.mrf.mxu0
    %v4528 = vadd.f32 %v4204, %v4527
    %4529 = vmatmul.bf16.gmra.mxu0 %v4192
    %v4530 = vpop.f32.mrf.mxu0
    %v4531 = vadd.f32 %v4204, %v4530
    %v4532 = vpop.f32.mrf.mxu0
    %v4533 = vadd.f32 %v4204, %v4532
    %4534 = vmatmul.bf16.gmra.mxu0 %v4193
    %v4535 = vpop.f32.mrf.mxu0
    %v4536 = vadd.f32 %v4204, %v4535
    %v4537 = vpop.f32.mrf.mxu0
    %v4538 = vadd.f32 %v4204, %v4537
    %4539 = vmatmul.bf16.gmra.mxu0 %v4194
    %v4540 = vpop.f32.mrf.mxu0
    %v4541 = vadd.f32 %v4204, %v4540
    %v4542 = vpop.f32.mrf.mxu0
    %v4543 = vadd.f32 %v4204, %v4542
    %4544 = vmatmul.bf16.gmra.mxu0 %v4195
    %v4545 = vpop.f32.mrf.mxu0
    %v4546 = vadd.f32 %v4204, %v4545
    %v4547 = vpop.f32.mrf.mxu0
    %v4548 = vadd.f32 %v4204, %v4547
    %4549 = vmatmul.bf16.gmra.mxu0 %v4196
    %v4550 = vpop.f32.mrf.mxu0
    %v4551 = vadd.f32 %v4204, %v4550
    %v4552 = vpop.f32.mrf.mxu0
    %v4553 = vadd.f32 %v4204, %v4552
    %4554 = vmatmul.bf16.gmra.mxu0 %v4197
    %v4555 = vpop.f32.mrf.mxu0
    %v4556 = vadd.f32 %v4204, %v4555
    %v4557 = vpop.f32.mrf.mxu0
    %v4558 = vadd.f32 %v4204, %v4557
    %4559 = vmatmul.bf16.gmra.mxu0 %v4198
    %v4560 = vpop.f32.mrf.mxu0
    %v4561 = vadd.f32 %v4204, %v4560
    %v4562 = vpop.f32.mrf.mxu0
    %v4563 = vadd.f32 %v4204, %v4562
    %4564 = vdwg.mxu0
    %v4565 = vmax.f32 %v4379, 0.0
    %v4566 = vmax.f32 %v4428, 0.0
    %v4567 = vmax.f32 %v4477, 0.0
    %v4568 = vmax.f32 %v4526, 0.0
    %v4569 = vmax.f32 %v4381, 0.0
    %v4570 = vmax.f32 %v4430, 0.0
    %v4571 = vmax.f32 %v4479, 0.0
    %v4572 = vmax.f32 %v4528, 0.0
    %v4573 = vmax.f32 %v4384, 0.0
    %v4574 = vmax.f32 %v4433, 0.0
    %v4575 = vmax.f32 %v4482, 0.0
    %v4576 = vmax.f32 %v4531, 0.0
    %v4577 = vmax.f32 %v4386, 0.0
    %v4578 = vmax.f32 %v4435, 0.0
    %v4579 = vmax.f32 %v4484, 0.0
    %v4580 = vmax.f32 %v4533, 0.0
    %v4581 = vmax.f32 %v4389, 0.0
    %v4582 = vmax.f32 %v4438, 0.0
    %v4583 = vmax.f32 %v4487, 0.0
    %v4584 = vmax.f32 %v4536, 0.0
    %v4585 = vmax.f32 %v4391, 0.0
    %v4586 = vmax.f32 %v4440, 0.0
    %v4587 = vmax.f32 %v4489, 0.0
    %v4588 = vmax.f32 %v4538, 0.0
    %v4589 = vmax.f32 %v4394, 0.0
    %v4590 = vmax.f32 %v4443, 0.0
    %v4591 = vmax.f32 %v4492, 0.0
    %v4592 = vmax.f32 %v4541, 0.0
    %v4593 = vmax.f32 %v4396, 0.0
    %v4594 = vmax.f32 %v4445, 0.0
    %v4595 = vmax.f32 %v4494, 0.0
    %v4596 = vmax.f32 %v4543, 0.0
    %v4597 = vmax.f32 %v4399, 0.0
    %v4598 = vmax.f32 %v4448, 0.0
    %v4599 = vmax.f32 %v4497, 0.0
    %v4600 = vmax.f32 %v4546, 0.0
    %v4601 = vmax.f32 %v4401, 0.0
    %v4602 = vmax.f32 %v4450, 0.0
    %v4603 = vmax.f32 %v4499, 0.0
    %v4604 = vmax.f32 %v4548, 0.0
    %v4605 = vmax.f32 %v4404, 0.0
    %v4606 = vmax.f32 %v4453, 0.0
    %v4607 = vmax.f32 %v4502, 0.0
    %v4608 = vmax.f32 %v4551, 0.0
    %v4609 = vmax.f32 %v4406, 0.0
    %v4610 = vmax.f32 %v4455, 0.0
    %v4611 = vmax.f32 %v4504, 0.0
    %v4612 = vmax.f32 %v4553, 0.0
    %v4613 = vmax.f32 %v4409, 0.0
    %v4614 = vmax.f32 %v4458, 0.0
    %v4615 = vmax.f32 %v4507, 0.0
    %v4616 = vmax.f32 %v4556, 0.0
    %v4617 = vmax.f32 %v4411, 0.0
    %v4618 = vmax.f32 %v4460, 0.0
    %v4619 = vmax.f32 %v4509, 0.0
    %v4620 = vmax.f32 %v4558, 0.0
    %v4621 = vmax.f32 %v4414, 0.0
    %v4622 = vmax.f32 %v4463, 0.0
    %v4623 = vmax.f32 %v4512, 0.0
    %v4624 = vmax.f32 %v4561, 0.0
    %v4625 = vmax.f32 %v4416, 0.0
    %v4626 = vmax.f32 %v4465, 0.0
    %v4627 = vmax.f32 %v4514, 0.0
    %v4628 = vmax.f32 %v4563, 0.0
    %v4629 = vld [vmem:[#allocation17] sm:$0xf]
    %v4630 = vld [vmem:[#allocation17 + $0x4] sm:$0xf]
    %v4631 = vld [vmem:[#allocation17 + $0x8] sm:$0xf]
    %v4632 = vld [vmem:[#allocation17 + $0xc] sm:$0xf]
    %v4633 = vld [vmem:[#allocation17 + $0x10] sm:$0xf]
    %v4634 = vld [vmem:[#allocation17 + $0x14] sm:$0xf]
    %v4635 = vld [vmem:[#allocation17 + $0x18] sm:$0xf]
    %v4636 = vld [vmem:[#allocation17 + $0x1c] sm:$0xf]
    %v4637 = vld [vmem:[#allocation17 + $0x20] sm:$0xf]
    %v4638 = vld [vmem:[#allocation17 + $0x24] sm:$0xf]
    %v4639 = vld [vmem:[#allocation17 + $0x28] sm:$0xf]
    %v4640 = vld [vmem:[#allocation17 + $0x2c] sm:$0xf]
    %v4641 = vld [vmem:[#allocation17 + $0x30] sm:$0xf]
    %v4642 = vld [vmem:[#allocation17 + $0x34] sm:$0xf]
    %v4643 = vld [vmem:[#allocation17 + $0x38] sm:$0xf]
    %v4644 = vld [vmem:[#allocation17 + $0x3c] sm:$0xf]
    %v4645 = vld [vmem:[#allocation17 + $0x40] sm:$0xf]
    %v4646 = vld [vmem:[#allocation17 + $0x44] sm:$0xf]
    %v4647 = vld [vmem:[#allocation17 + $0x48] sm:$0xf]
    %v4648 = vld [vmem:[#allocation17 + $0x4c] sm:$0xf]
    %v4649 = vld [vmem:[#allocation17 + $0x50] sm:$0xf]
    %v4650 = vld [vmem:[#allocation17 + $0x54] sm:$0xf]
    %v4651 = vld [vmem:[#allocation17 + $0x58] sm:$0xf]
    %v4652 = vld [vmem:[#allocation17 + $0x5c] sm:$0xf]
    %v4653 = vld [vmem:[#allocation17 + $0x60] sm:$0xf]
    %v4654 = vld [vmem:[#allocation17 + $0x64] sm:$0xf]
    %v4655 = vld [vmem:[#allocation17 + $0x68] sm:$0xf]
    %v4656 = vld [vmem:[#allocation17 + $0x6c] sm:$0xf]
    %v4657 = vld [vmem:[#allocation17 + $0x70] sm:$0xf]
    %v4658 = vld [vmem:[#allocation17 + $0x74] sm:$0xf]
    %v4659 = vld [vmem:[#allocation17 + $0x78] sm:$0xf]
    %v4660 = vld [vmem:[#allocation17 + $0x7c] sm:$0xf]
    %v4661 = vld [vmem:[#allocation17 + $0x80] sm:$0xf]
    %v4662 = vld [vmem:[#allocation17 + $0x84] sm:$0xf]
    %v4663 = vld [vmem:[#allocation17 + $0x88] sm:$0xf]
    %v4664 = vld [vmem:[#allocation17 + $0x8c] sm:$0xf]
    %v4665 = vld [vmem:[#allocation17 + $0x90] sm:$0xf]
    %v4666 = vld [vmem:[#allocation17 + $0x94] sm:$0xf]
    %v4667 = vld [vmem:[#allocation17 + $0x98] sm:$0xf]
    %v4668 = vld [vmem:[#allocation17 + $0x9c] sm:$0xf]
    %v4669 = vld [vmem:[#allocation17 + $0xa0] sm:$0xf]
    %v4670 = vld [vmem:[#allocation17 + $0xa4] sm:$0xf]
    %v4671 = vld [vmem:[#allocation17 + $0xa8] sm:$0xf]
    %v4672 = vld [vmem:[#allocation17 + $0xac] sm:$0xf]
    %v4673 = vld [vmem:[#allocation17 + $0xb0] sm:$0xf]
    %v4674 = vld [vmem:[#allocation17 + $0xb4] sm:$0xf]
    %v4675 = vld [vmem:[#allocation17 + $0xb8] sm:$0xf]
    %v4676 = vld [vmem:[#allocation17 + $0xbc] sm:$0xf]
    %v4677 = vld [vmem:[#allocation17 + $0xc0] sm:$0xf]
    %v4678 = vld [vmem:[#allocation17 + $0xc4] sm:$0xf]
    %v4679 = vld [vmem:[#allocation17 + $0xc8] sm:$0xf]
    %v4680 = vld [vmem:[#allocation17 + $0xcc] sm:$0xf]
    %v4681 = vld [vmem:[#allocation17 + $0xd0] sm:$0xf]
    %v4682 = vld [vmem:[#allocation17 + $0xd4] sm:$0xf]
    %v4683 = vld [vmem:[#allocation17 + $0xd8] sm:$0xf]
    %v4684 = vld [vmem:[#allocation17 + $0xdc] sm:$0xf]
    %v4685 = vld [vmem:[#allocation17 + $0xe0] sm:$0xf]
    %v4686 = vld [vmem:[#allocation17 + $0xe4] sm:$0xf]
    %v4687 = vld [vmem:[#allocation17 + $0xe8] sm:$0xf]
    %v4688 = vld [vmem:[#allocation17 + $0xec] sm:$0xf]
    %v4689 = vld [vmem:[#allocation17 + $0xf0] sm:$0xf]
    %v4690 = vld [vmem:[#allocation17 + $0xf4] sm:$0xf]
    %v4691 = vld [vmem:[#allocation17 + $0xf8] sm:$0xf]
    %v4692 = vld [vmem:[#allocation17 + $0xfc] sm:$0xf]
    %v4693 = vpack.c.bf16 %v4569, %v4565
    %v4694 = vpack.c.bf16 %v4570, %v4566
    %v4695 = vpack.c.bf16 %v4571, %v4567
    %v4696 = vpack.c.bf16 %v4572, %v4568
    %v4697 = vpack.c.bf16 %v4577, %v4573
    %v4698 = vpack.c.bf16 %v4578, %v4574
    %v4699 = vpack.c.bf16 %v4579, %v4575
    %v4700 = vpack.c.bf16 %v4580, %v4576
    %v4701 = vpack.c.bf16 %v4585, %v4581
    %v4702 = vpack.c.bf16 %v4586, %v4582
    %v4703 = vpack.c.bf16 %v4587, %v4583
    %v4704 = vpack.c.bf16 %v4588, %v4584
    %v4705 = vpack.c.bf16 %v4593, %v4589
    %v4706 = vpack.c.bf16 %v4594, %v4590
    %v4707 = vpack.c.bf16 %v4595, %v4591
    %v4708 = vpack.c.bf16 %v4596, %v4592
    %v4709 = vpack.c.bf16 %v4601, %v4597
    %v4710 = vpack.c.bf16 %v4602, %v4598
    %v4711 = vpack.c.bf16 %v4603, %v4599
    %v4712 = vpack.c.bf16 %v4604, %v4600
    %v4713 = vpack.c.bf16 %v4609, %v4605
    %v4714 = vpack.c.bf16 %v4610, %v4606
    %v4715 = vpack.c.bf16 %v4611, %v4607
    %v4716 = vpack.c.bf16 %v4612, %v4608
    %v4717 = vpack.c.bf16 %v4617, %v4613
    %v4718 = vpack.c.bf16 %v4618, %v4614
    %v4719 = vpack.c.bf16 %v4619, %v4615
    %v4720 = vpack.c.bf16 %v4620, %v4616
    %v4721 = vpack.c.bf16 %v4625, %v4621
    %v4722 = vpack.c.bf16 %v4626, %v4622
    %v4723 = vpack.c.bf16 %v4627, %v4623
    %v4724 = vpack.c.bf16 %v4628, %v4624
    %v4789 = vunpack.c.l.b16 %v4629
    %v4790 = vunpack.c.l.b16 %v4630
    %v4791 = vunpack.c.l.b16 %v4631
    %v4792 = vunpack.c.l.b16 %v4632
    %v4793 = vunpack.c.l.b16 %v4633
    %v4794 = vunpack.c.l.b16 %v4634
    %v4795 = vunpack.c.l.b16 %v4635
    %v4796 = vunpack.c.l.b16 %v4636
    %v4797 = vunpack.c.l.b16 %v4637
    %v4798 = vunpack.c.l.b16 %v4638
    %v4799 = vunpack.c.l.b16 %v4639
    %v4800 = vunpack.c.l.b16 %v4640
    %v4801 = vunpack.c.l.b16 %v4641
    %v4802 = vunpack.c.l.b16 %v4642
    %v4803 = vunpack.c.l.b16 %v4643
    %v4804 = vunpack.c.l.b16 %v4644
    %v4805 = vunpack.c.l.b16 %v4645
    %v4806 = vunpack.c.l.b16 %v4646
    %v4807 = vunpack.c.l.b16 %v4647
    %v4808 = vunpack.c.l.b16 %v4648
    %v4809 = vunpack.c.l.b16 %v4649
    %v4810 = vunpack.c.l.b16 %v4650
    %v4811 = vunpack.c.l.b16 %v4651
    %v4812 = vunpack.c.l.b16 %v4652
    %v4813 = vunpack.c.l.b16 %v4653
    %v4814 = vunpack.c.l.b16 %v4654
    %v4815 = vunpack.c.l.b16 %v4655
    %v4816 = vunpack.c.l.b16 %v4656
    %v4817 = vunpack.c.l.b16 %v4657
    %v4818 = vunpack.c.l.b16 %v4658
    %v4819 = vunpack.c.l.b16 %v4659
    %v4820 = vunpack.c.l.b16 %v4660
    %v4821 = vunpack.c.l.b16 %v4661
    %v4822 = vunpack.c.l.b16 %v4662
    %v4823 = vunpack.c.l.b16 %v4663
    %v4824 = vunpack.c.l.b16 %v4664
    %v4825 = vunpack.c.l.b16 %v4665
    %v4826 = vunpack.c.l.b16 %v4666
    %v4827 = vunpack.c.l.b16 %v4667
    %v4828 = vunpack.c.l.b16 %v4668
    %v4829 = vunpack.c.l.b16 %v4669
    %v4830 = vunpack.c.l.b16 %v4670
    %v4831 = vunpack.c.l.b16 %v4671
    %v4832 = vunpack.c.l.b16 %v4672
    %v4833 = vunpack.c.l.b16 %v4673
    %v4834 = vunpack.c.l.b16 %v4674
    %v4835 = vunpack.c.l.b16 %v4675
    %v4836 = vunpack.c.l.b16 %v4676
    %v4837 = vunpack.c.l.b16 %v4677
    %v4838 = vunpack.c.l.b16 %v4678
    %v4839 = vunpack.c.l.b16 %v4679
    %v4840 = vunpack.c.l.b16 %v4680
    %v4841 = vunpack.c.l.b16 %v4681
    %v4842 = vunpack.c.l.b16 %v4682
    %v4843 = vunpack.c.l.b16 %v4683
    %v4844 = vunpack.c.l.b16 %v4684
    %v4845 = vunpack.c.l.b16 %v4685
    %v4846 = vunpack.c.l.b16 %v4686
    %v4847 = vunpack.c.l.b16 %v4687
    %v4848 = vunpack.c.l.b16 %v4688
    %v4849 = vunpack.c.l.b16 %v4689
    %v4850 = vunpack.c.l.b16 %v4690
    %v4851 = vunpack.c.l.b16 %v4691
    %v4852 = vunpack.c.l.b16 %v4692
    %v4853 = vpack.c.b16 %v4790, %v4789
    %v4854 = vpack.c.b16 %v4792, %v4791
    %v4855 = vpack.c.b16 %v4794, %v4793
    %v4856 = vpack.c.b16 %v4796, %v4795
    %v4857 = vpack.c.b16 %v4798, %v4797
    %v4858 = vpack.c.b16 %v4800, %v4799
    %v4859 = vpack.c.b16 %v4802, %v4801
    %v4860 = vpack.c.b16 %v4804, %v4803
    %v4861 = vpack.c.b16 %v4806, %v4805
    %v4862 = vpack.c.b16 %v4808, %v4807
    %v4863 = vpack.c.b16 %v4810, %v4809
    %v4864 = vpack.c.b16 %v4812, %v4811
    %v4865 = vpack.c.b16 %v4814, %v4813
    %v4866 = vpack.c.b16 %v4816, %v4815
    %v4867 = vpack.c.b16 %v4818, %v4817
    %v4868 = vpack.c.b16 %v4820, %v4819
    %v4869 = vpack.c.b16 %v4822, %v4821
    %v4870 = vpack.c.b16 %v4824, %v4823
    %v4871 = vpack.c.b16 %v4826, %v4825
    %v4872 = vpack.c.b16 %v4828, %v4827
    %v4873 = vpack.c.b16 %v4830, %v4829
    %v4874 = vpack.c.b16 %v4832, %v4831
    %v4875 = vpack.c.b16 %v4834, %v4833
    %v4876 = vpack.c.b16 %v4836, %v4835
    %v4877 = vpack.c.b16 %v4838, %v4837
    %v4878 = vpack.c.b16 %v4840, %v4839
    %v4879 = vpack.c.b16 %v4842, %v4841
    %v4880 = vpack.c.b16 %v4844, %v4843
    %v4881 = vpack.c.b16 %v4846, %v4845
    %v4882 = vpack.c.b16 %v4848, %v4847
    %v4883 = vpack.c.b16 %v4850, %v4849
    %v4884 = vpack.c.b16 %v4852, %v4851
    %4917 = vmatpush.bf16.msra.mxu0 %v4860
    %4918 = vmatpush.bf16.msra.mxu0 %v4859
    %4919 = vmatpush.bf16.msra.mxu0 %v4858
    %4920 = vmatpush.bf16.msra.mxu0 %v4857
    %4921 = vmatpush.bf16.msra.mxu0 %v4856
    %4922 = vmatpush.bf16.msra.mxu0 %v4855
    %4923 = vmatpush.bf16.msra.mxu0 %v4854
    %4924 = vmatpush.bf16.msra.mxu0 %v4853
    %4925 = vmatmul.bf16.gmra.mxu0 %v4693
    %v4926 = vpop.f32.mrf.mxu0
    %v4927 = vadd.f32 0.0, %v4926
    %v4928 = vpop.f32.mrf.mxu0
    %v4929 = vadd.f32 0.0, %v4928
    %4930 = vmatmul.bf16.gmra.mxu0 %v4697
    %v4931 = vpop.f32.mrf.mxu0
    %v4932 = vadd.f32 0.0, %v4931
    %v4933 = vpop.f32.mrf.mxu0
    %v4934 = vadd.f32 0.0, %v4933
    %4935 = vmatmul.bf16.gmra.mxu0 %v4701
    %v4936 = vpop.f32.mrf.mxu0
    %v4937 = vadd.f32 0.0, %v4936
    %v4938 = vpop.f32.mrf.mxu0
    %v4939 = vadd.f32 0.0, %v4938
    %4940 = vmatmul.bf16.gmra.mxu0 %v4705
    %v4941 = vpop.f32.mrf.mxu0
    %v4942 = vadd.f32 0.0, %v4941
    %v4943 = vpop.f32.mrf.mxu0
    %v4944 = vadd.f32 0.0, %v4943
    %4945 = vmatmul.bf16.gmra.mxu0 %v4709
    %v4946 = vpop.f32.mrf.mxu0
    %v4947 = vadd.f32 0.0, %v4946
    %v4948 = vpop.f32.mrf.mxu0
    %v4949 = vadd.f32 0.0, %v4948
    %4950 = vmatmul.bf16.gmra.mxu0 %v4713
    %v4951 = vpop.f32.mrf.mxu0
    %v4952 = vadd.f32 0.0, %v4951
    %v4953 = vpop.f32.mrf.mxu0
    %v4954 = vadd.f32 0.0, %v4953
    %4955 = vmatmul.bf16.gmra.mxu0 %v4717
    %v4956 = vpop.f32.mrf.mxu0
    %v4957 = vadd.f32 0.0, %v4956
    %v4958 = vpop.f32.mrf.mxu0
    %v4959 = vadd.f32 0.0, %v4958
    %4960 = vmatmul.bf16.gmra.mxu0 %v4721
    %v4961 = vpop.f32.mrf.mxu0
    %v4962 = vadd.f32 0.0, %v4961
    %v4963 = vpop.f32.mrf.mxu0
    %v4964 = vadd.f32 0.0, %v4963
    %4965 = vdwg.mxu0
    %4966 = vmatpush.bf16.msra.mxu0 %v4868
    %4967 = vmatpush.bf16.msra.mxu0 %v4867
    %4968 = vmatpush.bf16.msra.mxu0 %v4866
    %4969 = vmatpush.bf16.msra.mxu0 %v4865
    %4970 = vmatpush.bf16.msra.mxu0 %v4864
    %4971 = vmatpush.bf16.msra.mxu0 %v4863
    %4972 = vmatpush.bf16.msra.mxu0 %v4862
    %4973 = vmatpush.bf16.msra.mxu0 %v4861
    %4974 = vmatmul.bf16.gmra.mxu0 %v4694
    %v4975 = vpop.f32.mrf.mxu0
    %v4976 = vadd.f32 %v4927, %v4975
    %v4977 = vpop.f32.mrf.mxu0
    %v4978 = vadd.f32 %v4929, %v4977
    %4979 = vmatmul.bf16.gmra.mxu0 %v4698
    %v4980 = vpop.f32.mrf.mxu0
    %v4981 = vadd.f32 %v4932, %v4980
    %v4982 = vpop.f32.mrf.mxu0
    %v4983 = vadd.f32 %v4934, %v4982
    %4984 = vmatmul.bf16.gmra.mxu0 %v4702
    %v4985 = vpop.f32.mrf.mxu0
    %v4986 = vadd.f32 %v4937, %v4985
    %v4987 = vpop.f32.mrf.mxu0
    %v4988 = vadd.f32 %v4939, %v4987
    %4989 = vmatmul.bf16.gmra.mxu0 %v4706
    %v4990 = vpop.f32.mrf.mxu0
    %v4991 = vadd.f32 %v4942, %v4990
    %v4992 = vpop.f32.mrf.mxu0
    %v4993 = vadd.f32 %v4944, %v4992
    %4994 = vmatmul.bf16.gmra.mxu0 %v4710
    %v4995 = vpop.f32.mrf.mxu0
    %v4996 = vadd.f32 %v4947, %v4995
    %v4997 = vpop.f32.mrf.mxu0
    %v4998 = vadd.f32 %v4949, %v4997
    %4999 = vmatmul.bf16.gmra.mxu0 %v4714
    %v5000 = vpop.f32.mrf.mxu0
    %v5001 = vadd.f32 %v4952, %v5000
    %v5002 = vpop.f32.mrf.mxu0
    %v5003 = vadd.f32 %v4954, %v5002
    %5004 = vmatmul.bf16.gmra.mxu0 %v4718
    %v5005 = vpop.f32.mrf.mxu0
    %v5006 = vadd.f32 %v4957, %v5005
    %v5007 = vpop.f32.mrf.mxu0
    %v5008 = vadd.f32 %v4959, %v5007
    %5009 = vmatmul.bf16.gmra.mxu0 %v4722
    %v5010 = vpop.f32.mrf.mxu0
    %v5011 = vadd.f32 %v4962, %v5010
    %v5012 = vpop.f32.mrf.mxu0
    %v5013 = vadd.f32 %v4964, %v5012
    %5014 = vdwg.mxu0
    %5015 = vmatpush.bf16.msra.mxu0 %v4876
    %5016 = vmatpush.bf16.msra.mxu0 %v4875
    %5017 = vmatpush.bf16.msra.mxu0 %v4874
    %5018 = vmatpush.bf16.msra.mxu0 %v4873
    %5019 = vmatpush.bf16.msra.mxu0 %v4872
    %5020 = vmatpush.bf16.msra.mxu0 %v4871
    %5021 = vmatpush.bf16.msra.mxu0 %v4870
    %5022 = vmatpush.bf16.msra.mxu0 %v4869
    %5023 = vmatmul.bf16.gmra.mxu0 %v4695
    %v5024 = vpop.f32.mrf.mxu0
    %v5025 = vadd.f32 %v4976, %v5024
    %v5026 = vpop.f32.mrf.mxu0
    %v5027 = vadd.f32 %v4978, %v5026
    %5028 = vmatmul.bf16.gmra.mxu0 %v4699
    %v5029 = vpop.f32.mrf.mxu0
    %v5030 = vadd.f32 %v4981, %v5029
    %v5031 = vpop.f32.mrf.mxu0
    %v5032 = vadd.f32 %v4983, %v5031
    %5033 = vmatmul.bf16.gmra.mxu0 %v4703
    %v5034 = vpop.f32.mrf.mxu0
    %v5035 = vadd.f32 %v4986, %v5034
    %v5036 = vpop.f32.mrf.mxu0
    %v5037 = vadd.f32 %v4988, %v5036
    %5038 = vmatmul.bf16.gmra.mxu0 %v4707
    %v5039 = vpop.f32.mrf.mxu0
    %v5040 = vadd.f32 %v4991, %v5039
    %v5041 = vpop.f32.mrf.mxu0
    %v5042 = vadd.f32 %v4993, %v5041
    %5043 = vmatmul.bf16.gmra.mxu0 %v4711
    %v5044 = vpop.f32.mrf.mxu0
    %v5045 = vadd.f32 %v4996, %v5044
    %v5046 = vpop.f32.mrf.mxu0
    %v5047 = vadd.f32 %v4998, %v5046
    %5048 = vmatmul.bf16.gmra.mxu0 %v4715
    %v5049 = vpop.f32.mrf.mxu0
    %v5050 = vadd.f32 %v5001, %v5049
    %v5051 = vpop.f32.mrf.mxu0
    %v5052 = vadd.f32 %v5003, %v5051
    %5053 = vmatmul.bf16.gmra.mxu0 %v4719
    %v5054 = vpop.f32.mrf.mxu0
    %v5055 = vadd.f32 %v5006, %v5054
    %v5056 = vpop.f32.mrf.mxu0
    %v5057 = vadd.f32 %v5008, %v5056
    %5058 = vmatmul.bf16.gmra.mxu0 %v4723
    %v5059 = vpop.f32.mrf.mxu0
    %v5060 = vadd.f32 %v5011, %v5059
    %v5061 = vpop.f32.mrf.mxu0
    %v5062 = vadd.f32 %v5013, %v5061
    %5063 = vdwg.mxu0
    %5064 = vmatpush.bf16.msra.mxu0 %v4884
    %5065 = vmatpush.bf16.msra.mxu0 %v4883
    %5066 = vmatpush.bf16.msra.mxu0 %v4882
    %5067 = vmatpush.bf16.msra.mxu0 %v4881
    %5068 = vmatpush.bf16.msra.mxu0 %v4880
    %5069 = vmatpush.bf16.msra.mxu0 %v4879
    %5070 = vmatpush.bf16.msra.mxu0 %v4878
    %5071 = vmatpush.bf16.msra.mxu0 %v4877
    %5072 = vmatmul.bf16.gmra.mxu0 %v4696
    %v5073 = vpop.f32.mrf.mxu0
    %v5074 = vadd.f32 %v5025, %v5073
    %v5075 = vpop.f32.mrf.mxu0
    %v5076 = vadd.f32 %v5027, %v5075
    %5077 = vmatmul.bf16.gmra.mxu0 %v4700
    %v5078 = vpop.f32.mrf.mxu0
    %v5079 = vadd.f32 %v5030, %v5078
    %v5080 = vpop.f32.mrf.mxu0
    %v5081 = vadd.f32 %v5032, %v5080
    %5082 = vmatmul.bf16.gmra.mxu0 %v4704
    %v5083 = vpop.f32.mrf.mxu0
    %v5084 = vadd.f32 %v5035, %v5083
    %v5085 = vpop.f32.mrf.mxu0
    %v5086 = vadd.f32 %v5037, %v5085
    %5087 = vmatmul.bf16.gmra.mxu0 %v4708
    %v5088 = vpop.f32.mrf.mxu0
    %v5089 = vadd.f32 %v5040, %v5088
    %v5090 = vpop.f32.mrf.mxu0
    %v5091 = vadd.f32 %v5042, %v5090
    %5092 = vmatmul.bf16.gmra.mxu0 %v4712
    %v5093 = vpop.f32.mrf.mxu0
    %v5094 = vadd.f32 %v5045, %v5093
    %v5095 = vpop.f32.mrf.mxu0
    %v5096 = vadd.f32 %v5047, %v5095
    %5097 = vmatmul.bf16.gmra.mxu0 %v4716
    %v5098 = vpop.f32.mrf.mxu0
    %v5099 = vadd.f32 %v5050, %v5098
    %v5100 = vpop.f32.mrf.mxu0
    %v5101 = vadd.f32 %v5052, %v5100
    %5102 = vmatmul.bf16.gmra.mxu0 %v4720
    %v5103 = vpop.f32.mrf.mxu0
    %v5104 = vadd.f32 %v5055, %v5103
    %v5105 = vpop.f32.mrf.mxu0
    %v5106 = vadd.f32 %v5057, %v5105
    %5107 = vmatmul.bf16.gmra.mxu0 %v4724
    %v5108 = vpop.f32.mrf.mxu0
    %v5109 = vadd.f32 %v5060, %v5108
    %v5110 = vpop.f32.mrf.mxu0
    %v5111 = vadd.f32 %v5062, %v5110
    %5112 = vdwg.mxu0
    %v5113 = vadd.f32 %v3751, %v5074
    %v5114 = vadd.f32 %v3752, %v5076
    %v5115 = vadd.f32 %v3753, %v5079
    %v5116 = vadd.f32 %v3754, %v5081
    %v5117 = vadd.f32 %v3755, %v5084
    %v5118 = vadd.f32 %v3756, %v5086
    %v5119 = vadd.f32 %v3757, %v5089
    %v5120 = vadd.f32 %v3758, %v5091
    %v5121 = vadd.f32 %v3759, %v5094
    %v5122 = vadd.f32 %v3760, %v5096
    %v5123 = vadd.f32 %v3761, %v5099
    %v5124 = vadd.f32 %v3762, %v5101
    %v5125 = vadd.f32 %v3763, %v5104
    %v5126 = vadd.f32 %v3764, %v5106
    %v5127 = vadd.f32 %v3765, %v5109
    %v5128 = vadd.f32 %v3766, %v5111
    %v5129 = vld [vmem:[#allocation19] sm:$0x1]
    %v5131 = vperm.slane %v5129, 0
    %v5133 = vadd.f32 %v5113, %v5131
    %v5134 = vadd.f32 %v5114, %v5131
    %v5135 = vadd.f32 %v5115, %v5131
    %v5136 = vadd.f32 %v5116, %v5131
    %v5137 = vadd.f32 %v5117, %v5131
    %v5138 = vadd.f32 %v5118, %v5131
    %v5139 = vadd.f32 %v5119, %v5131
    %v5140 = vadd.f32 %v5120, %v5131
    %v5141 = vadd.f32 %v5121, %v5131
    %v5142 = vadd.f32 %v5122, %v5131
    %v5143 = vadd.f32 %v5123, %v5131
    %v5144 = vadd.f32 %v5124, %v5131
    %v5145 = vadd.f32 %v5125, %v5131
    %v5146 = vadd.f32 %v5126, %v5131
    %v5147 = vadd.f32 %v5127, %v5131
    %v5148 = vadd.f32 %v5128, %v5131
    %s5149 = scalar_lea.vmem [#allocation7], 1
    %v5150 = vld [vmem:[%s5149] sm:$0x1]
    %s5151 = scalar_lea.vmem [#allocation8], 1
    %v5152 = vld [vmem:[%s5151] sm:$0x1]
    %5153 = vadd.xlane.f32.xlu0 %v5133
    %v5154 = vpop.xlane.xlu0 %5153
    %5155 = vadd.xlane.f32.xlu0 %v5134
    %v5156 = vpop.xlane.xlu0 %5155
    %5157 = vadd.xlane.f32.xlu0 %v5135
    %v5158 = vpop.xlane.xlu0 %5157
    %5159 = vadd.xlane.f32.xlu0 %v5136
    %v5160 = vpop.xlane.xlu0 %5159
    %5161 = vadd.xlane.f32.xlu0 %v5137
    %v5162 = vpop.xlane.xlu0 %5161
    %5163 = vadd.xlane.f32.xlu0 %v5138
    %v5164 = vpop.xlane.xlu0 %5163
    %5165 = vadd.xlane.f32.xlu0 %v5139
    %v5166 = vpop.xlane.xlu0 %5165
    %5167 = vadd.xlane.f32.xlu0 %v5140
    %v5168 = vpop.xlane.xlu0 %5167
    %5169 = vadd.xlane.f32.xlu0 %v5141
    %v5170 = vpop.xlane.xlu0 %5169
    %5171 = vadd.xlane.f32.xlu0 %v5142
    %v5172 = vpop.xlane.xlu0 %5171
    %5173 = vadd.xlane.f32.xlu0 %v5143
    %v5174 = vpop.xlane.xlu0 %5173
    %5175 = vadd.xlane.f32.xlu0 %v5144
    %v5176 = vpop.xlane.xlu0 %5175
    %5177 = vadd.xlane.f32.xlu0 %v5145
    %v5178 = vpop.xlane.xlu0 %5177
    %5179 = vadd.xlane.f32.xlu0 %v5146
    %v5180 = vpop.xlane.xlu0 %5179
    %5181 = vadd.xlane.f32.xlu0 %v5147
    %v5182 = vpop.xlane.xlu0 %5181
    %5183 = vadd.xlane.f32.xlu0 %v5148
    %v5184 = vpop.xlane.xlu0 %5183
    %v5185 = vmul.f32 %v5154, %v973
    %v5186 = vmul.f32 %v5156, %v973
    %v5187 = vmul.f32 %v5158, %v973
    %v5188 = vmul.f32 %v5160, %v973
    %v5189 = vmul.f32 %v5162, %v973
    %v5190 = vmul.f32 %v5164, %v973
    %v5191 = vmul.f32 %v5166, %v973
    %v5192 = vmul.f32 %v5168, %v973
    %v5193 = vmul.f32 %v5170, %v973
    %v5194 = vmul.f32 %v5172, %v973
    %v5195 = vmul.f32 %v5174, %v973
    %v5196 = vmul.f32 %v5176, %v973
    %v5197 = vmul.f32 %v5178, %v973
    %v5198 = vmul.f32 %v5180, %v973
    %v5199 = vmul.f32 %v5182, %v973
    %v5200 = vmul.f32 %v5184, %v973
    %v5201 = vmul.f32 %v5133, %v5133
    %v5202 = vmul.f32 %v5134, %v5134
    %v5203 = vmul.f32 %v5135, %v5135
    %v5204 = vmul.f32 %v5136, %v5136
    %v5205 = vmul.f32 %v5137, %v5137
    %v5206 = vmul.f32 %v5138, %v5138
    %v5207 = vmul.f32 %v5139, %v5139
    %v5208 = vmul.f32 %v5140, %v5140
    %v5209 = vmul.f32 %v5141, %v5141
    %v5210 = vmul.f32 %v5142, %v5142
    %v5211 = vmul.f32 %v5143, %v5143
    %v5212 = vmul.f32 %v5144, %v5144
    %v5213 = vmul.f32 %v5145, %v5145
    %v5214 = vmul.f32 %v5146, %v5146
    %v5215 = vmul.f32 %v5147, %v5147
    %v5216 = vmul.f32 %v5148, %v5148
    %5217 = vadd.xlane.f32.xlu0 %v5201
    %v5218 = vpop.xlane.xlu0 %5217
    %5219 = vadd.xlane.f32.xlu0 %v5202
    %v5220 = vpop.xlane.xlu0 %5219
    %5221 = vadd.xlane.f32.xlu0 %v5203
    %v5222 = vpop.xlane.xlu0 %5221
    %5223 = vadd.xlane.f32.xlu0 %v5204
    %v5224 = vpop.xlane.xlu0 %5223
    %5225 = vadd.xlane.f32.xlu0 %v5205
    %v5226 = vpop.xlane.xlu0 %5225
    %5227 = vadd.xlane.f32.xlu0 %v5206
    %v5228 = vpop.xlane.xlu0 %5227
    %5229 = vadd.xlane.f32.xlu0 %v5207
    %v5230 = vpop.xlane.xlu0 %5229
    %5231 = vadd.xlane.f32.xlu0 %v5208
    %v5232 = vpop.xlane.xlu0 %5231
    %5233 = vadd.xlane.f32.xlu0 %v5209
    %v5234 = vpop.xlane.xlu0 %5233
    %5235 = vadd.xlane.f32.xlu0 %v5210
    %v5236 = vpop.xlane.xlu0 %5235
    %5237 = vadd.xlane.f32.xlu0 %v5211
    %v5238 = vpop.xlane.xlu0 %5237
    %5239 = vadd.xlane.f32.xlu0 %v5212
    %v5240 = vpop.xlane.xlu0 %5239
    %5241 = vadd.xlane.f32.xlu0 %v5213
    %v5242 = vpop.xlane.xlu0 %5241
    %5243 = vadd.xlane.f32.xlu0 %v5214
    %v5244 = vpop.xlane.xlu0 %5243
    %5245 = vadd.xlane.f32.xlu0 %v5215
    %v5246 = vpop.xlane.xlu0 %5245
    %5247 = vadd.xlane.f32.xlu0 %v5216
    %v5248 = vpop.xlane.xlu0 %5247
    %v5249 = vmul.f32 %v5218, %v973
    %v5250 = vmul.f32 %v5220, %v973
    %v5251 = vmul.f32 %v5222, %v973
    %v5252 = vmul.f32 %v5224, %v973
    %v5253 = vmul.f32 %v5226, %v973
    %v5254 = vmul.f32 %v5228, %v973
    %v5255 = vmul.f32 %v5230, %v973
    %v5256 = vmul.f32 %v5232, %v973
    %v5257 = vmul.f32 %v5234, %v973
    %v5258 = vmul.f32 %v5236, %v973
    %v5259 = vmul.f32 %v5238, %v973
    %v5260 = vmul.f32 %v5240, %v973
    %v5261 = vmul.f32 %v5242, %v973
    %v5262 = vmul.f32 %v5244, %v973
    %v5263 = vmul.f32 %v5246, %v973
    %v5264 = vmul.f32 %v5248, %v973
    %v5265 = vmul.f32 %v5185, %v5185
    %v5266 = vmul.f32 %v5186, %v5186
    %v5267 = vmul.f32 %v5187, %v5187
    %v5268 = vmul.f32 %v5188, %v5188
    %v5269 = vmul.f32 %v5189, %v5189
    %v5270 = vmul.f32 %v5190, %v5190
    %v5271 = vmul.f32 %v5191, %v5191
    %v5272 = vmul.f32 %v5192, %v5192
    %v5273 = vmul.f32 %v5193, %v5193
    %v5274 = vmul.f32 %v5194, %v5194
    %v5275 = vmul.f32 %v5195, %v5195
    %v5276 = vmul.f32 %v5196, %v5196
    %v5277 = vmul.f32 %v5197, %v5197
    %v5278 = vmul.f32 %v5198, %v5198
    %v5279 = vmul.f32 %v5199, %v5199
    %v5280 = vmul.f32 %v5200, %v5200
    %v5281 = vsub.f32 %v5249, %v5265
    %v5282 = vsub.f32 %v5250, %v5266
    %v5283 = vsub.f32 %v5251, %v5267
    %v5284 = vsub.f32 %v5252, %v5268
    %v5285 = vsub.f32 %v5253, %v5269
    %v5286 = vsub.f32 %v5254, %v5270
    %v5287 = vsub.f32 %v5255, %v5271
    %v5288 = vsub.f32 %v5256, %v5272
    %v5289 = vsub.f32 %v5257, %v5273
    %v5290 = vsub.f32 %v5258, %v5274
    %v5291 = vsub.f32 %v5259, %v5275
    %v5292 = vsub.f32 %v5260, %v5276
    %v5293 = vsub.f32 %v5261, %v5277
    %v5294 = vsub.f32 %v5262, %v5278
    %v5295 = vsub.f32 %v5263, %v5279
    %v5296 = vsub.f32 %v5264, %v5280
    %v5297 = vsub.f32 %v5133, %v5185
    %v5298 = vsub.f32 %v5134, %v5186
    %v5299 = vsub.f32 %v5135, %v5187
    %v5300 = vsub.f32 %v5136, %v5188
    %v5301 = vsub.f32 %v5137, %v5189
    %v5302 = vsub.f32 %v5138, %v5190
    %v5303 = vsub.f32 %v5139, %v5191
    %v5304 = vsub.f32 %v5140, %v5192
    %v5305 = vsub.f32 %v5141, %v5193
    %v5306 = vsub.f32 %v5142, %v5194
    %v5307 = vsub.f32 %v5143, %v5195
    %v5308 = vsub.f32 %v5144, %v5196
    %v5309 = vsub.f32 %v5145, %v5197
    %v5310 = vsub.f32 %v5146, %v5198
    %v5311 = vsub.f32 %v5147, %v5199
    %v5312 = vsub.f32 %v5148, %v5200
    %v5313 = vadd.f32 %v5281, 1e-05
    %v5314 = vadd.f32 %v5282, 1e-05
    %v5315 = vadd.f32 %v5283, 1e-05
    %v5316 = vadd.f32 %v5284, 1e-05
    %v5317 = vadd.f32 %v5285, 1e-05
    %v5318 = vadd.f32 %v5286, 1e-05
    %v5319 = vadd.f32 %v5287, 1e-05
    %v5320 = vadd.f32 %v5288, 1e-05
    %v5321 = vadd.f32 %v5289, 1e-05
    %v5322 = vadd.f32 %v5290, 1e-05
    %v5323 = vadd.f32 %v5291, 1e-05
    %v5324 = vadd.f32 %v5292, 1e-05
    %v5325 = vadd.f32 %v5293, 1e-05
    %v5326 = vadd.f32 %v5294, 1e-05
    %v5327 = vadd.f32 %v5295, 1e-05
    %v5328 = vadd.f32 %v5296, 1e-05
    %v5329 = vrsqrt.pop %v5313
    %v5330 = vmul.f32 %v5329, %v5313
    %v5331 = vmul.f32 %v5330, %v5329
    %v5332 = vmul.f32 0.5, %v5331
    %v5333 = vsub.f32 1.5, %v5332
    %v5334 = vmul.f32 %v5329, %v5333
    %vm5335 = vweird.f32 %v5313
    %vm5336 = vweird.f32 %v5329
    %vm5337 = vmor %vm5335, %vm5336
    %v5338 = vsel %vm5337, %v5329, %v5334
    %v5339 = vrsqrt.pop %v5314
    %v5340 = vmul.f32 %v5339, %v5314
    %v5341 = vmul.f32 %v5340, %v5339
    %v5342 = vmul.f32 0.5, %v5341
    %v5343 = vsub.f32 1.5, %v5342
    %v5344 = vmul.f32 %v5339, %v5343
    %vm5345 = vweird.f32 %v5314
    %vm5346 = vweird.f32 %v5339
    %vm5347 = vmor %vm5345, %vm5346
    %v5348 = vsel %vm5347, %v5339, %v5344
    %v5349 = vrsqrt.pop %v5315
    %v5350 = vmul.f32 %v5349, %v5315
    %v5351 = vmul.f32 %v5350, %v5349
    %v5352 = vmul.f32 0.5, %v5351
    %v5353 = vsub.f32 1.5, %v5352
    %v5354 = vmul.f32 %v5349, %v5353
    %vm5355 = vweird.f32 %v5315
    %vm5356 = vweird.f32 %v5349
    %vm5357 = vmor %vm5355, %vm5356
    %v5358 = vsel %vm5357, %v5349, %v5354
    %v5359 = vrsqrt.pop %v5316
    %v5360 = vmul.f32 %v5359, %v5316
    %v5361 = vmul.f32 %v5360, %v5359
    %v5362 = vmul.f32 0.5, %v5361
    %v5363 = vsub.f32 1.5, %v5362
    %v5364 = vmul.f32 %v5359, %v5363
    %vm5365 = vweird.f32 %v5316
    %vm5366 = vweird.f32 %v5359
    %vm5367 = vmor %vm5365, %vm5366
    %v5368 = vsel %vm5367, %v5359, %v5364
    %v5369 = vrsqrt.pop %v5317
    %v5370 = vmul.f32 %v5369, %v5317
    %v5371 = vmul.f32 %v5370, %v5369
    %v5372 = vmul.f32 0.5, %v5371
    %v5373 = vsub.f32 1.5, %v5372
    %v5374 = vmul.f32 %v5369, %v5373
    %vm5375 = vweird.f32 %v5317
    %vm5376 = vweird.f32 %v5369
    %vm5377 = vmor %vm5375, %vm5376
    %v5378 = vsel %vm5377, %v5369, %v5374
    %v5379 = vrsqrt.pop %v5318
    %v5380 = vmul.f32 %v5379, %v5318
    %v5381 = vmul.f32 %v5380, %v5379
    %v5382 = vmul.f32 0.5, %v5381
    %v5383 = vsub.f32 1.5, %v5382
    %v5384 = vmul.f32 %v5379, %v5383
    %vm5385 = vweird.f32 %v5318
    %vm5386 = vweird.f32 %v5379
    %vm5387 = vmor %vm5385, %vm5386
    %v5388 = vsel %vm5387, %v5379, %v5384
    %v5389 = vrsqrt.pop %v5319
    %v5390 = vmul.f32 %v5389, %v5319
    %v5391 = vmul.f32 %v5390, %v5389
    %v5392 = vmul.f32 0.5, %v5391
    %v5393 = vsub.f32 1.5, %v5392
    %v5394 = vmul.f32 %v5389, %v5393
    %vm5395 = vweird.f32 %v5319
    %vm5396 = vweird.f32 %v5389
    %vm5397 = vmor %vm5395, %vm5396
    %v5398 = vsel %vm5397, %v5389, %v5394
    %v5399 = vrsqrt.pop %v5320
    %v5400 = vmul.f32 %v5399, %v5320
    %v5401 = vmul.f32 %v5400, %v5399
    %v5402 = vmul.f32 0.5, %v5401
    %v5403 = vsub.f32 1.5, %v5402
    %v5404 = vmul.f32 %v5399, %v5403
    %vm5405 = vweird.f32 %v5320
    %vm5406 = vweird.f32 %v5399
    %vm5407 = vmor %vm5405, %vm5406
    %v5408 = vsel %vm5407, %v5399, %v5404
    %v5409 = vrsqrt.pop %v5321
    %v5410 = vmul.f32 %v5409, %v5321
    %v5411 = vmul.f32 %v5410, %v5409
    %v5412 = vmul.f32 0.5, %v5411
    %v5413 = vsub.f32 1.5, %v5412
    %v5414 = vmul.f32 %v5409, %v5413
    %vm5415 = vweird.f32 %v5321
    %vm5416 = vweird.f32 %v5409
    %vm5417 = vmor %vm5415, %vm5416
    %v5418 = vsel %vm5417, %v5409, %v5414
    %v5419 = vrsqrt.pop %v5322
    %v5420 = vmul.f32 %v5419, %v5322
    %v5421 = vmul.f32 %v5420, %v5419
    %v5422 = vmul.f32 0.5, %v5421
    %v5423 = vsub.f32 1.5, %v5422
    %v5424 = vmul.f32 %v5419, %v5423
    %vm5425 = vweird.f32 %v5322
    %vm5426 = vweird.f32 %v5419
    %vm5427 = vmor %vm5425, %vm5426
    %v5428 = vsel %vm5427, %v5419, %v5424
    %v5429 = vrsqrt.pop %v5323
    %v5430 = vmul.f32 %v5429, %v5323
    %v5431 = vmul.f32 %v5430, %v5429
    %v5432 = vmul.f32 0.5, %v5431
    %v5433 = vsub.f32 1.5, %v5432
    %v5434 = vmul.f32 %v5429, %v5433
    %vm5435 = vweird.f32 %v5323
    %vm5436 = vweird.f32 %v5429
    %vm5437 = vmor %vm5435, %vm5436
    %v5438 = vsel %vm5437, %v5429, %v5434
    %v5439 = vrsqrt.pop %v5324
    %v5440 = vmul.f32 %v5439, %v5324
    %v5441 = vmul.f32 %v5440, %v5439
    %v5442 = vmul.f32 0.5, %v5441
    %v5443 = vsub.f32 1.5, %v5442
    %v5444 = vmul.f32 %v5439, %v5443
    %vm5445 = vweird.f32 %v5324
    %vm5446 = vweird.f32 %v5439
    %vm5447 = vmor %vm5445, %vm5446
    %v5448 = vsel %vm5447, %v5439, %v5444
    %v5449 = vrsqrt.pop %v5325
    %v5450 = vmul.f32 %v5449, %v5325
    %v5451 = vmul.f32 %v5450, %v5449
    %v5452 = vmul.f32 0.5, %v5451
    %v5453 = vsub.f32 1.5, %v5452
    %v5454 = vmul.f32 %v5449, %v5453
    %vm5455 = vweird.f32 %v5325
    %vm5456 = vweird.f32 %v5449
    %vm5457 = vmor %vm5455, %vm5456
    %v5458 = vsel %vm5457, %v5449, %v5454
    %v5459 = vrsqrt.pop %v5326
    %v5460 = vmul.f32 %v5459, %v5326
    %v5461 = vmul.f32 %v5460, %v5459
    %v5462 = vmul.f32 0.5, %v5461
    %v5463 = vsub.f32 1.5, %v5462
    %v5464 = vmul.f32 %v5459, %v5463
    %vm5465 = vweird.f32 %v5326
    %vm5466 = vweird.f32 %v5459
    %vm5467 = vmor %vm5465, %vm5466
    %v5468 = vsel %vm5467, %v5459, %v5464
    %v5469 = vrsqrt.pop %v5327
    %v5470 = vmul.f32 %v5469, %v5327
    %v5471 = vmul.f32 %v5470, %v5469
    %v5472 = vmul.f32 0.5, %v5471
    %v5473 = vsub.f32 1.5, %v5472
    %v5474 = vmul.f32 %v5469, %v5473
    %vm5475 = vweird.f32 %v5327
    %vm5476 = vweird.f32 %v5469
    %vm5477 = vmor %vm5475, %vm5476
    %v5478 = vsel %vm5477, %v5469, %v5474
    %v5479 = vrsqrt.pop %v5328
    %v5480 = vmul.f32 %v5479, %v5328
    %v5481 = vmul.f32 %v5480, %v5479
    %v5482 = vmul.f32 0.5, %v5481
    %v5483 = vsub.f32 1.5, %v5482
    %v5484 = vmul.f32 %v5479, %v5483
    %vm5485 = vweird.f32 %v5328
    %vm5486 = vweird.f32 %v5479
    %vm5487 = vmor %vm5485, %vm5486
    %v5488 = vsel %vm5487, %v5479, %v5484
    %v5489 = vmul.f32 %v5297, %v5338
    %v5490 = vmul.f32 %v5298, %v5348
    %v5491 = vmul.f32 %v5299, %v5358
    %v5492 = vmul.f32 %v5300, %v5368
    %v5493 = vmul.f32 %v5301, %v5378
    %v5494 = vmul.f32 %v5302, %v5388
    %v5495 = vmul.f32 %v5303, %v5398
    %v5496 = vmul.f32 %v5304, %v5408
    %v5497 = vmul.f32 %v5305, %v5418
    %v5498 = vmul.f32 %v5306, %v5428
    %v5499 = vmul.f32 %v5307, %v5438
    %v5500 = vmul.f32 %v5308, %v5448
    %v5501 = vmul.f32 %v5309, %v5458
    %v5502 = vmul.f32 %v5310, %v5468
    %v5503 = vmul.f32 %v5311, %v5478
    %v5504 = vmul.f32 %v5312, %v5488
    %v5506 = vperm.slane %v5150, 0
    %v5508 = vmul.f32 %v5489, %v5506
    %v5509 = vmul.f32 %v5490, %v5506
    %v5510 = vmul.f32 %v5491, %v5506
    %v5511 = vmul.f32 %v5492, %v5506
    %v5512 = vmul.f32 %v5493, %v5506
    %v5513 = vmul.f32 %v5494, %v5506
    %v5514 = vmul.f32 %v5495, %v5506
    %v5515 = vmul.f32 %v5496, %v5506
    %v5516 = vmul.f32 %v5497, %v5506
    %v5517 = vmul.f32 %v5498, %v5506
    %v5518 = vmul.f32 %v5499, %v5506
    %v5519 = vmul.f32 %v5500, %v5506
    %v5520 = vmul.f32 %v5501, %v5506
    %v5521 = vmul.f32 %v5502, %v5506
    %v5522 = vmul.f32 %v5503, %v5506
    %v5523 = vmul.f32 %v5504, %v5506
    %v5525 = vperm.slane %v5152, 0
    %v5527 = vadd.f32 %v5508, %v5525
    %v5528 = vadd.f32 %v5509, %v5525
    %v5529 = vadd.f32 %v5510, %v5525
    %v5530 = vadd.f32 %v5511, %v5525
    %v5531 = vadd.f32 %v5512, %v5525
    %v5532 = vadd.f32 %v5513, %v5525
    %v5533 = vadd.f32 %v5514, %v5525
    %v5534 = vadd.f32 %v5515, %v5525
    %v5535 = vadd.f32 %v5516, %v5525
    %v5536 = vadd.f32 %v5517, %v5525
    %v5537 = vadd.f32 %v5518, %v5525
    %v5538 = vadd.f32 %v5519, %v5525
    %v5539 = vadd.f32 %v5520, %v5525
    %v5540 = vadd.f32 %v5521, %v5525
    %v5541 = vadd.f32 %v5522, %v5525
    %v5542 = vadd.f32 %v5523, %v5525
    %s5543 = scalar_lea.vmem [#allocation10], 192
    %v5544 = vld [vmem:[%s5543] sm:$0xff]
    %v5545 = vld [vmem:[%s5543 + $0x8] sm:$0xf]
    %v5546 = vld [vmem:[%s5543 + $0xc] sm:$0xff]
    %v5547 = vld [vmem:[%s5543 + $0x14] sm:$0xf]
    %v5548 = vld [vmem:[%s5543 + $0x18] sm:$0xff]
    %v5549 = vld [vmem:[%s5543 + $0x20] sm:$0xf]
    %v5550 = vld [vmem:[%s5543 + $0x24] sm:$0xff]
    %v5551 = vld [vmem:[%s5543 + $0x2c] sm:$0xf]
    %v5552 = vld [vmem:[%s5543 + $0x30] sm:$0xff]
    %v5553 = vld [vmem:[%s5543 + $0x38] sm:$0xf]
    %v5554 = vld [vmem:[%s5543 + $0x3c] sm:$0xff]
    %v5555 = vld [vmem:[%s5543 + $0x44] sm:$0xf]
    %v5556 = vld [vmem:[%s5543 + $0x48] sm:$0xff]
    %v5557 = vld [vmem:[%s5543 + $0x50] sm:$0xf]
    %v5558 = vld [vmem:[%s5543 + $0x54] sm:$0xff]
    %v5559 = vld [vmem:[%s5543 + $0x5c] sm:$0xf]
    %v5560 = vld [vmem:[%s5543 + $0x60] sm:$0xff]
    %v5561 = vld [vmem:[%s5543 + $0x68] sm:$0xf]
    %v5562 = vld [vmem:[%s5543 + $0x6c] sm:$0xff]
    %v5563 = vld [vmem:[%s5543 + $0x74] sm:$0xf]
    %v5564 = vld [vmem:[%s5543 + $0x78] sm:$0xff]
    %v5565 = vld [vmem:[%s5543 + $0x80] sm:$0xf]
    %v5566 = vld [vmem:[%s5543 + $0x84] sm:$0xff]
    %v5567 = vld [vmem:[%s5543 + $0x8c] sm:$0xf]
    %v5568 = vld [vmem:[%s5543 + $0x90] sm:$0xff]
    %v5569 = vld [vmem:[%s5543 + $0x98] sm:$0xf]
    %v5570 = vld [vmem:[%s5543 + $0x9c] sm:$0xff]
    %v5571 = vld [vmem:[%s5543 + $0xa4] sm:$0xf]
    %v5572 = vld [vmem:[%s5543 + $0xa8] sm:$0xff]
    %v5573 = vld [vmem:[%s5543 + $0xb0] sm:$0xf]
    %v5574 = vld [vmem:[%s5543 + $0xb4] sm:$0xff]
    %v5575 = vld [vmem:[%s5543 + $0xbc] sm:$0xf]
    %v5576 = vpack.c.bf16 %v5528, %v5527
    %v5577 = vpack.c.bf16 %v5530, %v5529
    %v5578 = vpack.c.bf16 %v5532, %v5531
    %v5579 = vpack.c.bf16 %v5534, %v5533
    %v5580 = vpack.c.bf16 %v5536, %v5535
    %v5581 = vpack.c.bf16 %v5538, %v5537
    %v5582 = vpack.c.bf16 %v5540, %v5539
    %v5583 = vpack.c.bf16 %v5542, %v5541
    %v5616 = vunpack.c.l.b16 %v5544
    %v5617 = vunpack.c.h.b16 %v5544
    %v5618 = vunpack.c.l.b16 %v5545
    %v5619 = vunpack.c.l.b16 %v5546
    %v5620 = vunpack.c.h.b16 %v5546
    %v5621 = vunpack.c.l.b16 %v5547
    %v5622 = vunpack.c.l.b16 %v5548
    %v5623 = vunpack.c.h.b16 %v5548
    %v5624 = vunpack.c.l.b16 %v5549
    %v5625 = vunpack.c.l.b16 %v5550
    %v5626 = vunpack.c.h.b16 %v5550
    %v5627 = vunpack.c.l.b16 %v5551
    %v5628 = vunpack.c.l.b16 %v5552
    %v5629 = vunpack.c.h.b16 %v5552
    %v5630 = vunpack.c.l.b16 %v5553
    %v5631 = vunpack.c.l.b16 %v5554
    %v5632 = vunpack.c.h.b16 %v5554
    %v5633 = vunpack.c.l.b16 %v5555
    %v5634 = vunpack.c.l.b16 %v5556
    %v5635 = vunpack.c.h.b16 %v5556
    %v5636 = vunpack.c.l.b16 %v5557
    %v5637 = vunpack.c.l.b16 %v5558
    %v5638 = vunpack.c.h.b16 %v5558
    %v5639 = vunpack.c.l.b16 %v5559
    %v5640 = vunpack.c.l.b16 %v5560
    %v5641 = vunpack.c.h.b16 %v5560
    %v5642 = vunpack.c.l.b16 %v5561
    %v5643 = vunpack.c.l.b16 %v5562
    %v5644 = vunpack.c.h.b16 %v5562
    %v5645 = vunpack.c.l.b16 %v5563
    %v5646 = vunpack.c.l.b16 %v5564
    %v5647 = vunpack.c.h.b16 %v5564
    %v5648 = vunpack.c.l.b16 %v5565
    %v5649 = vunpack.c.l.b16 %v5566
    %v5650 = vunpack.c.h.b16 %v5566
    %v5651 = vunpack.c.l.b16 %v5567
    %v5652 = vunpack.c.l.b16 %v5568
    %v5653 = vunpack.c.h.b16 %v5568
    %v5654 = vunpack.c.l.b16 %v5569
    %v5655 = vunpack.c.l.b16 %v5570
    %v5656 = vunpack.c.h.b16 %v5570
    %v5657 = vunpack.c.l.b16 %v5571
    %v5658 = vunpack.c.l.b16 %v5572
    %v5659 = vunpack.c.h.b16 %v5572
    %v5660 = vunpack.c.l.b16 %v5573
    %v5661 = vunpack.c.l.b16 %v5574
    %v5662 = vunpack.c.h.b16 %v5574
    %v5663 = vunpack.c.l.b16 %v5575
    %v5664 = vpack.c.b16 %v5619, %v5616
    %v5665 = vpack.c.b16 %v5620, %v5617
    %v5666 = vpack.c.b16 %v5621, %v5618
    %v5667 = vpack.c.b16 %v5625, %v5622
    %v5668 = vpack.c.b16 %v5626, %v5623
    %v5669 = vpack.c.b16 %v5627, %v5624
    %v5670 = vpack.c.b16 %v5631, %v5628
    %v5671 = vpack.c.b16 %v5632, %v5629
    %v5672 = vpack.c.b16 %v5633, %v5630
    %v5673 = vpack.c.b16 %v5637, %v5634
    %v5674 = vpack.c.b16 %v5638, %v5635
    %v5675 = vpack.c.b16 %v5639, %v5636
    %v5676 = vpack.c.b16 %v5643, %v5640
    %v5677 = vpack.c.b16 %v5644, %v5641
    %v5678 = vpack.c.b16 %v5645, %v5642
    %v5679 = vpack.c.b16 %v5649, %v5646
    %v5680 = vpack.c.b16 %v5650, %v5647
    %v5681 = vpack.c.b16 %v5651, %v5648
    %v5682 = vpack.c.b16 %v5655, %v5652
    %v5683 = vpack.c.b16 %v5656, %v5653
    %v5684 = vpack.c.b16 %v5657, %v5654
    %v5685 = vpack.c.b16 %v5661, %v5658
    %v5686 = vpack.c.b16 %v5662, %v5659
    %v5687 = vpack.c.b16 %v5663, %v5660
    %5712 = vmatpush.bf16.msra.mxu0 %v5685
    %5713 = vmatpush.bf16.msra.mxu0 %v5682
    %5714 = vmatpush.bf16.msra.mxu0 %v5679
    %5715 = vmatpush.bf16.msra.mxu0 %v5676
    %5716 = vmatpush.bf16.msra.mxu0 %v5673
    %5717 = vmatpush.bf16.msra.mxu0 %v5670
    %5718 = vmatpush.bf16.msra.mxu0 %v5667
    %5719 = vmatpush.bf16.msra.mxu0 %v5664
    %5720 = vmatmul.bf16.gmra.mxu0 %v5576
    %v5721 = vpop.f32.mrf.mxu0
    %v5722 = vadd.f32 0.0, %v5721
    %v5723 = vpop.f32.mrf.mxu0
    %v5724 = vadd.f32 0.0, %v5723
    %5725 = vmatmul.bf16.gmra.mxu0 %v5577
    %v5726 = vpop.f32.mrf.mxu0
    %v5727 = vadd.f32 0.0, %v5726
    %v5728 = vpop.f32.mrf.mxu0
    %v5729 = vadd.f32 0.0, %v5728
    %5730 = vmatmul.bf16.gmra.mxu0 %v5578
    %v5731 = vpop.f32.mrf.mxu0
    %v5732 = vadd.f32 0.0, %v5731
    %v5733 = vpop.f32.mrf.mxu0
    %v5734 = vadd.f32 0.0, %v5733
    %5735 = vmatmul.bf16.gmra.mxu0 %v5579
    %v5736 = vpop.f32.mrf.mxu0
    %v5737 = vadd.f32 0.0, %v5736
    %v5738 = vpop.f32.mrf.mxu0
    %v5739 = vadd.f32 0.0, %v5738
    %5740 = vmatmul.bf16.gmra.mxu0 %v5580
    %v5741 = vpop.f32.mrf.mxu0
    %v5742 = vadd.f32 0.0, %v5741
    %v5743 = vpop.f32.mrf.mxu0
    %v5744 = vadd.f32 0.0, %v5743
    %5745 = vmatmul.bf16.gmra.mxu0 %v5581
    %v5746 = vpop.f32.mrf.mxu0
    %v5747 = vadd.f32 0.0, %v5746
    %v5748 = vpop.f32.mrf.mxu0
    %v5749 = vadd.f32 0.0, %v5748
    %5750 = vmatmul.bf16.gmra.mxu0 %v5582
    %v5751 = vpop.f32.mrf.mxu0
    %v5752 = vadd.f32 0.0, %v5751
    %v5753 = vpop.f32.mrf.mxu0
    %v5754 = vadd.f32 0.0, %v5753
    %5755 = vmatmul.bf16.gmra.mxu0 %v5583
    %v5756 = vpop.f32.mrf.mxu0
    %v5757 = vadd.f32 0.0, %v5756
    %v5758 = vpop.f32.mrf.mxu0
    %v5759 = vadd.f32 0.0, %v5758
    %5760 = vdwg.mxu0
    %5761 = vmatpush.bf16.msra.mxu0 %v5686
    %5762 = vmatpush.bf16.msra.mxu0 %v5683
    %5763 = vmatpush.bf16.msra.mxu0 %v5680
    %5764 = vmatpush.bf16.msra.mxu0 %v5677
    %5765 = vmatpush.bf16.msra.mxu0 %v5674
    %5766 = vmatpush.bf16.msra.mxu0 %v5671
    %5767 = vmatpush.bf16.msra.mxu0 %v5668
    %5768 = vmatpush.bf16.msra.mxu0 %v5665
    %5769 = vmatmul.bf16.gmra.mxu0 %v5576
    %v5770 = vpop.f32.mrf.mxu0
    %v5771 = vadd.f32 0.0, %v5770
    %v5772 = vpop.f32.mrf.mxu0
    %v5773 = vadd.f32 0.0, %v5772
    %5774 = vmatmul.bf16.gmra.mxu0 %v5577
    %v5775 = vpop.f32.mrf.mxu0
    %v5776 = vadd.f32 0.0, %v5775
    %v5777 = vpop.f32.mrf.mxu0
    %v5778 = vadd.f32 0.0, %v5777
    %5779 = vmatmul.bf16.gmra.mxu0 %v5578
    %v5780 = vpop.f32.mrf.mxu0
    %v5781 = vadd.f32 0.0, %v5780
    %v5782 = vpop.f32.mrf.mxu0
    %v5783 = vadd.f32 0.0, %v5782
    %5784 = vmatmul.bf16.gmra.mxu0 %v5579
    %v5785 = vpop.f32.mrf.mxu0
    %v5786 = vadd.f32 0.0, %v5785
    %v5787 = vpop.f32.mrf.mxu0
    %v5788 = vadd.f32 0.0, %v5787
    %5789 = vmatmul.bf16.gmra.mxu0 %v5580
    %v5790 = vpop.f32.mrf.mxu0
    %v5791 = vadd.f32 0.0, %v5790
    %v5792 = vpop.f32.mrf.mxu0
    %v5793 = vadd.f32 0.0, %v5792
    %5794 = vmatmul.bf16.gmra.mxu0 %v5581
    %v5795 = vpop.f32.mrf.mxu0
    %v5796 = vadd.f32 0.0, %v5795
    %v5797 = vpop.f32.mrf.mxu0
    %v5798 = vadd.f32 0.0, %v5797
    %5799 = vmatmul.bf16.gmra.mxu0 %v5582
    %v5800 = vpop.f32.mrf.mxu0
    %v5801 = vadd.f32 0.0, %v5800
    %v5802 = vpop.f32.mrf.mxu0
    %v5803 = vadd.f32 0.0, %v5802
    %5804 = vmatmul.bf16.gmra.mxu0 %v5583
    %v5805 = vpop.f32.mrf.mxu0
    %v5806 = vadd.f32 0.0, %v5805
    %v5807 = vpop.f32.mrf.mxu0
    %v5808 = vadd.f32 0.0, %v5807
    %5809 = vdwg.mxu0
    %5810 = vmatpush.bf16.msra.mxu0 %v5687
    %5811 = vmatpush.bf16.msra.mxu0 %v5684
    %5812 = vmatpush.bf16.msra.mxu0 %v5681
    %5813 = vmatpush.bf16.msra.mxu0 %v5678
    %5814 = vmatpush.bf16.msra.mxu0 %v5675
    %5815 = vmatpush.bf16.msra.mxu0 %v5672
    %5816 = vmatpush.bf16.msra.mxu0 %v5669
    %5817 = vmatpush.bf16.msra.mxu0 %v5666
    %5818 = vmatmul.bf16.gmra.mxu0 %v5576
    %v5819 = vpop.f32.mrf.mxu0
    %v5820 = vadd.f32 0.0, %v5819
    %v5821 = vpop.f32.mrf.mxu0
    %v5822 = vadd.f32 0.0, %v5821
    %5823 = vmatmul.bf16.gmra.mxu0 %v5577
    %v5824 = vpop.f32.mrf.mxu0
    %v5825 = vadd.f32 0.0, %v5824
    %v5826 = vpop.f32.mrf.mxu0
    %v5827 = vadd.f32 0.0, %v5826
    %5828 = vmatmul.bf16.gmra.mxu0 %v5578
    %v5829 = vpop.f32.mrf.mxu0
    %v5830 = vadd.f32 0.0, %v5829
    %v5831 = vpop.f32.mrf.mxu0
    %v5832 = vadd.f32 0.0, %v5831
    %5833 = vmatmul.bf16.gmra.mxu0 %v5579
    %v5834 = vpop.f32.mrf.mxu0
    %v5835 = vadd.f32 0.0, %v5834
    %v5836 = vpop.f32.mrf.mxu0
    %v5837 = vadd.f32 0.0, %v5836
    %5838 = vmatmul.bf16.gmra.mxu0 %v5580
    %v5839 = vpop.f32.mrf.mxu0
    %v5840 = vadd.f32 0.0, %v5839
    %v5841 = vpop.f32.mrf.mxu0
    %v5842 = vadd.f32 0.0, %v5841
    %5843 = vmatmul.bf16.gmra.mxu0 %v5581
    %v5844 = vpop.f32.mrf.mxu0
    %v5845 = vadd.f32 0.0, %v5844
    %v5846 = vpop.f32.mrf.mxu0
    %v5847 = vadd.f32 0.0, %v5846
    %5848 = vmatmul.bf16.gmra.mxu0 %v5582
    %v5849 = vpop.f32.mrf.mxu0
    %v5850 = vadd.f32 0.0, %v5849
    %v5851 = vpop.f32.mrf.mxu0
    %v5852 = vadd.f32 0.0, %v5851
    %5853 = vmatmul.bf16.gmra.mxu0 %v5583
    %v5854 = vpop.f32.mrf.mxu0
    %v5855 = vadd.f32 0.0, %v5854
    %v5856 = vpop.f32.mrf.mxu0
    %v5857 = vadd.f32 0.0, %v5856
    %5858 = vdwg.mxu0
    %v5859 = vpack.c.bf16 %v5771, %v5722
    %v5860 = vpack.c.bf16 %v5820, %v5820
    %v5861 = vpack.c.bf16 %v5773, %v5724
    %v5862 = vpack.c.bf16 %v5822, %v5822
    %v5863 = vpack.c.bf16 %v5776, %v5727
    %v5864 = vpack.c.bf16 %v5825, %v5825
    %v5865 = vpack.c.bf16 %v5778, %v5729
    %v5866 = vpack.c.bf16 %v5827, %v5827
    %v5867 = vpack.c.bf16 %v5781, %v5732
    %v5868 = vpack.c.bf16 %v5830, %v5830
    %v5869 = vpack.c.bf16 %v5783, %v5734
    %v5870 = vpack.c.bf16 %v5832, %v5832
    %v5871 = vpack.c.bf16 %v5786, %v5737
    %v5872 = vpack.c.bf16 %v5835, %v5835
    %v5873 = vpack.c.bf16 %v5788, %v5739
    %v5874 = vpack.c.bf16 %v5837, %v5837
    %v5875 = vpack.c.bf16 %v5791, %v5742
    %v5876 = vpack.c.bf16 %v5840, %v5840
    %v5877 = vpack.c.bf16 %v5793, %v5744
    %v5878 = vpack.c.bf16 %v5842, %v5842
    %v5879 = vpack.c.bf16 %v5796, %v5747
    %v5880 = vpack.c.bf16 %v5845, %v5845
    %v5881 = vpack.c.bf16 %v5798, %v5749
    %v5882 = vpack.c.bf16 %v5847, %v5847
    %v5883 = vpack.c.bf16 %v5801, %v5752
    %v5884 = vpack.c.bf16 %v5850, %v5850
    %v5885 = vpack.c.bf16 %v5803, %v5754
    %v5886 = vpack.c.bf16 %v5852, %v5852
    %v5887 = vpack.c.bf16 %v5806, %v5757
    %v5888 = vpack.c.bf16 %v5855, %v5855
    %v5889 = vpack.c.bf16 %v5808, %v5759
    %v5890 = vpack.c.bf16 %v5857, %v5857
    %v5907 = vunpack.c.l.b16 %v5859
    %v5908 = vunpack.c.l.b16 %v5861
    %v5909 = vunpack.c.l.b16 %v5863
    %v5910 = vunpack.c.l.b16 %v5865
    %v5911 = vunpack.c.l.b16 %v5867
    %v5912 = vunpack.c.l.b16 %v5869
    %v5913 = vunpack.c.l.b16 %v5871
    %v5914 = vunpack.c.l.b16 %v5873
    %v5915 = vunpack.c.l.b16 %v5875
    %v5916 = vunpack.c.l.b16 %v5877
    %v5917 = vunpack.c.l.b16 %v5879
    %v5918 = vunpack.c.l.b16 %v5881
    %v5919 = vunpack.c.l.b16 %v5883
    %v5920 = vunpack.c.l.b16 %v5885
    %v5921 = vunpack.c.l.b16 %v5887
    %v5922 = vunpack.c.l.b16 %v5889
    %v5923 = vpack.c.b16 %v5908, %v5907
    %v5924 = vpack.c.b16 %v5910, %v5909
    %v5925 = vpack.c.b16 %v5912, %v5911
    %v5926 = vpack.c.b16 %v5914, %v5913
    %v5927 = vpack.c.b16 %v5916, %v5915
    %v5928 = vpack.c.b16 %v5918, %v5917
    %v5929 = vpack.c.b16 %v5920, %v5919
    %v5930 = vpack.c.b16 %v5922, %v5921
    %v5931 = vunpack.c.h.b16 %v5859
    %v5932 = vunpack.c.h.b16 %v5861
    %v5933 = vunpack.c.h.b16 %v5863
    %v5934 = vunpack.c.h.b16 %v5865
    %v5935 = vunpack.c.h.b16 %v5867
    %v5936 = vunpack.c.h.b16 %v5869
    %v5937 = vunpack.c.h.b16 %v5871
    %v5938 = vunpack.c.h.b16 %v5873
    %v5939 = vunpack.c.h.b16 %v5875
    %v5940 = vunpack.c.h.b16 %v5877
    %v5941 = vunpack.c.h.b16 %v5879
    %v5942 = vunpack.c.h.b16 %v5881
    %v5943 = vunpack.c.h.b16 %v5883
    %v5944 = vunpack.c.h.b16 %v5885
    %v5945 = vunpack.c.h.b16 %v5887
    %v5946 = vunpack.c.h.b16 %v5889
    %v5947 = vpack.c.b16 %v5932, %v5931
    %v5948 = vpack.c.b16 %v5934, %v5933
    %v5949 = vpack.c.b16 %v5936, %v5935
    %v5950 = vpack.c.b16 %v5938, %v5937
    %v5951 = vpack.c.b16 %v5940, %v5939
    %v5952 = vpack.c.b16 %v5942, %v5941
    %v5953 = vpack.c.b16 %v5944, %v5943
    %v5954 = vpack.c.b16 %v5946, %v5945
    %v5956 = vsel %vm1743, %v5923, 0
    %v5959 = vsel %vm1743, %v5924, 0
    %v5962 = vsel %vm1743, %v5925, 0
    %v5965 = vsel %vm1743, %v5926, 0
    %v5968 = vsel %vm1743, %v5927, 0
    %v5971 = vsel %vm1743, %v5928, 0
    %v5974 = vsel %vm1743, %v5929, 0
    %v5977 = vsel %vm1743, %v5930, 0
    %v5980 = vsel %vm1743, %v5947, 0
    %v5983 = vsel %vm1743, %v5948, 0
    %v5986 = vsel %vm1743, %v5949, 0
    %v5989 = vsel %vm1743, %v5950, 0
    %v5992 = vsel %vm1743, %v5951, 0
    %v5995 = vsel %vm1743, %v5952, 0
    %v5998 = vsel %vm1743, %v5953, 0
    %v6001 = vsel %vm1743, %v5954, 0
    %6003 = vmatpush.bf16.xpose.msra.mxu0 %v6001
    %6004 = vmatpush.bf16.xpose.msra.mxu0 %v5998
    %6005 = vmatpush.bf16.xpose.msra.mxu0 %v5995
    %6006 = vmatpush.bf16.xpose.msra.mxu0 %v5992
    %6007 = vmatpush.bf16.xpose.msra.mxu0 %v5989
    %6008 = vmatpush.bf16.xpose.msra.mxu0 %v5986
    %6009 = vmatpush.bf16.xpose.msra.mxu0 %v5983
    %6010 = vmatpush.bf16.xpose.msra.mxu0 %v5980
    %6011 = vmatmul.bf16.gmra.mxu0 %v5956
    %v6012 = vpop.f32.mrf.mxu0
    %v6013 = vadd.f32 0.0, %v6012
    %v6014 = vpop.f32.mrf.mxu0
    %v6015 = vadd.f32 0.0, %v6014
    %6016 = vmatmul.bf16.gmra.mxu0 %v5959
    %v6017 = vpop.f32.mrf.mxu0
    %v6018 = vadd.f32 0.0, %v6017
    %v6019 = vpop.f32.mrf.mxu0
    %v6020 = vadd.f32 0.0, %v6019
    %6021 = vmatmul.bf16.gmra.mxu0 %v5962
    %v6022 = vpop.f32.mrf.mxu0
    %v6023 = vadd.f32 0.0, %v6022
    %v6024 = vpop.f32.mrf.mxu0
    %v6025 = vadd.f32 0.0, %v6024
    %6026 = vmatmul.bf16.gmra.mxu0 %v5965
    %v6027 = vpop.f32.mrf.mxu0
    %v6028 = vadd.f32 0.0, %v6027
    %v6029 = vpop.f32.mrf.mxu0
    %v6030 = vadd.f32 0.0, %v6029
    %6031 = vmatmul.bf16.gmra.mxu0 %v5968
    %v6032 = vpop.f32.mrf.mxu0
    %v6033 = vadd.f32 0.0, %v6032
    %v6034 = vpop.f32.mrf.mxu0
    %v6035 = vadd.f32 0.0, %v6034
    %6036 = vmatmul.bf16.gmra.mxu0 %v5971
    %v6037 = vpop.f32.mrf.mxu0
    %v6038 = vadd.f32 0.0, %v6037
    %v6039 = vpop.f32.mrf.mxu0
    %v6040 = vadd.f32 0.0, %v6039
    %6041 = vmatmul.bf16.gmra.mxu0 %v5974
    %v6042 = vpop.f32.mrf.mxu0
    %v6043 = vadd.f32 0.0, %v6042
    %v6044 = vpop.f32.mrf.mxu0
    %v6045 = vadd.f32 0.0, %v6044
    %6046 = vmatmul.bf16.gmra.mxu0 %v5977
    %v6047 = vpop.f32.mrf.mxu0
    %v6048 = vadd.f32 0.0, %v6047
    %v6049 = vpop.f32.mrf.mxu0
    %v6050 = vadd.f32 0.0, %v6049
    %6051 = vdwg.mxu0
    %v6052 = vmul.f32 %v6013, 0.088388346
    %v6053 = vmul.f32 %v6015, 0.088388346
    %v6054 = vmul.f32 %v6018, 0.088388346
    %v6055 = vmul.f32 %v6020, 0.088388346
    %v6056 = vmul.f32 %v6023, 0.088388346
    %v6057 = vmul.f32 %v6025, 0.088388346
    %v6058 = vmul.f32 %v6028, 0.088388346
    %v6059 = vmul.f32 %v6030, 0.088388346
    %v6060 = vmul.f32 %v6033, 0.088388346
    %v6061 = vmul.f32 %v6035, 0.088388346
    %v6062 = vmul.f32 %v6038, 0.088388346
    %v6063 = vmul.f32 %v6040, 0.088388346
    %v6064 = vmul.f32 %v6043, 0.088388346
    %v6065 = vmul.f32 %v6045, 0.088388346
    %v6066 = vmul.f32 %v6048, 0.088388346
    %v6067 = vmul.f32 %v6050, 0.088388346
    %v6068 = vsel %vm917, %v6052, -1e+30
    %v6069 = vsel %vm918, %v6053, -1e+30
    %v6070 = vsel %vm919, %v6054, -1e+30
    %v6071 = vsel %vm920, %v6055, -1e+30
    %v6072 = vsel %vm921, %v6056, -1e+30
    %v6073 = vsel %vm922, %v6057, -1e+30
    %v6074 = vsel %vm923, %v6058, -1e+30
    %v6075 = vsel %vm924, %v6059, -1e+30
    %v6076 = vsel %vm925, %v6060, -1e+30
    %v6077 = vsel %vm926, %v6061, -1e+30
    %v6078 = vsel %vm927, %v6062, -1e+30
    %v6079 = vsel %vm928, %v6063, -1e+30
    %v6080 = vsel %vm929, %v6064, -1e+30
    %v6081 = vsel %vm930, %v6065, -1e+30
    %v6082 = vsel %vm931, %v6066, -1e+30
    %v6083 = vsel %vm932, %v6067, -1e+30
    %6084 = vmax.xlane.f32.xlu0 %v6068
    %v6085 = vpop.xlane.xlu0 %6084
    %6086 = vmax.xlane.f32.xlu0 %v6069
    %v6087 = vpop.xlane.xlu0 %6086
    %6088 = vmax.xlane.f32.xlu0 %v6070
    %v6089 = vpop.xlane.xlu0 %6088
    %6090 = vmax.xlane.f32.xlu0 %v6071
    %v6091 = vpop.xlane.xlu0 %6090
    %6092 = vmax.xlane.f32.xlu0 %v6072
    %v6093 = vpop.xlane.xlu0 %6092
    %6094 = vmax.xlane.f32.xlu0 %v6073
    %v6095 = vpop.xlane.xlu0 %6094
    %6096 = vmax.xlane.f32.xlu0 %v6074
    %v6097 = vpop.xlane.xlu0 %6096
    %6098 = vmax.xlane.f32.xlu0 %v6075
    %v6099 = vpop.xlane.xlu0 %6098
    %6100 = vmax.xlane.f32.xlu0 %v6076
    %v6101 = vpop.xlane.xlu0 %6100
    %6102 = vmax.xlane.f32.xlu0 %v6077
    %v6103 = vpop.xlane.xlu0 %6102
    %6104 = vmax.xlane.f32.xlu0 %v6078
    %v6105 = vpop.xlane.xlu0 %6104
    %6106 = vmax.xlane.f32.xlu0 %v6079
    %v6107 = vpop.xlane.xlu0 %6106
    %6108 = vmax.xlane.f32.xlu0 %v6080
    %v6109 = vpop.xlane.xlu0 %6108
    %6110 = vmax.xlane.f32.xlu0 %v6081
    %v6111 = vpop.xlane.xlu0 %6110
    %6112 = vmax.xlane.f32.xlu0 %v6082
    %v6113 = vpop.xlane.xlu0 %6112
    %6114 = vmax.xlane.f32.xlu0 %v6083
    %v6115 = vpop.xlane.xlu0 %6114
    %v6116 = vsub.f32 %v6068, %v6085
    %v6117 = vsub.f32 %v6069, %v6087
    %v6118 = vsub.f32 %v6070, %v6089
    %v6119 = vsub.f32 %v6071, %v6091
    %v6120 = vsub.f32 %v6072, %v6093
    %v6121 = vsub.f32 %v6073, %v6095
    %v6122 = vsub.f32 %v6074, %v6097
    %v6123 = vsub.f32 %v6075, %v6099
    %v6124 = vsub.f32 %v6076, %v6101
    %v6125 = vsub.f32 %v6077, %v6103
    %v6126 = vsub.f32 %v6078, %v6105
    %v6127 = vsub.f32 %v6079, %v6107
    %v6128 = vsub.f32 %v6080, %v6109
    %v6129 = vsub.f32 %v6081, %v6111
    %v6130 = vsub.f32 %v6082, %v6113
    %v6131 = vsub.f32 %v6083, %v6115
    %v6132 = vmul.f32 %v6116, 1.442695
    %v6133 = vpow.pop %v6132
    %v6134 = vmul.f32 %v6117, 1.442695
    %v6135 = vpow.pop %v6134
    %v6136 = vmul.f32 %v6118, 1.442695
    %v6137 = vpow.pop %v6136
    %v6138 = vmul.f32 %v6119, 1.442695
    %v6139 = vpow.pop %v6138
    %v6140 = vmul.f32 %v6120, 1.442695
    %v6141 = vpow.pop %v6140
    %v6142 = vmul.f32 %v6121, 1.442695
    %v6143 = vpow.pop %v6142
    %v6144 = vmul.f32 %v6122, 1.442695
    %v6145 = vpow.pop %v6144
    %v6146 = vmul.f32 %v6123, 1.442695
    %v6147 = vpow.pop %v6146
    %v6148 = vmul.f32 %v6124, 1.442695
    %v6149 = vpow.pop %v6148
    %v6150 = vmul.f32 %v6125, 1.442695
    %v6151 = vpow.pop %v6150
    %v6152 = vmul.f32 %v6126, 1.442695
    %v6153 = vpow.pop %v6152
    %v6154 = vmul.f32 %v6127, 1.442695
    %v6155 = vpow.pop %v6154
    %v6156 = vmul.f32 %v6128, 1.442695
    %v6157 = vpow.pop %v6156
    %v6158 = vmul.f32 %v6129, 1.442695
    %v6159 = vpow.pop %v6158
    %v6160 = vmul.f32 %v6130, 1.442695
    %v6161 = vpow.pop %v6160
    %v6162 = vmul.f32 %v6131, 1.442695
    %v6163 = vpow.pop %v6162
    %6164 = vadd.xlane.f32.xlu0 %v6133
    %v6165 = vpop.xlane.xlu0 %6164
    %6166 = vadd.xlane.f32.xlu0 %v6135
    %v6167 = vpop.xlane.xlu0 %6166
    %6168 = vadd.xlane.f32.xlu0 %v6137
    %v6169 = vpop.xlane.xlu0 %6168
    %6170 = vadd.xlane.f32.xlu0 %v6139
    %v6171 = vpop.xlane.xlu0 %6170
    %6172 = vadd.xlane.f32.xlu0 %v6141
    %v6173 = vpop.xlane.xlu0 %6172
    %6174 = vadd.xlane.f32.xlu0 %v6143
    %v6175 = vpop.xlane.xlu0 %6174
    %6176 = vadd.xlane.f32.xlu0 %v6145
    %v6177 = vpop.xlane.xlu0 %6176
    %6178 = vadd.xlane.f32.xlu0 %v6147
    %v6179 = vpop.xlane.xlu0 %6178
    %6180 = vadd.xlane.f32.xlu0 %v6149
    %v6181 = vpop.xlane.xlu0 %6180
    %6182 = vadd.xlane.f32.xlu0 %v6151
    %v6183 = vpop.xlane.xlu0 %6182
    %6184 = vadd.xlane.f32.xlu0 %v6153
    %v6185 = vpop.xlane.xlu0 %6184
    %6186 = vadd.xlane.f32.xlu0 %v6155
    %v6187 = vpop.xlane.xlu0 %6186
    %6188 = vadd.xlane.f32.xlu0 %v6157
    %v6189 = vpop.xlane.xlu0 %6188
    %6190 = vadd.xlane.f32.xlu0 %v6159
    %v6191 = vpop.xlane.xlu0 %6190
    %6192 = vadd.xlane.f32.xlu0 %v6161
    %v6193 = vpop.xlane.xlu0 %6192
    %6194 = vadd.xlane.f32.xlu0 %v6163
    %v6195 = vpop.xlane.xlu0 %6194
    %v6196 = vrcp.pop %v6165
    %v6197 = vrcp.pop %v6167
    %v6198 = vrcp.pop %v6169
    %v6199 = vrcp.pop %v6171
    %v6200 = vrcp.pop %v6173
    %v6201 = vrcp.pop %v6175
    %v6202 = vrcp.pop %v6177
    %v6203 = vrcp.pop %v6179
    %v6204 = vrcp.pop %v6181
    %v6205 = vrcp.pop %v6183
    %v6206 = vrcp.pop %v6185
    %v6207 = vrcp.pop %v6187
    %v6208 = vrcp.pop %v6189
    %v6209 = vrcp.pop %v6191
    %v6210 = vrcp.pop %v6193
    %v6211 = vrcp.pop %v6195
    %v6212 = vmul.f32 %v6133, %v6196
    %v6213 = vmul.f32 %v6135, %v6197
    %v6214 = vmul.f32 %v6137, %v6198
    %v6215 = vmul.f32 %v6139, %v6199
    %v6216 = vmul.f32 %v6141, %v6200
    %v6217 = vmul.f32 %v6143, %v6201
    %v6218 = vmul.f32 %v6145, %v6202
    %v6219 = vmul.f32 %v6147, %v6203
    %v6220 = vmul.f32 %v6149, %v6204
    %v6221 = vmul.f32 %v6151, %v6205
    %v6222 = vmul.f32 %v6153, %v6206
    %v6223 = vmul.f32 %v6155, %v6207
    %v6224 = vmul.f32 %v6157, %v6208
    %v6225 = vmul.f32 %v6159, %v6209
    %v6226 = vmul.f32 %v6161, %v6210
    %v6227 = vmul.f32 %v6163, %v6211
    %v6228 = vpack.c.bf16 %v6213, %v6212
    %v6229 = vpack.c.bf16 %v6215, %v6214
    %v6230 = vpack.c.bf16 %v6217, %v6216
    %v6231 = vpack.c.bf16 %v6219, %v6218
    %v6232 = vpack.c.bf16 %v6221, %v6220
    %v6233 = vpack.c.bf16 %v6223, %v6222
    %v6234 = vpack.c.bf16 %v6225, %v6224
    %v6235 = vpack.c.bf16 %v6227, %v6226
    %v6252 = vunpack.c.l.b16 %v5860
    %v6253 = vunpack.c.l.b16 %v5862
    %v6254 = vunpack.c.l.b16 %v5864
    %v6255 = vunpack.c.l.b16 %v5866
    %v6256 = vunpack.c.l.b16 %v5868
    %v6257 = vunpack.c.l.b16 %v5870
    %v6258 = vunpack.c.l.b16 %v5872
    %v6259 = vunpack.c.l.b16 %v5874
    %v6260 = vunpack.c.l.b16 %v5876
    %v6261 = vunpack.c.l.b16 %v5878
    %v6262 = vunpack.c.l.b16 %v5880
    %v6263 = vunpack.c.l.b16 %v5882
    %v6264 = vunpack.c.l.b16 %v5884
    %v6265 = vunpack.c.l.b16 %v5886
    %v6266 = vunpack.c.l.b16 %v5888
    %v6267 = vunpack.c.l.b16 %v5890
    %v6268 = vpack.c.b16 %v6253, %v6252
    %v6269 = vpack.c.b16 %v6255, %v6254
    %v6270 = vpack.c.b16 %v6257, %v6256
    %v6271 = vpack.c.b16 %v6259, %v6258
    %v6272 = vpack.c.b16 %v6261, %v6260
    %v6273 = vpack.c.b16 %v6263, %v6262
    %v6274 = vpack.c.b16 %v6265, %v6264
    %v6275 = vpack.c.b16 %v6267, %v6266
    %6284 = vmatpush.bf16.msra.mxu0 %v6275
    %6285 = vmatpush.bf16.msra.mxu0 %v6274
    %6286 = vmatpush.bf16.msra.mxu0 %v6273
    %6287 = vmatpush.bf16.msra.mxu0 %v6272
    %6288 = vmatpush.bf16.msra.mxu0 %v6271
    %6289 = vmatpush.bf16.msra.mxu0 %v6270
    %6290 = vmatpush.bf16.msra.mxu0 %v6269
    %6291 = vmatpush.bf16.msra.mxu0 %v6268
    %6292 = vmatmul.bf16.gmra.mxu0 %v6228
    %v6293 = vpop.f32.mrf.mxu0
    %v6294 = vadd.f32 0.0, %v6293
    %v6295 = vpop.f32.mrf.mxu0
    %v6296 = vadd.f32 0.0, %v6295
    %6297 = vmatmul.bf16.gmra.mxu0 %v6229
    %v6298 = vpop.f32.mrf.mxu0
    %v6299 = vadd.f32 0.0, %v6298
    %v6300 = vpop.f32.mrf.mxu0
    %v6301 = vadd.f32 0.0, %v6300
    %6302 = vmatmul.bf16.gmra.mxu0 %v6230
    %v6303 = vpop.f32.mrf.mxu0
    %v6304 = vadd.f32 0.0, %v6303
    %v6305 = vpop.f32.mrf.mxu0
    %v6306 = vadd.f32 0.0, %v6305
    %6307 = vmatmul.bf16.gmra.mxu0 %v6231
    %v6308 = vpop.f32.mrf.mxu0
    %v6309 = vadd.f32 0.0, %v6308
    %v6310 = vpop.f32.mrf.mxu0
    %v6311 = vadd.f32 0.0, %v6310
    %6312 = vmatmul.bf16.gmra.mxu0 %v6232
    %v6313 = vpop.f32.mrf.mxu0
    %v6314 = vadd.f32 0.0, %v6313
    %v6315 = vpop.f32.mrf.mxu0
    %v6316 = vadd.f32 0.0, %v6315
    %6317 = vmatmul.bf16.gmra.mxu0 %v6233
    %v6318 = vpop.f32.mrf.mxu0
    %v6319 = vadd.f32 0.0, %v6318
    %v6320 = vpop.f32.mrf.mxu0
    %v6321 = vadd.f32 0.0, %v6320
    %6322 = vmatmul.bf16.gmra.mxu0 %v6234
    %v6323 = vpop.f32.mrf.mxu0
    %v6324 = vadd.f32 0.0, %v6323
    %v6325 = vpop.f32.mrf.mxu0
    %v6326 = vadd.f32 0.0, %v6325
    %6327 = vmatmul.bf16.gmra.mxu0 %v6235
    %v6328 = vpop.f32.mrf.mxu0
    %v6329 = vadd.f32 0.0, %v6328
    %v6330 = vpop.f32.mrf.mxu0
    %v6331 = vadd.f32 0.0, %v6330
    %6332 = vdwg.mxu0
    %v6333 = vpack.c.bf16 %v6294, %v6294
    %v6334 = vpack.c.bf16 %v6296, %v6296
    %v6335 = vpack.c.bf16 %v6299, %v6299
    %v6336 = vpack.c.bf16 %v6301, %v6301
    %v6337 = vpack.c.bf16 %v6304, %v6304
    %v6338 = vpack.c.bf16 %v6306, %v6306
    %v6339 = vpack.c.bf16 %v6309, %v6309
    %v6340 = vpack.c.bf16 %v6311, %v6311
    %v6341 = vpack.c.bf16 %v6314, %v6314
    %v6342 = vpack.c.bf16 %v6316, %v6316
    %v6343 = vpack.c.bf16 %v6319, %v6319
    %v6344 = vpack.c.bf16 %v6321, %v6321
    %v6345 = vpack.c.bf16 %v6324, %v6324
    %v6346 = vpack.c.bf16 %v6326, %v6326
    %v6347 = vpack.c.bf16 %v6329, %v6329
    %v6348 = vpack.c.bf16 %v6331, %v6331
    %6349 = vrot.lane.b32.xlu0 %v5923, 96
    %v6350 = vpop.permute.xlu0 %6349
    %6351 = vrot.lane.b32.xlu0 %v5924, 96
    %v6352 = vpop.permute.xlu0 %6351
    %6353 = vrot.lane.b32.xlu0 %v5925, 96
    %v6354 = vpop.permute.xlu0 %6353
    %6355 = vrot.lane.b32.xlu0 %v5926, 96
    %v6356 = vpop.permute.xlu0 %6355
    %6357 = vrot.lane.b32.xlu0 %v5927, 96
    %v6358 = vpop.permute.xlu0 %6357
    %6359 = vrot.lane.b32.xlu0 %v5928, 96
    %v6360 = vpop.permute.xlu0 %6359
    %6361 = vrot.lane.b32.xlu0 %v5929, 96
    %v6362 = vpop.permute.xlu0 %6361
    %6363 = vrot.lane.b32.xlu0 %v5930, 96
    %v6364 = vpop.permute.xlu0 %6363
    %6365 = vrot.lane.b32.xlu0 %v5947, 96
    %v6366 = vpop.permute.xlu0 %6365
    %6367 = vrot.lane.b32.xlu0 %v5948, 96
    %v6368 = vpop.permute.xlu0 %6367
    %6369 = vrot.lane.b32.xlu0 %v5949, 96
    %v6370 = vpop.permute.xlu0 %6369
    %6371 = vrot.lane.b32.xlu0 %v5950, 96
    %v6372 = vpop.permute.xlu0 %6371
    %6373 = vrot.lane.b32.xlu0 %v5951, 96
    %v6374 = vpop.permute.xlu0 %6373
    %6375 = vrot.lane.b32.xlu0 %v5952, 96
    %v6376 = vpop.permute.xlu0 %6375
    %6377 = vrot.lane.b32.xlu0 %v5953, 96
    %v6378 = vpop.permute.xlu0 %6377
    %6379 = vrot.lane.b32.xlu0 %v5954, 96
    %v6380 = vpop.permute.xlu0 %6379
    %v6382 = vsel %vm1743, %v6350, 0
    %v6385 = vsel %vm1743, %v6352, 0
    %v6388 = vsel %vm1743, %v6354, 0
    %v6391 = vsel %vm1743, %v6356, 0
    %v6394 = vsel %vm1743, %v6358, 0
    %v6397 = vsel %vm1743, %v6360, 0
    %v6400 = vsel %vm1743, %v6362, 0
    %v6403 = vsel %vm1743, %v6364, 0
    %v6406 = vsel %vm1743, %v6366, 0
    %v6409 = vsel %vm1743, %v6368, 0
    %v6412 = vsel %vm1743, %v6370, 0
    %v6415 = vsel %vm1743, %v6372, 0
    %v6418 = vsel %vm1743, %v6374, 0
    %v6421 = vsel %vm1743, %v6376, 0
    %v6424 = vsel %vm1743, %v6378, 0
    %v6427 = vsel %vm1743, %v6380, 0
    %6429 = vmatpush.bf16.xpose.msra.mxu0 %v6427
    %6430 = vmatpush.bf16.xpose.msra.mxu0 %v6424
    %6431 = vmatpush.bf16.xpose.msra.mxu0 %v6421
    %6432 = vmatpush.bf16.xpose.msra.mxu0 %v6418
    %6433 = vmatpush.bf16.xpose.msra.mxu0 %v6415
    %6434 = vmatpush.bf16.xpose.msra.mxu0 %v6412
    %6435 = vmatpush.bf16.xpose.msra.mxu0 %v6409
    %6436 = vmatpush.bf16.xpose.msra.mxu0 %v6406
    %6437 = vmatmul.bf16.gmra.mxu0 %v6382
    %v6438 = vpop.f32.mrf.mxu0
    %v6439 = vadd.f32 0.0, %v6438
    %v6440 = vpop.f32.mrf.mxu0
    %v6441 = vadd.f32 0.0, %v6440
    %6442 = vmatmul.bf16.gmra.mxu0 %v6385
    %v6443 = vpop.f32.mrf.mxu0
    %v6444 = vadd.f32 0.0, %v6443
    %v6445 = vpop.f32.mrf.mxu0
    %v6446 = vadd.f32 0.0, %v6445
    %6447 = vmatmul.bf16.gmra.mxu0 %v6388
    %v6448 = vpop.f32.mrf.mxu0
    %v6449 = vadd.f32 0.0, %v6448
    %v6450 = vpop.f32.mrf.mxu0
    %v6451 = vadd.f32 0.0, %v6450
    %6452 = vmatmul.bf16.gmra.mxu0 %v6391
    %v6453 = vpop.f32.mrf.mxu0
    %v6454 = vadd.f32 0.0, %v6453
    %v6455 = vpop.f32.mrf.mxu0
    %v6456 = vadd.f32 0.0, %v6455
    %6457 = vmatmul.bf16.gmra.mxu0 %v6394
    %v6458 = vpop.f32.mrf.mxu0
    %v6459 = vadd.f32 0.0, %v6458
    %v6460 = vpop.f32.mrf.mxu0
    %v6461 = vadd.f32 0.0, %v6460
    %6462 = vmatmul.bf16.gmra.mxu0 %v6397
    %v6463 = vpop.f32.mrf.mxu0
    %v6464 = vadd.f32 0.0, %v6463
    %v6465 = vpop.f32.mrf.mxu0
    %v6466 = vadd.f32 0.0, %v6465
    %6467 = vmatmul.bf16.gmra.mxu0 %v6400
    %v6468 = vpop.f32.mrf.mxu0
    %v6469 = vadd.f32 0.0, %v6468
    %v6470 = vpop.f32.mrf.mxu0
    %v6471 = vadd.f32 0.0, %v6470
    %6472 = vmatmul.bf16.gmra.mxu0 %v6403
    %v6473 = vpop.f32.mrf.mxu0
    %v6474 = vadd.f32 0.0, %v6473
    %v6475 = vpop.f32.mrf.mxu0
    %v6476 = vadd.f32 0.0, %v6475
    %6477 = vdwg.mxu0
    %v6478 = vmul.f32 %v6439, 0.088388346
    %v6479 = vmul.f32 %v6441, 0.088388346
    %v6480 = vmul.f32 %v6444, 0.088388346
    %v6481 = vmul.f32 %v6446, 0.088388346
    %v6482 = vmul.f32 %v6449, 0.088388346
    %v6483 = vmul.f32 %v6451, 0.088388346
    %v6484 = vmul.f32 %v6454, 0.088388346
    %v6485 = vmul.f32 %v6456, 0.088388346
    %v6486 = vmul.f32 %v6459, 0.088388346
    %v6487 = vmul.f32 %v6461, 0.088388346
    %v6488 = vmul.f32 %v6464, 0.088388346
    %v6489 = vmul.f32 %v6466, 0.088388346
    %v6490 = vmul.f32 %v6469, 0.088388346
    %v6491 = vmul.f32 %v6471, 0.088388346
    %v6492 = vmul.f32 %v6474, 0.088388346
    %v6493 = vmul.f32 %v6476, 0.088388346
    %v6494 = vsel %vm917, %v6478, -1e+30
    %v6495 = vsel %vm918, %v6479, -1e+30
    %v6496 = vsel %vm919, %v6480, -1e+30
    %v6497 = vsel %vm920, %v6481, -1e+30
    %v6498 = vsel %vm921, %v6482, -1e+30
    %v6499 = vsel %vm922, %v6483, -1e+30
    %v6500 = vsel %vm923, %v6484, -1e+30
    %v6501 = vsel %vm924, %v6485, -1e+30
    %v6502 = vsel %vm925, %v6486, -1e+30
    %v6503 = vsel %vm926, %v6487, -1e+30
    %v6504 = vsel %vm927, %v6488, -1e+30
    %v6505 = vsel %vm928, %v6489, -1e+30
    %v6506 = vsel %vm929, %v6490, -1e+30
    %v6507 = vsel %vm930, %v6491, -1e+30
    %v6508 = vsel %vm931, %v6492, -1e+30
    %v6509 = vsel %vm932, %v6493, -1e+30
    %6510 = vmax.xlane.f32.xlu0 %v6494
    %v6511 = vpop.xlane.xlu0 %6510
    %6512 = vmax.xlane.f32.xlu0 %v6495
    %v6513 = vpop.xlane.xlu0 %6512
    %6514 = vmax.xlane.f32.xlu0 %v6496
    %v6515 = vpop.xlane.xlu0 %6514
    %6516 = vmax.xlane.f32.xlu0 %v6497
    %v6517 = vpop.xlane.xlu0 %6516
    %6518 = vmax.xlane.f32.xlu0 %v6498
    %v6519 = vpop.xlane.xlu0 %6518
    %6520 = vmax.xlane.f32.xlu0 %v6499
    %v6521 = vpop.xlane.xlu0 %6520
    %6522 = vmax.xlane.f32.xlu0 %v6500
    %v6523 = vpop.xlane.xlu0 %6522
    %6524 = vmax.xlane.f32.xlu0 %v6501
    %v6525 = vpop.xlane.xlu0 %6524
    %6526 = vmax.xlane.f32.xlu0 %v6502
    %v6527 = vpop.xlane.xlu0 %6526
    %6528 = vmax.xlane.f32.xlu0 %v6503
    %v6529 = vpop.xlane.xlu0 %6528
    %6530 = vmax.xlane.f32.xlu0 %v6504
    %v6531 = vpop.xlane.xlu0 %6530
    %6532 = vmax.xlane.f32.xlu0 %v6505
    %v6533 = vpop.xlane.xlu0 %6532
    %6534 = vmax.xlane.f32.xlu0 %v6506
    %v6535 = vpop.xlane.xlu0 %6534
    %6536 = vmax.xlane.f32.xlu0 %v6507
    %v6537 = vpop.xlane.xlu0 %6536
    %6538 = vmax.xlane.f32.xlu0 %v6508
    %v6539 = vpop.xlane.xlu0 %6538
    %6540 = vmax.xlane.f32.xlu0 %v6509
    %v6541 = vpop.xlane.xlu0 %6540
    %v6542 = vsub.f32 %v6494, %v6511
    %v6543 = vsub.f32 %v6495, %v6513
    %v6544 = vsub.f32 %v6496, %v6515
    %v6545 = vsub.f32 %v6497, %v6517
    %v6546 = vsub.f32 %v6498, %v6519
    %v6547 = vsub.f32 %v6499, %v6521
    %v6548 = vsub.f32 %v6500, %v6523
    %v6549 = vsub.f32 %v6501, %v6525
    %v6550 = vsub.f32 %v6502, %v6527
    %v6551 = vsub.f32 %v6503, %v6529
    %v6552 = vsub.f32 %v6504, %v6531
    %v6553 = vsub.f32 %v6505, %v6533
    %v6554 = vsub.f32 %v6506, %v6535
    %v6555 = vsub.f32 %v6507, %v6537
    %v6556 = vsub.f32 %v6508, %v6539
    %v6557 = vsub.f32 %v6509, %v6541
    %v6558 = vmul.f32 %v6542, 1.442695
    %v6559 = vpow.pop %v6558
    %v6560 = vmul.f32 %v6543, 1.442695
    %v6561 = vpow.pop %v6560
    %v6562 = vmul.f32 %v6544, 1.442695
    %v6563 = vpow.pop %v6562
    %v6564 = vmul.f32 %v6545, 1.442695
    %v6565 = vpow.pop %v6564
    %v6566 = vmul.f32 %v6546, 1.442695
    %v6567 = vpow.pop %v6566
    %v6568 = vmul.f32 %v6547, 1.442695
    %v6569 = vpow.pop %v6568
    %v6570 = vmul.f32 %v6548, 1.442695
    %v6571 = vpow.pop %v6570
    %v6572 = vmul.f32 %v6549, 1.442695
    %v6573 = vpow.pop %v6572
    %v6574 = vmul.f32 %v6550, 1.442695
    %v6575 = vpow.pop %v6574
    %v6576 = vmul.f32 %v6551, 1.442695
    %v6577 = vpow.pop %v6576
    %v6578 = vmul.f32 %v6552, 1.442695
    %v6579 = vpow.pop %v6578
    %v6580 = vmul.f32 %v6553, 1.442695
    %v6581 = vpow.pop %v6580
    %v6582 = vmul.f32 %v6554, 1.442695
    %v6583 = vpow.pop %v6582
    %v6584 = vmul.f32 %v6555, 1.442695
    %v6585 = vpow.pop %v6584
    %v6586 = vmul.f32 %v6556, 1.442695
    %v6587 = vpow.pop %v6586
    %v6588 = vmul.f32 %v6557, 1.442695
    %v6589 = vpow.pop %v6588
    %6590 = vadd.xlane.f32.xlu0 %v6559
    %v6591 = vpop.xlane.xlu0 %6590
    %6592 = vadd.xlane.f32.xlu0 %v6561
    %v6593 = vpop.xlane.xlu0 %6592
    %6594 = vadd.xlane.f32.xlu0 %v6563
    %v6595 = vpop.xlane.xlu0 %6594
    %6596 = vadd.xlane.f32.xlu0 %v6565
    %v6597 = vpop.xlane.xlu0 %6596
    %6598 = vadd.xlane.f32.xlu0 %v6567
    %v6599 = vpop.xlane.xlu0 %6598
    %6600 = vadd.xlane.f32.xlu0 %v6569
    %v6601 = vpop.xlane.xlu0 %6600
    %6602 = vadd.xlane.f32.xlu0 %v6571
    %v6603 = vpop.xlane.xlu0 %6602
    %6604 = vadd.xlane.f32.xlu0 %v6573
    %v6605 = vpop.xlane.xlu0 %6604
    %6606 = vadd.xlane.f32.xlu0 %v6575
    %v6607 = vpop.xlane.xlu0 %6606
    %6608 = vadd.xlane.f32.xlu0 %v6577
    %v6609 = vpop.xlane.xlu0 %6608
    %6610 = vadd.xlane.f32.xlu0 %v6579
    %v6611 = vpop.xlane.xlu0 %6610
    %6612 = vadd.xlane.f32.xlu0 %v6581
    %v6613 = vpop.xlane.xlu0 %6612
    %6614 = vadd.xlane.f32.xlu0 %v6583
    %v6615 = vpop.xlane.xlu0 %6614
    %6616 = vadd.xlane.f32.xlu0 %v6585
    %v6617 = vpop.xlane.xlu0 %6616
    %6618 = vadd.xlane.f32.xlu0 %v6587
    %v6619 = vpop.xlane.xlu0 %6618
    %6620 = vadd.xlane.f32.xlu0 %v6589
    %v6621 = vpop.xlane.xlu0 %6620
    %v6622 = vrcp.pop %v6591
    %v6623 = vrcp.pop %v6593
    %v6624 = vrcp.pop %v6595
    %v6625 = vrcp.pop %v6597
    %v6626 = vrcp.pop %v6599
    %v6627 = vrcp.pop %v6601
    %v6628 = vrcp.pop %v6603
    %v6629 = vrcp.pop %v6605
    %v6630 = vrcp.pop %v6607
    %v6631 = vrcp.pop %v6609
    %v6632 = vrcp.pop %v6611
    %v6633 = vrcp.pop %v6613
    %v6634 = vrcp.pop %v6615
    %v6635 = vrcp.pop %v6617
    %v6636 = vrcp.pop %v6619
    %v6637 = vrcp.pop %v6621
    %v6638 = vmul.f32 %v6559, %v6622
    %v6639 = vmul.f32 %v6561, %v6623
    %v6640 = vmul.f32 %v6563, %v6624
    %v6641 = vmul.f32 %v6565, %v6625
    %v6642 = vmul.f32 %v6567, %v6626
    %v6643 = vmul.f32 %v6569, %v6627
    %v6644 = vmul.f32 %v6571, %v6628
    %v6645 = vmul.f32 %v6573, %v6629
    %v6646 = vmul.f32 %v6575, %v6630
    %v6647 = vmul.f32 %v6577, %v6631
    %v6648 = vmul.f32 %v6579, %v6632
    %v6649 = vmul.f32 %v6581, %v6633
    %v6650 = vmul.f32 %v6583, %v6634
    %v6651 = vmul.f32 %v6585, %v6635
    %v6652 = vmul.f32 %v6587, %v6636
    %v6653 = vmul.f32 %v6589, %v6637
    %v6654 = vpack.c.bf16 %v6639, %v6638
    %v6655 = vpack.c.bf16 %v6641, %v6640
    %v6656 = vpack.c.bf16 %v6643, %v6642
    %v6657 = vpack.c.bf16 %v6645, %v6644
    %v6658 = vpack.c.bf16 %v6647, %v6646
    %v6659 = vpack.c.bf16 %v6649, %v6648
    %v6660 = vpack.c.bf16 %v6651, %v6650
    %v6661 = vpack.c.bf16 %v6653, %v6652
    %6662 = vrot.lane.b32.xlu0 %v6268, 96
    %v6663 = vpop.permute.xlu0 %6662
    %6664 = vrot.lane.b32.xlu0 %v6269, 96
    %v6665 = vpop.permute.xlu0 %6664
    %6666 = vrot.lane.b32.xlu0 %v6270, 96
    %v6667 = vpop.permute.xlu0 %6666
    %6668 = vrot.lane.b32.xlu0 %v6271, 96
    %v6669 = vpop.permute.xlu0 %6668
    %6670 = vrot.lane.b32.xlu0 %v6272, 96
    %v6671 = vpop.permute.xlu0 %6670
    %6672 = vrot.lane.b32.xlu0 %v6273, 96
    %v6673 = vpop.permute.xlu0 %6672
    %6674 = vrot.lane.b32.xlu0 %v6274, 96
    %v6675 = vpop.permute.xlu0 %6674
    %6676 = vrot.lane.b32.xlu0 %v6275, 96
    %v6677 = vpop.permute.xlu0 %6676
    %6686 = vmatpush.bf16.msra.mxu0 %v6677
    %6687 = vmatpush.bf16.msra.mxu0 %v6675
    %6688 = vmatpush.bf16.msra.mxu0 %v6673
    %6689 = vmatpush.bf16.msra.mxu0 %v6671
    %6690 = vmatpush.bf16.msra.mxu0 %v6669
    %6691 = vmatpush.bf16.msra.mxu0 %v6667
    %6692 = vmatpush.bf16.msra.mxu0 %v6665
    %6693 = vmatpush.bf16.msra.mxu0 %v6663
    %6694 = vmatmul.bf16.gmra.mxu0 %v6654
    %v6695 = vpop.f32.mrf.mxu0
    %v6696 = vadd.f32 0.0, %v6695
    %v6697 = vpop.f32.mrf.mxu0
    %v6698 = vadd.f32 0.0, %v6697
    %6699 = vmatmul.bf16.gmra.mxu0 %v6655
    %v6700 = vpop.f32.mrf.mxu0
    %v6701 = vadd.f32 0.0, %v6700
    %v6702 = vpop.f32.mrf.mxu0
    %v6703 = vadd.f32 0.0, %v6702
    %6704 = vmatmul.bf16.gmra.mxu0 %v6656
    %v6705 = vpop.f32.mrf.mxu0
    %v6706 = vadd.f32 0.0, %v6705
    %v6707 = vpop.f32.mrf.mxu0
    %v6708 = vadd.f32 0.0, %v6707
    %6709 = vmatmul.bf16.gmra.mxu0 %v6657
    %v6710 = vpop.f32.mrf.mxu0
    %v6711 = vadd.f32 0.0, %v6710
    %v6712 = vpop.f32.mrf.mxu0
    %v6713 = vadd.f32 0.0, %v6712
    %6714 = vmatmul.bf16.gmra.mxu0 %v6658
    %v6715 = vpop.f32.mrf.mxu0
    %v6716 = vadd.f32 0.0, %v6715
    %v6717 = vpop.f32.mrf.mxu0
    %v6718 = vadd.f32 0.0, %v6717
    %6719 = vmatmul.bf16.gmra.mxu0 %v6659
    %v6720 = vpop.f32.mrf.mxu0
    %v6721 = vadd.f32 0.0, %v6720
    %v6722 = vpop.f32.mrf.mxu0
    %v6723 = vadd.f32 0.0, %v6722
    %6724 = vmatmul.bf16.gmra.mxu0 %v6660
    %v6725 = vpop.f32.mrf.mxu0
    %v6726 = vadd.f32 0.0, %v6725
    %v6727 = vpop.f32.mrf.mxu0
    %v6728 = vadd.f32 0.0, %v6727
    %6729 = vmatmul.bf16.gmra.mxu0 %v6661
    %v6730 = vpop.f32.mrf.mxu0
    %v6731 = vadd.f32 0.0, %v6730
    %v6732 = vpop.f32.mrf.mxu0
    %v6733 = vadd.f32 0.0, %v6732
    %6734 = vdwg.mxu0
    %v6735 = vpack.c.bf16 %v6696, %v6696
    %v6736 = vpack.c.bf16 %v6698, %v6698
    %v6737 = vpack.c.bf16 %v6701, %v6701
    %v6738 = vpack.c.bf16 %v6703, %v6703
    %v6739 = vpack.c.bf16 %v6706, %v6706
    %v6740 = vpack.c.bf16 %v6708, %v6708
    %v6741 = vpack.c.bf16 %v6711, %v6711
    %v6742 = vpack.c.bf16 %v6713, %v6713
    %v6743 = vpack.c.bf16 %v6716, %v6716
    %v6744 = vpack.c.bf16 %v6718, %v6718
    %v6745 = vpack.c.bf16 %v6721, %v6721
    %v6746 = vpack.c.bf16 %v6723, %v6723
    %v6747 = vpack.c.bf16 %v6726, %v6726
    %v6748 = vpack.c.bf16 %v6728, %v6728
    %v6749 = vpack.c.bf16 %v6731, %v6731
    %v6750 = vpack.c.bf16 %v6733, %v6733
    %6751 = vrot.lane.b32.xlu0 %v5923, 64
    %v6752 = vpop.permute.xlu0 %6751
    %6753 = vrot.lane.b32.xlu0 %v5924, 64
    %v6754 = vpop.permute.xlu0 %6753
    %6755 = vrot.lane.b32.xlu0 %v5925, 64
    %v6756 = vpop.permute.xlu0 %6755
    %6757 = vrot.lane.b32.xlu0 %v5926, 64
    %v6758 = vpop.permute.xlu0 %6757
    %6759 = vrot.lane.b32.xlu0 %v5927, 64
    %v6760 = vpop.permute.xlu0 %6759
    %6761 = vrot.lane.b32.xlu0 %v5928, 64
    %v6762 = vpop.permute.xlu0 %6761
    %6763 = vrot.lane.b32.xlu0 %v5929, 64
    %v6764 = vpop.permute.xlu0 %6763
    %6765 = vrot.lane.b32.xlu0 %v5930, 64
    %v6766 = vpop.permute.xlu0 %6765
    %6767 = vrot.lane.b32.xlu0 %v5947, 64
    %v6768 = vpop.permute.xlu0 %6767
    %6769 = vrot.lane.b32.xlu0 %v5948, 64
    %v6770 = vpop.permute.xlu0 %6769
    %6771 = vrot.lane.b32.xlu0 %v5949, 64
    %v6772 = vpop.permute.xlu0 %6771
    %6773 = vrot.lane.b32.xlu0 %v5950, 64
    %v6774 = vpop.permute.xlu0 %6773
    %6775 = vrot.lane.b32.xlu0 %v5951, 64
    %v6776 = vpop.permute.xlu0 %6775
    %6777 = vrot.lane.b32.xlu0 %v5952, 64
    %v6778 = vpop.permute.xlu0 %6777
    %6779 = vrot.lane.b32.xlu0 %v5953, 64
    %v6780 = vpop.permute.xlu0 %6779
    %6781 = vrot.lane.b32.xlu0 %v5954, 64
    %v6782 = vpop.permute.xlu0 %6781
    %v6784 = vsel %vm1743, %v6752, 0
    %v6787 = vsel %vm1743, %v6754, 0
    %v6790 = vsel %vm1743, %v6756, 0
    %v6793 = vsel %vm1743, %v6758, 0
    %v6796 = vsel %vm1743, %v6760, 0
    %v6799 = vsel %vm1743, %v6762, 0
    %v6802 = vsel %vm1743, %v6764, 0
    %v6805 = vsel %vm1743, %v6766, 0
    %v6808 = vsel %vm1743, %v6768, 0
    %v6811 = vsel %vm1743, %v6770, 0
    %v6814 = vsel %vm1743, %v6772, 0
    %v6817 = vsel %vm1743, %v6774, 0
    %v6820 = vsel %vm1743, %v6776, 0
    %v6823 = vsel %vm1743, %v6778, 0
    %v6826 = vsel %vm1743, %v6780, 0
    %v6829 = vsel %vm1743, %v6782, 0
    %6831 = vmatpush.bf16.xpose.msra.mxu0 %v6829
    %6832 = vmatpush.bf16.xpose.msra.mxu0 %v6826
    %6833 = vmatpush.bf16.xpose.msra.mxu0 %v6823
    %6834 = vmatpush.bf16.xpose.msra.mxu0 %v6820
    %6835 = vmatpush.bf16.xpose.msra.mxu0 %v6817
    %6836 = vmatpush.bf16.xpose.msra.mxu0 %v6814
    %6837 = vmatpush.bf16.xpose.msra.mxu0 %v6811
    %6838 = vmatpush.bf16.xpose.msra.mxu0 %v6808
    %6839 = vmatmul.bf16.gmra.mxu0 %v6784
    %v6840 = vpop.f32.mrf.mxu0
    %v6841 = vadd.f32 0.0, %v6840
    %v6842 = vpop.f32.mrf.mxu0
    %v6843 = vadd.f32 0.0, %v6842
    %6844 = vmatmul.bf16.gmra.mxu0 %v6787
    %v6845 = vpop.f32.mrf.mxu0
    %v6846 = vadd.f32 0.0, %v6845
    %v6847 = vpop.f32.mrf.mxu0
    %v6848 = vadd.f32 0.0, %v6847
    %6849 = vmatmul.bf16.gmra.mxu0 %v6790
    %v6850 = vpop.f32.mrf.mxu0
    %v6851 = vadd.f32 0.0, %v6850
    %v6852 = vpop.f32.mrf.mxu0
    %v6853 = vadd.f32 0.0, %v6852
    %6854 = vmatmul.bf16.gmra.mxu0 %v6793
    %v6855 = vpop.f32.mrf.mxu0
    %v6856 = vadd.f32 0.0, %v6855
    %v6857 = vpop.f32.mrf.mxu0
    %v6858 = vadd.f32 0.0, %v6857
    %6859 = vmatmul.bf16.gmra.mxu0 %v6796
    %v6860 = vpop.f32.mrf.mxu0
    %v6861 = vadd.f32 0.0, %v6860
    %v6862 = vpop.f32.mrf.mxu0
    %v6863 = vadd.f32 0.0, %v6862
    %6864 = vmatmul.bf16.gmra.mxu0 %v6799
    %v6865 = vpop.f32.mrf.mxu0
    %v6866 = vadd.f32 0.0, %v6865
    %v6867 = vpop.f32.mrf.mxu0
    %v6868 = vadd.f32 0.0, %v6867
    %6869 = vmatmul.bf16.gmra.mxu0 %v6802
    %v6870 = vpop.f32.mrf.mxu0
    %v6871 = vadd.f32 0.0, %v6870
    %v6872 = vpop.f32.mrf.mxu0
    %v6873 = vadd.f32 0.0, %v6872
    %6874 = vmatmul.bf16.gmra.mxu0 %v6805
    %v6875 = vpop.f32.mrf.mxu0
    %v6876 = vadd.f32 0.0, %v6875
    %v6877 = vpop.f32.mrf.mxu0
    %v6878 = vadd.f32 0.0, %v6877
    %6879 = vdwg.mxu0
    %v6880 = vmul.f32 %v6841, 0.088388346
    %v6881 = vmul.f32 %v6843, 0.088388346
    %v6882 = vmul.f32 %v6846, 0.088388346
    %v6883 = vmul.f32 %v6848, 0.088388346
    %v6884 = vmul.f32 %v6851, 0.088388346
    %v6885 = vmul.f32 %v6853, 0.088388346
    %v6886 = vmul.f32 %v6856, 0.088388346
    %v6887 = vmul.f32 %v6858, 0.088388346
    %v6888 = vmul.f32 %v6861, 0.088388346
    %v6889 = vmul.f32 %v6863, 0.088388346
    %v6890 = vmul.f32 %v6866, 0.088388346
    %v6891 = vmul.f32 %v6868, 0.088388346
    %v6892 = vmul.f32 %v6871, 0.088388346
    %v6893 = vmul.f32 %v6873, 0.088388346
    %v6894 = vmul.f32 %v6876, 0.088388346
    %v6895 = vmul.f32 %v6878, 0.088388346
    %v6896 = vsel %vm917, %v6880, -1e+30
    %v6897 = vsel %vm918, %v6881, -1e+30
    %v6898 = vsel %vm919, %v6882, -1e+30
    %v6899 = vsel %vm920, %v6883, -1e+30
    %v6900 = vsel %vm921, %v6884, -1e+30
    %v6901 = vsel %vm922, %v6885, -1e+30
    %v6902 = vsel %vm923, %v6886, -1e+30
    %v6903 = vsel %vm924, %v6887, -1e+30
    %v6904 = vsel %vm925, %v6888, -1e+30
    %v6905 = vsel %vm926, %v6889, -1e+30
    %v6906 = vsel %vm927, %v6890, -1e+30
    %v6907 = vsel %vm928, %v6891, -1e+30
    %v6908 = vsel %vm929, %v6892, -1e+30
    %v6909 = vsel %vm930, %v6893, -1e+30
    %v6910 = vsel %vm931, %v6894, -1e+30
    %v6911 = vsel %vm932, %v6895, -1e+30
    %6912 = vmax.xlane.f32.xlu0 %v6896
    %v6913 = vpop.xlane.xlu0 %6912
    %6914 = vmax.xlane.f32.xlu0 %v6897
    %v6915 = vpop.xlane.xlu0 %6914
    %6916 = vmax.xlane.f32.xlu0 %v6898
    %v6917 = vpop.xlane.xlu0 %6916
    %6918 = vmax.xlane.f32.xlu0 %v6899
    %v6919 = vpop.xlane.xlu0 %6918
    %6920 = vmax.xlane.f32.xlu0 %v6900
    %v6921 = vpop.xlane.xlu0 %6920
    %6922 = vmax.xlane.f32.xlu0 %v6901
    %v6923 = vpop.xlane.xlu0 %6922
    %6924 = vmax.xlane.f32.xlu0 %v6902
    %v6925 = vpop.xlane.xlu0 %6924
    %6926 = vmax.xlane.f32.xlu0 %v6903
    %v6927 = vpop.xlane.xlu0 %6926
    %6928 = vmax.xlane.f32.xlu0 %v6904
    %v6929 = vpop.xlane.xlu0 %6928
    %6930 = vmax.xlane.f32.xlu0 %v6905
    %v6931 = vpop.xlane.xlu0 %6930
    %6932 = vmax.xlane.f32.xlu0 %v6906
    %v6933 = vpop.xlane.xlu0 %6932
    %6934 = vmax.xlane.f32.xlu0 %v6907
    %v6935 = vpop.xlane.xlu0 %6934
    %6936 = vmax.xlane.f32.xlu0 %v6908
    %v6937 = vpop.xlane.xlu0 %6936
    %6938 = vmax.xlane.f32.xlu0 %v6909
    %v6939 = vpop.xlane.xlu0 %6938
    %6940 = vmax.xlane.f32.xlu0 %v6910
    %v6941 = vpop.xlane.xlu0 %6940
    %6942 = vmax.xlane.f32.xlu0 %v6911
    %v6943 = vpop.xlane.xlu0 %6942
    %v6944 = vsub.f32 %v6896, %v6913
    %v6945 = vsub.f32 %v6897, %v6915
    %v6946 = vsub.f32 %v6898, %v6917
    %v6947 = vsub.f32 %v6899, %v6919
    %v6948 = vsub.f32 %v6900, %v6921
    %v6949 = vsub.f32 %v6901, %v6923
    %v6950 = vsub.f32 %v6902, %v6925
    %v6951 = vsub.f32 %v6903, %v6927
    %v6952 = vsub.f32 %v6904, %v6929
    %v6953 = vsub.f32 %v6905, %v6931
    %v6954 = vsub.f32 %v6906, %v6933
    %v6955 = vsub.f32 %v6907, %v6935
    %v6956 = vsub.f32 %v6908, %v6937
    %v6957 = vsub.f32 %v6909, %v6939
    %v6958 = vsub.f32 %v6910, %v6941
    %v6959 = vsub.f32 %v6911, %v6943
    %v6960 = vmul.f32 %v6944, 1.442695
    %v6961 = vpow.pop %v6960
    %v6962 = vmul.f32 %v6945, 1.442695
    %v6963 = vpow.pop %v6962
    %v6964 = vmul.f32 %v6946, 1.442695
    %v6965 = vpow.pop %v6964
    %v6966 = vmul.f32 %v6947, 1.442695
    %v6967 = vpow.pop %v6966
    %v6968 = vmul.f32 %v6948, 1.442695
    %v6969 = vpow.pop %v6968
    %v6970 = vmul.f32 %v6949, 1.442695
    %v6971 = vpow.pop %v6970
    %v6972 = vmul.f32 %v6950, 1.442695
    %v6973 = vpow.pop %v6972
    %v6974 = vmul.f32 %v6951, 1.442695
    %v6975 = vpow.pop %v6974
    %v6976 = vmul.f32 %v6952, 1.442695
    %v6977 = vpow.pop %v6976
    %v6978 = vmul.f32 %v6953, 1.442695
    %v6979 = vpow.pop %v6978
    %v6980 = vmul.f32 %v6954, 1.442695
    %v6981 = vpow.pop %v6980
    %v6982 = vmul.f32 %v6955, 1.442695
    %v6983 = vpow.pop %v6982
    %v6984 = vmul.f32 %v6956, 1.442695
    %v6985 = vpow.pop %v6984
    %v6986 = vmul.f32 %v6957, 1.442695
    %v6987 = vpow.pop %v6986
    %v6988 = vmul.f32 %v6958, 1.442695
    %v6989 = vpow.pop %v6988
    %v6990 = vmul.f32 %v6959, 1.442695
    %v6991 = vpow.pop %v6990
    %6992 = vadd.xlane.f32.xlu0 %v6961
    %v6993 = vpop.xlane.xlu0 %6992
    %6994 = vadd.xlane.f32.xlu0 %v6963
    %v6995 = vpop.xlane.xlu0 %6994
    %6996 = vadd.xlane.f32.xlu0 %v6965
    %v6997 = vpop.xlane.xlu0 %6996
    %6998 = vadd.xlane.f32.xlu0 %v6967
    %v6999 = vpop.xlane.xlu0 %6998
    %7000 = vadd.xlane.f32.xlu0 %v6969
    %v7001 = vpop.xlane.xlu0 %7000
    %7002 = vadd.xlane.f32.xlu0 %v6971
    %v7003 = vpop.xlane.xlu0 %7002
    %7004 = vadd.xlane.f32.xlu0 %v6973
    %v7005 = vpop.xlane.xlu0 %7004
    %7006 = vadd.xlane.f32.xlu0 %v6975
    %v7007 = vpop.xlane.xlu0 %7006
    %7008 = vadd.xlane.f32.xlu0 %v6977
    %v7009 = vpop.xlane.xlu0 %7008
    %7010 = vadd.xlane.f32.xlu0 %v6979
    %v7011 = vpop.xlane.xlu0 %7010
    %7012 = vadd.xlane.f32.xlu0 %v6981
    %v7013 = vpop.xlane.xlu0 %7012
    %7014 = vadd.xlane.f32.xlu0 %v6983
    %v7015 = vpop.xlane.xlu0 %7014
    %7016 = vadd.xlane.f32.xlu0 %v6985
    %v7017 = vpop.xlane.xlu0 %7016
    %7018 = vadd.xlane.f32.xlu0 %v6987
    %v7019 = vpop.xlane.xlu0 %7018
    %7020 = vadd.xlane.f32.xlu0 %v6989
    %v7021 = vpop.xlane.xlu0 %7020
    %7022 = vadd.xlane.f32.xlu0 %v6991
    %v7023 = vpop.xlane.xlu0 %7022
    %v7024 = vrcp.pop %v6993
    %v7025 = vrcp.pop %v6995
    %v7026 = vrcp.pop %v6997
    %v7027 = vrcp.pop %v6999
    %v7028 = vrcp.pop %v7001
    %v7029 = vrcp.pop %v7003
    %v7030 = vrcp.pop %v7005
    %v7031 = vrcp.pop %v7007
    %v7032 = vrcp.pop %v7009
    %v7033 = vrcp.pop %v7011
    %v7034 = vrcp.pop %v7013
    %v7035 = vrcp.pop %v7015
    %v7036 = vrcp.pop %v7017
    %v7037 = vrcp.pop %v7019
    %v7038 = vrcp.pop %v7021
    %v7039 = vrcp.pop %v7023
    %v7040 = vmul.f32 %v6961, %v7024
    %v7041 = vmul.f32 %v6963, %v7025
    %v7042 = vmul.f32 %v6965, %v7026
    %v7043 = vmul.f32 %v6967, %v7027
    %v7044 = vmul.f32 %v6969, %v7028
    %v7045 = vmul.f32 %v6971, %v7029
    %v7046 = vmul.f32 %v6973, %v7030
    %v7047 = vmul.f32 %v6975, %v7031
    %v7048 = vmul.f32 %v6977, %v7032
    %v7049 = vmul.f32 %v6979, %v7033
    %v7050 = vmul.f32 %v6981, %v7034
    %v7051 = vmul.f32 %v6983, %v7035
    %v7052 = vmul.f32 %v6985, %v7036
    %v7053 = vmul.f32 %v6987, %v7037
    %v7054 = vmul.f32 %v6989, %v7038
    %v7055 = vmul.f32 %v6991, %v7039
    %v7056 = vpack.c.bf16 %v7041, %v7040
    %v7057 = vpack.c.bf16 %v7043, %v7042
    %v7058 = vpack.c.bf16 %v7045, %v7044
    %v7059 = vpack.c.bf16 %v7047, %v7046
    %v7060 = vpack.c.bf16 %v7049, %v7048
    %v7061 = vpack.c.bf16 %v7051, %v7050
    %v7062 = vpack.c.bf16 %v7053, %v7052
    %v7063 = vpack.c.bf16 %v7055, %v7054
    %7064 = vrot.lane.b32.xlu0 %v6268, 64
    %v7065 = vpop.permute.xlu0 %7064
    %7066 = vrot.lane.b32.xlu0 %v6269, 64
    %v7067 = vpop.permute.xlu0 %7066
    %7068 = vrot.lane.b32.xlu0 %v6270, 64
    %v7069 = vpop.permute.xlu0 %7068
    %7070 = vrot.lane.b32.xlu0 %v6271, 64
    %v7071 = vpop.permute.xlu0 %7070
    %7072 = vrot.lane.b32.xlu0 %v6272, 64
    %v7073 = vpop.permute.xlu0 %7072
    %7074 = vrot.lane.b32.xlu0 %v6273, 64
    %v7075 = vpop.permute.xlu0 %7074
    %7076 = vrot.lane.b32.xlu0 %v6274, 64
    %v7077 = vpop.permute.xlu0 %7076
    %7078 = vrot.lane.b32.xlu0 %v6275, 64
    %v7079 = vpop.permute.xlu0 %7078
    %7088 = vmatpush.bf16.msra.mxu0 %v7079
    %7089 = vmatpush.bf16.msra.mxu0 %v7077
    %7090 = vmatpush.bf16.msra.mxu0 %v7075
    %7091 = vmatpush.bf16.msra.mxu0 %v7073
    %7092 = vmatpush.bf16.msra.mxu0 %v7071
    %7093 = vmatpush.bf16.msra.mxu0 %v7069
    %7094 = vmatpush.bf16.msra.mxu0 %v7067
    %7095 = vmatpush.bf16.msra.mxu0 %v7065
    %7096 = vmatmul.bf16.gmra.mxu0 %v7056
    %v7097 = vpop.f32.mrf.mxu0
    %v7098 = vadd.f32 0.0, %v7097
    %v7099 = vpop.f32.mrf.mxu0
    %v7100 = vadd.f32 0.0, %v7099
    %7101 = vmatmul.bf16.gmra.mxu0 %v7057
    %v7102 = vpop.f32.mrf.mxu0
    %v7103 = vadd.f32 0.0, %v7102
    %v7104 = vpop.f32.mrf.mxu0
    %v7105 = vadd.f32 0.0, %v7104
    %7106 = vmatmul.bf16.gmra.mxu0 %v7058
    %v7107 = vpop.f32.mrf.mxu0
    %v7108 = vadd.f32 0.0, %v7107
    %v7109 = vpop.f32.mrf.mxu0
    %v7110 = vadd.f32 0.0, %v7109
    %7111 = vmatmul.bf16.gmra.mxu0 %v7059
    %v7112 = vpop.f32.mrf.mxu0
    %v7113 = vadd.f32 0.0, %v7112
    %v7114 = vpop.f32.mrf.mxu0
    %v7115 = vadd.f32 0.0, %v7114
    %7116 = vmatmul.bf16.gmra.mxu0 %v7060
    %v7117 = vpop.f32.mrf.mxu0
    %v7118 = vadd.f32 0.0, %v7117
    %v7119 = vpop.f32.mrf.mxu0
    %v7120 = vadd.f32 0.0, %v7119
    %7121 = vmatmul.bf16.gmra.mxu0 %v7061
    %v7122 = vpop.f32.mrf.mxu0
    %v7123 = vadd.f32 0.0, %v7122
    %v7124 = vpop.f32.mrf.mxu0
    %v7125 = vadd.f32 0.0, %v7124
    %7126 = vmatmul.bf16.gmra.mxu0 %v7062
    %v7127 = vpop.f32.mrf.mxu0
    %v7128 = vadd.f32 0.0, %v7127
    %v7129 = vpop.f32.mrf.mxu0
    %v7130 = vadd.f32 0.0, %v7129
    %7131 = vmatmul.bf16.gmra.mxu0 %v7063
    %v7132 = vpop.f32.mrf.mxu0
    %v7133 = vadd.f32 0.0, %v7132
    %v7134 = vpop.f32.mrf.mxu0
    %v7135 = vadd.f32 0.0, %v7134
    %7136 = vdwg.mxu0
    %v7137 = vpack.c.bf16 %v7098, %v7098
    %v7138 = vpack.c.bf16 %v7100, %v7100
    %v7139 = vpack.c.bf16 %v7103, %v7103
    %v7140 = vpack.c.bf16 %v7105, %v7105
    %v7141 = vpack.c.bf16 %v7108, %v7108
    %v7142 = vpack.c.bf16 %v7110, %v7110
    %v7143 = vpack.c.bf16 %v7113, %v7113
    %v7144 = vpack.c.bf16 %v7115, %v7115
    %v7145 = vpack.c.bf16 %v7118, %v7118
    %v7146 = vpack.c.bf16 %v7120, %v7120
    %v7147 = vpack.c.bf16 %v7123, %v7123
    %v7148 = vpack.c.bf16 %v7125, %v7125
    %v7149 = vpack.c.bf16 %v7128, %v7128
    %v7150 = vpack.c.bf16 %v7130, %v7130
    %v7151 = vpack.c.bf16 %v7133, %v7133
    %v7152 = vpack.c.bf16 %v7135, %v7135
    %7153 = vrot.lane.b32.xlu0 %v5923, 32
    %v7154 = vpop.permute.xlu0 %7153
    %7155 = vrot.lane.b32.xlu0 %v5924, 32
    %v7156 = vpop.permute.xlu0 %7155
    %7157 = vrot.lane.b32.xlu0 %v5925, 32
    %v7158 = vpop.permute.xlu0 %7157
    %7159 = vrot.lane.b32.xlu0 %v5926, 32
    %v7160 = vpop.permute.xlu0 %7159
    %7161 = vrot.lane.b32.xlu0 %v5927, 32
    %v7162 = vpop.permute.xlu0 %7161
    %7163 = vrot.lane.b32.xlu0 %v5928, 32
    %v7164 = vpop.permute.xlu0 %7163
    %7165 = vrot.lane.b32.xlu0 %v5929, 32
    %v7166 = vpop.permute.xlu0 %7165
    %7167 = vrot.lane.b32.xlu0 %v5930, 32
    %v7168 = vpop.permute.xlu0 %7167
    %7169 = vrot.lane.b32.xlu0 %v5947, 32
    %v7170 = vpop.permute.xlu0 %7169
    %7171 = vrot.lane.b32.xlu0 %v5948, 32
    %v7172 = vpop.permute.xlu0 %7171
    %7173 = vrot.lane.b32.xlu0 %v5949, 32
    %v7174 = vpop.permute.xlu0 %7173
    %7175 = vrot.lane.b32.xlu0 %v5950, 32
    %v7176 = vpop.permute.xlu0 %7175
    %7177 = vrot.lane.b32.xlu0 %v5951, 32
    %v7178 = vpop.permute.xlu0 %7177
    %7179 = vrot.lane.b32.xlu0 %v5952, 32
    %v7180 = vpop.permute.xlu0 %7179
    %7181 = vrot.lane.b32.xlu0 %v5953, 32
    %v7182 = vpop.permute.xlu0 %7181
    %7183 = vrot.lane.b32.xlu0 %v5954, 32
    %v7184 = vpop.permute.xlu0 %7183
    %v7186 = vsel %vm1743, %v7154, 0
    %v7189 = vsel %vm1743, %v7156, 0
    %v7192 = vsel %vm1743, %v7158, 0
    %v7195 = vsel %vm1743, %v7160, 0
    %v7198 = vsel %vm1743, %v7162, 0
    %v7201 = vsel %vm1743, %v7164, 0
    %v7204 = vsel %vm1743, %v7166, 0
    %v7207 = vsel %vm1743, %v7168, 0
    %v7210 = vsel %vm1743, %v7170, 0
    %v7213 = vsel %vm1743, %v7172, 0
    %v7216 = vsel %vm1743, %v7174, 0
    %v7219 = vsel %vm1743, %v7176, 0
    %v7222 = vsel %vm1743, %v7178, 0
    %v7225 = vsel %vm1743, %v7180, 0
    %v7228 = vsel %vm1743, %v7182, 0
    %v7231 = vsel %vm1743, %v7184, 0
    %7233 = vmatpush.bf16.xpose.msra.mxu0 %v7231
    %7234 = vmatpush.bf16.xpose.msra.mxu0 %v7228
    %7235 = vmatpush.bf16.xpose.msra.mxu0 %v7225
    %7236 = vmatpush.bf16.xpose.msra.mxu0 %v7222
    %7237 = vmatpush.bf16.xpose.msra.mxu0 %v7219
    %7238 = vmatpush.bf16.xpose.msra.mxu0 %v7216
    %7239 = vmatpush.bf16.xpose.msra.mxu0 %v7213
    %7240 = vmatpush.bf16.xpose.msra.mxu0 %v7210
    %7241 = vmatmul.bf16.gmra.mxu0 %v7186
    %v7242 = vpop.f32.mrf.mxu0
    %v7243 = vadd.f32 0.0, %v7242
    %v7244 = vpop.f32.mrf.mxu0
    %v7245 = vadd.f32 0.0, %v7244
    %7246 = vmatmul.bf16.gmra.mxu0 %v7189
    %v7247 = vpop.f32.mrf.mxu0
    %v7248 = vadd.f32 0.0, %v7247
    %v7249 = vpop.f32.mrf.mxu0
    %v7250 = vadd.f32 0.0, %v7249
    %7251 = vmatmul.bf16.gmra.mxu0 %v7192
    %v7252 = vpop.f32.mrf.mxu0
    %v7253 = vadd.f32 0.0, %v7252
    %v7254 = vpop.f32.mrf.mxu0
    %v7255 = vadd.f32 0.0, %v7254
    %7256 = vmatmul.bf16.gmra.mxu0 %v7195
    %v7257 = vpop.f32.mrf.mxu0
    %v7258 = vadd.f32 0.0, %v7257
    %v7259 = vpop.f32.mrf.mxu0
    %v7260 = vadd.f32 0.0, %v7259
    %7261 = vmatmul.bf16.gmra.mxu0 %v7198
    %v7262 = vpop.f32.mrf.mxu0
    %v7263 = vadd.f32 0.0, %v7262
    %v7264 = vpop.f32.mrf.mxu0
    %v7265 = vadd.f32 0.0, %v7264
    %7266 = vmatmul.bf16.gmra.mxu0 %v7201
    %v7267 = vpop.f32.mrf.mxu0
    %v7268 = vadd.f32 0.0, %v7267
    %v7269 = vpop.f32.mrf.mxu0
    %v7270 = vadd.f32 0.0, %v7269
    %7271 = vmatmul.bf16.gmra.mxu0 %v7204
    %v7272 = vpop.f32.mrf.mxu0
    %v7273 = vadd.f32 0.0, %v7272
    %v7274 = vpop.f32.mrf.mxu0
    %v7275 = vadd.f32 0.0, %v7274
    %7276 = vmatmul.bf16.gmra.mxu0 %v7207
    %v7277 = vpop.f32.mrf.mxu0
    %v7278 = vadd.f32 0.0, %v7277
    %v7279 = vpop.f32.mrf.mxu0
    %v7280 = vadd.f32 0.0, %v7279
    %7281 = vdwg.mxu0
    %v7282 = vmul.f32 %v7243, 0.088388346
    %v7283 = vmul.f32 %v7245, 0.088388346
    %v7284 = vmul.f32 %v7248, 0.088388346
    %v7285 = vmul.f32 %v7250, 0.088388346
    %v7286 = vmul.f32 %v7253, 0.088388346
    %v7287 = vmul.f32 %v7255, 0.088388346
    %v7288 = vmul.f32 %v7258, 0.088388346
    %v7289 = vmul.f32 %v7260, 0.088388346
    %v7290 = vmul.f32 %v7263, 0.088388346
    %v7291 = vmul.f32 %v7265, 0.088388346
    %v7292 = vmul.f32 %v7268, 0.088388346
    %v7293 = vmul.f32 %v7270, 0.088388346
    %v7294 = vmul.f32 %v7273, 0.088388346
    %v7295 = vmul.f32 %v7275, 0.088388346
    %v7296 = vmul.f32 %v7278, 0.088388346
    %v7297 = vmul.f32 %v7280, 0.088388346
    %v7298 = vsel %vm917, %v7282, -1e+30
    %v7299 = vsel %vm918, %v7283, -1e+30
    %v7300 = vsel %vm919, %v7284, -1e+30
    %v7301 = vsel %vm920, %v7285, -1e+30
    %v7302 = vsel %vm921, %v7286, -1e+30
    %v7303 = vsel %vm922, %v7287, -1e+30
    %v7304 = vsel %vm923, %v7288, -1e+30
    %v7305 = vsel %vm924, %v7289, -1e+30
    %v7306 = vsel %vm925, %v7290, -1e+30
    %v7307 = vsel %vm926, %v7291, -1e+30
    %v7308 = vsel %vm927, %v7292, -1e+30
    %v7309 = vsel %vm928, %v7293, -1e+30
    %v7310 = vsel %vm929, %v7294, -1e+30
    %v7311 = vsel %vm930, %v7295, -1e+30
    %v7312 = vsel %vm931, %v7296, -1e+30
    %v7313 = vsel %vm932, %v7297, -1e+30
    %7314 = vmax.xlane.f32.xlu0 %v7298
    %v7315 = vpop.xlane.xlu0 %7314
    %7316 = vmax.xlane.f32.xlu0 %v7299
    %v7317 = vpop.xlane.xlu0 %7316
    %7318 = vmax.xlane.f32.xlu0 %v7300
    %v7319 = vpop.xlane.xlu0 %7318
    %7320 = vmax.xlane.f32.xlu0 %v7301
    %v7321 = vpop.xlane.xlu0 %7320
    %7322 = vmax.xlane.f32.xlu0 %v7302
    %v7323 = vpop.xlane.xlu0 %7322
    %7324 = vmax.xlane.f32.xlu0 %v7303
    %v7325 = vpop.xlane.xlu0 %7324
    %7326 = vmax.xlane.f32.xlu0 %v7304
    %v7327 = vpop.xlane.xlu0 %7326
    %7328 = vmax.xlane.f32.xlu0 %v7305
    %v7329 = vpop.xlane.xlu0 %7328
    %7330 = vmax.xlane.f32.xlu0 %v7306
    %v7331 = vpop.xlane.xlu0 %7330
    %7332 = vmax.xlane.f32.xlu0 %v7307
    %v7333 = vpop.xlane.xlu0 %7332
    %7334 = vmax.xlane.f32.xlu0 %v7308
    %v7335 = vpop.xlane.xlu0 %7334
    %7336 = vmax.xlane.f32.xlu0 %v7309
    %v7337 = vpop.xlane.xlu0 %7336
    %7338 = vmax.xlane.f32.xlu0 %v7310
    %v7339 = vpop.xlane.xlu0 %7338
    %7340 = vmax.xlane.f32.xlu0 %v7311
    %v7341 = vpop.xlane.xlu0 %7340
    %7342 = vmax.xlane.f32.xlu0 %v7312
    %v7343 = vpop.xlane.xlu0 %7342
    %7344 = vmax.xlane.f32.xlu0 %v7313
    %v7345 = vpop.xlane.xlu0 %7344
    %v7346 = vsub.f32 %v7298, %v7315
    %v7347 = vsub.f32 %v7299, %v7317
    %v7348 = vsub.f32 %v7300, %v7319
    %v7349 = vsub.f32 %v7301, %v7321
    %v7350 = vsub.f32 %v7302, %v7323
    %v7351 = vsub.f32 %v7303, %v7325
    %v7352 = vsub.f32 %v7304, %v7327
    %v7353 = vsub.f32 %v7305, %v7329
    %v7354 = vsub.f32 %v7306, %v7331
    %v7355 = vsub.f32 %v7307, %v7333
    %v7356 = vsub.f32 %v7308, %v7335
    %v7357 = vsub.f32 %v7309, %v7337
    %v7358 = vsub.f32 %v7310, %v7339
    %v7359 = vsub.f32 %v7311, %v7341
    %v7360 = vsub.f32 %v7312, %v7343
    %v7361 = vsub.f32 %v7313, %v7345
    %v7362 = vmul.f32 %v7346, 1.442695
    %v7363 = vpow.pop %v7362
    %v7364 = vmul.f32 %v7347, 1.442695
    %v7365 = vpow.pop %v7364
    %v7366 = vmul.f32 %v7348, 1.442695
    %v7367 = vpow.pop %v7366
    %v7368 = vmul.f32 %v7349, 1.442695
    %v7369 = vpow.pop %v7368
    %v7370 = vmul.f32 %v7350, 1.442695
    %v7371 = vpow.pop %v7370
    %v7372 = vmul.f32 %v7351, 1.442695
    %v7373 = vpow.pop %v7372
    %v7374 = vmul.f32 %v7352, 1.442695
    %v7375 = vpow.pop %v7374
    %v7376 = vmul.f32 %v7353, 1.442695
    %v7377 = vpow.pop %v7376
    %v7378 = vmul.f32 %v7354, 1.442695
    %v7379 = vpow.pop %v7378
    %v7380 = vmul.f32 %v7355, 1.442695
    %v7381 = vpow.pop %v7380
    %v7382 = vmul.f32 %v7356, 1.442695
    %v7383 = vpow.pop %v7382
    %v7384 = vmul.f32 %v7357, 1.442695
    %v7385 = vpow.pop %v7384
    %v7386 = vmul.f32 %v7358, 1.442695
    %v7387 = vpow.pop %v7386
    %v7388 = vmul.f32 %v7359, 1.442695
    %v7389 = vpow.pop %v7388
    %v7390 = vmul.f32 %v7360, 1.442695
    %v7391 = vpow.pop %v7390
    %v7392 = vmul.f32 %v7361, 1.442695
    %v7393 = vpow.pop %v7392
    %7394 = vadd.xlane.f32.xlu0 %v7363
    %v7395 = vpop.xlane.xlu0 %7394
    %7396 = vadd.xlane.f32.xlu0 %v7365
    %v7397 = vpop.xlane.xlu0 %7396
    %7398 = vadd.xlane.f32.xlu0 %v7367
    %v7399 = vpop.xlane.xlu0 %7398
    %7400 = vadd.xlane.f32.xlu0 %v7369
    %v7401 = vpop.xlane.xlu0 %7400
    %7402 = vadd.xlane.f32.xlu0 %v7371
    %v7403 = vpop.xlane.xlu0 %7402
    %7404 = vadd.xlane.f32.xlu0 %v7373
    %v7405 = vpop.xlane.xlu0 %7404
    %7406 = vadd.xlane.f32.xlu0 %v7375
    %v7407 = vpop.xlane.xlu0 %7406
    %7408 = vadd.xlane.f32.xlu0 %v7377
    %v7409 = vpop.xlane.xlu0 %7408
    %7410 = vadd.xlane.f32.xlu0 %v7379
    %v7411 = vpop.xlane.xlu0 %7410
    %7412 = vadd.xlane.f32.xlu0 %v7381
    %v7413 = vpop.xlane.xlu0 %7412
    %7414 = vadd.xlane.f32.xlu0 %v7383
    %v7415 = vpop.xlane.xlu0 %7414
    %7416 = vadd.xlane.f32.xlu0 %v7385
    %v7417 = vpop.xlane.xlu0 %7416
    %7418 = vadd.xlane.f32.xlu0 %v7387
    %v7419 = vpop.xlane.xlu0 %7418
    %7420 = vadd.xlane.f32.xlu0 %v7389
    %v7421 = vpop.xlane.xlu0 %7420
    %7422 = vadd.xlane.f32.xlu0 %v7391
    %v7423 = vpop.xlane.xlu0 %7422
    %7424 = vadd.xlane.f32.xlu0 %v7393
    %v7425 = vpop.xlane.xlu0 %7424
    %v7426 = vrcp.pop %v7395
    %v7427 = vrcp.pop %v7397
    %v7428 = vrcp.pop %v7399
    %v7429 = vrcp.pop %v7401
    %v7430 = vrcp.pop %v7403
    %v7431 = vrcp.pop %v7405
    %v7432 = vrcp.pop %v7407
    %v7433 = vrcp.pop %v7409
    %v7434 = vrcp.pop %v7411
    %v7435 = vrcp.pop %v7413
    %v7436 = vrcp.pop %v7415
    %v7437 = vrcp.pop %v7417
    %v7438 = vrcp.pop %v7419
    %v7439 = vrcp.pop %v7421
    %v7440 = vrcp.pop %v7423
    %v7441 = vrcp.pop %v7425
    %v7442 = vmul.f32 %v7363, %v7426
    %v7443 = vmul.f32 %v7365, %v7427
    %v7444 = vmul.f32 %v7367, %v7428
    %v7445 = vmul.f32 %v7369, %v7429
    %v7446 = vmul.f32 %v7371, %v7430
    %v7447 = vmul.f32 %v7373, %v7431
    %v7448 = vmul.f32 %v7375, %v7432
    %v7449 = vmul.f32 %v7377, %v7433
    %v7450 = vmul.f32 %v7379, %v7434
    %v7451 = vmul.f32 %v7381, %v7435
    %v7452 = vmul.f32 %v7383, %v7436
    %v7453 = vmul.f32 %v7385, %v7437
    %v7454 = vmul.f32 %v7387, %v7438
    %v7455 = vmul.f32 %v7389, %v7439
    %v7456 = vmul.f32 %v7391, %v7440
    %v7457 = vmul.f32 %v7393, %v7441
    %v7458 = vpack.c.bf16 %v7443, %v7442
    %v7459 = vpack.c.bf16 %v7445, %v7444
    %v7460 = vpack.c.bf16 %v7447, %v7446
    %v7461 = vpack.c.bf16 %v7449, %v7448
    %v7462 = vpack.c.bf16 %v7451, %v7450
    %v7463 = vpack.c.bf16 %v7453, %v7452
    %v7464 = vpack.c.bf16 %v7455, %v7454
    %v7465 = vpack.c.bf16 %v7457, %v7456
    %7466 = vrot.lane.b32.xlu0 %v6268, 32
    %v7467 = vpop.permute.xlu0 %7466
    %7468 = vrot.lane.b32.xlu0 %v6269, 32
    %v7469 = vpop.permute.xlu0 %7468
    %7470 = vrot.lane.b32.xlu0 %v6270, 32
    %v7471 = vpop.permute.xlu0 %7470
    %7472 = vrot.lane.b32.xlu0 %v6271, 32
    %v7473 = vpop.permute.xlu0 %7472
    %7474 = vrot.lane.b32.xlu0 %v6272, 32
    %v7475 = vpop.permute.xlu0 %7474
    %7476 = vrot.lane.b32.xlu0 %v6273, 32
    %v7477 = vpop.permute.xlu0 %7476
    %7478 = vrot.lane.b32.xlu0 %v6274, 32
    %v7479 = vpop.permute.xlu0 %7478
    %7480 = vrot.lane.b32.xlu0 %v6275, 32
    %v7481 = vpop.permute.xlu0 %7480
    %7490 = vmatpush.bf16.msra.mxu0 %v7481
    %7491 = vmatpush.bf16.msra.mxu0 %v7479
    %7492 = vmatpush.bf16.msra.mxu0 %v7477
    %7493 = vmatpush.bf16.msra.mxu0 %v7475
    %7494 = vmatpush.bf16.msra.mxu0 %v7473
    %7495 = vmatpush.bf16.msra.mxu0 %v7471
    %7496 = vmatpush.bf16.msra.mxu0 %v7469
    %7497 = vmatpush.bf16.msra.mxu0 %v7467
    %7498 = vmatmul.bf16.gmra.mxu0 %v7458
    %v7499 = vpop.f32.mrf.mxu0
    %v7500 = vadd.f32 0.0, %v7499
    %v7501 = vpop.f32.mrf.mxu0
    %v7502 = vadd.f32 0.0, %v7501
    %7503 = vmatmul.bf16.gmra.mxu0 %v7459
    %v7504 = vpop.f32.mrf.mxu0
    %v7505 = vadd.f32 0.0, %v7504
    %v7506 = vpop.f32.mrf.mxu0
    %v7507 = vadd.f32 0.0, %v7506
    %7508 = vmatmul.bf16.gmra.mxu0 %v7460
    %v7509 = vpop.f32.mrf.mxu0
    %v7510 = vadd.f32 0.0, %v7509
    %v7511 = vpop.f32.mrf.mxu0
    %v7512 = vadd.f32 0.0, %v7511
    %7513 = vmatmul.bf16.gmra.mxu0 %v7461
    %v7514 = vpop.f32.mrf.mxu0
    %v7515 = vadd.f32 0.0, %v7514
    %v7516 = vpop.f32.mrf.mxu0
    %v7517 = vadd.f32 0.0, %v7516
    %7518 = vmatmul.bf16.gmra.mxu0 %v7462
    %v7519 = vpop.f32.mrf.mxu0
    %v7520 = vadd.f32 0.0, %v7519
    %v7521 = vpop.f32.mrf.mxu0
    %v7522 = vadd.f32 0.0, %v7521
    %7523 = vmatmul.bf16.gmra.mxu0 %v7463
    %v7524 = vpop.f32.mrf.mxu0
    %v7525 = vadd.f32 0.0, %v7524
    %v7526 = vpop.f32.mrf.mxu0
    %v7527 = vadd.f32 0.0, %v7526
    %7528 = vmatmul.bf16.gmra.mxu0 %v7464
    %v7529 = vpop.f32.mrf.mxu0
    %v7530 = vadd.f32 0.0, %v7529
    %v7531 = vpop.f32.mrf.mxu0
    %v7532 = vadd.f32 0.0, %v7531
    %7533 = vmatmul.bf16.gmra.mxu0 %v7465
    %v7534 = vpop.f32.mrf.mxu0
    %v7535 = vadd.f32 0.0, %v7534
    %v7536 = vpop.f32.mrf.mxu0
    %v7537 = vadd.f32 0.0, %v7536
    %7538 = vdwg.mxu0
    %v7539 = vpack.c.bf16 %v7500, %v7500
    %v7540 = vpack.c.bf16 %v7502, %v7502
    %v7541 = vpack.c.bf16 %v7505, %v7505
    %v7542 = vpack.c.bf16 %v7507, %v7507
    %v7543 = vpack.c.bf16 %v7510, %v7510
    %v7544 = vpack.c.bf16 %v7512, %v7512
    %v7545 = vpack.c.bf16 %v7515, %v7515
    %v7546 = vpack.c.bf16 %v7517, %v7517
    %v7547 = vpack.c.bf16 %v7520, %v7520
    %v7548 = vpack.c.bf16 %v7522, %v7522
    %v7549 = vpack.c.bf16 %v7525, %v7525
    %v7550 = vpack.c.bf16 %v7527, %v7527
    %v7551 = vpack.c.bf16 %v7530, %v7530
    %v7552 = vpack.c.bf16 %v7532, %v7532
    %v7553 = vpack.c.bf16 %v7535, %v7535
    %v7554 = vpack.c.bf16 %v7537, %v7537
    %v7571 = vunpack.c.l.b16 %v6333
    %v7572 = vunpack.c.l.b16 %v6334
    %v7573 = vunpack.c.l.b16 %v6335
    %v7574 = vunpack.c.l.b16 %v6336
    %v7575 = vunpack.c.l.b16 %v6337
    %v7576 = vunpack.c.l.b16 %v6338
    %v7577 = vunpack.c.l.b16 %v6339
    %v7578 = vunpack.c.l.b16 %v6340
    %v7579 = vunpack.c.l.b16 %v6341
    %v7580 = vunpack.c.l.b16 %v6342
    %v7581 = vunpack.c.l.b16 %v6343
    %v7582 = vunpack.c.l.b16 %v6344
    %v7583 = vunpack.c.l.b16 %v6345
    %v7584 = vunpack.c.l.b16 %v6346
    %v7585 = vunpack.c.l.b16 %v6347
    %v7586 = vunpack.c.l.b16 %v6348
    %v7587 = vpack.c.b16 %v7572, %v7571
    %v7588 = vpack.c.b16 %v7574, %v7573
    %v7589 = vpack.c.b16 %v7576, %v7575
    %v7590 = vpack.c.b16 %v7578, %v7577
    %v7591 = vpack.c.b16 %v7580, %v7579
    %v7592 = vpack.c.b16 %v7582, %v7581
    %v7593 = vpack.c.b16 %v7584, %v7583
    %v7594 = vpack.c.b16 %v7586, %v7585
    %v7611 = vunpack.c.l.b16 %v6735
    %v7612 = vunpack.c.l.b16 %v6736
    %v7613 = vunpack.c.l.b16 %v6737
    %v7614 = vunpack.c.l.b16 %v6738
    %v7615 = vunpack.c.l.b16 %v6739
    %v7616 = vunpack.c.l.b16 %v6740
    %v7617 = vunpack.c.l.b16 %v6741
    %v7618 = vunpack.c.l.b16 %v6742
    %v7619 = vunpack.c.l.b16 %v6743
    %v7620 = vunpack.c.l.b16 %v6744
    %v7621 = vunpack.c.l.b16 %v6745
    %v7622 = vunpack.c.l.b16 %v6746
    %v7623 = vunpack.c.l.b16 %v6747
    %v7624 = vunpack.c.l.b16 %v6748
    %v7625 = vunpack.c.l.b16 %v6749
    %v7626 = vunpack.c.l.b16 %v6750
    %v7627 = vpack.c.b16 %v7612, %v7611
    %v7628 = vpack.c.b16 %v7614, %v7613
    %v7629 = vpack.c.b16 %v7616, %v7615
    %v7630 = vpack.c.b16 %v7618, %v7617
    %v7631 = vpack.c.b16 %v7620, %v7619
    %v7632 = vpack.c.b16 %v7622, %v7621
    %v7633 = vpack.c.b16 %v7624, %v7623
    %v7634 = vpack.c.b16 %v7626, %v7625
    %7635 = vrot.lane.b32.xlu0 %v7627, 32
    %v7636 = vpop.permute.xlu0 %7635
    %7637 = vrot.lane.b32.xlu0 %v7628, 32
    %v7638 = vpop.permute.xlu0 %7637
    %7639 = vrot.lane.b32.xlu0 %v7629, 32
    %v7640 = vpop.permute.xlu0 %7639
    %7641 = vrot.lane.b32.xlu0 %v7630, 32
    %v7642 = vpop.permute.xlu0 %7641
    %7643 = vrot.lane.b32.xlu0 %v7631, 32
    %v7644 = vpop.permute.xlu0 %7643
    %7645 = vrot.lane.b32.xlu0 %v7632, 32
    %v7646 = vpop.permute.xlu0 %7645
    %7647 = vrot.lane.b32.xlu0 %v7633, 32
    %v7648 = vpop.permute.xlu0 %7647
    %7649 = vrot.lane.b32.xlu0 %v7634, 32
    %v7650 = vpop.permute.xlu0 %7649
    %v7667 = vunpack.c.l.b16 %v7137
    %v7668 = vunpack.c.l.b16 %v7138
    %v7669 = vunpack.c.l.b16 %v7139
    %v7670 = vunpack.c.l.b16 %v7140
    %v7671 = vunpack.c.l.b16 %v7141
    %v7672 = vunpack.c.l.b16 %v7142
    %v7673 = vunpack.c.l.b16 %v7143
    %v7674 = vunpack.c.l.b16 %v7144
    %v7675 = vunpack.c.l.b16 %v7145
    %v7676 = vunpack.c.l.b16 %v7146
    %v7677 = vunpack.c.l.b16 %v7147
    %v7678 = vunpack.c.l.b16 %v7148
    %v7679 = vunpack.c.l.b16 %v7149
    %v7680 = vunpack.c.l.b16 %v7150
    %v7681 = vunpack.c.l.b16 %v7151
    %v7682 = vunpack.c.l.b16 %v7152
    %v7683 = vpack.c.b16 %v7668, %v7667
    %v7684 = vpack.c.b16 %v7670, %v7669
    %v7685 = vpack.c.b16 %v7672, %v7671
    %v7686 = vpack.c.b16 %v7674, %v7673
    %v7687 = vpack.c.b16 %v7676, %v7675
    %v7688 = vpack.c.b16 %v7678, %v7677
    %v7689 = vpack.c.b16 %v7680, %v7679
    %v7690 = vpack.c.b16 %v7682, %v7681
    %7691 = vrot.lane.b32.xlu0 %v7683, 64
    %v7692 = vpop.permute.xlu0 %7691
    %7693 = vrot.lane.b32.xlu0 %v7684, 64
    %v7694 = vpop.permute.xlu0 %7693
    %7695 = vrot.lane.b32.xlu0 %v7685, 64
    %v7696 = vpop.permute.xlu0 %7695
    %7697 = vrot.lane.b32.xlu0 %v7686, 64
    %v7698 = vpop.permute.xlu0 %7697
    %7699 = vrot.lane.b32.xlu0 %v7687, 64
    %v7700 = vpop.permute.xlu0 %7699
    %7701 = vrot.lane.b32.xlu0 %v7688, 64
    %v7702 = vpop.permute.xlu0 %7701
    %7703 = vrot.lane.b32.xlu0 %v7689, 64
    %v7704 = vpop.permute.xlu0 %7703
    %7705 = vrot.lane.b32.xlu0 %v7690, 64
    %v7706 = vpop.permute.xlu0 %7705
    %v7723 = vunpack.c.l.b16 %v7539
    %v7724 = vunpack.c.l.b16 %v7540
    %v7725 = vunpack.c.l.b16 %v7541
    %v7726 = vunpack.c.l.b16 %v7542
    %v7727 = vunpack.c.l.b16 %v7543
    %v7728 = vunpack.c.l.b16 %v7544
    %v7729 = vunpack.c.l.b16 %v7545
    %v7730 = vunpack.c.l.b16 %v7546
    %v7731 = vunpack.c.l.b16 %v7547
    %v7732 = vunpack.c.l.b16 %v7548
    %v7733 = vunpack.c.l.b16 %v7549
    %v7734 = vunpack.c.l.b16 %v7550
    %v7735 = vunpack.c.l.b16 %v7551
    %v7736 = vunpack.c.l.b16 %v7552
    %v7737 = vunpack.c.l.b16 %v7553
    %v7738 = vunpack.c.l.b16 %v7554
    %v7739 = vpack.c.b16 %v7724, %v7723
    %v7740 = vpack.c.b16 %v7726, %v7725
    %v7741 = vpack.c.b16 %v7728, %v7727
    %v7742 = vpack.c.b16 %v7730, %v7729
    %v7743 = vpack.c.b16 %v7732, %v7731
    %v7744 = vpack.c.b16 %v7734, %v7733
    %v7745 = vpack.c.b16 %v7736, %v7735
    %v7746 = vpack.c.b16 %v7738, %v7737
    %7747 = vrot.lane.b32.xlu0 %v7739, 96
    %v7748 = vpop.permute.xlu0 %7747
    %7749 = vrot.lane.b32.xlu0 %v7740, 96
    %v7750 = vpop.permute.xlu0 %7749
    %7751 = vrot.lane.b32.xlu0 %v7741, 96
    %v7752 = vpop.permute.xlu0 %7751
    %7753 = vrot.lane.b32.xlu0 %v7742, 96
    %v7754 = vpop.permute.xlu0 %7753
    %7755 = vrot.lane.b32.xlu0 %v7743, 96
    %v7756 = vpop.permute.xlu0 %7755
    %7757 = vrot.lane.b32.xlu0 %v7744, 96
    %v7758 = vpop.permute.xlu0 %7757
    %7759 = vrot.lane.b32.xlu0 %v7745, 96
    %v7760 = vpop.permute.xlu0 %7759
    %7761 = vrot.lane.b32.xlu0 %v7746, 96
    %v7762 = vpop.permute.xlu0 %7761
    %v7765 = vsel %vm1743, %v7587, %v7636
    %v7768 = vsel %vm1743, %v7588, %v7638
    %v7771 = vsel %vm1743, %v7589, %v7640
    %v7774 = vsel %vm1743, %v7590, %v7642
    %v7777 = vsel %vm1743, %v7591, %v7644
    %v7780 = vsel %vm1743, %v7592, %v7646
    %v7783 = vsel %vm1743, %v7593, %v7648
    %v7786 = vsel %vm1743, %v7594, %v7650
    %v7788 = vsel %vm3576, %v7765, %v7692
    %v7790 = vsel %vm3576, %v7768, %v7694
    %v7792 = vsel %vm3576, %v7771, %v7696
    %v7794 = vsel %vm3576, %v7774, %v7698
    %v7796 = vsel %vm3576, %v7777, %v7700
    %v7798 = vsel %vm3576, %v7780, %v7702
    %v7800 = vsel %vm3576, %v7783, %v7704
    %v7802 = vsel %vm3576, %v7786, %v7706
    %v7804 = vsel %vm3593, %v7788, %v7748
    %v7807 = vsel %vm3593, %v7790, %v7750
    %v7810 = vsel %vm3593, %v7792, %v7752
    %v7813 = vsel %vm3593, %v7794, %v7754
    %v7816 = vsel %vm3593, %v7796, %v7756
    %v7819 = vsel %vm3593, %v7798, %v7758
    %v7822 = vsel %vm3593, %v7800, %v7760
    %v7825 = vsel %vm3593, %v7802, %v7762
    %s7827 = scalar_lea.vmem %s6, 64
    %v7828 = vld [vmem:[%s7827] sm:$0xf]
    %v7829 = vld [vmem:[%s7827 + $0x4] sm:$0xf]
    %v7830 = vld [vmem:[%s7827 + $0x8] sm:$0xf]
    %v7831 = vld [vmem:[%s7827 + $0xc] sm:$0xf]
    %v7832 = vld [vmem:[%s7827 + $0x10] sm:$0xf]
    %v7833 = vld [vmem:[%s7827 + $0x14] sm:$0xf]
    %v7834 = vld [vmem:[%s7827 + $0x18] sm:$0xf]
    %v7835 = vld [vmem:[%s7827 + $0x1c] sm:$0xf]
    %v7836 = vld [vmem:[%s7827 + $0x20] sm:$0xf]
    %v7837 = vld [vmem:[%s7827 + $0x24] sm:$0xf]
    %v7838 = vld [vmem:[%s7827 + $0x28] sm:$0xf]
    %v7839 = vld [vmem:[%s7827 + $0x2c] sm:$0xf]
    %v7840 = vld [vmem:[%s7827 + $0x30] sm:$0xf]
    %v7841 = vld [vmem:[%s7827 + $0x34] sm:$0xf]
    %v7842 = vld [vmem:[%s7827 + $0x38] sm:$0xf]
    %v7843 = vld [vmem:[%s7827 + $0x3c] sm:$0xf]
    %v7860 = vunpack.c.l.b16 %v7828
    %v7861 = vunpack.c.l.b16 %v7829
    %v7862 = vunpack.c.l.b16 %v7830
    %v7863 = vunpack.c.l.b16 %v7831
    %v7864 = vunpack.c.l.b16 %v7832
    %v7865 = vunpack.c.l.b16 %v7833
    %v7866 = vunpack.c.l.b16 %v7834
    %v7867 = vunpack.c.l.b16 %v7835
    %v7868 = vunpack.c.l.b16 %v7836
    %v7869 = vunpack.c.l.b16 %v7837
    %v7870 = vunpack.c.l.b16 %v7838
    %v7871 = vunpack.c.l.b16 %v7839
    %v7872 = vunpack.c.l.b16 %v7840
    %v7873 = vunpack.c.l.b16 %v7841
    %v7874 = vunpack.c.l.b16 %v7842
    %v7875 = vunpack.c.l.b16 %v7843
    %v7876 = vpack.c.b16 %v7861, %v7860
    %v7877 = vpack.c.b16 %v7863, %v7862
    %v7878 = vpack.c.b16 %v7865, %v7864
    %v7879 = vpack.c.b16 %v7867, %v7866
    %v7880 = vpack.c.b16 %v7869, %v7868
    %v7881 = vpack.c.b16 %v7871, %v7870
    %v7882 = vpack.c.b16 %v7873, %v7872
    %v7883 = vpack.c.b16 %v7875, %v7874
    %7892 = vmatpush.bf16.msra.mxu0 %v7883
    %7893 = vmatpush.bf16.msra.mxu0 %v7882
    %7894 = vmatpush.bf16.msra.mxu0 %v7881
    %7895 = vmatpush.bf16.msra.mxu0 %v7880
    %7896 = vmatpush.bf16.msra.mxu0 %v7879
    %7897 = vmatpush.bf16.msra.mxu0 %v7878
    %7898 = vmatpush.bf16.msra.mxu0 %v7877
    %7899 = vmatpush.bf16.msra.mxu0 %v7876
    %7900 = vmatmul.bf16.gmra.mxu0 %v7804
    %v7901 = vpop.f32.mrf.mxu0
    %v7902 = vadd.f32 0.0, %v7901
    %v7903 = vpop.f32.mrf.mxu0
    %v7904 = vadd.f32 0.0, %v7903
    %7905 = vmatmul.bf16.gmra.mxu0 %v7807
    %v7906 = vpop.f32.mrf.mxu0
    %v7907 = vadd.f32 0.0, %v7906
    %v7908 = vpop.f32.mrf.mxu0
    %v7909 = vadd.f32 0.0, %v7908
    %7910 = vmatmul.bf16.gmra.mxu0 %v7810
    %v7911 = vpop.f32.mrf.mxu0
    %v7912 = vadd.f32 0.0, %v7911
    %v7913 = vpop.f32.mrf.mxu0
    %v7914 = vadd.f32 0.0, %v7913
    %7915 = vmatmul.bf16.gmra.mxu0 %v7813
    %v7916 = vpop.f32.mrf.mxu0
    %v7917 = vadd.f32 0.0, %v7916
    %v7918 = vpop.f32.mrf.mxu0
    %v7919 = vadd.f32 0.0, %v7918
    %7920 = vmatmul.bf16.gmra.mxu0 %v7816
    %v7921 = vpop.f32.mrf.mxu0
    %v7922 = vadd.f32 0.0, %v7921
    %v7923 = vpop.f32.mrf.mxu0
    %v7924 = vadd.f32 0.0, %v7923
    %7925 = vmatmul.bf16.gmra.mxu0 %v7819
    %v7926 = vpop.f32.mrf.mxu0
    %v7927 = vadd.f32 0.0, %v7926
    %v7928 = vpop.f32.mrf.mxu0
    %v7929 = vadd.f32 0.0, %v7928
    %7930 = vmatmul.bf16.gmra.mxu0 %v7822
    %v7931 = vpop.f32.mrf.mxu0
    %v7932 = vadd.f32 0.0, %v7931
    %v7933 = vpop.f32.mrf.mxu0
    %v7934 = vadd.f32 0.0, %v7933
    %7935 = vmatmul.bf16.gmra.mxu0 %v7825
    %v7936 = vpop.f32.mrf.mxu0
    %v7937 = vadd.f32 0.0, %v7936
    %v7938 = vpop.f32.mrf.mxu0
    %v7939 = vadd.f32 0.0, %v7938
    %7940 = vdwg.mxu0
    %v7941 = vadd.f32 %v5133, %v7902
    %v7942 = vadd.f32 %v5134, %v7904
    %v7943 = vadd.f32 %v5135, %v7907
    %v7944 = vadd.f32 %v5136, %v7909
    %v7945 = vadd.f32 %v5137, %v7912
    %v7946 = vadd.f32 %v5138, %v7914
    %v7947 = vadd.f32 %v5139, %v7917
    %v7948 = vadd.f32 %v5140, %v7919
    %v7949 = vadd.f32 %v5141, %v7922
    %v7950 = vadd.f32 %v5142, %v7924
    %v7951 = vadd.f32 %v5143, %v7927
    %v7952 = vadd.f32 %v5144, %v7929
    %v7953 = vadd.f32 %v5145, %v7932
    %v7954 = vadd.f32 %v5146, %v7934
    %v7955 = vadd.f32 %v5147, %v7937
    %v7956 = vadd.f32 %v5148, %v7939
    %s7957 = scalar_lea.vmem [#allocation11], 1
    %v7958 = vld [vmem:[%s7957] sm:$0x1]
    %v7960 = vperm.slane %v7958, 0
    %v7962 = vadd.f32 %v7941, %v7960
    %v7963 = vadd.f32 %v7942, %v7960
    %v7964 = vadd.f32 %v7943, %v7960
    %v7965 = vadd.f32 %v7944, %v7960
    %v7966 = vadd.f32 %v7945, %v7960
    %v7967 = vadd.f32 %v7946, %v7960
    %v7968 = vadd.f32 %v7947, %v7960
    %v7969 = vadd.f32 %v7948, %v7960
    %v7970 = vadd.f32 %v7949, %v7960
    %v7971 = vadd.f32 %v7950, %v7960
    %v7972 = vadd.f32 %v7951, %v7960
    %v7973 = vadd.f32 %v7952, %v7960
    %v7974 = vadd.f32 %v7953, %v7960
    %v7975 = vadd.f32 %v7954, %v7960
    %v7976 = vadd.f32 %v7955, %v7960
    %v7977 = vadd.f32 %v7956, %v7960
    %s7978 = scalar_lea.vmem [#allocation13], 1
    %v7979 = vld [vmem:[%s7978] sm:$0x1]
    %s7980 = scalar_lea.vmem [#allocation14], 1
    %v7981 = vld [vmem:[%s7980] sm:$0x1]
    %7982 = vadd.xlane.f32.xlu0 %v7962
    %v7983 = vpop.xlane.xlu0 %7982
    %7984 = vadd.xlane.f32.xlu0 %v7963
    %v7985 = vpop.xlane.xlu0 %7984
    %7986 = vadd.xlane.f32.xlu0 %v7964
    %v7987 = vpop.xlane.xlu0 %7986
    %7988 = vadd.xlane.f32.xlu0 %v7965
    %v7989 = vpop.xlane.xlu0 %7988
    %7990 = vadd.xlane.f32.xlu0 %v7966
    %v7991 = vpop.xlane.xlu0 %7990
    %7992 = vadd.xlane.f32.xlu0 %v7967
    %v7993 = vpop.xlane.xlu0 %7992
    %7994 = vadd.xlane.f32.xlu0 %v7968
    %v7995 = vpop.xlane.xlu0 %7994
    %7996 = vadd.xlane.f32.xlu0 %v7969
    %v7997 = vpop.xlane.xlu0 %7996
    %7998 = vadd.xlane.f32.xlu0 %v7970
    %v7999 = vpop.xlane.xlu0 %7998
    %8000 = vadd.xlane.f32.xlu0 %v7971
    %v8001 = vpop.xlane.xlu0 %8000
    %8002 = vadd.xlane.f32.xlu0 %v7972
    %v8003 = vpop.xlane.xlu0 %8002
    %8004 = vadd.xlane.f32.xlu0 %v7973
    %v8005 = vpop.xlane.xlu0 %8004
    %8006 = vadd.xlane.f32.xlu0 %v7974
    %v8007 = vpop.xlane.xlu0 %8006
    %8008 = vadd.xlane.f32.xlu0 %v7975
    %v8009 = vpop.xlane.xlu0 %8008
    %8010 = vadd.xlane.f32.xlu0 %v7976
    %v8011 = vpop.xlane.xlu0 %8010
    %8012 = vadd.xlane.f32.xlu0 %v7977
    %v8013 = vpop.xlane.xlu0 %8012
    %v8014 = vmul.f32 %v7983, %v973
    %v8015 = vmul.f32 %v7985, %v973
    %v8016 = vmul.f32 %v7987, %v973
    %v8017 = vmul.f32 %v7989, %v973
    %v8018 = vmul.f32 %v7991, %v973
    %v8019 = vmul.f32 %v7993, %v973
    %v8020 = vmul.f32 %v7995, %v973
    %v8021 = vmul.f32 %v7997, %v973
    %v8022 = vmul.f32 %v7999, %v973
    %v8023 = vmul.f32 %v8001, %v973
    %v8024 = vmul.f32 %v8003, %v973
    %v8025 = vmul.f32 %v8005, %v973
    %v8026 = vmul.f32 %v8007, %v973
    %v8027 = vmul.f32 %v8009, %v973
    %v8028 = vmul.f32 %v8011, %v973
    %v8029 = vmul.f32 %v8013, %v973
    %v8030 = vmul.f32 %v7962, %v7962
    %v8031 = vmul.f32 %v7963, %v7963
    %v8032 = vmul.f32 %v7964, %v7964
    %v8033 = vmul.f32 %v7965, %v7965
    %v8034 = vmul.f32 %v7966, %v7966
    %v8035 = vmul.f32 %v7967, %v7967
    %v8036 = vmul.f32 %v7968, %v7968
    %v8037 = vmul.f32 %v7969, %v7969
    %v8038 = vmul.f32 %v7970, %v7970
    %v8039 = vmul.f32 %v7971, %v7971
    %v8040 = vmul.f32 %v7972, %v7972
    %v8041 = vmul.f32 %v7973, %v7973
    %v8042 = vmul.f32 %v7974, %v7974
    %v8043 = vmul.f32 %v7975, %v7975
    %v8044 = vmul.f32 %v7976, %v7976
    %v8045 = vmul.f32 %v7977, %v7977
    %8046 = vadd.xlane.f32.xlu0 %v8030
    %v8047 = vpop.xlane.xlu0 %8046
    %8048 = vadd.xlane.f32.xlu0 %v8031
    %v8049 = vpop.xlane.xlu0 %8048
    %8050 = vadd.xlane.f32.xlu0 %v8032
    %v8051 = vpop.xlane.xlu0 %8050
    %8052 = vadd.xlane.f32.xlu0 %v8033
    %v8053 = vpop.xlane.xlu0 %8052
    %8054 = vadd.xlane.f32.xlu0 %v8034
    %v8055 = vpop.xlane.xlu0 %8054
    %8056 = vadd.xlane.f32.xlu0 %v8035
    %v8057 = vpop.xlane.xlu0 %8056
    %8058 = vadd.xlane.f32.xlu0 %v8036
    %v8059 = vpop.xlane.xlu0 %8058
    %8060 = vadd.xlane.f32.xlu0 %v8037
    %v8061 = vpop.xlane.xlu0 %8060
    %8062 = vadd.xlane.f32.xlu0 %v8038
    %v8063 = vpop.xlane.xlu0 %8062
    %8064 = vadd.xlane.f32.xlu0 %v8039
    %v8065 = vpop.xlane.xlu0 %8064
    %8066 = vadd.xlane.f32.xlu0 %v8040
    %v8067 = vpop.xlane.xlu0 %8066
    %8068 = vadd.xlane.f32.xlu0 %v8041
    %v8069 = vpop.xlane.xlu0 %8068
    %8070 = vadd.xlane.f32.xlu0 %v8042
    %v8071 = vpop.xlane.xlu0 %8070
    %8072 = vadd.xlane.f32.xlu0 %v8043
    %v8073 = vpop.xlane.xlu0 %8072
    %8074 = vadd.xlane.f32.xlu0 %v8044
    %v8075 = vpop.xlane.xlu0 %8074
    %8076 = vadd.xlane.f32.xlu0 %v8045
    %v8077 = vpop.xlane.xlu0 %8076
    %v8078 = vmul.f32 %v8047, %v973
    %v8079 = vmul.f32 %v8049, %v973
    %v8080 = vmul.f32 %v8051, %v973
    %v8081 = vmul.f32 %v8053, %v973
    %v8082 = vmul.f32 %v8055, %v973
    %v8083 = vmul.f32 %v8057, %v973
    %v8084 = vmul.f32 %v8059, %v973
    %v8085 = vmul.f32 %v8061, %v973
    %v8086 = vmul.f32 %v8063, %v973
    %v8087 = vmul.f32 %v8065, %v973
    %v8088 = vmul.f32 %v8067, %v973
    %v8089 = vmul.f32 %v8069, %v973
    %v8090 = vmul.f32 %v8071, %v973
    %v8091 = vmul.f32 %v8073, %v973
    %v8092 = vmul.f32 %v8075, %v973
    %v8093 = vmul.f32 %v8077, %v973
    %v8094 = vmul.f32 %v8014, %v8014
    %v8095 = vmul.f32 %v8015, %v8015
    %v8096 = vmul.f32 %v8016, %v8016
    %v8097 = vmul.f32 %v8017, %v8017
    %v8098 = vmul.f32 %v8018, %v8018
    %v8099 = vmul.f32 %v8019, %v8019
    %v8100 = vmul.f32 %v8020, %v8020
    %v8101 = vmul.f32 %v8021, %v8021
    %v8102 = vmul.f32 %v8022, %v8022
    %v8103 = vmul.f32 %v8023, %v8023
    %v8104 = vmul.f32 %v8024, %v8024
    %v8105 = vmul.f32 %v8025, %v8025
    %v8106 = vmul.f32 %v8026, %v8026
    %v8107 = vmul.f32 %v8027, %v8027
    %v8108 = vmul.f32 %v8028, %v8028
    %v8109 = vmul.f32 %v8029, %v8029
    %v8110 = vsub.f32 %v8078, %v8094
    %v8111 = vsub.f32 %v8079, %v8095
    %v8112 = vsub.f32 %v8080, %v8096
    %v8113 = vsub.f32 %v8081, %v8097
    %v8114 = vsub.f32 %v8082, %v8098
    %v8115 = vsub.f32 %v8083, %v8099
    %v8116 = vsub.f32 %v8084, %v8100
    %v8117 = vsub.f32 %v8085, %v8101
    %v8118 = vsub.f32 %v8086, %v8102
    %v8119 = vsub.f32 %v8087, %v8103
    %v8120 = vsub.f32 %v8088, %v8104
    %v8121 = vsub.f32 %v8089, %v8105
    %v8122 = vsub.f32 %v8090, %v8106
    %v8123 = vsub.f32 %v8091, %v8107
    %v8124 = vsub.f32 %v8092, %v8108
    %v8125 = vsub.f32 %v8093, %v8109
    %v8126 = vsub.f32 %v7962, %v8014
    %v8127 = vsub.f32 %v7963, %v8015
    %v8128 = vsub.f32 %v7964, %v8016
    %v8129 = vsub.f32 %v7965, %v8017
    %v8130 = vsub.f32 %v7966, %v8018
    %v8131 = vsub.f32 %v7967, %v8019
    %v8132 = vsub.f32 %v7968, %v8020
    %v8133 = vsub.f32 %v7969, %v8021
    %v8134 = vsub.f32 %v7970, %v8022
    %v8135 = vsub.f32 %v7971, %v8023
    %v8136 = vsub.f32 %v7972, %v8024
    %v8137 = vsub.f32 %v7973, %v8025
    %v8138 = vsub.f32 %v7974, %v8026
    %v8139 = vsub.f32 %v7975, %v8027
    %v8140 = vsub.f32 %v7976, %v8028
    %v8141 = vsub.f32 %v7977, %v8029
    %v8142 = vadd.f32 %v8110, 1e-05
    %v8143 = vadd.f32 %v8111, 1e-05
    %v8144 = vadd.f32 %v8112, 1e-05
    %v8145 = vadd.f32 %v8113, 1e-05
    %v8146 = vadd.f32 %v8114, 1e-05
    %v8147 = vadd.f32 %v8115, 1e-05
    %v8148 = vadd.f32 %v8116, 1e-05
    %v8149 = vadd.f32 %v8117, 1e-05
    %v8150 = vadd.f32 %v8118, 1e-05
    %v8151 = vadd.f32 %v8119, 1e-05
    %v8152 = vadd.f32 %v8120, 1e-05
    %v8153 = vadd.f32 %v8121, 1e-05
    %v8154 = vadd.f32 %v8122, 1e-05
    %v8155 = vadd.f32 %v8123, 1e-05
    %v8156 = vadd.f32 %v8124, 1e-05
    %v8157 = vadd.f32 %v8125, 1e-05
    %v8158 = vrsqrt.pop %v8142
    %v8159 = vmul.f32 %v8158, %v8142
    %v8160 = vmul.f32 %v8159, %v8158
    %v8161 = vmul.f32 0.5, %v8160
    %v8162 = vsub.f32 1.5, %v8161
    %v8163 = vmul.f32 %v8158, %v8162
    %vm8164 = vweird.f32 %v8142
    %vm8165 = vweird.f32 %v8158
    %vm8166 = vmor %vm8164, %vm8165
    %v8167 = vsel %vm8166, %v8158, %v8163
    %v8168 = vrsqrt.pop %v8143
    %v8169 = vmul.f32 %v8168, %v8143
    %v8170 = vmul.f32 %v8169, %v8168
    %v8171 = vmul.f32 0.5, %v8170
    %v8172 = vsub.f32 1.5, %v8171
    %v8173 = vmul.f32 %v8168, %v8172
    %vm8174 = vweird.f32 %v8143
    %vm8175 = vweird.f32 %v8168
    %vm8176 = vmor %vm8174, %vm8175
    %v8177 = vsel %vm8176, %v8168, %v8173
    %v8178 = vrsqrt.pop %v8144
    %v8179 = vmul.f32 %v8178, %v8144
    %v8180 = vmul.f32 %v8179, %v8178
    %v8181 = vmul.f32 0.5, %v8180
    %v8182 = vsub.f32 1.5, %v8181
    %v8183 = vmul.f32 %v8178, %v8182
    %vm8184 = vweird.f32 %v8144
    %vm8185 = vweird.f32 %v8178
    %vm8186 = vmor %vm8184, %vm8185
    %v8187 = vsel %vm8186, %v8178, %v8183
    %v8188 = vrsqrt.pop %v8145
    %v8189 = vmul.f32 %v8188, %v8145
    %v8190 = vmul.f32 %v8189, %v8188
    %v8191 = vmul.f32 0.5, %v8190
    %v8192 = vsub.f32 1.5, %v8191
    %v8193 = vmul.f32 %v8188, %v8192
    %vm8194 = vweird.f32 %v8145
    %vm8195 = vweird.f32 %v8188
    %vm8196 = vmor %vm8194, %vm8195
    %v8197 = vsel %vm8196, %v8188, %v8193
    %v8198 = vrsqrt.pop %v8146
    %v8199 = vmul.f32 %v8198, %v8146
    %v8200 = vmul.f32 %v8199, %v8198
    %v8201 = vmul.f32 0.5, %v8200
    %v8202 = vsub.f32 1.5, %v8201
    %v8203 = vmul.f32 %v8198, %v8202
    %vm8204 = vweird.f32 %v8146
    %vm8205 = vweird.f32 %v8198
    %vm8206 = vmor %vm8204, %vm8205
    %v8207 = vsel %vm8206, %v8198, %v8203
    %v8208 = vrsqrt.pop %v8147
    %v8209 = vmul.f32 %v8208, %v8147
    %v8210 = vmul.f32 %v8209, %v8208
    %v8211 = vmul.f32 0.5, %v8210
    %v8212 = vsub.f32 1.5, %v8211
    %v8213 = vmul.f32 %v8208, %v8212
    %vm8214 = vweird.f32 %v8147
    %vm8215 = vweird.f32 %v8208
    %vm8216 = vmor %vm8214, %vm8215
    %v8217 = vsel %vm8216, %v8208, %v8213
    %v8218 = vrsqrt.pop %v8148
    %v8219 = vmul.f32 %v8218, %v8148
    %v8220 = vmul.f32 %v8219, %v8218
    %v8221 = vmul.f32 0.5, %v8220
    %v8222 = vsub.f32 1.5, %v8221
    %v8223 = vmul.f32 %v8218, %v8222
    %vm8224 = vweird.f32 %v8148
    %vm8225 = vweird.f32 %v8218
    %vm8226 = vmor %vm8224, %vm8225
    %v8227 = vsel %vm8226, %v8218, %v8223
    %v8228 = vrsqrt.pop %v8149
    %v8229 = vmul.f32 %v8228, %v8149
    %v8230 = vmul.f32 %v8229, %v8228
    %v8231 = vmul.f32 0.5, %v8230
    %v8232 = vsub.f32 1.5, %v8231
    %v8233 = vmul.f32 %v8228, %v8232
    %vm8234 = vweird.f32 %v8149
    %vm8235 = vweird.f32 %v8228
    %vm8236 = vmor %vm8234, %vm8235
    %v8237 = vsel %vm8236, %v8228, %v8233
    %v8238 = vrsqrt.pop %v8150
    %v8239 = vmul.f32 %v8238, %v8150
    %v8240 = vmul.f32 %v8239, %v8238
    %v8241 = vmul.f32 0.5, %v8240
    %v8242 = vsub.f32 1.5, %v8241
    %v8243 = vmul.f32 %v8238, %v8242
    %vm8244 = vweird.f32 %v8150
    %vm8245 = vweird.f32 %v8238
    %vm8246 = vmor %vm8244, %vm8245
    %v8247 = vsel %vm8246, %v8238, %v8243
    %v8248 = vrsqrt.pop %v8151
    %v8249 = vmul.f32 %v8248, %v8151
    %v8250 = vmul.f32 %v8249, %v8248
    %v8251 = vmul.f32 0.5, %v8250
    %v8252 = vsub.f32 1.5, %v8251
    %v8253 = vmul.f32 %v8248, %v8252
    %vm8254 = vweird.f32 %v8151
    %vm8255 = vweird.f32 %v8248
    %vm8256 = vmor %vm8254, %vm8255
    %v8257 = vsel %vm8256, %v8248, %v8253
    %v8258 = vrsqrt.pop %v8152
    %v8259 = vmul.f32 %v8258, %v8152
    %v8260 = vmul.f32 %v8259, %v8258
    %v8261 = vmul.f32 0.5, %v8260
    %v8262 = vsub.f32 1.5, %v8261
    %v8263 = vmul.f32 %v8258, %v8262
    %vm8264 = vweird.f32 %v8152
    %vm8265 = vweird.f32 %v8258
    %vm8266 = vmor %vm8264, %vm8265
    %v8267 = vsel %vm8266, %v8258, %v8263
    %v8268 = vrsqrt.pop %v8153
    %v8269 = vmul.f32 %v8268, %v8153
    %v8270 = vmul.f32 %v8269, %v8268
    %v8271 = vmul.f32 0.5, %v8270
    %v8272 = vsub.f32 1.5, %v8271
    %v8273 = vmul.f32 %v8268, %v8272
    %vm8274 = vweird.f32 %v8153
    %vm8275 = vweird.f32 %v8268
    %vm8276 = vmor %vm8274, %vm8275
    %v8277 = vsel %vm8276, %v8268, %v8273
    %v8278 = vrsqrt.pop %v8154
    %v8279 = vmul.f32 %v8278, %v8154
    %v8280 = vmul.f32 %v8279, %v8278
    %v8281 = vmul.f32 0.5, %v8280
    %v8282 = vsub.f32 1.5, %v8281
    %v8283 = vmul.f32 %v8278, %v8282
    %vm8284 = vweird.f32 %v8154
    %vm8285 = vweird.f32 %v8278
    %vm8286 = vmor %vm8284, %vm8285
    %v8287 = vsel %vm8286, %v8278, %v8283
    %v8288 = vrsqrt.pop %v8155
    %v8289 = vmul.f32 %v8288, %v8155
    %v8290 = vmul.f32 %v8289, %v8288
    %v8291 = vmul.f32 0.5, %v8290
    %v8292 = vsub.f32 1.5, %v8291
    %v8293 = vmul.f32 %v8288, %v8292
    %vm8294 = vweird.f32 %v8155
    %vm8295 = vweird.f32 %v8288
    %vm8296 = vmor %vm8294, %vm8295
    %v8297 = vsel %vm8296, %v8288, %v8293
    %v8298 = vrsqrt.pop %v8156
    %v8299 = vmul.f32 %v8298, %v8156
    %v8300 = vmul.f32 %v8299, %v8298
    %v8301 = vmul.f32 0.5, %v8300
    %v8302 = vsub.f32 1.5, %v8301
    %v8303 = vmul.f32 %v8298, %v8302
    %vm8304 = vweird.f32 %v8156
    %vm8305 = vweird.f32 %v8298
    %vm8306 = vmor %vm8304, %vm8305
    %v8307 = vsel %vm8306, %v8298, %v8303
    %v8308 = vrsqrt.pop %v8157
    %v8309 = vmul.f32 %v8308, %v8157
    %v8310 = vmul.f32 %v8309, %v8308
    %v8311 = vmul.f32 0.5, %v8310
    %v8312 = vsub.f32 1.5, %v8311
    %v8313 = vmul.f32 %v8308, %v8312
    %vm8314 = vweird.f32 %v8157
    %vm8315 = vweird.f32 %v8308
    %vm8316 = vmor %vm8314, %vm8315
    %v8317 = vsel %vm8316, %v8308, %v8313
    %v8318 = vmul.f32 %v8126, %v8167
    %v8319 = vmul.f32 %v8127, %v8177
    %v8320 = vmul.f32 %v8128, %v8187
    %v8321 = vmul.f32 %v8129, %v8197
    %v8322 = vmul.f32 %v8130, %v8207
    %v8323 = vmul.f32 %v8131, %v8217
    %v8324 = vmul.f32 %v8132, %v8227
    %v8325 = vmul.f32 %v8133, %v8237
    %v8326 = vmul.f32 %v8134, %v8247
    %v8327 = vmul.f32 %v8135, %v8257
    %v8328 = vmul.f32 %v8136, %v8267
    %v8329 = vmul.f32 %v8137, %v8277
    %v8330 = vmul.f32 %v8138, %v8287
    %v8331 = vmul.f32 %v8139, %v8297
    %v8332 = vmul.f32 %v8140, %v8307
    %v8333 = vmul.f32 %v8141, %v8317
    %v8335 = vperm.slane %v7979, 0
    %v8337 = vmul.f32 %v8318, %v8335
    %v8338 = vmul.f32 %v8319, %v8335
    %v8339 = vmul.f32 %v8320, %v8335
    %v8340 = vmul.f32 %v8321, %v8335
    %v8341 = vmul.f32 %v8322, %v8335
    %v8342 = vmul.f32 %v8323, %v8335
    %v8343 = vmul.f32 %v8324, %v8335
    %v8344 = vmul.f32 %v8325, %v8335
    %v8345 = vmul.f32 %v8326, %v8335
    %v8346 = vmul.f32 %v8327, %v8335
    %v8347 = vmul.f32 %v8328, %v8335
    %v8348 = vmul.f32 %v8329, %v8335
    %v8349 = vmul.f32 %v8330, %v8335
    %v8350 = vmul.f32 %v8331, %v8335
    %v8351 = vmul.f32 %v8332, %v8335
    %v8352 = vmul.f32 %v8333, %v8335
    %v8354 = vperm.slane %v7981, 0
    %v8356 = vadd.f32 %v8337, %v8354
    %v8357 = vadd.f32 %v8338, %v8354
    %v8358 = vadd.f32 %v8339, %v8354
    %v8359 = vadd.f32 %v8340, %v8354
    %v8360 = vadd.f32 %v8341, %v8354
    %v8361 = vadd.f32 %v8342, %v8354
    %v8362 = vadd.f32 %v8343, %v8354
    %v8363 = vadd.f32 %v8344, %v8354
    %v8364 = vadd.f32 %v8345, %v8354
    %v8365 = vadd.f32 %v8346, %v8354
    %v8366 = vadd.f32 %v8347, %v8354
    %v8367 = vadd.f32 %v8348, %v8354
    %v8368 = vadd.f32 %v8349, %v8354
    %v8369 = vadd.f32 %v8350, %v8354
    %v8370 = vadd.f32 %v8351, %v8354
    %v8371 = vadd.f32 %v8352, %v8354
    %s8372 = scalar_lea.vmem [#allocation16], 256
    %v8373 = vld [vmem:[%s8372] sm:$0xff]
    %v8374 = vld [vmem:[%s8372 + $0x8] sm:$0xff]
    %v8375 = vld [vmem:[%s8372 + $0x10] sm:$0xff]
    %v8376 = vld [vmem:[%s8372 + $0x18] sm:$0xff]
    %v8377 = vld [vmem:[%s8372 + $0x20] sm:$0xff]
    %v8378 = vld [vmem:[%s8372 + $0x28] sm:$0xff]
    %v8379 = vld [vmem:[%s8372 + $0x30] sm:$0xff]
    %v8380 = vld [vmem:[%s8372 + $0x38] sm:$0xff]
    %v8381 = vld [vmem:[%s8372 + $0x40] sm:$0xff]
    %v8382 = vld [vmem:[%s8372 + $0x48] sm:$0xff]
    %v8383 = vld [vmem:[%s8372 + $0x50] sm:$0xff]
    %v8384 = vld [vmem:[%s8372 + $0x58] sm:$0xff]
    %v8385 = vld [vmem:[%s8372 + $0x60] sm:$0xff]
    %v8386 = vld [vmem:[%s8372 + $0x68] sm:$0xff]
    %v8387 = vld [vmem:[%s8372 + $0x70] sm:$0xff]
    %v8388 = vld [vmem:[%s8372 + $0x78] sm:$0xff]
    %v8389 = vld [vmem:[%s8372 + $0x80] sm:$0xff]
    %v8390 = vld [vmem:[%s8372 + $0x88] sm:$0xff]
    %v8391 = vld [vmem:[%s8372 + $0x90] sm:$0xff]
    %v8392 = vld [vmem:[%s8372 + $0x98] sm:$0xff]
    %v8393 = vld [vmem:[%s8372 + $0xa0] sm:$0xff]
    %v8394 = vld [vmem:[%s8372 + $0xa8] sm:$0xff]
    %v8395 = vld [vmem:[%s8372 + $0xb0] sm:$0xff]
    %v8396 = vld [vmem:[%s8372 + $0xb8] sm:$0xff]
    %v8397 = vld [vmem:[%s8372 + $0xc0] sm:$0xff]
    %v8398 = vld [vmem:[%s8372 + $0xc8] sm:$0xff]
    %v8399 = vld [vmem:[%s8372 + $0xd0] sm:$0xff]
    %v8400 = vld [vmem:[%s8372 + $0xd8] sm:$0xff]
    %v8401 = vld [vmem:[%s8372 + $0xe0] sm:$0xff]
    %v8402 = vld [vmem:[%s8372 + $0xe8] sm:$0xff]
    %v8403 = vld [vmem:[%s8372 + $0xf0] sm:$0xff]
    %v8404 = vld [vmem:[%s8372 + $0xf8] sm:$0xff]
    %v8405 = vpack.c.bf16 %v8357, %v8356
    %v8406 = vpack.c.bf16 %v8359, %v8358
    %v8407 = vpack.c.bf16 %v8361, %v8360
    %v8408 = vpack.c.bf16 %v8363, %v8362
    %v8409 = vpack.c.bf16 %v8365, %v8364
    %v8410 = vpack.c.bf16 %v8367, %v8366
    %v8411 = vpack.c.bf16 %v8369, %v8368
    %v8412 = vpack.c.bf16 %v8371, %v8370
    %s8413 = scalar_lea.vmem %s11, 4
    %v8414 = vld [vmem:[%s8413] sm:$0xf]
    %v8416 = vperm.slane %v8414, 0
    %v8417 = vperm.slane %v8414, 1
    %v8418 = vperm.slane %v8414, 2
    %v8419 = vperm.slane %v8414, 3
    %v8456 = vunpack.c.l.b16 %v8373
    %v8457 = vunpack.c.h.b16 %v8373
    %v8458 = vunpack.c.l.b16 %v8374
    %v8459 = vunpack.c.h.b16 %v8374
    %v8460 = vunpack.c.l.b16 %v8375
    %v8461 = vunpack.c.h.b16 %v8375
    %v8462 = vunpack.c.l.b16 %v8376
    %v8463 = vunpack.c.h.b16 %v8376
    %v8464 = vunpack.c.l.b16 %v8377
    %v8465 = vunpack.c.h.b16 %v8377
    %v8466 = vunpack.c.l.b16 %v8378
    %v8467 = vunpack.c.h.b16 %v8378
    %v8468 = vunpack.c.l.b16 %v8379
    %v8469 = vunpack.c.h.b16 %v8379
    %v8470 = vunpack.c.l.b16 %v8380
    %v8471 = vunpack.c.h.b16 %v8380
    %v8472 = vunpack.c.l.b16 %v8381
    %v8473 = vunpack.c.h.b16 %v8381
    %v8474 = vunpack.c.l.b16 %v8382
    %v8475 = vunpack.c.h.b16 %v8382
    %v8476 = vunpack.c.l.b16 %v8383
    %v8477 = vunpack.c.h.b16 %v8383
    %v8478 = vunpack.c.l.b16 %v8384
    %v8479 = vunpack.c.h.b16 %v8384
    %v8480 = vunpack.c.l.b16 %v8385
    %v8481 = vunpack.c.h.b16 %v8385
    %v8482 = vunpack.c.l.b16 %v8386
    %v8483 = vunpack.c.h.b16 %v8386
    %v8484 = vunpack.c.l.b16 %v8387
    %v8485 = vunpack.c.h.b16 %v8387
    %v8486 = vunpack.c.l.b16 %v8388
    %v8487 = vunpack.c.h.b16 %v8388
    %v8488 = vunpack.c.l.b16 %v8389
    %v8489 = vunpack.c.h.b16 %v8389
    %v8490 = vunpack.c.l.b16 %v8390
    %v8491 = vunpack.c.h.b16 %v8390
    %v8492 = vunpack.c.l.b16 %v8391
    %v8493 = vunpack.c.h.b16 %v8391
    %v8494 = vunpack.c.l.b16 %v8392
    %v8495 = vunpack.c.h.b16 %v8392
    %v8496 = vunpack.c.l.b16 %v8393
    %v8497 = vunpack.c.h.b16 %v8393
    %v8498 = vunpack.c.l.b16 %v8394
    %v8499 = vunpack.c.h.b16 %v8394
    %v8500 = vunpack.c.l.b16 %v8395
    %v8501 = vunpack.c.h.b16 %v8395
    %v8502 = vunpack.c.l.b16 %v8396
    %v8503 = vunpack.c.h.b16 %v8396
    %v8504 = vunpack.c.l.b16 %v8397
    %v8505 = vunpack.c.h.b16 %v8397
    %v8506 = vunpack.c.l.b16 %v8398
    %v8507 = vunpack.c.h.b16 %v8398
    %v8508 = vunpack.c.l.b16 %v8399
    %v8509 = vunpack.c.h.b16 %v8399
    %v8510 = vunpack.c.l.b16 %v8400
    %v8511 = vunpack.c.h.b16 %v8400
    %v8512 = vunpack.c.l.b16 %v8401
    %v8513 = vunpack.c.h.b16 %v8401
    %v8514 = vunpack.c.l.b16 %v8402
    %v8515 = vunpack.c.h.b16 %v8402
    %v8516 = vunpack.c.l.b16 %v8403
    %v8517 = vunpack.c.h.b16 %v8403
    %v8518 = vunpack.c.l.b16 %v8404
    %v8519 = vunpack.c.h.b16 %v8404
    %v8520 = vpack.c.b16 %v8460, %v8456
    %v8521 = vpack.c.b16 %v8461, %v8457
    %v8522 = vpack.c.b16 %v8462, %v8458
    %v8523 = vpack.c.b16 %v8463, %v8459
    %v8524 = vpack.c.b16 %v8468, %v8464
    %v8525 = vpack.c.b16 %v8469, %v8465
    %v8526 = vpack.c.b16 %v8470, %v8466
    %v8527 = vpack.c.b16 %v8471, %v8467
    %v8528 = vpack.c.b16 %v8476, %v8472
    %v8529 = vpack.c.b16 %v8477, %v8473
    %v8530 = vpack.c.b16 %v8478, %v8474
    %v8531 = vpack.c.b16 %v8479, %v8475
    %v8532 = vpack.c.b16 %v8484, %v8480
    %v8533 = vpack.c.b16 %v8485, %v8481
    %v8534 = vpack.c.b16 %v8486, %v8482
    %v8535 = vpack.c.b16 %v8487, %v8483
    %v8536 = vpack.c.b16 %v8492, %v8488
    %v8537 = vpack.c.b16 %v8493, %v8489
    %v8538 = vpack.c.b16 %v8494, %v8490
    %v8539 = vpack.c.b16 %v8495, %v8491
    %v8540 = vpack.c.b16 %v8500, %v8496
    %v8541 = vpack.c.b16 %v8501, %v8497
    %v8542 = vpack.c.b16 %v8502, %v8498
    %v8543 = vpack.c.b16 %v8503, %v8499
    %v8544 = vpack.c.b16 %v8508, %v8504
    %v8545 = vpack.c.b16 %v8509, %v8505
    %v8546 = vpack.c.b16 %v8510, %v8506
    %v8547 = vpack.c.b16 %v8511, %v8507
    %v8548 = vpack.c.b16 %v8516, %v8512
    %v8549 = vpack.c.b16 %v8517, %v8513
    %v8550 = vpack.c.b16 %v8518, %v8514
    %v8551 = vpack.c.b16 %v8519, %v8515
    %8584 = vmatpush.bf16.msra.mxu0 %v8548
    %8585 = vmatpush.bf16.msra.mxu0 %v8544
    %8586 = vmatpush.bf16.msra.mxu0 %v8540
    %8587 = vmatpush.bf16.msra.mxu0 %v8536
    %8588 = vmatpush.bf16.msra.mxu0 %v8532
    %8589 = vmatpush.bf16.msra.mxu0 %v8528
    %8590 = vmatpush.bf16.msra.mxu0 %v8524
    %8591 = vmatpush.bf16.msra.mxu0 %v8520
    %8592 = vmatmul.bf16.gmra.mxu0 %v8405
    %v8593 = vpop.f32.mrf.mxu0
    %v8594 = vadd.f32 %v8416, %v8593
    %v8595 = vpop.f32.mrf.mxu0
    %v8596 = vadd.f32 %v8416, %v8595
    %8597 = vmatmul.bf16.gmra.mxu0 %v8406
    %v8598 = vpop.f32.mrf.mxu0
    %v8599 = vadd.f32 %v8416, %v8598
    %v8600 = vpop.f32.mrf.mxu0
    %v8601 = vadd.f32 %v8416, %v8600
    %8602 = vmatmul.bf16.gmra.mxu0 %v8407
    %v8603 = vpop.f32.mrf.mxu0
    %v8604 = vadd.f32 %v8416, %v8603
    %v8605 = vpop.f32.mrf.mxu0
    %v8606 = vadd.f32 %v8416, %v8605
    %8607 = vmatmul.bf16.gmra.mxu0 %v8408
    %v8608 = vpop.f32.mrf.mxu0
    %v8609 = vadd.f32 %v8416, %v8608
    %v8610 = vpop.f32.mrf.mxu0
    %v8611 = vadd.f32 %v8416, %v8610
    %8612 = vmatmul.bf16.gmra.mxu0 %v8409
    %v8613 = vpop.f32.mrf.mxu0
    %v8614 = vadd.f32 %v8416, %v8613
    %v8615 = vpop.f32.mrf.mxu0
    %v8616 = vadd.f32 %v8416, %v8615
    %8617 = vmatmul.bf16.gmra.mxu0 %v8410
    %v8618 = vpop.f32.mrf.mxu0
    %v8619 = vadd.f32 %v8416, %v8618
    %v8620 = vpop.f32.mrf.mxu0
    %v8621 = vadd.f32 %v8416, %v8620
    %8622 = vmatmul.bf16.gmra.mxu0 %v8411
    %v8623 = vpop.f32.mrf.mxu0
    %v8624 = vadd.f32 %v8416, %v8623
    %v8625 = vpop.f32.mrf.mxu0
    %v8626 = vadd.f32 %v8416, %v8625
    %8627 = vmatmul.bf16.gmra.mxu0 %v8412
    %v8628 = vpop.f32.mrf.mxu0
    %v8629 = vadd.f32 %v8416, %v8628
    %v8630 = vpop.f32.mrf.mxu0
    %v8631 = vadd.f32 %v8416, %v8630
    %8632 = vdwg.mxu0
    %8633 = vmatpush.bf16.msra.mxu0 %v8549
    %8634 = vmatpush.bf16.msra.mxu0 %v8545
    %8635 = vmatpush.bf16.msra.mxu0 %v8541
    %8636 = vmatpush.bf16.msra.mxu0 %v8537
    %8637 = vmatpush.bf16.msra.mxu0 %v8533
    %8638 = vmatpush.bf16.msra.mxu0 %v8529
    %8639 = vmatpush.bf16.msra.mxu0 %v8525
    %8640 = vmatpush.bf16.msra.mxu0 %v8521
    %8641 = vmatmul.bf16.gmra.mxu0 %v8405
    %v8642 = vpop.f32.mrf.mxu0
    %v8643 = vadd.f32 %v8417, %v8642
    %v8644 = vpop.f32.mrf.mxu0
    %v8645 = vadd.f32 %v8417, %v8644
    %8646 = vmatmul.bf16.gmra.mxu0 %v8406
    %v8647 = vpop.f32.mrf.mxu0
    %v8648 = vadd.f32 %v8417, %v8647
    %v8649 = vpop.f32.mrf.mxu0
    %v8650 = vadd.f32 %v8417, %v8649
    %8651 = vmatmul.bf16.gmra.mxu0 %v8407
    %v8652 = vpop.f32.mrf.mxu0
    %v8653 = vadd.f32 %v8417, %v8652
    %v8654 = vpop.f32.mrf.mxu0
    %v8655 = vadd.f32 %v8417, %v8654
    %8656 = vmatmul.bf16.gmra.mxu0 %v8408
    %v8657 = vpop.f32.mrf.mxu0
    %v8658 = vadd.f32 %v8417, %v8657
    %v8659 = vpop.f32.mrf.mxu0
    %v8660 = vadd.f32 %v8417, %v8659
    %8661 = vmatmul.bf16.gmra.mxu0 %v8409
    %v8662 = vpop.f32.mrf.mxu0
    %v8663 = vadd.f32 %v8417, %v8662
    %v8664 = vpop.f32.mrf.mxu0
    %v8665 = vadd.f32 %v8417, %v8664
    %8666 = vmatmul.bf16.gmra.mxu0 %v8410
    %v8667 = vpop.f32.mrf.mxu0
    %v8668 = vadd.f32 %v8417, %v8667
    %v8669 = vpop.f32.mrf.mxu0
    %v8670 = vadd.f32 %v8417, %v8669
    %8671 = vmatmul.bf16.gmra.mxu0 %v8411
    %v8672 = vpop.f32.mrf.mxu0
    %v8673 = vadd.f32 %v8417, %v8672
    %v8674 = vpop.f32.mrf.mxu0
    %v8675 = vadd.f32 %v8417, %v8674
    %8676 = vmatmul.bf16.gmra.mxu0 %v8412
    %v8677 = vpop.f32.mrf.mxu0
    %v8678 = vadd.f32 %v8417, %v8677
    %v8679 = vpop.f32.mrf.mxu0
    %v8680 = vadd.f32 %v8417, %v8679
    %8681 = vdwg.mxu0
    %8682 = vmatpush.bf16.msra.mxu0 %v8550
    %8683 = vmatpush.bf16.msra.mxu0 %v8546
    %8684 = vmatpush.bf16.msra.mxu0 %v8542
    %8685 = vmatpush.bf16.msra.mxu0 %v8538
    %8686 = vmatpush.bf16.msra.mxu0 %v8534
    %8687 = vmatpush.bf16.msra.mxu0 %v8530
    %8688 = vmatpush.bf16.msra.mxu0 %v8526
    %8689 = vmatpush.bf16.msra.mxu0 %v8522
    %8690 = vmatmul.bf16.gmra.mxu0 %v8405
    %v8691 = vpop.f32.mrf.mxu0
    %v8692 = vadd.f32 %v8418, %v8691
    %v8693 = vpop.f32.mrf.mxu0
    %v8694 = vadd.f32 %v8418, %v8693
    %8695 = vmatmul.bf16.gmra.mxu0 %v8406
    %v8696 = vpop.f32.mrf.mxu0
    %v8697 = vadd.f32 %v8418, %v8696
    %v8698 = vpop.f32.mrf.mxu0
    %v8699 = vadd.f32 %v8418, %v8698
    %8700 = vmatmul.bf16.gmra.mxu0 %v8407
    %v8701 = vpop.f32.mrf.mxu0
    %v8702 = vadd.f32 %v8418, %v8701
    %v8703 = vpop.f32.mrf.mxu0
    %v8704 = vadd.f32 %v8418, %v8703
    %8705 = vmatmul.bf16.gmra.mxu0 %v8408
    %v8706 = vpop.f32.mrf.mxu0
    %v8707 = vadd.f32 %v8418, %v8706
    %v8708 = vpop.f32.mrf.mxu0
    %v8709 = vadd.f32 %v8418, %v8708
    %8710 = vmatmul.bf16.gmra.mxu0 %v8409
    %v8711 = vpop.f32.mrf.mxu0
    %v8712 = vadd.f32 %v8418, %v8711
    %v8713 = vpop.f32.mrf.mxu0
    %v8714 = vadd.f32 %v8418, %v8713
    %8715 = vmatmul.bf16.gmra.mxu0 %v8410
    %v8716 = vpop.f32.mrf.mxu0
    %v8717 = vadd.f32 %v8418, %v8716
    %v8718 = vpop.f32.mrf.mxu0
    %v8719 = vadd.f32 %v8418, %v8718
    %8720 = vmatmul.bf16.gmra.mxu0 %v8411
    %v8721 = vpop.f32.mrf.mxu0
    %v8722 = vadd.f32 %v8418, %v8721
    %v8723 = vpop.f32.mrf.mxu0
    %v8724 = vadd.f32 %v8418, %v8723
    %8725 = vmatmul.bf16.gmra.mxu0 %v8412
    %v8726 = vpop.f32.mrf.mxu0
    %v8727 = vadd.f32 %v8418, %v8726
    %v8728 = vpop.f32.mrf.mxu0
    %v8729 = vadd.f32 %v8418, %v8728
    %8730 = vdwg.mxu0
    %8731 = vmatpush.bf16.msra.mxu0 %v8551
    %8732 = vmatpush.bf16.msra.mxu0 %v8547
    %8733 = vmatpush.bf16.msra.mxu0 %v8543
    %8734 = vmatpush.bf16.msra.mxu0 %v8539
    %8735 = vmatpush.bf16.msra.mxu0 %v8535
    %8736 = vmatpush.bf16.msra.mxu0 %v8531
    %8737 = vmatpush.bf16.msra.mxu0 %v8527
    %8738 = vmatpush.bf16.msra.mxu0 %v8523
    %8739 = vmatmul.bf16.gmra.mxu0 %v8405
    %v8740 = vpop.f32.mrf.mxu0
    %v8741 = vadd.f32 %v8419, %v8740
    %v8742 = vpop.f32.mrf.mxu0
    %v8743 = vadd.f32 %v8419, %v8742
    %8744 = vmatmul.bf16.gmra.mxu0 %v8406
    %v8745 = vpop.f32.mrf.mxu0
    %v8746 = vadd.f32 %v8419, %v8745
    %v8747 = vpop.f32.mrf.mxu0
    %v8748 = vadd.f32 %v8419, %v8747
    %8749 = vmatmul.bf16.gmra.mxu0 %v8407
    %v8750 = vpop.f32.mrf.mxu0
    %v8751 = vadd.f32 %v8419, %v8750
    %v8752 = vpop.f32.mrf.mxu0
    %v8753 = vadd.f32 %v8419, %v8752
    %8754 = vmatmul.bf16.gmra.mxu0 %v8408
    %v8755 = vpop.f32.mrf.mxu0
    %v8756 = vadd.f32 %v8419, %v8755
    %v8757 = vpop.f32.mrf.mxu0
    %v8758 = vadd.f32 %v8419, %v8757
    %8759 = vmatmul.bf16.gmra.mxu0 %v8409
    %v8760 = vpop.f32.mrf.mxu0
    %v8761 = vadd.f32 %v8419, %v8760
    %v8762 = vpop.f32.mrf.mxu0
    %v8763 = vadd.f32 %v8419, %v8762
    %8764 = vmatmul.bf16.gmra.mxu0 %v8410
    %v8765 = vpop.f32.mrf.mxu0
    %v8766 = vadd.f32 %v8419, %v8765
    %v8767 = vpop.f32.mrf.mxu0
    %v8768 = vadd.f32 %v8419, %v8767
    %8769 = vmatmul.bf16.gmra.mxu0 %v8411
    %v8770 = vpop.f32.mrf.mxu0
    %v8771 = vadd.f32 %v8419, %v8770
    %v8772 = vpop.f32.mrf.mxu0
    %v8773 = vadd.f32 %v8419, %v8772
    %8774 = vmatmul.bf16.gmra.mxu0 %v8412
    %v8775 = vpop.f32.mrf.mxu0
    %v8776 = vadd.f32 %v8419, %v8775
    %v8777 = vpop.f32.mrf.mxu0
    %v8778 = vadd.f32 %v8419, %v8777
    %8779 = vdwg.mxu0
    %v8780 = vmax.f32 %v8594, 0.0
    %v8781 = vmax.f32 %v8643, 0.0
    %v8782 = vmax.f32 %v8692, 0.0
    %v8783 = vmax.f32 %v8741, 0.0
    %v8784 = vmax.f32 %v8596, 0.0
    %v8785 = vmax.f32 %v8645, 0.0
    %v8786 = vmax.f32 %v8694, 0.0
    %v8787 = vmax.f32 %v8743, 0.0
    %v8788 = vmax.f32 %v8599, 0.0
    %v8789 = vmax.f32 %v8648, 0.0
    %v8790 = vmax.f32 %v8697, 0.0
    %v8791 = vmax.f32 %v8746, 0.0
    %v8792 = vmax.f32 %v8601, 0.0
    %v8793 = vmax.f32 %v8650, 0.0
    %v8794 = vmax.f32 %v8699, 0.0
    %v8795 = vmax.f32 %v8748, 0.0
    %v8796 = vmax.f32 %v8604, 0.0
    %v8797 = vmax.f32 %v8653, 0.0
    %v8798 = vmax.f32 %v8702, 0.0
    %v8799 = vmax.f32 %v8751, 0.0
    %v8800 = vmax.f32 %v8606, 0.0
    %v8801 = vmax.f32 %v8655, 0.0
    %v8802 = vmax.f32 %v8704, 0.0
    %v8803 = vmax.f32 %v8753, 0.0
    %v8804 = vmax.f32 %v8609, 0.0
    %v8805 = vmax.f32 %v8658, 0.0
    %v8806 = vmax.f32 %v8707, 0.0
    %v8807 = vmax.f32 %v8756, 0.0
    %v8808 = vmax.f32 %v8611, 0.0
    %v8809 = vmax.f32 %v8660, 0.0
    %v8810 = vmax.f32 %v8709, 0.0
    %v8811 = vmax.f32 %v8758, 0.0
    %v8812 = vmax.f32 %v8614, 0.0
    %v8813 = vmax.f32 %v8663, 0.0
    %v8814 = vmax.f32 %v8712, 0.0
    %v8815 = vmax.f32 %v8761, 0.0
    %v8816 = vmax.f32 %v8616, 0.0
    %v8817 = vmax.f32 %v8665, 0.0
    %v8818 = vmax.f32 %v8714, 0.0
    %v8819 = vmax.f32 %v8763, 0.0
    %v8820 = vmax.f32 %v8619, 0.0
    %v8821 = vmax.f32 %v8668, 0.0
    %v8822 = vmax.f32 %v8717, 0.0
    %v8823 = vmax.f32 %v8766, 0.0
    %v8824 = vmax.f32 %v8621, 0.0
    %v8825 = vmax.f32 %v8670, 0.0
    %v8826 = vmax.f32 %v8719, 0.0
    %v8827 = vmax.f32 %v8768, 0.0
    %v8828 = vmax.f32 %v8624, 0.0
    %v8829 = vmax.f32 %v8673, 0.0
    %v8830 = vmax.f32 %v8722, 0.0
    %v8831 = vmax.f32 %v8771, 0.0
    %v8832 = vmax.f32 %v8626, 0.0
    %v8833 = vmax.f32 %v8675, 0.0
    %v8834 = vmax.f32 %v8724, 0.0
    %v8835 = vmax.f32 %v8773, 0.0
    %v8836 = vmax.f32 %v8629, 0.0
    %v8837 = vmax.f32 %v8678, 0.0
    %v8838 = vmax.f32 %v8727, 0.0
    %v8839 = vmax.f32 %v8776, 0.0
    %v8840 = vmax.f32 %v8631, 0.0
    %v8841 = vmax.f32 %v8680, 0.0
    %v8842 = vmax.f32 %v8729, 0.0
    %v8843 = vmax.f32 %v8778, 0.0
    %s8844 = scalar_lea.vmem [#allocation17], 256
    %v8845 = vld [vmem:[%s8844] sm:$0xf]
    %v8846 = vld [vmem:[%s8844 + $0x4] sm:$0xf]
    %v8847 = vld [vmem:[%s8844 + $0x8] sm:$0xf]
    %v8848 = vld [vmem:[%s8844 + $0xc] sm:$0xf]
    %v8849 = vld [vmem:[%s8844 + $0x10] sm:$0xf]
    %v8850 = vld [vmem:[%s8844 + $0x14] sm:$0xf]
    %v8851 = vld [vmem:[%s8844 + $0x18] sm:$0xf]
    %v8852 = vld [vmem:[%s8844 + $0x1c] sm:$0xf]
    %v8853 = vld [vmem:[%s8844 + $0x20] sm:$0xf]
    %v8854 = vld [vmem:[%s8844 + $0x24] sm:$0xf]
    %v8855 = vld [vmem:[%s8844 + $0x28] sm:$0xf]
    %v8856 = vld [vmem:[%s8844 + $0x2c] sm:$0xf]
    %v8857 = vld [vmem:[%s8844 + $0x30] sm:$0xf]
    %v8858 = vld [vmem:[%s8844 + $0x34] sm:$0xf]
    %v8859 = vld [vmem:[%s8844 + $0x38] sm:$0xf]
    %v8860 = vld [vmem:[%s8844 + $0x3c] sm:$0xf]
    %v8861 = vld [vmem:[%s8844 + $0x40] sm:$0xf]
    %v8862 = vld [vmem:[%s8844 + $0x44] sm:$0xf]
    %v8863 = vld [vmem:[%s8844 + $0x48] sm:$0xf]
    %v8864 = vld [vmem:[%s8844 + $0x4c] sm:$0xf]
    %v8865 = vld [vmem:[%s8844 + $0x50] sm:$0xf]
    %v8866 = vld [vmem:[%s8844 + $0x54] sm:$0xf]
    %v8867 = vld [vmem:[%s8844 + $0x58] sm:$0xf]
    %v8868 = vld [vmem:[%s8844 + $0x5c] sm:$0xf]
    %v8869 = vld [vmem:[%s8844 + $0x60] sm:$0xf]
    %v8870 = vld [vmem:[%s8844 + $0x64] sm:$0xf]
    %v8871 = vld [vmem:[%s8844 + $0x68] sm:$0xf]
    %v8872 = vld [vmem:[%s8844 + $0x6c] sm:$0xf]
    %v8873 = vld [vmem:[%s8844 + $0x70] sm:$0xf]
    %v8874 = vld [vmem:[%s8844 + $0x74] sm:$0xf]
    %v8875 = vld [vmem:[%s8844 + $0x78] sm:$0xf]
    %v8876 = vld [vmem:[%s8844 + $0x7c] sm:$0xf]
    %v8877 = vld [vmem:[%s8844 + $0x80] sm:$0xf]
    %v8878 = vld [vmem:[%s8844 + $0x84] sm:$0xf]
    %v8879 = vld [vmem:[%s8844 + $0x88] sm:$0xf]
    %v8880 = vld [vmem:[%s8844 + $0x8c] sm:$0xf]
    %v8881 = vld [vmem:[%s8844 + $0x90] sm:$0xf]
    %v8882 = vld [vmem:[%s8844 + $0x94] sm:$0xf]
    %v8883 = vld [vmem:[%s8844 + $0x98] sm:$0xf]
    %v8884 = vld [vmem:[%s8844 + $0x9c] sm:$0xf]
    %v8885 = vld [vmem:[%s8844 + $0xa0] sm:$0xf]
    %v8886 = vld [vmem:[%s8844 + $0xa4] sm:$0xf]
    %v8887 = vld [vmem:[%s8844 + $0xa8] sm:$0xf]
    %v8888 = vld [vmem:[%s8844 + $0xac] sm:$0xf]
    %v8889 = vld [vmem:[%s8844 + $0xb0] sm:$0xf]
    %v8890 = vld [vmem:[%s8844 + $0xb4] sm:$0xf]
    %v8891 = vld [vmem:[%s8844 + $0xb8] sm:$0xf]
    %v8892 = vld [vmem:[%s8844 + $0xbc] sm:$0xf]
    %v8893 = vld [vmem:[%s8844 + $0xc0] sm:$0xf]
    %v8894 = vld [vmem:[%s8844 + $0xc4] sm:$0xf]
    %v8895 = vld [vmem:[%s8844 + $0xc8] sm:$0xf]
    %v8896 = vld [vmem:[%s8844 + $0xcc] sm:$0xf]
    %v8897 = vld [vmem:[%s8844 + $0xd0] sm:$0xf]
    %v8898 = vld [vmem:[%s8844 + $0xd4] sm:$0xf]
    %v8899 = vld [vmem:[%s8844 + $0xd8] sm:$0xf]
    %v8900 = vld [vmem:[%s8844 + $0xdc] sm:$0xf]
    %v8901 = vld [vmem:[%s8844 + $0xe0] sm:$0xf]
    %v8902 = vld [vmem:[%s8844 + $0xe4] sm:$0xf]
    %v8903 = vld [vmem:[%s8844 + $0xe8] sm:$0xf]
    %v8904 = vld [vmem:[%s8844 + $0xec] sm:$0xf]
    %v8905 = vld [vmem:[%s8844 + $0xf0] sm:$0xf]
    %v8906 = vld [vmem:[%s8844 + $0xf4] sm:$0xf]
    %v8907 = vld [vmem:[%s8844 + $0xf8] sm:$0xf]
    %v8908 = vld [vmem:[%s8844 + $0xfc] sm:$0xf]
    %v8909 = vpack.c.bf16 %v8784, %v8780
    %v8910 = vpack.c.bf16 %v8785, %v8781
    %v8911 = vpack.c.bf16 %v8786, %v8782
    %v8912 = vpack.c.bf16 %v8787, %v8783
    %v8913 = vpack.c.bf16 %v8792, %v8788
    %v8914 = vpack.c.bf16 %v8793, %v8789
    %v8915 = vpack.c.bf16 %v8794, %v8790
    %v8916 = vpack.c.bf16 %v8795, %v8791
    %v8917 = vpack.c.bf16 %v8800, %v8796
    %v8918 = vpack.c.bf16 %v8801, %v8797
    %v8919 = vpack.c.bf16 %v8802, %v8798
    %v8920 = vpack.c.bf16 %v8803, %v8799
    %v8921 = vpack.c.bf16 %v8808, %v8804
    %v8922 = vpack.c.bf16 %v8809, %v8805
    %v8923 = vpack.c.bf16 %v8810, %v8806
    %v8924 = vpack.c.bf16 %v8811, %v8807
    %v8925 = vpack.c.bf16 %v8816, %v8812
    %v8926 = vpack.c.bf16 %v8817, %v8813
    %v8927 = vpack.c.bf16 %v8818, %v8814
    %v8928 = vpack.c.bf16 %v8819, %v8815
    %v8929 = vpack.c.bf16 %v8824, %v8820
    %v8930 = vpack.c.bf16 %v8825, %v8821
    %v8931 = vpack.c.bf16 %v8826, %v8822
    %v8932 = vpack.c.bf16 %v8827, %v8823
    %v8933 = vpack.c.bf16 %v8832, %v8828
    %v8934 = vpack.c.bf16 %v8833, %v8829
    %v8935 = vpack.c.bf16 %v8834, %v8830
    %v8936 = vpack.c.bf16 %v8835, %v8831
    %v8937 = vpack.c.bf16 %v8840, %v8836
    %v8938 = vpack.c.bf16 %v8841, %v8837
    %v8939 = vpack.c.bf16 %v8842, %v8838
    %v8940 = vpack.c.bf16 %v8843, %v8839
    %v9005 = vunpack.c.l.b16 %v8845
    %v9006 = vunpack.c.l.b16 %v8846
    %v9007 = vunpack.c.l.b16 %v8847
    %v9008 = vunpack.c.l.b16 %v8848
    %v9009 = vunpack.c.l.b16 %v8849
    %v9010 = vunpack.c.l.b16 %v8850
    %v9011 = vunpack.c.l.b16 %v8851
    %v9012 = vunpack.c.l.b16 %v8852
    %v9013 = vunpack.c.l.b16 %v8853
    %v9014 = vunpack.c.l.b16 %v8854
    %v9015 = vunpack.c.l.b16 %v8855
    %v9016 = vunpack.c.l.b16 %v8856
    %v9017 = vunpack.c.l.b16 %v8857
    %v9018 = vunpack.c.l.b16 %v8858
    %v9019 = vunpack.c.l.b16 %v8859
    %v9020 = vunpack.c.l.b16 %v8860
    %v9021 = vunpack.c.l.b16 %v8861
    %v9022 = vunpack.c.l.b16 %v8862
    %v9023 = vunpack.c.l.b16 %v8863
    %v9024 = vunpack.c.l.b16 %v8864
    %v9025 = vunpack.c.l.b16 %v8865
    %v9026 = vunpack.c.l.b16 %v8866
    %v9027 = vunpack.c.l.b16 %v8867
    %v9028 = vunpack.c.l.b16 %v8868
    %v9029 = vunpack.c.l.b16 %v8869
    %v9030 = vunpack.c.l.b16 %v8870
    %v9031 = vunpack.c.l.b16 %v8871
    %v9032 = vunpack.c.l.b16 %v8872
    %v9033 = vunpack.c.l.b16 %v8873
    %v9034 = vunpack.c.l.b16 %v8874
    %v9035 = vunpack.c.l.b16 %v8875
    %v9036 = vunpack.c.l.b16 %v8876
    %v9037 = vunpack.c.l.b16 %v8877
    %v9038 = vunpack.c.l.b16 %v8878
    %v9039 = vunpack.c.l.b16 %v8879
    %v9040 = vunpack.c.l.b16 %v8880
    %v9041 = vunpack.c.l.b16 %v8881
    %v9042 = vunpack.c.l.b16 %v8882
    %v9043 = vunpack.c.l.b16 %v8883
    %v9044 = vunpack.c.l.b16 %v8884
    %v9045 = vunpack.c.l.b16 %v8885
    %v9046 = vunpack.c.l.b16 %v8886
    %v9047 = vunpack.c.l.b16 %v8887
    %v9048 = vunpack.c.l.b16 %v8888
    %v9049 = vunpack.c.l.b16 %v8889
    %v9050 = vunpack.c.l.b16 %v8890
    %v9051 = vunpack.c.l.b16 %v8891
    %v9052 = vunpack.c.l.b16 %v8892
    %v9053 = vunpack.c.l.b16 %v8893
    %v9054 = vunpack.c.l.b16 %v8894
    %v9055 = vunpack.c.l.b16 %v8895
    %v9056 = vunpack.c.l.b16 %v8896
    %v9057 = vunpack.c.l.b16 %v8897
    %v9058 = vunpack.c.l.b16 %v8898
    %v9059 = vunpack.c.l.b16 %v8899
    %v9060 = vunpack.c.l.b16 %v8900
    %v9061 = vunpack.c.l.b16 %v8901
    %v9062 = vunpack.c.l.b16 %v8902
    %v9063 = vunpack.c.l.b16 %v8903
    %v9064 = vunpack.c.l.b16 %v8904
    %v9065 = vunpack.c.l.b16 %v8905
    %v9066 = vunpack.c.l.b16 %v8906
    %v9067 = vunpack.c.l.b16 %v8907
    %v9068 = vunpack.c.l.b16 %v8908
    %v9069 = vpack.c.b16 %v9006, %v9005
    %v9070 = vpack.c.b16 %v9008, %v9007
    %v9071 = vpack.c.b16 %v9010, %v9009
    %v9072 = vpack.c.b16 %v9012, %v9011
    %v9073 = vpack.c.b16 %v9014, %v9013
    %v9074 = vpack.c.b16 %v9016, %v9015
    %v9075 = vpack.c.b16 %v9018, %v9017
    %v9076 = vpack.c.b16 %v9020, %v9019
    %v9077 = vpack.c.b16 %v9022, %v9021
    %v9078 = vpack.c.b16 %v9024, %v9023
    %v9079 = vpack.c.b16 %v9026, %v9025
    %v9080 = vpack.c.b16 %v9028, %v9027
    %v9081 = vpack.c.b16 %v9030, %v9029
    %v9082 = vpack.c.b16 %v9032, %v9031
    %v9083 = vpack.c.b16 %v9034, %v9033
    %v9084 = vpack.c.b16 %v9036, %v9035
    %v9085 = vpack.c.b16 %v9038, %v9037
    %v9086 = vpack.c.b16 %v9040, %v9039
    %v9087 = vpack.c.b16 %v9042, %v9041
    %v9088 = vpack.c.b16 %v9044, %v9043
    %v9089 = vpack.c.b16 %v9046, %v9045
    %v9090 = vpack.c.b16 %v9048, %v9047
    %v9091 = vpack.c.b16 %v9050, %v9049
    %v9092 = vpack.c.b16 %v9052, %v9051
    %v9093 = vpack.c.b16 %v9054, %v9053
    %v9094 = vpack.c.b16 %v9056, %v9055
    %v9095 = vpack.c.b16 %v9058, %v9057
    %v9096 = vpack.c.b16 %v9060, %v9059
    %v9097 = vpack.c.b16 %v9062, %v9061
    %v9098 = vpack.c.b16 %v9064, %v9063
    %v9099 = vpack.c.b16 %v9066, %v9065
    %v9100 = vpack.c.b16 %v9068, %v9067
    %9133 = vmatpush.bf16.msra.mxu0 %v9076
    %9134 = vmatpush.bf16.msra.mxu0 %v9075
    %9135 = vmatpush.bf16.msra.mxu0 %v9074
    %9136 = vmatpush.bf16.msra.mxu0 %v9073
    %9137 = vmatpush.bf16.msra.mxu0 %v9072
    %9138 = vmatpush.bf16.msra.mxu0 %v9071
    %9139 = vmatpush.bf16.msra.mxu0 %v9070
    %9140 = vmatpush.bf16.msra.mxu0 %v9069
    %9141 = vmatmul.bf16.gmra.mxu0 %v8909
    %v9142 = vpop.f32.mrf.mxu0
    %v9143 = vadd.f32 0.0, %v9142
    %v9144 = vpop.f32.mrf.mxu0
    %v9145 = vadd.f32 0.0, %v9144
    %9146 = vmatmul.bf16.gmra.mxu0 %v8913
    %v9147 = vpop.f32.mrf.mxu0
    %v9148 = vadd.f32 0.0, %v9147
    %v9149 = vpop.f32.mrf.mxu0
    %v9150 = vadd.f32 0.0, %v9149
    %9151 = vmatmul.bf16.gmra.mxu0 %v8917
    %v9152 = vpop.f32.mrf.mxu0
    %v9153 = vadd.f32 0.0, %v9152
    %v9154 = vpop.f32.mrf.mxu0
    %v9155 = vadd.f32 0.0, %v9154
    %9156 = vmatmul.bf16.gmra.mxu0 %v8921
    %v9157 = vpop.f32.mrf.mxu0
    %v9158 = vadd.f32 0.0, %v9157
    %v9159 = vpop.f32.mrf.mxu0
    %v9160 = vadd.f32 0.0, %v9159
    %9161 = vmatmul.bf16.gmra.mxu0 %v8925
    %v9162 = vpop.f32.mrf.mxu0
    %v9163 = vadd.f32 0.0, %v9162
    %v9164 = vpop.f32.mrf.mxu0
    %v9165 = vadd.f32 0.0, %v9164
    %9166 = vmatmul.bf16.gmra.mxu0 %v8929
    %v9167 = vpop.f32.mrf.mxu0
    %v9168 = vadd.f32 0.0, %v9167
    %v9169 = vpop.f32.mrf.mxu0
    %v9170 = vadd.f32 0.0, %v9169
    %9171 = vmatmul.bf16.gmra.mxu0 %v8933
    %v9172 = vpop.f32.mrf.mxu0
    %v9173 = vadd.f32 0.0, %v9172
    %v9174 = vpop.f32.mrf.mxu0
    %v9175 = vadd.f32 0.0, %v9174
    %9176 = vmatmul.bf16.gmra.mxu0 %v8937
    %v9177 = vpop.f32.mrf.mxu0
    %v9178 = vadd.f32 0.0, %v9177
    %v9179 = vpop.f32.mrf.mxu0
    %v9180 = vadd.f32 0.0, %v9179
    %9181 = vdwg.mxu0
    %9182 = vmatpush.bf16.msra.mxu0 %v9084
    %9183 = vmatpush.bf16.msra.mxu0 %v9083
    %9184 = vmatpush.bf16.msra.mxu0 %v9082
    %9185 = vmatpush.bf16.msra.mxu0 %v9081
    %9186 = vmatpush.bf16.msra.mxu0 %v9080
    %9187 = vmatpush.bf16.msra.mxu0 %v9079
    %9188 = vmatpush.bf16.msra.mxu0 %v9078
    %9189 = vmatpush.bf16.msra.mxu0 %v9077
    %9190 = vmatmul.bf16.gmra.mxu0 %v8910
    %v9191 = vpop.f32.mrf.mxu0
    %v9192 = vadd.f32 %v9143, %v9191
    %v9193 = vpop.f32.mrf.mxu0
    %v9194 = vadd.f32 %v9145, %v9193
    %9195 = vmatmul.bf16.gmra.mxu0 %v8914
    %v9196 = vpop.f32.mrf.mxu0
    %v9197 = vadd.f32 %v9148, %v9196
    %v9198 = vpop.f32.mrf.mxu0
    %v9199 = vadd.f32 %v9150, %v9198
    %9200 = vmatmul.bf16.gmra.mxu0 %v8918
    %v9201 = vpop.f32.mrf.mxu0
    %v9202 = vadd.f32 %v9153, %v9201
    %v9203 = vpop.f32.mrf.mxu0
    %v9204 = vadd.f32 %v9155, %v9203
    %9205 = vmatmul.bf16.gmra.mxu0 %v8922
    %v9206 = vpop.f32.mrf.mxu0
    %v9207 = vadd.f32 %v9158, %v9206
    %v9208 = vpop.f32.mrf.mxu0
    %v9209 = vadd.f32 %v9160, %v9208
    %9210 = vmatmul.bf16.gmra.mxu0 %v8926
    %v9211 = vpop.f32.mrf.mxu0
    %v9212 = vadd.f32 %v9163, %v9211
    %v9213 = vpop.f32.mrf.mxu0
    %v9214 = vadd.f32 %v9165, %v9213
    %9215 = vmatmul.bf16.gmra.mxu0 %v8930
    %v9216 = vpop.f32.mrf.mxu0
    %v9217 = vadd.f32 %v9168, %v9216
    %v9218 = vpop.f32.mrf.mxu0
    %v9219 = vadd.f32 %v9170, %v9218
    %9220 = vmatmul.bf16.gmra.mxu0 %v8934
    %v9221 = vpop.f32.mrf.mxu0
    %v9222 = vadd.f32 %v9173, %v9221
    %v9223 = vpop.f32.mrf.mxu0
    %v9224 = vadd.f32 %v9175, %v9223
    %9225 = vmatmul.bf16.gmra.mxu0 %v8938
    %v9226 = vpop.f32.mrf.mxu0
    %v9227 = vadd.f32 %v9178, %v9226
    %v9228 = vpop.f32.mrf.mxu0
    %v9229 = vadd.f32 %v9180, %v9228
    %9230 = vdwg.mxu0
    %9231 = vmatpush.bf16.msra.mxu0 %v9092
    %9232 = vmatpush.bf16.msra.mxu0 %v9091
    %9233 = vmatpush.bf16.msra.mxu0 %v9090
    %9234 = vmatpush.bf16.msra.mxu0 %v9089
    %9235 = vmatpush.bf16.msra.mxu0 %v9088
    %9236 = vmatpush.bf16.msra.mxu0 %v9087
    %9237 = vmatpush.bf16.msra.mxu0 %v9086
    %9238 = vmatpush.bf16.msra.mxu0 %v9085
    %9239 = vmatmul.bf16.gmra.mxu0 %v8911
    %v9240 = vpop.f32.mrf.mxu0
    %v9241 = vadd.f32 %v9192, %v9240
    %v9242 = vpop.f32.mrf.mxu0
    %v9243 = vadd.f32 %v9194, %v9242
    %9244 = vmatmul.bf16.gmra.mxu0 %v8915
    %v9245 = vpop.f32.mrf.mxu0
    %v9246 = vadd.f32 %v9197, %v9245
    %v9247 = vpop.f32.mrf.mxu0
    %v9248 = vadd.f32 %v9199, %v9247
    %9249 = vmatmul.bf16.gmra.mxu0 %v8919
    %v9250 = vpop.f32.mrf.mxu0
    %v9251 = vadd.f32 %v9202, %v9250
    %v9252 = vpop.f32.mrf.mxu0
    %v9253 = vadd.f32 %v9204, %v9252
    %9254 = vmatmul.bf16.gmra.mxu0 %v8923
    %v9255 = vpop.f32.mrf.mxu0
    %v9256 = vadd.f32 %v9207, %v9255
    %v9257 = vpop.f32.mrf.mxu0
    %v9258 = vadd.f32 %v9209, %v9257
    %9259 = vmatmul.bf16.gmra.mxu0 %v8927
    %v9260 = vpop.f32.mrf.mxu0
    %v9261 = vadd.f32 %v9212, %v9260
    %v9262 = vpop.f32.mrf.mxu0
    %v9263 = vadd.f32 %v9214, %v9262
    %9264 = vmatmul.bf16.gmra.mxu0 %v8931
    %v9265 = vpop.f32.mrf.mxu0
    %v9266 = vadd.f32 %v9217, %v9265
    %v9267 = vpop.f32.mrf.mxu0
    %v9268 = vadd.f32 %v9219, %v9267
    %9269 = vmatmul.bf16.gmra.mxu0 %v8935
    %v9270 = vpop.f32.mrf.mxu0
    %v9271 = vadd.f32 %v9222, %v9270
    %v9272 = vpop.f32.mrf.mxu0
    %v9273 = vadd.f32 %v9224, %v9272
    %9274 = vmatmul.bf16.gmra.mxu0 %v8939
    %v9275 = vpop.f32.mrf.mxu0
    %v9276 = vadd.f32 %v9227, %v9275
    %v9277 = vpop.f32.mrf.mxu0
    %v9278 = vadd.f32 %v9229, %v9277
    %9279 = vdwg.mxu0
    %9280 = vmatpush.bf16.msra.mxu0 %v9100
    %9281 = vmatpush.bf16.msra.mxu0 %v9099
    %9282 = vmatpush.bf16.msra.mxu0 %v9098
    %9283 = vmatpush.bf16.msra.mxu0 %v9097
    %9284 = vmatpush.bf16.msra.mxu0 %v9096
    %9285 = vmatpush.bf16.msra.mxu0 %v9095
    %9286 = vmatpush.bf16.msra.mxu0 %v9094
    %9287 = vmatpush.bf16.msra.mxu0 %v9093
    %9288 = vmatmul.bf16.gmra.mxu0 %v8912
    %v9289 = vpop.f32.mrf.mxu0
    %v9290 = vadd.f32 %v9241, %v9289
    %v9291 = vpop.f32.mrf.mxu0
    %v9292 = vadd.f32 %v9243, %v9291
    %9293 = vmatmul.bf16.gmra.mxu0 %v8916
    %v9294 = vpop.f32.mrf.mxu0
    %v9295 = vadd.f32 %v9246, %v9294
    %v9296 = vpop.f32.mrf.mxu0
    %v9297 = vadd.f32 %v9248, %v9296
    %9298 = vmatmul.bf16.gmra.mxu0 %v8920
    %v9299 = vpop.f32.mrf.mxu0
    %v9300 = vadd.f32 %v9251, %v9299
    %v9301 = vpop.f32.mrf.mxu0
    %v9302 = vadd.f32 %v9253, %v9301
    %9303 = vmatmul.bf16.gmra.mxu0 %v8924
    %v9304 = vpop.f32.mrf.mxu0
    %v9305 = vadd.f32 %v9256, %v9304
    %v9306 = vpop.f32.mrf.mxu0
    %v9307 = vadd.f32 %v9258, %v9306
    %9308 = vmatmul.bf16.gmra.mxu0 %v8928
    %v9309 = vpop.f32.mrf.mxu0
    %v9310 = vadd.f32 %v9261, %v9309
    %v9311 = vpop.f32.mrf.mxu0
    %v9312 = vadd.f32 %v9263, %v9311
    %9313 = vmatmul.bf16.gmra.mxu0 %v8932
    %v9314 = vpop.f32.mrf.mxu0
    %v9315 = vadd.f32 %v9266, %v9314
    %v9316 = vpop.f32.mrf.mxu0
    %v9317 = vadd.f32 %v9268, %v9316
    %9318 = vmatmul.bf16.gmra.mxu0 %v8936
    %v9319 = vpop.f32.mrf.mxu0
    %v9320 = vadd.f32 %v9271, %v9319
    %v9321 = vpop.f32.mrf.mxu0
    %v9322 = vadd.f32 %v9273, %v9321
    %9323 = vmatmul.bf16.gmra.mxu0 %v8940
    %v9324 = vpop.f32.mrf.mxu0
    %v9325 = vadd.f32 %v9276, %v9324
    %v9326 = vpop.f32.mrf.mxu0
    %v9327 = vadd.f32 %v9278, %v9326
    %9328 = vdwg.mxu0
    %v9329 = vadd.f32 %v7962, %v9290
    %v9330 = vadd.f32 %v7963, %v9292
    %v9331 = vadd.f32 %v7964, %v9295
    %v9332 = vadd.f32 %v7965, %v9297
    %v9333 = vadd.f32 %v7966, %v9300
    %v9334 = vadd.f32 %v7967, %v9302
    %v9335 = vadd.f32 %v7968, %v9305
    %v9336 = vadd.f32 %v7969, %v9307
    %v9337 = vadd.f32 %v7970, %v9310
    %v9338 = vadd.f32 %v7971, %v9312
    %v9339 = vadd.f32 %v7972, %v9315
    %v9340 = vadd.f32 %v7973, %v9317
    %v9341 = vadd.f32 %v7974, %v9320
    %v9342 = vadd.f32 %v7975, %v9322
    %v9343 = vadd.f32 %v7976, %v9325
    %v9344 = vadd.f32 %v7977, %v9327
    %s9345 = scalar_lea.vmem [#allocation19], 1
    %v9346 = vld [vmem:[%s9345] sm:$0x1]
    %v9348 = vperm.slane %v9346, 0
    %v9350 = vadd.f32 %v9329, %v9348
    %v9351 = vadd.f32 %v9330, %v9348
    %v9352 = vadd.f32 %v9331, %v9348
    %v9353 = vadd.f32 %v9332, %v9348
    %v9354 = vadd.f32 %v9333, %v9348
    %v9355 = vadd.f32 %v9334, %v9348
    %v9356 = vadd.f32 %v9335, %v9348
    %v9357 = vadd.f32 %v9336, %v9348
    %v9358 = vadd.f32 %v9337, %v9348
    %v9359 = vadd.f32 %v9338, %v9348
    %v9360 = vadd.f32 %v9339, %v9348
    %v9361 = vadd.f32 %v9340, %v9348
    %v9362 = vadd.f32 %v9341, %v9348
    %v9363 = vadd.f32 %v9342, %v9348
    %v9364 = vadd.f32 %v9343, %v9348
    %v9365 = vadd.f32 %v9344, %v9348
    %v9366 = vld [vmem:[%s14] sm:$0x1]
    %v9367 = vld [vmem:[%s15] sm:$0x1]
    %9368 = vadd.xlane.f32.xlu0 %v9350
    %v9369 = vpop.xlane.xlu0 %9368
    %9370 = vadd.xlane.f32.xlu0 %v9351
    %v9371 = vpop.xlane.xlu0 %9370
    %9372 = vadd.xlane.f32.xlu0 %v9352
    %v9373 = vpop.xlane.xlu0 %9372
    %9374 = vadd.xlane.f32.xlu0 %v9353
    %v9375 = vpop.xlane.xlu0 %9374
    %9376 = vadd.xlane.f32.xlu0 %v9354
    %v9377 = vpop.xlane.xlu0 %9376
    %9378 = vadd.xlane.f32.xlu0 %v9355
    %v9379 = vpop.xlane.xlu0 %9378
    %9380 = vadd.xlane.f32.xlu0 %v9356
    %v9381 = vpop.xlane.xlu0 %9380
    %9382 = vadd.xlane.f32.xlu0 %v9357
    %v9383 = vpop.xlane.xlu0 %9382
    %9384 = vadd.xlane.f32.xlu0 %v9358
    %v9385 = vpop.xlane.xlu0 %9384
    %9386 = vadd.xlane.f32.xlu0 %v9359
    %v9387 = vpop.xlane.xlu0 %9386
    %9388 = vadd.xlane.f32.xlu0 %v9360
    %v9389 = vpop.xlane.xlu0 %9388
    %9390 = vadd.xlane.f32.xlu0 %v9361
    %v9391 = vpop.xlane.xlu0 %9390
    %9392 = vadd.xlane.f32.xlu0 %v9362
    %v9393 = vpop.xlane.xlu0 %9392
    %9394 = vadd.xlane.f32.xlu0 %v9363
    %v9395 = vpop.xlane.xlu0 %9394
    %9396 = vadd.xlane.f32.xlu0 %v9364
    %v9397 = vpop.xlane.xlu0 %9396
    %9398 = vadd.xlane.f32.xlu0 %v9365
    %v9399 = vpop.xlane.xlu0 %9398
    %v9400 = vmul.f32 %v9369, %v973
    %v9401 = vmul.f32 %v9371, %v973
    %v9402 = vmul.f32 %v9373, %v973
    %v9403 = vmul.f32 %v9375, %v973
    %v9404 = vmul.f32 %v9377, %v973
    %v9405 = vmul.f32 %v9379, %v973
    %v9406 = vmul.f32 %v9381, %v973
    %v9407 = vmul.f32 %v9383, %v973
    %v9408 = vmul.f32 %v9385, %v973
    %v9409 = vmul.f32 %v9387, %v973
    %v9410 = vmul.f32 %v9389, %v973
    %v9411 = vmul.f32 %v9391, %v973
    %v9412 = vmul.f32 %v9393, %v973
    %v9413 = vmul.f32 %v9395, %v973
    %v9414 = vmul.f32 %v9397, %v973
    %v9415 = vmul.f32 %v9399, %v973
    %v9416 = vmul.f32 %v9350, %v9350
    %v9417 = vmul.f32 %v9351, %v9351
    %v9418 = vmul.f32 %v9352, %v9352
    %v9419 = vmul.f32 %v9353, %v9353
    %v9420 = vmul.f32 %v9354, %v9354
    %v9421 = vmul.f32 %v9355, %v9355
    %v9422 = vmul.f32 %v9356, %v9356
    %v9423 = vmul.f32 %v9357, %v9357
    %v9424 = vmul.f32 %v9358, %v9358
    %v9425 = vmul.f32 %v9359, %v9359
    %v9426 = vmul.f32 %v9360, %v9360
    %v9427 = vmul.f32 %v9361, %v9361
    %v9428 = vmul.f32 %v9362, %v9362
    %v9429 = vmul.f32 %v9363, %v9363
    %v9430 = vmul.f32 %v9364, %v9364
    %v9431 = vmul.f32 %v9365, %v9365
    %9432 = vadd.xlane.f32.xlu0 %v9416
    %v9433 = vpop.xlane.xlu0 %9432
    %9434 = vadd.xlane.f32.xlu0 %v9417
    %v9435 = vpop.xlane.xlu0 %9434
    %9436 = vadd.xlane.f32.xlu0 %v9418
    %v9437 = vpop.xlane.xlu0 %9436
    %9438 = vadd.xlane.f32.xlu0 %v9419
    %v9439 = vpop.xlane.xlu0 %9438
    %9440 = vadd.xlane.f32.xlu0 %v9420
    %v9441 = vpop.xlane.xlu0 %9440
    %9442 = vadd.xlane.f32.xlu0 %v9421
    %v9443 = vpop.xlane.xlu0 %9442
    %9444 = vadd.xlane.f32.xlu0 %v9422
    %v9445 = vpop.xlane.xlu0 %9444
    %9446 = vadd.xlane.f32.xlu0 %v9423
    %v9447 = vpop.xlane.xlu0 %9446
    %9448 = vadd.xlane.f32.xlu0 %v9424
    %v9449 = vpop.xlane.xlu0 %9448
    %9450 = vadd.xlane.f32.xlu0 %v9425
    %v9451 = vpop.xlane.xlu0 %9450
    %9452 = vadd.xlane.f32.xlu0 %v9426
    %v9453 = vpop.xlane.xlu0 %9452
    %9454 = vadd.xlane.f32.xlu0 %v9427
    %v9455 = vpop.xlane.xlu0 %9454
    %9456 = vadd.xlane.f32.xlu0 %v9428
    %v9457 = vpop.xlane.xlu0 %9456
    %9458 = vadd.xlane.f32.xlu0 %v9429
    %v9459 = vpop.xlane.xlu0 %9458
    %9460 = vadd.xlane.f32.xlu0 %v9430
    %v9461 = vpop.xlane.xlu0 %9460
    %9462 = vadd.xlane.f32.xlu0 %v9431
    %v9463 = vpop.xlane.xlu0 %9462
    %v9464 = vmul.f32 %v9433, %v973
    %v9465 = vmul.f32 %v9435, %v973
    %v9466 = vmul.f32 %v9437, %v973
    %v9467 = vmul.f32 %v9439, %v973
    %v9468 = vmul.f32 %v9441, %v973
    %v9469 = vmul.f32 %v9443, %v973
    %v9470 = vmul.f32 %v9445, %v973
    %v9471 = vmul.f32 %v9447, %v973
    %v9472 = vmul.f32 %v9449, %v973
    %v9473 = vmul.f32 %v9451, %v973
    %v9474 = vmul.f32 %v9453, %v973
    %v9475 = vmul.f32 %v9455, %v973
    %v9476 = vmul.f32 %v9457, %v973
    %v9477 = vmul.f32 %v9459, %v973
    %v9478 = vmul.f32 %v9461, %v973
    %v9479 = vmul.f32 %v9463, %v973
    %v9480 = vmul.f32 %v9400, %v9400
    %v9481 = vmul.f32 %v9401, %v9401
    %v9482 = vmul.f32 %v9402, %v9402
    %v9483 = vmul.f32 %v9403, %v9403
    %v9484 = vmul.f32 %v9404, %v9404
    %v9485 = vmul.f32 %v9405, %v9405
    %v9486 = vmul.f32 %v9406, %v9406
    %v9487 = vmul.f32 %v9407, %v9407
    %v9488 = vmul.f32 %v9408, %v9408
    %v9489 = vmul.f32 %v9409, %v9409
    %v9490 = vmul.f32 %v9410, %v9410
    %v9491 = vmul.f32 %v9411, %v9411
    %v9492 = vmul.f32 %v9412, %v9412
    %v9493 = vmul.f32 %v9413, %v9413
    %v9494 = vmul.f32 %v9414, %v9414
    %v9495 = vmul.f32 %v9415, %v9415
    %v9496 = vsub.f32 %v9464, %v9480
    %v9497 = vsub.f32 %v9465, %v9481
    %v9498 = vsub.f32 %v9466, %v9482
    %v9499 = vsub.f32 %v9467, %v9483
    %v9500 = vsub.f32 %v9468, %v9484
    %v9501 = vsub.f32 %v9469, %v9485
    %v9502 = vsub.f32 %v9470, %v9486
    %v9503 = vsub.f32 %v9471, %v9487
    %v9504 = vsub.f32 %v9472, %v9488
    %v9505 = vsub.f32 %v9473, %v9489
    %v9506 = vsub.f32 %v9474, %v9490
    %v9507 = vsub.f32 %v9475, %v9491
    %v9508 = vsub.f32 %v9476, %v9492
    %v9509 = vsub.f32 %v9477, %v9493
    %v9510 = vsub.f32 %v9478, %v9494
    %v9511 = vsub.f32 %v9479, %v9495
    %v9512 = vsub.f32 %v9350, %v9400
    %v9513 = vsub.f32 %v9351, %v9401
    %v9514 = vsub.f32 %v9352, %v9402
    %v9515 = vsub.f32 %v9353, %v9403
    %v9516 = vsub.f32 %v9354, %v9404
    %v9517 = vsub.f32 %v9355, %v9405
    %v9518 = vsub.f32 %v9356, %v9406
    %v9519 = vsub.f32 %v9357, %v9407
    %v9520 = vsub.f32 %v9358, %v9408
    %v9521 = vsub.f32 %v9359, %v9409
    %v9522 = vsub.f32 %v9360, %v9410
    %v9523 = vsub.f32 %v9361, %v9411
    %v9524 = vsub.f32 %v9362, %v9412
    %v9525 = vsub.f32 %v9363, %v9413
    %v9526 = vsub.f32 %v9364, %v9414
    %v9527 = vsub.f32 %v9365, %v9415
    %v9528 = vadd.f32 %v9496, 1e-05
    %v9529 = vadd.f32 %v9497, 1e-05
    %v9530 = vadd.f32 %v9498, 1e-05
    %v9531 = vadd.f32 %v9499, 1e-05
    %v9532 = vadd.f32 %v9500, 1e-05
    %v9533 = vadd.f32 %v9501, 1e-05
    %v9534 = vadd.f32 %v9502, 1e-05
    %v9535 = vadd.f32 %v9503, 1e-05
    %v9536 = vadd.f32 %v9504, 1e-05
    %v9537 = vadd.f32 %v9505, 1e-05
    %v9538 = vadd.f32 %v9506, 1e-05
    %v9539 = vadd.f32 %v9507, 1e-05
    %v9540 = vadd.f32 %v9508, 1e-05
    %v9541 = vadd.f32 %v9509, 1e-05
    %v9542 = vadd.f32 %v9510, 1e-05
    %v9543 = vadd.f32 %v9511, 1e-05
    %v9544 = vrsqrt.pop %v9528
    %v9545 = vmul.f32 %v9544, %v9528
    %v9546 = vmul.f32 %v9545, %v9544
    %v9547 = vmul.f32 0.5, %v9546
    %v9548 = vsub.f32 1.5, %v9547
    %v9549 = vmul.f32 %v9544, %v9548
    %vm9550 = vweird.f32 %v9528
    %vm9551 = vweird.f32 %v9544
    %vm9552 = vmor %vm9550, %vm9551
    %v9553 = vsel %vm9552, %v9544, %v9549
    %v9554 = vrsqrt.pop %v9529
    %v9555 = vmul.f32 %v9554, %v9529
    %v9556 = vmul.f32 %v9555, %v9554
    %v9557 = vmul.f32 0.5, %v9556
    %v9558 = vsub.f32 1.5, %v9557
    %v9559 = vmul.f32 %v9554, %v9558
    %vm9560 = vweird.f32 %v9529
    %vm9561 = vweird.f32 %v9554
    %vm9562 = vmor %vm9560, %vm9561
    %v9563 = vsel %vm9562, %v9554, %v9559
    %v9564 = vrsqrt.pop %v9530
    %v9565 = vmul.f32 %v9564, %v9530
    %v9566 = vmul.f32 %v9565, %v9564
    %v9567 = vmul.f32 0.5, %v9566
    %v9568 = vsub.f32 1.5, %v9567
    %v9569 = vmul.f32 %v9564, %v9568
    %vm9570 = vweird.f32 %v9530
    %vm9571 = vweird.f32 %v9564
    %vm9572 = vmor %vm9570, %vm9571
    %v9573 = vsel %vm9572, %v9564, %v9569
    %v9574 = vrsqrt.pop %v9531
    %v9575 = vmul.f32 %v9574, %v9531
    %v9576 = vmul.f32 %v9575, %v9574
    %v9577 = vmul.f32 0.5, %v9576
    %v9578 = vsub.f32 1.5, %v9577
    %v9579 = vmul.f32 %v9574, %v9578
    %vm9580 = vweird.f32 %v9531
    %vm9581 = vweird.f32 %v9574
    %vm9582 = vmor %vm9580, %vm9581
    %v9583 = vsel %vm9582, %v9574, %v9579
    %v9584 = vrsqrt.pop %v9532
    %v9585 = vmul.f32 %v9584, %v9532
    %v9586 = vmul.f32 %v9585, %v9584
    %v9587 = vmul.f32 0.5, %v9586
    %v9588 = vsub.f32 1.5, %v9587
    %v9589 = vmul.f32 %v9584, %v9588
    %vm9590 = vweird.f32 %v9532
    %vm9591 = vweird.f32 %v9584
    %vm9592 = vmor %vm9590, %vm9591
    %v9593 = vsel %vm9592, %v9584, %v9589
    %v9594 = vrsqrt.pop %v9533
    %v9595 = vmul.f32 %v9594, %v9533
    %v9596 = vmul.f32 %v9595, %v9594
    %v9597 = vmul.f32 0.5, %v9596
    %v9598 = vsub.f32 1.5, %v9597
    %v9599 = vmul.f32 %v9594, %v9598
    %vm9600 = vweird.f32 %v9533
    %vm9601 = vweird.f32 %v9594
    %vm9602 = vmor %vm9600, %vm9601
    %v9603 = vsel %vm9602, %v9594, %v9599
    %v9604 = vrsqrt.pop %v9534
    %v9605 = vmul.f32 %v9604, %v9534
    %v9606 = vmul.f32 %v9605, %v9604
    %v9607 = vmul.f32 0.5, %v9606
    %v9608 = vsub.f32 1.5, %v9607
    %v9609 = vmul.f32 %v9604, %v9608
    %vm9610 = vweird.f32 %v9534
    %vm9611 = vweird.f32 %v9604
    %vm9612 = vmor %vm9610, %vm9611
    %v9613 = vsel %vm9612, %v9604, %v9609
    %v9614 = vrsqrt.pop %v9535
    %v9615 = vmul.f32 %v9614, %v9535
    %v9616 = vmul.f32 %v9615, %v9614
    %v9617 = vmul.f32 0.5, %v9616
    %v9618 = vsub.f32 1.5, %v9617
    %v9619 = vmul.f32 %v9614, %v9618
    %vm9620 = vweird.f32 %v9535
    %vm9621 = vweird.f32 %v9614
    %vm9622 = vmor %vm9620, %vm9621
    %v9623 = vsel %vm9622, %v9614, %v9619
    %v9624 = vrsqrt.pop %v9536
    %v9625 = vmul.f32 %v9624, %v9536
    %v9626 = vmul.f32 %v9625, %v9624
    %v9627 = vmul.f32 0.5, %v9626
    %v9628 = vsub.f32 1.5, %v9627
    %v9629 = vmul.f32 %v9624, %v9628
    %vm9630 = vweird.f32 %v9536
    %vm9631 = vweird.f32 %v9624
    %vm9632 = vmor %vm9630, %vm9631
    %v9633 = vsel %vm9632, %v9624, %v9629
    %v9634 = vrsqrt.pop %v9537
    %v9635 = vmul.f32 %v9634, %v9537
    %v9636 = vmul.f32 %v9635, %v9634
    %v9637 = vmul.f32 0.5, %v9636
    %v9638 = vsub.f32 1.5, %v9637
    %v9639 = vmul.f32 %v9634, %v9638
    %vm9640 = vweird.f32 %v9537
    %vm9641 = vweird.f32 %v9634
    %vm9642 = vmor %vm9640, %vm9641
    %v9643 = vsel %vm9642, %v9634, %v9639
    %v9644 = vrsqrt.pop %v9538
    %v9645 = vmul.f32 %v9644, %v9538
    %v9646 = vmul.f32 %v9645, %v9644
    %v9647 = vmul.f32 0.5, %v9646
    %v9648 = vsub.f32 1.5, %v9647
    %v9649 = vmul.f32 %v9644, %v9648
    %vm9650 = vweird.f32 %v9538
    %vm9651 = vweird.f32 %v9644
    %vm9652 = vmor %vm9650, %vm9651
    %v9653 = vsel %vm9652, %v9644, %v9649
    %v9654 = vrsqrt.pop %v9539
    %v9655 = vmul.f32 %v9654, %v9539
    %v9656 = vmul.f32 %v9655, %v9654
    %v9657 = vmul.f32 0.5, %v9656
    %v9658 = vsub.f32 1.5, %v9657
    %v9659 = vmul.f32 %v9654, %v9658
    %vm9660 = vweird.f32 %v9539
    %vm9661 = vweird.f32 %v9654
    %vm9662 = vmor %vm9660, %vm9661
    %v9663 = vsel %vm9662, %v9654, %v9659
    %v9664 = vrsqrt.pop %v9540
    %v9665 = vmul.f32 %v9664, %v9540
    %v9666 = vmul.f32 %v9665, %v9664
    %v9667 = vmul.f32 0.5, %v9666
    %v9668 = vsub.f32 1.5, %v9667
    %v9669 = vmul.f32 %v9664, %v9668
    %vm9670 = vweird.f32 %v9540
    %vm9671 = vweird.f32 %v9664
    %vm9672 = vmor %vm9670, %vm9671
    %v9673 = vsel %vm9672, %v9664, %v9669
    %v9674 = vrsqrt.pop %v9541
    %v9675 = vmul.f32 %v9674, %v9541
    %v9676 = vmul.f32 %v9675, %v9674
    %v9677 = vmul.f32 0.5, %v9676
    %v9678 = vsub.f32 1.5, %v9677
    %v9679 = vmul.f32 %v9674, %v9678
    %vm9680 = vweird.f32 %v9541
    %vm9681 = vweird.f32 %v9674
    %vm9682 = vmor %vm9680, %vm9681
    %v9683 = vsel %vm9682, %v9674, %v9679
    %v9684 = vrsqrt.pop %v9542
    %v9685 = vmul.f32 %v9684, %v9542
    %v9686 = vmul.f32 %v9685, %v9684
    %v9687 = vmul.f32 0.5, %v9686
    %v9688 = vsub.f32 1.5, %v9687
    %v9689 = vmul.f32 %v9684, %v9688
    %vm9690 = vweird.f32 %v9542
    %vm9691 = vweird.f32 %v9684
    %vm9692 = vmor %vm9690, %vm9691
    %v9693 = vsel %vm9692, %v9684, %v9689
    %v9694 = vrsqrt.pop %v9543
    %v9695 = vmul.f32 %v9694, %v9543
    %v9696 = vmul.f32 %v9695, %v9694
    %v9697 = vmul.f32 0.5, %v9696
    %v9698 = vsub.f32 1.5, %v9697
    %v9699 = vmul.f32 %v9694, %v9698
    %vm9700 = vweird.f32 %v9543
    %vm9701 = vweird.f32 %v9694
    %vm9702 = vmor %vm9700, %vm9701
    %v9703 = vsel %vm9702, %v9694, %v9699
    %v9704 = vmul.f32 %v9512, %v9553
    %v9705 = vmul.f32 %v9513, %v9563
    %v9706 = vmul.f32 %v9514, %v9573
    %v9707 = vmul.f32 %v9515, %v9583
    %v9708 = vmul.f32 %v9516, %v9593
    %v9709 = vmul.f32 %v9517, %v9603
    %v9710 = vmul.f32 %v9518, %v9613
    %v9711 = vmul.f32 %v9519, %v9623
    %v9712 = vmul.f32 %v9520, %v9633
    %v9713 = vmul.f32 %v9521, %v9643
    %v9714 = vmul.f32 %v9522, %v9653
    %v9715 = vmul.f32 %v9523, %v9663
    %v9716 = vmul.f32 %v9524, %v9673
    %v9717 = vmul.f32 %v9525, %v9683
    %v9718 = vmul.f32 %v9526, %v9693
    %v9719 = vmul.f32 %v9527, %v9703
    %v9721 = vperm.slane %v9366, 0
    %v9723 = vmul.f32 %v9704, %v9721
    %v9724 = vmul.f32 %v9705, %v9721
    %v9725 = vmul.f32 %v9706, %v9721
    %v9726 = vmul.f32 %v9707, %v9721
    %v9727 = vmul.f32 %v9708, %v9721
    %v9728 = vmul.f32 %v9709, %v9721
    %v9729 = vmul.f32 %v9710, %v9721
    %v9730 = vmul.f32 %v9711, %v9721
    %v9731 = vmul.f32 %v9712, %v9721
    %v9732 = vmul.f32 %v9713, %v9721
    %v9733 = vmul.f32 %v9714, %v9721
    %v9734 = vmul.f32 %v9715, %v9721
    %v9735 = vmul.f32 %v9716, %v9721
    %v9736 = vmul.f32 %v9717, %v9721
    %v9737 = vmul.f32 %v9718, %v9721
    %v9738 = vmul.f32 %v9719, %v9721
    %v9740 = vperm.slane %v9367, 0
    %v9742 = vadd.f32 %v9723, %v9740
    %v9743 = vadd.f32 %v9724, %v9740
    %v9744 = vadd.f32 %v9725, %v9740
    %v9745 = vadd.f32 %v9726, %v9740
    %v9746 = vadd.f32 %v9727, %v9740
    %v9747 = vadd.f32 %v9728, %v9740
    %v9748 = vadd.f32 %v9729, %v9740
    %v9749 = vadd.f32 %v9730, %v9740
    %v9750 = vadd.f32 %v9731, %v9740
    %v9751 = vadd.f32 %v9732, %v9740
    %v9752 = vadd.f32 %v9733, %v9740
    %v9753 = vadd.f32 %v9734, %v9740
    %v9754 = vadd.f32 %v9735, %v9740
    %v9755 = vadd.f32 %v9736, %v9740
    %v9756 = vadd.f32 %v9737, %v9740
    %v9757 = vadd.f32 %v9738, %v9740
    %v9758 = vld [vmem:[#allocation20] sm:$0xff]
    %v9759 = vld [vmem:[#allocation20 + $0x8] sm:$0xff]
    %v9760 = vld [vmem:[#allocation20 + $0x10] sm:$0xff]
    %v9761 = vld [vmem:[#allocation20 + $0x18] sm:$0xff]
    %v9762 = vld [vmem:[#allocation20 + $0x20] sm:$0xff]
    %v9763 = vld [vmem:[#allocation20 + $0x28] sm:$0xff]
    %v9764 = vld [vmem:[#allocation20 + $0x30] sm:$0xff]
    %v9765 = vld [vmem:[#allocation20 + $0x38] sm:$0xff]
    %v9766 = vld [vmem:[#allocation20 + $0x40] sm:$0xff]
    %v9767 = vld [vmem:[#allocation20 + $0x48] sm:$0xff]
    %v9768 = vld [vmem:[#allocation20 + $0x50] sm:$0xff]
    %v9769 = vld [vmem:[#allocation20 + $0x58] sm:$0xff]
    %v9770 = vld [vmem:[#allocation20 + $0x60] sm:$0xff]
    %v9771 = vld [vmem:[#allocation20 + $0x68] sm:$0xff]
    %v9772 = vld [vmem:[#allocation20 + $0x70] sm:$0xff]
    %v9773 = vld [vmem:[#allocation20 + $0x78] sm:$0xff]
    %v9774 = vld [vmem:[#allocation20 + $0x80] sm:$0xff]
    %v9775 = vld [vmem:[#allocation20 + $0x88] sm:$0xff]
    %v9776 = vld [vmem:[#allocation20 + $0x90] sm:$0xff]
    %v9777 = vld [vmem:[#allocation20 + $0x98] sm:$0xff]
    %v9778 = vld [vmem:[#allocation20 + $0xa0] sm:$0xff]
    %v9779 = vld [vmem:[#allocation20 + $0xa8] sm:$0xff]
    %v9780 = vld [vmem:[#allocation20 + $0xb0] sm:$0xff]
    %v9781 = vld [vmem:[#allocation20 + $0xb8] sm:$0xff]
    %v9782 = vld [vmem:[#allocation20 + $0xc0] sm:$0xff]
    %v9783 = vld [vmem:[#allocation20 + $0xc8] sm:$0xff]
    %v9784 = vld [vmem:[#allocation20 + $0xd0] sm:$0xff]
    %v9785 = vld [vmem:[#allocation20 + $0xd8] sm:$0xff]
    %v9786 = vld [vmem:[#allocation20 + $0xe0] sm:$0xff]
    %v9787 = vld [vmem:[#allocation20 + $0xe8] sm:$0xff]
    %v9788 = vld [vmem:[#allocation20 + $0xf0] sm:$0xff]
    %v9789 = vld [vmem:[#allocation20 + $0xf8] sm:$0xff]
    %v9790 = vpack.c.bf16 %v9743, %v9742
    %v9791 = vpack.c.bf16 %v9745, %v9744
    %v9792 = vpack.c.bf16 %v9747, %v9746
    %v9793 = vpack.c.bf16 %v9749, %v9748
    %v9794 = vpack.c.bf16 %v9751, %v9750
    %v9795 = vpack.c.bf16 %v9753, %v9752
    %v9796 = vpack.c.bf16 %v9755, %v9754
    %v9797 = vpack.c.bf16 %v9757, %v9756
    %v9798 = vld [vmem:[%s17] sm:$0xf]
    %v9800 = vperm.slane %v9798, 0
    %v9801 = vperm.slane %v9798, 1
    %v9802 = vperm.slane %v9798, 2
    %v9803 = vperm.slane %v9798, 3
    %v9840 = vunpack.c.l.b16 %v9758
    %v9841 = vunpack.c.h.b16 %v9758
    %v9842 = vunpack.c.l.b16 %v9759
    %v9843 = vunpack.c.h.b16 %v9759
    %v9844 = vunpack.c.l.b16 %v9760
    %v9845 = vunpack.c.h.b16 %v9760
    %v9846 = vunpack.c.l.b16 %v9761
    %v9847 = vunpack.c.h.b16 %v9761
    %v9848 = vunpack.c.l.b16 %v9762
    %v9849 = vunpack.c.h.b16 %v9762
    %v9850 = vunpack.c.l.b16 %v9763
    %v9851 = vunpack.c.h.b16 %v9763
    %v9852 = vunpack.c.l.b16 %v9764
    %v9853 = vunpack.c.h.b16 %v9764
    %v9854 = vunpack.c.l.b16 %v9765
    %v9855 = vunpack.c.h.b16 %v9765
    %v9856 = vunpack.c.l.b16 %v9766
    %v9857 = vunpack.c.h.b16 %v9766
    %v9858 = vunpack.c.l.b16 %v9767
    %v9859 = vunpack.c.h.b16 %v9767
    %v9860 = vunpack.c.l.b16 %v9768
    %v9861 = vunpack.c.h.b16 %v9768
    %v9862 = vunpack.c.l.b16 %v9769
    %v9863 = vunpack.c.h.b16 %v9769
    %v9864 = vunpack.c.l.b16 %v9770
    %v9865 = vunpack.c.h.b16 %v9770
    %v9866 = vunpack.c.l.b16 %v9771
    %v9867 = vunpack.c.h.b16 %v9771
    %v9868 = vunpack.c.l.b16 %v9772
    %v9869 = vunpack.c.h.b16 %v9772
    %v9870 = vunpack.c.l.b16 %v9773
    %v9871 = vunpack.c.h.b16 %v9773
    %v9872 = vunpack.c.l.b16 %v9774
    %v9873 = vunpack.c.h.b16 %v9774
    %v9874 = vunpack.c.l.b16 %v9775
    %v9875 = vunpack.c.h.b16 %v9775
    %v9876 = vunpack.c.l.b16 %v9776
    %v9877 = vunpack.c.h.b16 %v9776
    %v9878 = vunpack.c.l.b16 %v9777
    %v9879 = vunpack.c.h.b16 %v9777
    %v9880 = vunpack.c.l.b16 %v9778
    %v9881 = vunpack.c.h.b16 %v9778
    %v9882 = vunpack.c.l.b16 %v9779
    %v9883 = vunpack.c.h.b16 %v9779
    %v9884 = vunpack.c.l.b16 %v9780
    %v9885 = vunpack.c.h.b16 %v9780
    %v9886 = vunpack.c.l.b16 %v9781
    %v9887 = vunpack.c.h.b16 %v9781
    %v9888 = vunpack.c.l.b16 %v9782
    %v9889 = vunpack.c.h.b16 %v9782
    %v9890 = vunpack.c.l.b16 %v9783
    %v9891 = vunpack.c.h.b16 %v9783
    %v9892 = vunpack.c.l.b16 %v9784
    %v9893 = vunpack.c.h.b16 %v9784
    %v9894 = vunpack.c.l.b16 %v9785
    %v9895 = vunpack.c.h.b16 %v9785
    %v9896 = vunpack.c.l.b16 %v9786
    %v9897 = vunpack.c.h.b16 %v9786
    %v9898 = vunpack.c.l.b16 %v9787
    %v9899 = vunpack.c.h.b16 %v9787
    %v9900 = vunpack.c.l.b16 %v9788
    %v9901 = vunpack.c.h.b16 %v9788
    %v9902 = vunpack.c.l.b16 %v9789
    %v9903 = vunpack.c.h.b16 %v9789
    %v9904 = vpack.c.b16 %v9844, %v9840
    %v9905 = vpack.c.b16 %v9845, %v9841
    %v9906 = vpack.c.b16 %v9846, %v9842
    %v9907 = vpack.c.b16 %v9847, %v9843
    %v9908 = vpack.c.b16 %v9852, %v9848
    %v9909 = vpack.c.b16 %v9853, %v9849
    %v9910 = vpack.c.b16 %v9854, %v9850
    %v9911 = vpack.c.b16 %v9855, %v9851
    %v9912 = vpack.c.b16 %v9860, %v9856
    %v9913 = vpack.c.b16 %v9861, %v9857
    %v9914 = vpack.c.b16 %v9862, %v9858
    %v9915 = vpack.c.b16 %v9863, %v9859
    %v9916 = vpack.c.b16 %v9868, %v9864
    %v9917 = vpack.c.b16 %v9869, %v9865
    %v9918 = vpack.c.b16 %v9870, %v9866
    %v9919 = vpack.c.b16 %v9871, %v9867
    %v9920 = vpack.c.b16 %v9876, %v9872
    %v9921 = vpack.c.b16 %v9877, %v9873
    %v9922 = vpack.c.b16 %v9878, %v9874
    %v9923 = vpack.c.b16 %v9879, %v9875
    %v9924 = vpack.c.b16 %v9884, %v9880
    %v9925 = vpack.c.b16 %v9885, %v9881
    %v9926 = vpack.c.b16 %v9886, %v9882
    %v9927 = vpack.c.b16 %v9887, %v9883
    %v9928 = vpack.c.b16 %v9892, %v9888
    %v9929 = vpack.c.b16 %v9893, %v9889
    %v9930 = vpack.c.b16 %v9894, %v9890
    %v9931 = vpack.c.b16 %v9895, %v9891
    %v9932 = vpack.c.b16 %v9900, %v9896
    %v9933 = vpack.c.b16 %v9901, %v9897
    %v9934 = vpack.c.b16 %v9902, %v9898
    %v9935 = vpack.c.b16 %v9903, %v9899
    %9968 = vmatpush.bf16.msra.mxu0 %v9932
    %9969 = vmatpush.bf16.msra.mxu0 %v9928
    %9970 = vmatpush.bf16.msra.mxu0 %v9924
    %9971 = vmatpush.bf16.msra.mxu0 %v9920
    %9972 = vmatpush.bf16.msra.mxu0 %v9916
    %9973 = vmatpush.bf16.msra.mxu0 %v9912
    %9974 = vmatpush.bf16.msra.mxu0 %v9908
    %9975 = vmatpush.bf16.msra.mxu0 %v9904
    %9976 = vmatmul.bf16.gmra.mxu0 %v9790
    %v9977 = vpop.f32.mrf.mxu0
    %v9978 = vadd.f32 %v9800, %v9977
    %v9979 = vpop.f32.mrf.mxu0
    %v9980 = vadd.f32 %v9800, %v9979
    %9981 = vmatmul.bf16.gmra.mxu0 %v9791
    %v9982 = vpop.f32.mrf.mxu0
    %v9983 = vadd.f32 %v9800, %v9982
    %v9984 = vpop.f32.mrf.mxu0
    %v9985 = vadd.f32 %v9800, %v9984
    %9986 = vmatmul.bf16.gmra.mxu0 %v9792
    %v9987 = vpop.f32.mrf.mxu0
    %v9988 = vadd.f32 %v9800, %v9987
    %v9989 = vpop.f32.mrf.mxu0
    %v9990 = vadd.f32 %v9800, %v9989
    %9991 = vmatmul.bf16.gmra.mxu0 %v9793
    %v9992 = vpop.f32.mrf.mxu0
    %v9993 = vadd.f32 %v9800, %v9992
    %v9994 = vpop.f32.mrf.mxu0
    %v9995 = vadd.f32 %v9800, %v9994
    %9996 = vmatmul.bf16.gmra.mxu0 %v9794
    %v9997 = vpop.f32.mrf.mxu0
    %v9998 = vadd.f32 %v9800, %v9997
    %v9999 = vpop.f32.mrf.mxu0
    %v10000 = vadd.f32 %v9800, %v9999
    %10001 = vmatmul.bf16.gmra.mxu0 %v9795
    %v10002 = vpop.f32.mrf.mxu0
    %v10003 = vadd.f32 %v9800, %v10002
    %v10004 = vpop.f32.mrf.mxu0
    %v10005 = vadd.f32 %v9800, %v10004
    %10006 = vmatmul.bf16.gmra.mxu0 %v9796
    %v10007 = vpop.f32.mrf.mxu0
    %v10008 = vadd.f32 %v9800, %v10007
    %v10009 = vpop.f32.mrf.mxu0
    %v10010 = vadd.f32 %v9800, %v10009
    %10011 = vmatmul.bf16.gmra.mxu0 %v9797
    %v10012 = vpop.f32.mrf.mxu0
    %v10013 = vadd.f32 %v9800, %v10012
    %v10014 = vpop.f32.mrf.mxu0
    %v10015 = vadd.f32 %v9800, %v10014
    %10016 = vdwg.mxu0
    %10017 = vmatpush.bf16.msra.mxu0 %v9933
    %10018 = vmatpush.bf16.msra.mxu0 %v9929
    %10019 = vmatpush.bf16.msra.mxu0 %v9925
    %10020 = vmatpush.bf16.msra.mxu0 %v9921
    %10021 = vmatpush.bf16.msra.mxu0 %v9917
    %10022 = vmatpush.bf16.msra.mxu0 %v9913
    %10023 = vmatpush.bf16.msra.mxu0 %v9909
    %10024 = vmatpush.bf16.msra.mxu0 %v9905
    %10025 = vmatmul.bf16.gmra.mxu0 %v9790
    %v10026 = vpop.f32.mrf.mxu0
    %v10027 = vadd.f32 %v9801, %v10026
    %v10028 = vpop.f32.mrf.mxu0
    %v10029 = vadd.f32 %v9801, %v10028
    %10030 = vmatmul.bf16.gmra.mxu0 %v9791
    %v10031 = vpop.f32.mrf.mxu0
    %v10032 = vadd.f32 %v9801, %v10031
    %v10033 = vpop.f32.mrf.mxu0
    %v10034 = vadd.f32 %v9801, %v10033
    %10035 = vmatmul.bf16.gmra.mxu0 %v9792
    %v10036 = vpop.f32.mrf.mxu0
    %v10037 = vadd.f32 %v9801, %v10036
    %v10038 = vpop.f32.mrf.mxu0
    %v10039 = vadd.f32 %v9801, %v10038
    %10040 = vmatmul.bf16.gmra.mxu0 %v9793
    %v10041 = vpop.f32.mrf.mxu0
    %v10042 = vadd.f32 %v9801, %v10041
    %v10043 = vpop.f32.mrf.mxu0
    %v10044 = vadd.f32 %v9801, %v10043
    %10045 = vmatmul.bf16.gmra.mxu0 %v9794
    %v10046 = vpop.f32.mrf.mxu0
    %v10047 = vadd.f32 %v9801, %v10046
    %v10048 = vpop.f32.mrf.mxu0
    %v10049 = vadd.f32 %v9801, %v10048
    %10050 = vmatmul.bf16.gmra.mxu0 %v9795
    %v10051 = vpop.f32.mrf.mxu0
    %v10052 = vadd.f32 %v9801, %v10051
    %v10053 = vpop.f32.mrf.mxu0
    %v10054 = vadd.f32 %v9801, %v10053
    %10055 = vmatmul.bf16.gmra.mxu0 %v9796
    %v10056 = vpop.f32.mrf.mxu0
    %v10057 = vadd.f32 %v9801, %v10056
    %v10058 = vpop.f32.mrf.mxu0
    %v10059 = vadd.f32 %v9801, %v10058
    %10060 = vmatmul.bf16.gmra.mxu0 %v9797
    %v10061 = vpop.f32.mrf.mxu0
    %v10062 = vadd.f32 %v9801, %v10061
    %v10063 = vpop.f32.mrf.mxu0
    %v10064 = vadd.f32 %v9801, %v10063
    %10065 = vdwg.mxu0
    %10066 = vmatpush.bf16.msra.mxu0 %v9934
    %10067 = vmatpush.bf16.msra.mxu0 %v9930
    %10068 = vmatpush.bf16.msra.mxu0 %v9926
    %10069 = vmatpush.bf16.msra.mxu0 %v9922
    %10070 = vmatpush.bf16.msra.mxu0 %v9918
    %10071 = vmatpush.bf16.msra.mxu0 %v9914
    %10072 = vmatpush.bf16.msra.mxu0 %v9910
    %10073 = vmatpush.bf16.msra.mxu0 %v9906
    %10074 = vmatmul.bf16.gmra.mxu0 %v9790
    %v10075 = vpop.f32.mrf.mxu0
    %v10076 = vadd.f32 %v9802, %v10075
    %v10077 = vpop.f32.mrf.mxu0
    %v10078 = vadd.f32 %v9802, %v10077
    %10079 = vmatmul.bf16.gmra.mxu0 %v9791
    %v10080 = vpop.f32.mrf.mxu0
    %v10081 = vadd.f32 %v9802, %v10080
    %v10082 = vpop.f32.mrf.mxu0
    %v10083 = vadd.f32 %v9802, %v10082
    %10084 = vmatmul.bf16.gmra.mxu0 %v9792
    %v10085 = vpop.f32.mrf.mxu0
    %v10086 = vadd.f32 %v9802, %v10085
    %v10087 = vpop.f32.mrf.mxu0
    %v10088 = vadd.f32 %v9802, %v10087
    %10089 = vmatmul.bf16.gmra.mxu0 %v9793
    %v10090 = vpop.f32.mrf.mxu0
    %v10091 = vadd.f32 %v9802, %v10090
    %v10092 = vpop.f32.mrf.mxu0
    %v10093 = vadd.f32 %v9802, %v10092
    %10094 = vmatmul.bf16.gmra.mxu0 %v9794
    %v10095 = vpop.f32.mrf.mxu0
    %v10096 = vadd.f32 %v9802, %v10095
    %v10097 = vpop.f32.mrf.mxu0
    %v10098 = vadd.f32 %v9802, %v10097
    %10099 = vmatmul.bf16.gmra.mxu0 %v9795
    %v10100 = vpop.f32.mrf.mxu0
    %v10101 = vadd.f32 %v9802, %v10100
    %v10102 = vpop.f32.mrf.mxu0
    %v10103 = vadd.f32 %v9802, %v10102
    %10104 = vmatmul.bf16.gmra.mxu0 %v9796
    %v10105 = vpop.f32.mrf.mxu0
    %v10106 = vadd.f32 %v9802, %v10105
    %v10107 = vpop.f32.mrf.mxu0
    %v10108 = vadd.f32 %v9802, %v10107
    %10109 = vmatmul.bf16.gmra.mxu0 %v9797
    %v10110 = vpop.f32.mrf.mxu0
    %v10111 = vadd.f32 %v9802, %v10110
    %v10112 = vpop.f32.mrf.mxu0
    %v10113 = vadd.f32 %v9802, %v10112
    %10114 = vdwg.mxu0
    %10115 = vmatpush.bf16.msra.mxu0 %v9935
    %10116 = vmatpush.bf16.msra.mxu0 %v9931
    %10117 = vmatpush.bf16.msra.mxu0 %v9927
    %10118 = vmatpush.bf16.msra.mxu0 %v9923
    %10119 = vmatpush.bf16.msra.mxu0 %v9919
    %10120 = vmatpush.bf16.msra.mxu0 %v9915
    %10121 = vmatpush.bf16.msra.mxu0 %v9911
    %10122 = vmatpush.bf16.msra.mxu0 %v9907
    %10123 = vmatmul.bf16.gmra.mxu0 %v9790
    %v10124 = vpop.f32.mrf.mxu0
    %v10125 = vadd.f32 %v9803, %v10124
    %v10126 = vpop.f32.mrf.mxu0
    %v10127 = vadd.f32 %v9803, %v10126
    %10128 = vmatmul.bf16.gmra.mxu0 %v9791
    %v10129 = vpop.f32.mrf.mxu0
    %v10130 = vadd.f32 %v9803, %v10129
    %v10131 = vpop.f32.mrf.mxu0
    %v10132 = vadd.f32 %v9803, %v10131
    %10133 = vmatmul.bf16.gmra.mxu0 %v9792
    %v10134 = vpop.f32.mrf.mxu0
    %v10135 = vadd.f32 %v9803, %v10134
    %v10136 = vpop.f32.mrf.mxu0
    %v10137 = vadd.f32 %v9803, %v10136
    %10138 = vmatmul.bf16.gmra.mxu0 %v9793
    %v10139 = vpop.f32.mrf.mxu0
    %v10140 = vadd.f32 %v9803, %v10139
    %v10141 = vpop.f32.mrf.mxu0
    %v10142 = vadd.f32 %v9803, %v10141
    %10143 = vmatmul.bf16.gmra.mxu0 %v9794
    %v10144 = vpop.f32.mrf.mxu0
    %v10145 = vadd.f32 %v9803, %v10144
    %v10146 = vpop.f32.mrf.mxu0
    %v10147 = vadd.f32 %v9803, %v10146
    %10148 = vmatmul.bf16.gmra.mxu0 %v9795
    %v10149 = vpop.f32.mrf.mxu0
    %v10150 = vadd.f32 %v9803, %v10149
    %v10151 = vpop.f32.mrf.mxu0
    %v10152 = vadd.f32 %v9803, %v10151
    %10153 = vmatmul.bf16.gmra.mxu0 %v9796
    %v10154 = vpop.f32.mrf.mxu0
    %v10155 = vadd.f32 %v9803, %v10154
    %v10156 = vpop.f32.mrf.mxu0
    %v10157 = vadd.f32 %v9803, %v10156
    %10158 = vmatmul.bf16.gmra.mxu0 %v9797
    %v10159 = vpop.f32.mrf.mxu0
    %v10160 = vadd.f32 %v9803, %v10159
    %v10161 = vpop.f32.mrf.mxu0
    %v10162 = vadd.f32 %v9803, %v10161
    %10163 = vdwg.mxu0
    %10164 = vst [vmem:[#allocation22] sm:$0xff] %v9978
    %10165 = vst [vmem:[#allocation22 + $0x8] sm:$0xff] %v10027
    %10166 = vst [vmem:[#allocation22 + $0x10] sm:$0xff] %v10076
    %10167 = vst [vmem:[#allocation22 + $0x18] sm:$0xff] %v10125
    %10168 = vst [vmem:[#allocation22 + $0x20] sm:$0xff] %v9980
    %10169 = vst [vmem:[#allocation22 + $0x28] sm:$0xff] %v10029
    %10170 = vst [vmem:[#allocation22 + $0x30] sm:$0xff] %v10078
    %10171 = vst [vmem:[#allocation22 + $0x38] sm:$0xff] %v10127
    %10172 = vst [vmem:[#allocation22 + $0x40] sm:$0xff] %v9983
    %10173 = vst [vmem:[#allocation22 + $0x48] sm:$0xff] %v10032
    %10174 = vst [vmem:[#allocation22 + $0x50] sm:$0xff] %v10081
    %10175 = vst [vmem:[#allocation22 + $0x58] sm:$0xff] %v10130
    %10176 = vst [vmem:[#allocation22 + $0x60] sm:$0xff] %v9985
    %10177 = vst [vmem:[#allocation22 + $0x68] sm:$0xff] %v10034
    %10178 = vst [vmem:[#allocation22 + $0x70] sm:$0xff] %v10083
    %10179 = vst [vmem:[#allocation22 + $0x78] sm:$0xff] %v10132
    %10180 = vst [vmem:[#allocation22 + $0x80] sm:$0xff] %v9988
    %10181 = vst [vmem:[#allocation22 + $0x88] sm:$0xff] %v10037
    %10182 = vst [vmem:[#allocation22 + $0x90] sm:$0xff] %v10086
    %10183 = vst [vmem:[#allocation22 + $0x98] sm:$0xff] %v10135
    %10184 = vst [vmem:[#allocation22 + $0xa0] sm:$0xff] %v9990
    %10185 = vst [vmem:[#allocation22 + $0xa8] sm:$0xff] %v10039
    %10186 = vst [vmem:[#allocation22 + $0xb0] sm:$0xff] %v10088
    %10187 = vst [vmem:[#allocation22 + $0xb8] sm:$0xff] %v10137
    %10188 = vst [vmem:[#allocation22 + $0xc0] sm:$0xff] %v9993
    %10189 = vst [vmem:[#allocation22 + $0xc8] sm:$0xff] %v10042
    %10190 = vst [vmem:[#allocation22 + $0xd0] sm:$0xff] %v10091
    %10191 = vst [vmem:[#allocation22 + $0xd8] sm:$0xff] %v10140
    %10192 = vst [vmem:[#allocation22 + $0xe0] sm:$0xff] %v9995
    %10193 = vst [vmem:[#allocation22 + $0xe8] sm:$0xff] %v10044
    %10194 = vst [vmem:[#allocation22 + $0xf0] sm:$0xff] %v10093
    %10195 = vst [vmem:[#allocation22 + $0xf8] sm:$0xff] %v10142
    %10196 = vst [vmem:[#allocation22 + $0x100] sm:$0xff] %v9998
    %10197 = vst [vmem:[#allocation22 + $0x108] sm:$0xff] %v10047
    %10198 = vst [vmem:[#allocation22 + $0x110] sm:$0xff] %v10096
    %10199 = vst [vmem:[#allocation22 + $0x118] sm:$0xff] %v10145
    %10200 = vst [vmem:[#allocation22 + $0x120] sm:$0xff] %v10000
    %10201 = vst [vmem:[#allocation22 + $0x128] sm:$0xff] %v10049
    %10202 = vst [vmem:[#allocation22 + $0x130] sm:$0xff] %v10098
    %10203 = vst [vmem:[#allocation22 + $0x138] sm:$0xff] %v10147
    %10204 = vst [vmem:[#allocation22 + $0x140] sm:$0xff] %v10003
    %10205 = vst [vmem:[#allocation22 + $0x148] sm:$0xff] %v10052
    %10206 = vst [vmem:[#allocation22 + $0x150] sm:$0xff] %v10101
    %10207 = vst [vmem:[#allocation22 + $0x158] sm:$0xff] %v10150
    %10208 = vst [vmem:[#allocation22 + $0x160] sm:$0xff] %v10005
    %10209 = vst [vmem:[#allocation22 + $0x168] sm:$0xff] %v10054
    %10210 = vst [vmem:[#allocation22 + $0x170] sm:$0xff] %v10103
    %10211 = vst [vmem:[#allocation22 + $0x178] sm:$0xff] %v10152
    %10212 = vst [vmem:[#allocation22 + $0x180] sm:$0xff] %v10008
    %10213 = vst [vmem:[#allocation22 + $0x188] sm:$0xff] %v10057
    %10214 = vst [vmem:[#allocation22 + $0x190] sm:$0xff] %v10106
    %10215 = vst [vmem:[#allocation22 + $0x198] sm:$0xff] %v10155
    %10216 = vst [vmem:[#allocation22 + $0x1a0] sm:$0xff] %v10010
    %10217 = vst [vmem:[#allocation22 + $0x1a8] sm:$0xff] %v10059
    %10218 = vst [vmem:[#allocation22 + $0x1b0] sm:$0xff] %v10108
    %10219 = vst [vmem:[#allocation22 + $0x1b8] sm:$0xff] %v10157
    %10220 = vst [vmem:[#allocation22 + $0x1c0] sm:$0xff] %v10013
    %10221 = vst [vmem:[#allocation22 + $0x1c8] sm:$0xff] %v10062
    %10222 = vst [vmem:[#allocation22 + $0x1d0] sm:$0xff] %v10111
    %10223 = vst [vmem:[#allocation22 + $0x1d8] sm:$0xff] %v10160
    %10224 = vst [vmem:[#allocation22 + $0x1e0] sm:$0xff] %v10015
    %10225 = vst [vmem:[#allocation22 + $0x1e8] sm:$0xff] %v10064
    %10226 = vst [vmem:[#allocation22 + $0x1f0] sm:$0xff] %v10113
    %10227 = vst [vmem:[#allocation22 + $0x1f8] sm:$0xff] %v10162
    // Predicated region
    $region122: #{tpu_custom_call.1} parent=1 // pred_check
      _
    $region123: #{tpu_custom_call.1} parent=1 // pred_check_branch
      %10229 = sbr.rel (0) target = $region125
    $region124: #{tpu_custom_call.1} parent=1 // pred_region
      %10231 = vsyncadd [#allocation4], 0
      %s10232 = sshll.u32 [#allocation22], 4
      %s10233 = int_to_ptr.vmem [resolvable:$true] %s10232
      %s10234 = sshll.u32 %s18, 4
      %s10235 = int_to_ptr.hbm [resolvable:$true] %s10234
      %10240 = dma.vmem_to_hbm [thread:$0]  %s10233, 8192, %s10235, [#allocation4], 512, 512, 32
    $region125: #{tpu_custom_call.1} parent=1 // pred_fallthru
      _
    // Predicated region
    $region126: #{tpu_custom_call.1} parent=1 // pred_check
      _
    $region127: #{tpu_custom_call.1} parent=1 // pred_check_branch
      %10242 = sbr.rel (0) target = $region129
    $region128: #{tpu_custom_call.1} parent=1 // pred_region
      %10244 = dma.done [#allocation4], 8192
    $region129: #{tpu_custom_call.1} parent=1 // pred_fallthru
      _
    %10245 = vsyncpa [#allocation3], 1
    %10246 = vsyncpa [#allocation6], 1
    %10247 = vsyncpa [#allocation9], 1
    %10248 = vsyncpa [#allocation12], 1
    %10249 = vsyncpa [#allocation15], 1
    %10250 = vsyncpa [#allocation18], 1
    %10251 = vsyncpa [#allocation21], 1
    %10252 = vsyncpa [#allocation4], 1

</llo_original>
